<compile_context>
chip_gen: v7x
topology: tpu7x:2x2x1
jax: 0.10.0
libtpu: 0.0.40
codegen_flags: <defaults>
</compile_context>

<pallas_src>
import functools
import math

import jax
import jax.numpy as jnp
from jax import lax
from jax.experimental import pallas as pl
from jax.experimental.pallas import tpu as pltpu


# ------------------------------ model config -------------------------------

VOCAB = 128
HIDDEN = 32
HEADS = 2
HEAD_DIM = HIDDEN // HEADS
LAYERS = 2
INTER = 64
MAX_POS = 32
LN_EPS = 1e-12


# ------------------------------ fused kernel -------------------------------

def _mm(a, b):
    # bf16 MXU operands (v6e/v7x native), f32 accumulation.
    return jnp.dot(a.astype(jnp.bfloat16), b.astype(jnp.bfloat16),
                   preferred_element_type=jnp.float32)


def _layernorm(x, gamma, beta, eps):
    mu = jnp.mean(x, axis=-1, keepdims=True)
    var = jnp.mean(jnp.square(x - mu), axis=-1, keepdims=True)
    return (x - mu) * lax.rsqrt(var + eps) * gamma + beta


def _cross_encoder_kernel(h0_ref, bias_ref, label_ref,
                          emb_ln_ref, wqkv_ref, bqkv_ref, wo_ref, bo_ref,
                          ln1_ref, w1_ref, b1_ref, w2_ref, b2_ref, ln2_ref,
                          head_w_ref, head_b_ref,
                          logits_ref, loss_ref, acc_ref,
                          ctx_ref,
                          *, heads, eps):
    M, D = h0_ref.shape                 # M = bsz*num*seq tokens, D = hidden
    BN, S = bias_ref.shape              # BN = bsz*num sequences
    L = wqkv_ref.shape[0]
    dh = D // heads
    bsz = label_ref.shape[0]
    num = BN // bsz
    scale = 1.0 / math.sqrt(dh)

    # ---- embedding LayerNorm (no residual, no zeros tensor) ----
    h = _layernorm(h0_ref[...].astype(jnp.float32),
                   emb_ln_ref[0:1, :], emb_ln_ref[1:2, :], eps)

    # ---- transformer layers, fully unrolled, VMEM/vreg resident ----
    # TODO(synk): on v7x, shard BN across the 2 TensorCores (leading parallel
    # grid axis / core_map); single call uses one TC at these tiny sizes.
    for l in range(L):
        x = h
        qkv = _mm(x, wqkv_ref[l]) + bqkv_ref[l]          # (M, 3D), 96 lanes
        q = qkv[:, 0:D]
        k = qkv[:, D:2 * D]
        v = qkv[:, 2 * D:3 * D]
        for b in range(BN):
            rows = slice(b * S, (b + 1) * S)
            key_bias = bias_ref[b:b + 1, :]              # (1, S) key-side bias
            for hh in range(heads):
                cols = slice(hh * dh, (hh + 1) * dh)
                qb = q[rows, cols]
                kb = k[rows, cols]
                vb = v[rows, cols]
                s = lax.dot_general(                     # qb @ kb.T
                    qb.astype(jnp.bfloat16), kb.astype(jnp.bfloat16),
                    dimension_numbers=(((1,), (1,)), ((), ())),
                    preferred_element_type=jnp.float32) * scale + key_bias
                s = s - jnp.max(s, axis=-1, keepdims=True)
                p = jnp.exp(s)
                p = p * pl.reciprocal(jnp.sum(p, axis=-1, keepdims=True),
                                      approx=True)
                ctx_ref[rows, cols] = _mm(p, vb)         # (S, dh)
        ctx = ctx_ref[...]                               # (M, D)
        attn_out = _mm(ctx, wo_ref[l]) + bo_ref[l]
        ln1 = ln1_ref[l]
        h = _layernorm(attn_out + x, ln1[0:1, :], ln1[1:2, :], eps)
        ffn = _mm(h, w1_ref[l]) + b1_ref[l]
        # TODO(synk): HF BERT uses exact erf GELU; tanh approximation used here.
        ffn = jax.nn.gelu(ffn, approximate=True)
        ffn = _mm(ffn, w2_ref[l]) + b2_ref[l]
        ln2 = ln2_ref[l]
        h = _layernorm(ffn + h, ln2[0:1, :], ln2[1:2, :], eps)

    # ---- CLS extraction (rows 0, S, 2S, ...) via a selection matmul ----
    row = lax.broadcasted_iota(jnp.int32, (BN, M), 0)
    col = lax.broadcasted_iota(jnp.int32, (BN, M), 1)
    sel = (col == row * S).astype(jnp.float32)
    cls = jnp.dot(sel, h, preferred_element_type=jnp.float32)    # (BN, D)

    # ---- CLS head as a fused row-reduction (no N=1 matmul) ----
    logits = jnp.sum(cls * head_w_ref[...], axis=-1, keepdims=True)
    logits = logits + head_b_ref[...]                            # (BN, 1)
    logits_ref[...] = logits

    # ---- cross-entropy + accuracy over (bsz, num) groups ----
    loss_acc = jnp.zeros((1, 1), jnp.float32)
    correct = jnp.zeros((1, 1), jnp.float32)
    for b in range(bsz):
        sl = logits[b * num:(b + 1) * num, :]                    # (num, 1)
        lab = label_ref[b:b + 1, :]                              # (1, 1) int32
        m = jnp.max(sl, axis=0, keepdims=True)
        lse = jnp.log(jnp.sum(jnp.exp(sl - m), axis=0, keepdims=True)) + m
        ridx = lax.broadcasted_iota(jnp.int32, (num, 1), 0)
        onehot = (ridx == lab).astype(jnp.float32)
        label_logit = jnp.sum(sl * onehot, axis=0, keepdims=True)
        loss_acc = loss_acc + (lse - label_logit)
        # argmax with first-max tie-break (matches torch.max(...).indices)
        pred = jnp.min(jnp.where(sl == m, ridx, num), axis=0, keepdims=True)
        correct = correct + (pred == lab).astype(jnp.float32)
    loss_ref[0, 0] = jnp.sum(loss_acc) / bsz
    acc_ref[0, 0] = jnp.sum(correct) / bsz


# --------------------------------- params ----------------------------------

def init_params(key):
    ks = jax.random.split(key, 8)
    nrm = lambda k, shape: 0.02 * jax.random.normal(k, shape, jnp.float32)
    ln_pair = jnp.stack([jnp.ones((HIDDEN,), jnp.float32),
                         jnp.zeros((HIDDEN,), jnp.float32)])      # (2, D)
    # TODO(synk): if HIDDEN/INTER are scaled to real BERT sizes, tile N/K of
    # the weight matmuls and set vmem_limit_bytes instead of full-VMEM blocks.
    return {
        "word_emb": nrm(ks[0], (VOCAB, HIDDEN)),
        "pos_emb": nrm(ks[1], (MAX_POS, HIDDEN)),
        "type_emb": nrm(ks[2], (2, HIDDEN)),
        "emb_ln": ln_pair,                                        # gamma;beta
        "wqkv": nrm(ks[3], (LAYERS, HIDDEN, 3 * HIDDEN)),         # Wq|Wk|Wv
        "bqkv": jnp.zeros((LAYERS, 1, 3 * HIDDEN), jnp.float32),
        "wo": nrm(ks[4], (LAYERS, HIDDEN, HIDDEN)),
        "bo": jnp.zeros((LAYERS, 1, HIDDEN), jnp.float32),
        "ln1": jnp.tile(ln_pair[None], (LAYERS, 1, 1)),
        "w1": nrm(ks[5], (LAYERS, HIDDEN, INTER)),
        "b1": jnp.zeros((LAYERS, 1, INTER), jnp.float32),
        "w2": nrm(ks[6], (LAYERS, INTER, HIDDEN)),
        "b2": jnp.zeros((LAYERS, 1, HIDDEN), jnp.float32),
        "ln2": jnp.tile(ln_pair[None], (LAYERS, 1, 1)),
        "head_w": nrm(ks[7], (1, HIDDEN)),                        # linear1
        "head_b": jnp.zeros((1, 1), jnp.float32),
    }


# ------------------------------ forward pass -------------------------------

def cross_encoder_forward(params, input_ids, label):
    """input_ids: (bsz, num, seq) int32, label: (bsz,) int32.
    Returns (logits (bsz, num), loss scalar, acc scalar)."""
    bsz, num, S = input_ids.shape
    BN = bsz * num
    ids = input_ids.reshape(BN, S)

    # to_bert_input: attention_mask = 1 - (ids == 0); token_type_ids = 0
    mask_bias = jnp.where(ids == 0, -10000.0, 0.0).astype(jnp.float32)  # (BN,S)

    # embeddings (gather stays in plain-JAX glue); LayerNorm runs in-kernel
    h0 = (params["word_emb"][ids]
          + params["pos_emb"][None, :S, :]
          + params["type_emb"][0][None, None, :]).reshape(BN * S, HIDDEN)

    vmem = pl.BlockSpec(memory_space=pltpu.MemorySpace.VMEM)
    smem = pl.BlockSpec(memory_space=pltpu.MemorySpace.SMEM)

    logits_col, loss, acc = pl.pallas_call(
        functools.partial(_cross_encoder_kernel, heads=HEADS, eps=LN_EPS),
        out_shape=(jax.ShapeDtypeStruct((BN, 1), jnp.float32),
                   jax.ShapeDtypeStruct((1, 1), jnp.float32),
                   jax.ShapeDtypeStruct((1, 1), jnp.float32)),
        in_specs=[vmem] * 16,
        out_specs=(vmem, smem, smem),
        scratch_shapes=[pltpu.VMEM((BN * S, HIDDEN), jnp.float32)],
    )(h0, mask_bias, label.reshape(bsz, 1).astype(jnp.int32),
      params["emb_ln"], params["wqkv"], params["bqkv"], params["wo"],
      params["bo"], params["ln1"], params["w1"], params["b1"], params["w2"],
      params["b2"], params["ln2"], params["head_w"], params["head_b"])

    logits = logits_col.reshape(bsz, num)
    return logits, loss[0, 0], acc[0, 0]


# ---------------------------------- main ------------------------------------

if __name__ == "__main__":
    key = jax.random.PRNGKey(0)
    k_par, k_ids, k_lab = jax.random.split(key, 3)

    params = init_params(k_par)

    bsz, num, seq = 2, 4, 8
    input_ids = jax.random.randint(k_ids, (bsz, num, seq), 1, VOCAB,
                                   dtype=jnp.int32)
    # introduce some padding (id 0) so the attention mask is exercised
    input_ids = input_ids.at[:, :, -2:].set(0)
    label = jax.random.randint(k_lab, (bsz,), 0, num, dtype=jnp.int32)

    fwd = jax.jit(cross_encoder_forward)
    logits, loss, acc = fwd(params, input_ids, label)
    jax.block_until_ready((logits, loss, acc))

    assert logits.shape == (bsz, num)
    assert loss.shape == () and acc.shape == ()
    assert bool(jnp.isfinite(loss)) and bool(jnp.isfinite(logits).all())
    print("KERNEL_OK")
</pallas_src>

<mosaic_0001>
module attributes {stable_mosaic.version = 11 : i64} {
  func.func @_cross_encoder_kernel(%arg0: memref<64x32xf32, #tpu.memory_space<vmem>>, %arg1: memref<8x8xf32, #tpu.memory_space<vmem>>, %arg2: memref<2x1xi32, #tpu.memory_space<vmem>>, %arg3: memref<2x32xf32, #tpu.memory_space<vmem>>, %arg4: memref<2x32x96xf32, #tpu.memory_space<vmem>>, %arg5: memref<2x1x96xf32, #tpu.memory_space<vmem>>, %arg6: memref<2x32x32xf32, #tpu.memory_space<vmem>>, %arg7: memref<2x1x32xf32, #tpu.memory_space<vmem>>, %arg8: memref<2x2x32xf32, #tpu.memory_space<vmem>>, %arg9: memref<2x32x64xf32, #tpu.memory_space<vmem>>, %arg10: memref<2x1x64xf32, #tpu.memory_space<vmem>>, %arg11: memref<2x64x32xf32, #tpu.memory_space<vmem>>, %arg12: memref<2x1x32xf32, #tpu.memory_space<vmem>>, %arg13: memref<2x2x32xf32, #tpu.memory_space<vmem>>, %arg14: memref<1x32xf32, #tpu.memory_space<vmem>>, %arg15: memref<1x1xf32, #tpu.memory_space<vmem>>, %arg16: memref<8x1xf32, #tpu.memory_space<vmem>>, %arg17: memref<1x1xf32, #tpu.memory_space<smem>>, %arg18: memref<1x1xf32, #tpu.memory_space<smem>>, %arg19: memref<64x32xf32, #tpu.memory_space<vmem>>) attributes {dimension_semantics = [], scalar_prefetch = 0 : i64, scratch_operands = 1 : i64, tpu.core_type = #tpu.core_type<tc>} {
    %c0 = arith.constant 0 : index
    %c0_0 = arith.constant 0 : index
    %0 = vector.load %arg0[%c0, %c0_0] : memref<64x32xf32, #tpu.memory_space<vmem>>, vector<64x32xf32>
    %c0_1 = arith.constant 0 : index
    %c0_2 = arith.constant 0 : index
    %1 = vector.load %arg3[%c0_1, %c0_2] : memref<2x32xf32, #tpu.memory_space<vmem>>, vector<1x32xf32>
    %c1 = arith.constant 1 : index
    %c0_3 = arith.constant 0 : index
    %2 = vector.load %arg3[%c1, %c0_3] : memref<2x32xf32, #tpu.memory_space<vmem>>, vector<1x32xf32>
    %cst = arith.constant dense<0.000000e+00> : vector<64xf32>
    %3 = vector.multi_reduction <add>, %0, %cst [1] : vector<64x32xf32> to vector<64xf32>
    %4 = vector.shape_cast %3 : vector<64xf32> to vector<64x1xf32>
    %cst_4 = arith.constant 3.200000e+01 : f32
    %5 = vector.broadcast %cst_4 : f32 to vector<64x1xf32>
    %6 = arith.divf %4, %5 : vector<64x1xf32>
    %7 = vector.broadcast %6 : vector<64x1xf32> to vector<64x32xf32>
    %8 = arith.subf %0, %7 : vector<64x32xf32>
    %9 = arith.mulf %8, %8 : vector<64x32xf32>
    %cst_5 = arith.constant dense<0.000000e+00> : vector<64xf32>
    %10 = vector.multi_reduction <add>, %9, %cst_5 [1] : vector<64x32xf32> to vector<64xf32>
    %11 = vector.shape_cast %10 : vector<64xf32> to vector<64x1xf32>
    %cst_6 = arith.constant 3.200000e+01 : f32
    %12 = vector.broadcast %cst_6 : f32 to vector<64x1xf32>
    %13 = arith.divf %11, %12 : vector<64x1xf32>
    %14 = vector.broadcast %6 : vector<64x1xf32> to vector<64x32xf32>
    %15 = arith.subf %0, %14 : vector<64x32xf32>
    %cst_7 = arith.constant 9.99999996E-13 : f32
    %16 = vector.broadcast %cst_7 : f32 to vector<64x1xf32>
    %17 = arith.addf %13, %16 : vector<64x1xf32>
    %18 = math.rsqrt %17 : vector<64x1xf32>
    %19 = vector.broadcast %18 : vector<64x1xf32> to vector<64x32xf32>
    %20 = arith.mulf %15, %19 : vector<64x32xf32>
    %21 = vector.broadcast %1 : vector<1x32xf32> to vector<64x32xf32>
    %22 = arith.mulf %20, %21 : vector<64x32xf32>
    %23 = vector.broadcast %2 : vector<1x32xf32> to vector<64x32xf32>
    %24 = arith.addf %22, %23 : vector<64x32xf32>
    %c0_8 = arith.constant 0 : index
    %c0_9 = arith.constant 0 : index
    %c0_10 = arith.constant 0 : index
    %25 = vector.load %arg4[%c0_8, %c0_9, %c0_10] : memref<2x32x96xf32, #tpu.memory_space<vmem>>, vector<1x32x96xf32>
    %26 = vector.shape_cast %25 : vector<1x32x96xf32> to vector<32x96xf32>
    %27 = arith.truncf %24 : vector<64x32xf32> to vector<64x32xbf16>
    %28 = arith.truncf %26 : vector<32x96xf32> to vector<32x96xbf16>
    %cst_11 = arith.constant dense<0.000000e+00> : vector<64x96xf32>
    %29 = tpu.matmul %27, %28, %cst_11 {dimension_numbers = #tpu.dot_dimension_numbers<[1], [0], [0], [1], [0, 0, 1, 1], [], []>} : vector<64x32xbf16>, vector<32x96xbf16>, vector<64x96xf32> -> vector<64x96xf32>
    %c0_12 = arith.constant 0 : index
    %c0_13 = arith.constant 0 : index
    %c0_14 = arith.constant 0 : index
    %30 = vector.load %arg5[%c0_12, %c0_13, %c0_14] : memref<2x1x96xf32, #tpu.memory_space<vmem>>, vector<1x1x96xf32>
    %31 = vector.shape_cast %30 : vector<1x1x96xf32> to vector<1x96xf32>
    %32 = vector.broadcast %31 : vector<1x96xf32> to vector<64x96xf32>
    %33 = arith.addf %29, %32 : vector<64x96xf32>
    %34 = vector.extract_strided_slice %33 {offsets = [0, 0], sizes = [64, 32], strides = [1, 1]} : vector<64x96xf32> to vector<64x32xf32>
    %35 = vector.extract_strided_slice %33 {offsets = [0, 32], sizes = [64, 32], strides = [1, 1]} : vector<64x96xf32> to vector<64x32xf32>
    %36 = vector.extract_strided_slice %33 {offsets = [0, 64], sizes = [64, 32], strides = [1, 1]} : vector<64x96xf32> to vector<64x32xf32>
    %c0_15 = arith.constant 0 : index
    %c0_16 = arith.constant 0 : index
    %37 = vector.load %arg1[%c0_15, %c0_16] : memref<8x8xf32, #tpu.memory_space<vmem>>, vector<1x8xf32>
    %38 = vector.extract_strided_slice %34 {offsets = [0, 0], sizes = [8, 16], strides = [1, 1]} : vector<64x32xf32> to vector<8x16xf32>
    %39 = vector.extract_strided_slice %35 {offsets = [0, 0], sizes = [8, 16], strides = [1, 1]} : vector<64x32xf32> to vector<8x16xf32>
    %40 = vector.extract_strided_slice %36 {offsets = [0, 0], sizes = [8, 16], strides = [1, 1]} : vector<64x32xf32> to vector<8x16xf32>
    %41 = arith.truncf %38 : vector<8x16xf32> to vector<8x16xbf16>
    %42 = arith.truncf %39 : vector<8x16xf32> to vector<8x16xbf16>
    %cst_17 = arith.constant dense<0.000000e+00> : vector<8x8xf32>
    %43 = tpu.matmul %41, %42, %cst_17 {dimension_numbers = #tpu.dot_dimension_numbers<[1], [1], [0], [0], [0, 0, 1, 0], [], []>} : vector<8x16xbf16>, vector<8x16xbf16>, vector<8x8xf32> -> vector<8x8xf32>
    %cst_18 = arith.constant 2.500000e-01 : f32
    %44 = vector.broadcast %cst_18 : f32 to vector<8x8xf32>
    %45 = arith.mulf %43, %44 : vector<8x8xf32>
    %46 = vector.broadcast %37 : vector<1x8xf32> to vector<8x8xf32>
    %47 = arith.addf %45, %46 : vector<8x8xf32>
    %cst_19 = arith.constant dense<0xFF800000> : vector<8xf32>
    %48 = vector.multi_reduction <maximumf>, %47, %cst_19 [1] : vector<8x8xf32> to vector<8xf32>
    %49 = vector.shape_cast %48 : vector<8xf32> to vector<8x1xf32>
    %50 = vector.broadcast %49 : vector<8x1xf32> to vector<8x8xf32>
    %51 = arith.subf %47, %50 : vector<8x8xf32>
    %52 = math.exp %51 : vector<8x8xf32>
    %cst_20 = arith.constant dense<0.000000e+00> : vector<8xf32>
    %53 = vector.multi_reduction <add>, %52, %cst_20 [1] : vector<8x8xf32> to vector<8xf32>
    %54 = vector.shape_cast %53 : vector<8xf32> to vector<8x1xf32>
    %55 = tpu.reciprocal %54 {approx = true} : vector<8x1xf32> -> vector<8x1xf32>
    %56 = vector.broadcast %55 : vector<8x1xf32> to vector<8x8xf32>
    %57 = arith.mulf %52, %56 : vector<8x8xf32>
    %58 = arith.truncf %57 : vector<8x8xf32> to vector<8x8xbf16>
    %59 = arith.truncf %40 : vector<8x16xf32> to vector<8x16xbf16>
    %cst_21 = arith.constant dense<0.000000e+00> : vector<8x16xf32>
    %60 = tpu.matmul %58, %59, %cst_21 {dimension_numbers = #tpu.dot_dimension_numbers<[1], [0], [0], [1], [0, 0, 1, 1], [], []>} : vector<8x8xbf16>, vector<8x16xbf16>, vector<8x16xf32> -> vector<8x16xf32>
    %c0_22 = arith.constant 0 : index
    %c0_23 = arith.constant 0 : index
    %61 = vector.load %arg19[%c0_22, %c0_23] : memref<64x32xf32, #tpu.memory_space<vmem>>, vector<8x16xf32>
    tpu.vector_store %arg19[%c0_22, %c0_23], %60 {strides = array<i32>} : memref<64x32xf32, #tpu.memory_space<vmem>>, vector<8x16xf32>,
    %62 = vector.extract_strided_slice %34 {offsets = [0, 16], sizes = [8, 16], strides = [1, 1]} : vector<64x32xf32> to vector<8x16xf32>
    %63 = vector.extract_strided_slice %35 {offsets = [0, 16], sizes = [8, 16], strides = [1, 1]} : vector<64x32xf32> to vector<8x16xf32>
    %64 = vector.extract_strided_slice %36 {offsets = [0, 16], sizes = [8, 16], strides = [1, 1]} : vector<64x32xf32> to vector<8x16xf32>
    %65 = arith.truncf %62 : vector<8x16xf32> to vector<8x16xbf16>
    %66 = arith.truncf %63 : vector<8x16xf32> to vector<8x16xbf16>
    %cst_24 = arith.constant dense<0.000000e+00> : vector<8x8xf32>
    %67 = tpu.matmul %65, %66, %cst_24 {dimension_numbers = #tpu.dot_dimension_numbers<[1], [1], [0], [0], [0, 0, 1, 0], [], []>} : vector<8x16xbf16>, vector<8x16xbf16>, vector<8x8xf32> -> vector<8x8xf32>
    %cst_25 = arith.constant 2.500000e-01 : f32
    %68 = vector.broadcast %cst_25 : f32 to vector<8x8xf32>
    %69 = arith.mulf %67, %68 : vector<8x8xf32>
    %70 = vector.broadcast %37 : vector<1x8xf32> to vector<8x8xf32>
    %71 = arith.addf %69, %70 : vector<8x8xf32>
    %cst_26 = arith.constant dense<0xFF800000> : vector<8xf32>
    %72 = vector.multi_reduction <maximumf>, %71, %cst_26 [1] : vector<8x8xf32> to vector<8xf32>
    %73 = vector.shape_cast %72 : vector<8xf32> to vector<8x1xf32>
    %74 = vector.broadcast %73 : vector<8x1xf32> to vector<8x8xf32>
    %75 = arith.subf %71, %74 : vector<8x8xf32>
    %76 = math.exp %75 : vector<8x8xf32>
    %cst_27 = arith.constant dense<0.000000e+00> : vector<8xf32>
    %77 = vector.multi_reduction <add>, %76, %cst_27 [1] : vector<8x8xf32> to vector<8xf32>
    %78 = vector.shape_cast %77 : vector<8xf32> to vector<8x1xf32>
    %79 = tpu.reciprocal %78 {approx = true} : vector<8x1xf32> -> vector<8x1xf32>
    %80 = vector.broadcast %79 : vector<8x1xf32> to vector<8x8xf32>
    %81 = arith.mulf %76, %80 : vector<8x8xf32>
    %82 = arith.truncf %81 : vector<8x8xf32> to vector<8x8xbf16>
    %83 = arith.truncf %64 : vector<8x16xf32> to vector<8x16xbf16>
    %cst_28 = arith.constant dense<0.000000e+00> : vector<8x16xf32>
    %84 = tpu.matmul %82, %83, %cst_28 {dimension_numbers = #tpu.dot_dimension_numbers<[1], [0], [0], [1], [0, 0, 1, 1], [], []>} : vector<8x8xbf16>, vector<8x16xbf16>, vector<8x16xf32> -> vector<8x16xf32>
    %c0_29 = arith.constant 0 : index
    %c16 = arith.constant 16 : index
    %85 = vector.load %arg19[%c0_29, %c16] : memref<64x32xf32, #tpu.memory_space<vmem>>, vector<8x16xf32>
    tpu.vector_store %arg19[%c0_29, %c16], %84 {strides = array<i32>} : memref<64x32xf32, #tpu.memory_space<vmem>>, vector<8x16xf32>,
    %c1_30 = arith.constant 1 : index
    %c0_31 = arith.constant 0 : index
    %86 = vector.load %arg1[%c1_30, %c0_31] : memref<8x8xf32, #tpu.memory_space<vmem>>, vector<1x8xf32>
    %87 = vector.extract_strided_slice %34 {offsets = [8, 0], sizes = [8, 16], strides = [1, 1]} : vector<64x32xf32> to vector<8x16xf32>
    %88 = vector.extract_strided_slice %35 {offsets = [8, 0], sizes = [8, 16], strides = [1, 1]} : vector<64x32xf32> to vector<8x16xf32>
    %89 = vector.extract_strided_slice %36 {offsets = [8, 0], sizes = [8, 16], strides = [1, 1]} : vector<64x32xf32> to vector<8x16xf32>
    %90 = arith.truncf %87 : vector<8x16xf32> to vector<8x16xbf16>
    %91 = arith.truncf %88 : vector<8x16xf32> to vector<8x16xbf16>
    %cst_32 = arith.constant dense<0.000000e+00> : vector<8x8xf32>
    %92 = tpu.matmul %90, %91, %cst_32 {dimension_numbers = #tpu.dot_dimension_numbers<[1], [1], [0], [0], [0, 0, 1, 0], [], []>} : vector<8x16xbf16>, vector<8x16xbf16>, vector<8x8xf32> -> vector<8x8xf32>
    %cst_33 = arith.constant 2.500000e-01 : f32
    %93 = vector.broadcast %cst_33 : f32 to vector<8x8xf32>
    %94 = arith.mulf %92, %93 : vector<8x8xf32>
    %95 = vector.broadcast %86 : vector<1x8xf32> to vector<8x8xf32>
    %96 = arith.addf %94, %95 : vector<8x8xf32>
    %cst_34 = arith.constant dense<0xFF800000> : vector<8xf32>
    %97 = vector.multi_reduction <maximumf>, %96, %cst_34 [1] : vector<8x8xf32> to vector<8xf32>
    %98 = vector.shape_cast %97 : vector<8xf32> to vector<8x1xf32>
    %99 = vector.broadcast %98 : vector<8x1xf32> to vector<8x8xf32>
    %100 = arith.subf %96, %99 : vector<8x8xf32>
    %101 = math.exp %100 : vector<8x8xf32>
    %cst_35 = arith.constant dense<0.000000e+00> : vector<8xf32>
    %102 = vector.multi_reduction <add>, %101, %cst_35 [1] : vector<8x8xf32> to vector<8xf32>
    %103 = vector.shape_cast %102 : vector<8xf32> to vector<8x1xf32>
    %104 = tpu.reciprocal %103 {approx = true} : vector<8x1xf32> -> vector<8x1xf32>
    %105 = vector.broadcast %104 : vector<8x1xf32> to vector<8x8xf32>
    %106 = arith.mulf %101, %105 : vector<8x8xf32>
    %107 = arith.truncf %106 : vector<8x8xf32> to vector<8x8xbf16>
    %108 = arith.truncf %89 : vector<8x16xf32> to vector<8x16xbf16>
    %cst_36 = arith.constant dense<0.000000e+00> : vector<8x16xf32>
    %109 = tpu.matmul %107, %108, %cst_36 {dimension_numbers = #tpu.dot_dimension_numbers<[1], [0], [0], [1], [0, 0, 1, 1], [], []>} : vector<8x8xbf16>, vector<8x16xbf16>, vector<8x16xf32> -> vector<8x16xf32>
    %c8 = arith.constant 8 : index
    %c0_37 = arith.constant 0 : index
    %110 = vector.load %arg19[%c8, %c0_37] : memref<64x32xf32, #tpu.memory_space<vmem>>, vector<8x16xf32>
    tpu.vector_store %arg19[%c8, %c0_37], %109 {strides = array<i32>} : memref<64x32xf32, #tpu.memory_space<vmem>>, vector<8x16xf32>,
    %111 = vector.extract_strided_slice %34 {offsets = [8, 16], sizes = [8, 16], strides = [1, 1]} : vector<64x32xf32> to vector<8x16xf32>
    %112 = vector.extract_strided_slice %35 {offsets = [8, 16], sizes = [8, 16], strides = [1, 1]} : vector<64x32xf32> to vector<8x16xf32>
    %113 = vector.extract_strided_slice %36 {offsets = [8, 16], sizes = [8, 16], strides = [1, 1]} : vector<64x32xf32> to vector<8x16xf32>
    %114 = arith.truncf %111 : vector<8x16xf32> to vector<8x16xbf16>
    %115 = arith.truncf %112 : vector<8x16xf32> to vector<8x16xbf16>
    %cst_38 = arith.constant dense<0.000000e+00> : vector<8x8xf32>
    %116 = tpu.matmul %114, %115, %cst_38 {dimension_numbers = #tpu.dot_dimension_numbers<[1], [1], [0], [0], [0, 0, 1, 0], [], []>} : vector<8x16xbf16>, vector<8x16xbf16>, vector<8x8xf32> -> vector<8x8xf32>
    %cst_39 = arith.constant 2.500000e-01 : f32
    %117 = vector.broadcast %cst_39 : f32 to vector<8x8xf32>
    %118 = arith.mulf %116, %117 : vector<8x8xf32>
    %119 = vector.broadcast %86 : vector<1x8xf32> to vector<8x8xf32>
    %120 = arith.addf %118, %119 : vector<8x8xf32>
    %cst_40 = arith.constant dense<0xFF800000> : vector<8xf32>
    %121 = vector.multi_reduction <maximumf>, %120, %cst_40 [1] : vector<8x8xf32> to vector<8xf32>
    %122 = vector.shape_cast %121 : vector<8xf32> to vector<8x1xf32>
    %123 = vector.broadcast %122 : vector<8x1xf32> to vector<8x8xf32>
    %124 = arith.subf %120, %123 : vector<8x8xf32>
    %125 = math.exp %124 : vector<8x8xf32>
    %cst_41 = arith.constant dense<0.000000e+00> : vector<8xf32>
    %126 = vector.multi_reduction <add>, %125, %cst_41 [1] : vector<8x8xf32> to vector<8xf32>
    %127 = vector.shape_cast %126 : vector<8xf32> to vector<8x1xf32>
    %128 = tpu.reciprocal %127 {approx = true} : vector<8x1xf32> -> vector<8x1xf32>
    %129 = vector.broadcast %128 : vector<8x1xf32> to vector<8x8xf32>
    %130 = arith.mulf %125, %129 : vector<8x8xf32>
    %131 = arith.truncf %130 : vector<8x8xf32> to vector<8x8xbf16>
    %132 = arith.truncf %113 : vector<8x16xf32> to vector<8x16xbf16>
    %cst_42 = arith.constant dense<0.000000e+00> : vector<8x16xf32>
    %133 = tpu.matmul %131, %132, %cst_42 {dimension_numbers = #tpu.dot_dimension_numbers<[1], [0], [0], [1], [0, 0, 1, 1], [], []>} : vector<8x8xbf16>, vector<8x16xbf16>, vector<8x16xf32> -> vector<8x16xf32>
    %c8_43 = arith.constant 8 : index
    %c16_44 = arith.constant 16 : index
    %134 = vector.load %arg19[%c8_43, %c16_44] : memref<64x32xf32, #tpu.memory_space<vmem>>, vector<8x16xf32>
    tpu.vector_store %arg19[%c8_43, %c16_44], %133 {strides = array<i32>} : memref<64x32xf32, #tpu.memory_space<vmem>>, vector<8x16xf32>,
    %c2 = arith.constant 2 : index
    %c0_45 = arith.constant 0 : index
    %135 = vector.load %arg1[%c2, %c0_45] : memref<8x8xf32, #tpu.memory_space<vmem>>, vector<1x8xf32>
    %136 = vector.extract_strided_slice %34 {offsets = [16, 0], sizes = [8, 16], strides = [1, 1]} : vector<64x32xf32> to vector<8x16xf32>
    %137 = vector.extract_strided_slice %35 {offsets = [16, 0], sizes = [8, 16], strides = [1, 1]} : vector<64x32xf32> to vector<8x16xf32>
    %138 = vector.extract_strided_slice %36 {offsets = [16, 0], sizes = [8, 16], strides = [1, 1]} : vector<64x32xf32> to vector<8x16xf32>
    %139 = arith.truncf %136 : vector<8x16xf32> to vector<8x16xbf16>
    %140 = arith.truncf %137 : vector<8x16xf32> to vector<8x16xbf16>
    %cst_46 = arith.constant dense<0.000000e+00> : vector<8x8xf32>
    %141 = tpu.matmul %139, %140, %cst_46 {dimension_numbers = #tpu.dot_dimension_numbers<[1], [1], [0], [0], [0, 0, 1, 0], [], []>} : vector<8x16xbf16>, vector<8x16xbf16>, vector<8x8xf32> -> vector<8x8xf32>
    %cst_47 = arith.constant 2.500000e-01 : f32
    %142 = vector.broadcast %cst_47 : f32 to vector<8x8xf32>
    %143 = arith.mulf %141, %142 : vector<8x8xf32>
    %144 = vector.broadcast %135 : vector<1x8xf32> to vector<8x8xf32>
    %145 = arith.addf %143, %144 : vector<8x8xf32>
    %cst_48 = arith.constant dense<0xFF800000> : vector<8xf32>
    %146 = vector.multi_reduction <maximumf>, %145, %cst_48 [1] : vector<8x8xf32> to vector<8xf32>
    %147 = vector.shape_cast %146 : vector<8xf32> to vector<8x1xf32>
    %148 = vector.broadcast %147 : vector<8x1xf32> to vector<8x8xf32>
    %149 = arith.subf %145, %148 : vector<8x8xf32>
    %150 = math.exp %149 : vector<8x8xf32>
    %cst_49 = arith.constant dense<0.000000e+00> : vector<8xf32>
    %151 = vector.multi_reduction <add>, %150, %cst_49 [1] : vector<8x8xf32> to vector<8xf32>
    %152 = vector.shape_cast %151 : vector<8xf32> to vector<8x1xf32>
    %153 = tpu.reciprocal %152 {approx = true} : vector<8x1xf32> -> vector<8x1xf32>
    %154 = vector.broadcast %153 : vector<8x1xf32> to vector<8x8xf32>
    %155 = arith.mulf %150, %154 : vector<8x8xf32>
    %156 = arith.truncf %155 : vector<8x8xf32> to vector<8x8xbf16>
    %157 = arith.truncf %138 : vector<8x16xf32> to vector<8x16xbf16>
    %cst_50 = arith.constant dense<0.000000e+00> : vector<8x16xf32>
    %158 = tpu.matmul %156, %157, %cst_50 {dimension_numbers = #tpu.dot_dimension_numbers<[1], [0], [0], [1], [0, 0, 1, 1], [], []>} : vector<8x8xbf16>, vector<8x16xbf16>, vector<8x16xf32> -> vector<8x16xf32>
    %c16_51 = arith.constant 16 : index
    %c0_52 = arith.constant 0 : index
    %159 = vector.load %arg19[%c16_51, %c0_52] : memref<64x32xf32, #tpu.memory_space<vmem>>, vector<8x16xf32>
    tpu.vector_store %arg19[%c16_51, %c0_52], %158 {strides = array<i32>} : memref<64x32xf32, #tpu.memory_space<vmem>>, vector<8x16xf32>,
    %160 = vector.extract_strided_slice %34 {offsets = [16, 16], sizes = [8, 16], strides = [1, 1]} : vector<64x32xf32> to vector<8x16xf32>
    %161 = vector.extract_strided_slice %35 {offsets = [16, 16], sizes = [8, 16], strides = [1, 1]} : vector<64x32xf32> to vector<8x16xf32>
    %162 = vector.extract_strided_slice %36 {offsets = [16, 16], sizes = [8, 16], strides = [1, 1]} : vector<64x32xf32> to vector<8x16xf32>
    %163 = arith.truncf %160 : vector<8x16xf32> to vector<8x16xbf16>
    %164 = arith.truncf %161 : vector<8x16xf32> to vector<8x16xbf16>
    %cst_53 = arith.constant dense<0.000000e+00> : vector<8x8xf32>
    %165 = tpu.matmul %163, %164, %cst_53 {dimension_numbers = #tpu.dot_dimension_numbers<[1], [1], [0], [0], [0, 0, 1, 0], [], []>} : vector<8x16xbf16>, vector<8x16xbf16>, vector<8x8xf32> -> vector<8x8xf32>
    %cst_54 = arith.constant 2.500000e-01 : f32
    %166 = vector.broadcast %cst_54 : f32 to vector<8x8xf32>
    %167 = arith.mulf %165, %166 : vector<8x8xf32>
    %168 = vector.broadcast %135 : vector<1x8xf32> to vector<8x8xf32>
    %169 = arith.addf %167, %168 : vector<8x8xf32>
    %cst_55 = arith.constant dense<0xFF800000> : vector<8xf32>
    %170 = vector.multi_reduction <maximumf>, %169, %cst_55 [1] : vector<8x8xf32> to vector<8xf32>
    %171 = vector.shape_cast %170 : vector<8xf32> to vector<8x1xf32>
    %172 = vector.broadcast %171 : vector<8x1xf32> to vector<8x8xf32>
    %173 = arith.subf %169, %172 : vector<8x8xf32>
    %174 = math.exp %173 : vector<8x8xf32>
    %cst_56 = arith.constant dense<0.000000e+00> : vector<8xf32>
    %175 = vector.multi_reduction <add>, %174, %cst_56 [1] : vector<8x8xf32> to vector<8xf32>
    %176 = vector.shape_cast %175 : vector<8xf32> to vector<8x1xf32>
    %177 = tpu.reciprocal %176 {approx = true} : vector<8x1xf32> -> vector<8x1xf32>
    %178 = vector.broadcast %177 : vector<8x1xf32> to vector<8x8xf32>
    %179 = arith.mulf %174, %178 : vector<8x8xf32>
    %180 = arith.truncf %179 : vector<8x8xf32> to vector<8x8xbf16>
    %181 = arith.truncf %162 : vector<8x16xf32> to vector<8x16xbf16>
    %cst_57 = arith.constant dense<0.000000e+00> : vector<8x16xf32>
    %182 = tpu.matmul %180, %181, %cst_57 {dimension_numbers = #tpu.dot_dimension_numbers<[1], [0], [0], [1], [0, 0, 1, 1], [], []>} : vector<8x8xbf16>, vector<8x16xbf16>, vector<8x16xf32> -> vector<8x16xf32>
    %c16_58 = arith.constant 16 : index
    %c16_59 = arith.constant 16 : index
    %183 = vector.load %arg19[%c16_58, %c16_59] : memref<64x32xf32, #tpu.memory_space<vmem>>, vector<8x16xf32>
    tpu.vector_store %arg19[%c16_58, %c16_59], %182 {strides = array<i32>} : memref<64x32xf32, #tpu.memory_space<vmem>>, vector<8x16xf32>,
    %c3 = arith.constant 3 : index
    %c0_60 = arith.constant 0 : index
    %184 = vector.load %arg1[%c3, %c0_60] : memref<8x8xf32, #tpu.memory_space<vmem>>, vector<1x8xf32>
    %185 = vector.extract_strided_slice %34 {offsets = [24, 0], sizes = [8, 16], strides = [1, 1]} : vector<64x32xf32> to vector<8x16xf32>
    %186 = vector.extract_strided_slice %35 {offsets = [24, 0], sizes = [8, 16], strides = [1, 1]} : vector<64x32xf32> to vector<8x16xf32>
    %187 = vector.extract_strided_slice %36 {offsets = [24, 0], sizes = [8, 16], strides = [1, 1]} : vector<64x32xf32> to vector<8x16xf32>
    %188 = arith.truncf %185 : vector<8x16xf32> to vector<8x16xbf16>
    %189 = arith.truncf %186 : vector<8x16xf32> to vector<8x16xbf16>
    %cst_61 = arith.constant dense<0.000000e+00> : vector<8x8xf32>
    %190 = tpu.matmul %188, %189, %cst_61 {dimension_numbers = #tpu.dot_dimension_numbers<[1], [1], [0], [0], [0, 0, 1, 0], [], []>} : vector<8x16xbf16>, vector<8x16xbf16>, vector<8x8xf32> -> vector<8x8xf32>
    %cst_62 = arith.constant 2.500000e-01 : f32
    %191 = vector.broadcast %cst_62 : f32 to vector<8x8xf32>
    %192 = arith.mulf %190, %191 : vector<8x8xf32>
    %193 = vector.broadcast %184 : vector<1x8xf32> to vector<8x8xf32>
    %194 = arith.addf %192, %193 : vector<8x8xf32>
    %cst_63 = arith.constant dense<0xFF800000> : vector<8xf32>
    %195 = vector.multi_reduction <maximumf>, %194, %cst_63 [1] : vector<8x8xf32> to vector<8xf32>
    %196 = vector.shape_cast %195 : vector<8xf32> to vector<8x1xf32>
    %197 = vector.broadcast %196 : vector<8x1xf32> to vector<8x8xf32>
    %198 = arith.subf %194, %197 : vector<8x8xf32>
    %199 = math.exp %198 : vector<8x8xf32>
    %cst_64 = arith.constant dense<0.000000e+00> : vector<8xf32>
    %200 = vector.multi_reduction <add>, %199, %cst_64 [1] : vector<8x8xf32> to vector<8xf32>
    %201 = vector.shape_cast %200 : vector<8xf32> to vector<8x1xf32>
    %202 = tpu.reciprocal %201 {approx = true} : vector<8x1xf32> -> vector<8x1xf32>
    %203 = vector.broadcast %202 : vector<8x1xf32> to vector<8x8xf32>
    %204 = arith.mulf %199, %203 : vector<8x8xf32>
    %205 = arith.truncf %204 : vector<8x8xf32> to vector<8x8xbf16>
    %206 = arith.truncf %187 : vector<8x16xf32> to vector<8x16xbf16>
    %cst_65 = arith.constant dense<0.000000e+00> : vector<8x16xf32>
    %207 = tpu.matmul %205, %206, %cst_65 {dimension_numbers = #tpu.dot_dimension_numbers<[1], [0], [0], [1], [0, 0, 1, 1], [], []>} : vector<8x8xbf16>, vector<8x16xbf16>, vector<8x16xf32> -> vector<8x16xf32>
    %c24 = arith.constant 24 : index
    %c0_66 = arith.constant 0 : index
    %208 = vector.load %arg19[%c24, %c0_66] : memref<64x32xf32, #tpu.memory_space<vmem>>, vector<8x16xf32>
    tpu.vector_store %arg19[%c24, %c0_66], %207 {strides = array<i32>} : memref<64x32xf32, #tpu.memory_space<vmem>>, vector<8x16xf32>,
    %209 = vector.extract_strided_slice %34 {offsets = [24, 16], sizes = [8, 16], strides = [1, 1]} : vector<64x32xf32> to vector<8x16xf32>
    %210 = vector.extract_strided_slice %35 {offsets = [24, 16], sizes = [8, 16], strides = [1, 1]} : vector<64x32xf32> to vector<8x16xf32>
    %211 = vector.extract_strided_slice %36 {offsets = [24, 16], sizes = [8, 16], strides = [1, 1]} : vector<64x32xf32> to vector<8x16xf32>
    %212 = arith.truncf %209 : vector<8x16xf32> to vector<8x16xbf16>
    %213 = arith.truncf %210 : vector<8x16xf32> to vector<8x16xbf16>
    %cst_67 = arith.constant dense<0.000000e+00> : vector<8x8xf32>
    %214 = tpu.matmul %212, %213, %cst_67 {dimension_numbers = #tpu.dot_dimension_numbers<[1], [1], [0], [0], [0, 0, 1, 0], [], []>} : vector<8x16xbf16>, vector<8x16xbf16>, vector<8x8xf32> -> vector<8x8xf32>
    %cst_68 = arith.constant 2.500000e-01 : f32
    %215 = vector.broadcast %cst_68 : f32 to vector<8x8xf32>
    %216 = arith.mulf %214, %215 : vector<8x8xf32>
    %217 = vector.broadcast %184 : vector<1x8xf32> to vector<8x8xf32>
    %218 = arith.addf %216, %217 : vector<8x8xf32>
    %cst_69 = arith.constant dense<0xFF800000> : vector<8xf32>
    %219 = vector.multi_reduction <maximumf>, %218, %cst_69 [1] : vector<8x8xf32> to vector<8xf32>
    %220 = vector.shape_cast %219 : vector<8xf32> to vector<8x1xf32>
    %221 = vector.broadcast %220 : vector<8x1xf32> to vector<8x8xf32>
    %222 = arith.subf %218, %221 : vector<8x8xf32>
    %223 = math.exp %222 : vector<8x8xf32>
    %cst_70 = arith.constant dense<0.000000e+00> : vector<8xf32>
    %224 = vector.multi_reduction <add>, %223, %cst_70 [1] : vector<8x8xf32> to vector<8xf32>
    %225 = vector.shape_cast %224 : vector<8xf32> to vector<8x1xf32>
    %226 = tpu.reciprocal %225 {approx = true} : vector<8x1xf32> -> vector<8x1xf32>
    %227 = vector.broadcast %226 : vector<8x1xf32> to vector<8x8xf32>
    %228 = arith.mulf %223, %227 : vector<8x8xf32>
    %229 = arith.truncf %228 : vector<8x8xf32> to vector<8x8xbf16>
    %230 = arith.truncf %211 : vector<8x16xf32> to vector<8x16xbf16>
    %cst_71 = arith.constant dense<0.000000e+00> : vector<8x16xf32>
    %231 = tpu.matmul %229, %230, %cst_71 {dimension_numbers = #tpu.dot_dimension_numbers<[1], [0], [0], [1], [0, 0, 1, 1], [], []>} : vector<8x8xbf16>, vector<8x16xbf16>, vector<8x16xf32> -> vector<8x16xf32>
    %c24_72 = arith.constant 24 : index
    %c16_73 = arith.constant 16 : index
    %232 = vector.load %arg19[%c24_72, %c16_73] : memref<64x32xf32, #tpu.memory_space<vmem>>, vector<8x16xf32>
    tpu.vector_store %arg19[%c24_72, %c16_73], %231 {strides = array<i32>} : memref<64x32xf32, #tpu.memory_space<vmem>>, vector<8x16xf32>,
    %c4 = arith.constant 4 : index
    %c0_74 = arith.constant 0 : index
    %233 = vector.load %arg1[%c4, %c0_74] : memref<8x8xf32, #tpu.memory_space<vmem>>, vector<1x8xf32>
    %234 = vector.extract_strided_slice %34 {offsets = [32, 0], sizes = [8, 16], strides = [1, 1]} : vector<64x32xf32> to vector<8x16xf32>
    %235 = vector.extract_strided_slice %35 {offsets = [32, 0], sizes = [8, 16], strides = [1, 1]} : vector<64x32xf32> to vector<8x16xf32>
    %236 = vector.extract_strided_slice %36 {offsets = [32, 0], sizes = [8, 16], strides = [1, 1]} : vector<64x32xf32> to vector<8x16xf32>
    %237 = arith.truncf %234 : vector<8x16xf32> to vector<8x16xbf16>
    %238 = arith.truncf %235 : vector<8x16xf32> to vector<8x16xbf16>
    %cst_75 = arith.constant dense<0.000000e+00> : vector<8x8xf32>
    %239 = tpu.matmul %237, %238, %cst_75 {dimension_numbers = #tpu.dot_dimension_numbers<[1], [1], [0], [0], [0, 0, 1, 0], [], []>} : vector<8x16xbf16>, vector<8x16xbf16>, vector<8x8xf32> -> vector<8x8xf32>
    %cst_76 = arith.constant 2.500000e-01 : f32
    %240 = vector.broadcast %cst_76 : f32 to vector<8x8xf32>
    %241 = arith.mulf %239, %240 : vector<8x8xf32>
    %242 = vector.broadcast %233 : vector<1x8xf32> to vector<8x8xf32>
    %243 = arith.addf %241, %242 : vector<8x8xf32>
    %cst_77 = arith.constant dense<0xFF800000> : vector<8xf32>
    %244 = vector.multi_reduction <maximumf>, %243, %cst_77 [1] : vector<8x8xf32> to vector<8xf32>
    %245 = vector.shape_cast %244 : vector<8xf32> to vector<8x1xf32>
    %246 = vector.broadcast %245 : vector<8x1xf32> to vector<8x8xf32>
    %247 = arith.subf %243, %246 : vector<8x8xf32>
    %248 = math.exp %247 : vector<8x8xf32>
    %cst_78 = arith.constant dense<0.000000e+00> : vector<8xf32>
    %249 = vector.multi_reduction <add>, %248, %cst_78 [1] : vector<8x8xf32> to vector<8xf32>
    %250 = vector.shape_cast %249 : vector<8xf32> to vector<8x1xf32>
    %251 = tpu.reciprocal %250 {approx = true} : vector<8x1xf32> -> vector<8x1xf32>
    %252 = vector.broadcast %251 : vector<8x1xf32> to vector<8x8xf32>
    %253 = arith.mulf %248, %252 : vector<8x8xf32>
    %254 = arith.truncf %253 : vector<8x8xf32> to vector<8x8xbf16>
    %255 = arith.truncf %236 : vector<8x16xf32> to vector<8x16xbf16>
    %cst_79 = arith.constant dense<0.000000e+00> : vector<8x16xf32>
    %256 = tpu.matmul %254, %255, %cst_79 {dimension_numbers = #tpu.dot_dimension_numbers<[1], [0], [0], [1], [0, 0, 1, 1], [], []>} : vector<8x8xbf16>, vector<8x16xbf16>, vector<8x16xf32> -> vector<8x16xf32>
    %c32 = arith.constant 32 : index
    %c0_80 = arith.constant 0 : index
    %257 = vector.load %arg19[%c32, %c0_80] : memref<64x32xf32, #tpu.memory_space<vmem>>, vector<8x16xf32>
    tpu.vector_store %arg19[%c32, %c0_80], %256 {strides = array<i32>} : memref<64x32xf32, #tpu.memory_space<vmem>>, vector<8x16xf32>,
    %258 = vector.extract_strided_slice %34 {offsets = [32, 16], sizes = [8, 16], strides = [1, 1]} : vector<64x32xf32> to vector<8x16xf32>
    %259 = vector.extract_strided_slice %35 {offsets = [32, 16], sizes = [8, 16], strides = [1, 1]} : vector<64x32xf32> to vector<8x16xf32>
    %260 = vector.extract_strided_slice %36 {offsets = [32, 16], sizes = [8, 16], strides = [1, 1]} : vector<64x32xf32> to vector<8x16xf32>
    %261 = arith.truncf %258 : vector<8x16xf32> to vector<8x16xbf16>
    %262 = arith.truncf %259 : vector<8x16xf32> to vector<8x16xbf16>
    %cst_81 = arith.constant dense<0.000000e+00> : vector<8x8xf32>
    %263 = tpu.matmul %261, %262, %cst_81 {dimension_numbers = #tpu.dot_dimension_numbers<[1], [1], [0], [0], [0, 0, 1, 0], [], []>} : vector<8x16xbf16>, vector<8x16xbf16>, vector<8x8xf32> -> vector<8x8xf32>
    %cst_82 = arith.constant 2.500000e-01 : f32
    %264 = vector.broadcast %cst_82 : f32 to vector<8x8xf32>
    %265 = arith.mulf %263, %264 : vector<8x8xf32>
    %266 = vector.broadcast %233 : vector<1x8xf32> to vector<8x8xf32>
    %267 = arith.addf %265, %266 : vector<8x8xf32>
    %cst_83 = arith.constant dense<0xFF800000> : vector<8xf32>
    %268 = vector.multi_reduction <maximumf>, %267, %cst_83 [1] : vector<8x8xf32> to vector<8xf32>
    %269 = vector.shape_cast %268 : vector<8xf32> to vector<8x1xf32>
    %270 = vector.broadcast %269 : vector<8x1xf32> to vector<8x8xf32>
    %271 = arith.subf %267, %270 : vector<8x8xf32>
    %272 = math.exp %271 : vector<8x8xf32>
    %cst_84 = arith.constant dense<0.000000e+00> : vector<8xf32>
    %273 = vector.multi_reduction <add>, %272, %cst_84 [1] : vector<8x8xf32> to vector<8xf32>
    %274 = vector.shape_cast %273 : vector<8xf32> to vector<8x1xf32>
    %275 = tpu.reciprocal %274 {approx = true} : vector<8x1xf32> -> vector<8x1xf32>
    %276 = vector.broadcast %275 : vector<8x1xf32> to vector<8x8xf32>
    %277 = arith.mulf %272, %276 : vector<8x8xf32>
    %278 = arith.truncf %277 : vector<8x8xf32> to vector<8x8xbf16>
    %279 = arith.truncf %260 : vector<8x16xf32> to vector<8x16xbf16>
    %cst_85 = arith.constant dense<0.000000e+00> : vector<8x16xf32>
    %280 = tpu.matmul %278, %279, %cst_85 {dimension_numbers = #tpu.dot_dimension_numbers<[1], [0], [0], [1], [0, 0, 1, 1], [], []>} : vector<8x8xbf16>, vector<8x16xbf16>, vector<8x16xf32> -> vector<8x16xf32>
    %c32_86 = arith.constant 32 : index
    %c16_87 = arith.constant 16 : index
    %281 = vector.load %arg19[%c32_86, %c16_87] : memref<64x32xf32, #tpu.memory_space<vmem>>, vector<8x16xf32>
    tpu.vector_store %arg19[%c32_86, %c16_87], %280 {strides = array<i32>} : memref<64x32xf32, #tpu.memory_space<vmem>>, vector<8x16xf32>,
    %c5 = arith.constant 5 : index
    %c0_88 = arith.constant 0 : index
    %282 = vector.load %arg1[%c5, %c0_88] : memref<8x8xf32, #tpu.memory_space<vmem>>, vector<1x8xf32>
    %283 = vector.extract_strided_slice %34 {offsets = [40, 0], sizes = [8, 16], strides = [1, 1]} : vector<64x32xf32> to vector<8x16xf32>
    %284 = vector.extract_strided_slice %35 {offsets = [40, 0], sizes = [8, 16], strides = [1, 1]} : vector<64x32xf32> to vector<8x16xf32>
    %285 = vector.extract_strided_slice %36 {offsets = [40, 0], sizes = [8, 16], strides = [1, 1]} : vector<64x32xf32> to vector<8x16xf32>
    %286 = arith.truncf %283 : vector<8x16xf32> to vector<8x16xbf16>
    %287 = arith.truncf %284 : vector<8x16xf32> to vector<8x16xbf16>
    %cst_89 = arith.constant dense<0.000000e+00> : vector<8x8xf32>
    %288 = tpu.matmul %286, %287, %cst_89 {dimension_numbers = #tpu.dot_dimension_numbers<[1], [1], [0], [0], [0, 0, 1, 0], [], []>} : vector<8x16xbf16>, vector<8x16xbf16>, vector<8x8xf32> -> vector<8x8xf32>
    %cst_90 = arith.constant 2.500000e-01 : f32
    %289 = vector.broadcast %cst_90 : f32 to vector<8x8xf32>
    %290 = arith.mulf %288, %289 : vector<8x8xf32>
    %291 = vector.broadcast %282 : vector<1x8xf32> to vector<8x8xf32>
    %292 = arith.addf %290, %291 : vector<8x8xf32>
    %cst_91 = arith.constant dense<0xFF800000> : vector<8xf32>
    %293 = vector.multi_reduction <maximumf>, %292, %cst_91 [1] : vector<8x8xf32> to vector<8xf32>
    %294 = vector.shape_cast %293 : vector<8xf32> to vector<8x1xf32>
    %295 = vector.broadcast %294 : vector<8x1xf32> to vector<8x8xf32>
    %296 = arith.subf %292, %295 : vector<8x8xf32>
    %297 = math.exp %296 : vector<8x8xf32>
    %cst_92 = arith.constant dense<0.000000e+00> : vector<8xf32>
    %298 = vector.multi_reduction <add>, %297, %cst_92 [1] : vector<8x8xf32> to vector<8xf32>
    %299 = vector.shape_cast %298 : vector<8xf32> to vector<8x1xf32>
    %300 = tpu.reciprocal %299 {approx = true} : vector<8x1xf32> -> vector<8x1xf32>
    %301 = vector.broadcast %300 : vector<8x1xf32> to vector<8x8xf32>
    %302 = arith.mulf %297, %301 : vector<8x8xf32>
    %303 = arith.truncf %302 : vector<8x8xf32> to vector<8x8xbf16>
    %304 = arith.truncf %285 : vector<8x16xf32> to vector<8x16xbf16>
    %cst_93 = arith.constant dense<0.000000e+00> : vector<8x16xf32>
    %305 = tpu.matmul %303, %304, %cst_93 {dimension_numbers = #tpu.dot_dimension_numbers<[1], [0], [0], [1], [0, 0, 1, 1], [], []>} : vector<8x8xbf16>, vector<8x16xbf16>, vector<8x16xf32> -> vector<8x16xf32>
    %c40 = arith.constant 40 : index
    %c0_94 = arith.constant 0 : index
    %306 = vector.load %arg19[%c40, %c0_94] : memref<64x32xf32, #tpu.memory_space<vmem>>, vector<8x16xf32>
    tpu.vector_store %arg19[%c40, %c0_94], %305 {strides = array<i32>} : memref<64x32xf32, #tpu.memory_space<vmem>>, vector<8x16xf32>,
    %307 = vector.extract_strided_slice %34 {offsets = [40, 16], sizes = [8, 16], strides = [1, 1]} : vector<64x32xf32> to vector<8x16xf32>
    %308 = vector.extract_strided_slice %35 {offsets = [40, 16], sizes = [8, 16], strides = [1, 1]} : vector<64x32xf32> to vector<8x16xf32>
    %309 = vector.extract_strided_slice %36 {offsets = [40, 16], sizes = [8, 16], strides = [1, 1]} : vector<64x32xf32> to vector<8x16xf32>
    %310 = arith.truncf %307 : vector<8x16xf32> to vector<8x16xbf16>
    %311 = arith.truncf %308 : vector<8x16xf32> to vector<8x16xbf16>
    %cst_95 = arith.constant dense<0.000000e+00> : vector<8x8xf32>
    %312 = tpu.matmul %310, %311, %cst_95 {dimension_numbers = #tpu.dot_dimension_numbers<[1], [1], [0], [0], [0, 0, 1, 0], [], []>} : vector<8x16xbf16>, vector<8x16xbf16>, vector<8x8xf32> -> vector<8x8xf32>
    %cst_96 = arith.constant 2.500000e-01 : f32
    %313 = vector.broadcast %cst_96 : f32 to vector<8x8xf32>
    %314 = arith.mulf %312, %313 : vector<8x8xf32>
    %315 = vector.broadcast %282 : vector<1x8xf32> to vector<8x8xf32>
    %316 = arith.addf %314, %315 : vector<8x8xf32>
    %cst_97 = arith.constant dense<0xFF800000> : vector<8xf32>
    %317 = vector.multi_reduction <maximumf>, %316, %cst_97 [1] : vector<8x8xf32> to vector<8xf32>
    %318 = vector.shape_cast %317 : vector<8xf32> to vector<8x1xf32>
    %319 = vector.broadcast %318 : vector<8x1xf32> to vector<8x8xf32>
    %320 = arith.subf %316, %319 : vector<8x8xf32>
    %321 = math.exp %320 : vector<8x8xf32>
    %cst_98 = arith.constant dense<0.000000e+00> : vector<8xf32>
    %322 = vector.multi_reduction <add>, %321, %cst_98 [1] : vector<8x8xf32> to vector<8xf32>
    %323 = vector.shape_cast %322 : vector<8xf32> to vector<8x1xf32>
    %324 = tpu.reciprocal %323 {approx = true} : vector<8x1xf32> -> vector<8x1xf32>
    %325 = vector.broadcast %324 : vector<8x1xf32> to vector<8x8xf32>
    %326 = arith.mulf %321, %325 : vector<8x8xf32>
    %327 = arith.truncf %326 : vector<8x8xf32> to vector<8x8xbf16>
    %328 = arith.truncf %309 : vector<8x16xf32> to vector<8x16xbf16>
    %cst_99 = arith.constant dense<0.000000e+00> : vector<8x16xf32>
    %329 = tpu.matmul %327, %328, %cst_99 {dimension_numbers = #tpu.dot_dimension_numbers<[1], [0], [0], [1], [0, 0, 1, 1], [], []>} : vector<8x8xbf16>, vector<8x16xbf16>, vector<8x16xf32> -> vector<8x16xf32>
    %c40_100 = arith.constant 40 : index
    %c16_101 = arith.constant 16 : index
    %330 = vector.load %arg19[%c40_100, %c16_101] : memref<64x32xf32, #tpu.memory_space<vmem>>, vector<8x16xf32>
    tpu.vector_store %arg19[%c40_100, %c16_101], %329 {strides = array<i32>} : memref<64x32xf32, #tpu.memory_space<vmem>>, vector<8x16xf32>,
    %c6 = arith.constant 6 : index
    %c0_102 = arith.constant 0 : index
    %331 = vector.load %arg1[%c6, %c0_102] : memref<8x8xf32, #tpu.memory_space<vmem>>, vector<1x8xf32>
    %332 = vector.extract_strided_slice %34 {offsets = [48, 0], sizes = [8, 16], strides = [1, 1]} : vector<64x32xf32> to vector<8x16xf32>
    %333 = vector.extract_strided_slice %35 {offsets = [48, 0], sizes = [8, 16], strides = [1, 1]} : vector<64x32xf32> to vector<8x16xf32>
    %334 = vector.extract_strided_slice %36 {offsets = [48, 0], sizes = [8, 16], strides = [1, 1]} : vector<64x32xf32> to vector<8x16xf32>
    %335 = arith.truncf %332 : vector<8x16xf32> to vector<8x16xbf16>
    %336 = arith.truncf %333 : vector<8x16xf32> to vector<8x16xbf16>
    %cst_103 = arith.constant dense<0.000000e+00> : vector<8x8xf32>
    %337 = tpu.matmul %335, %336, %cst_103 {dimension_numbers = #tpu.dot_dimension_numbers<[1], [1], [0], [0], [0, 0, 1, 0], [], []>} : vector<8x16xbf16>, vector<8x16xbf16>, vector<8x8xf32> -> vector<8x8xf32>
    %cst_104 = arith.constant 2.500000e-01 : f32
    %338 = vector.broadcast %cst_104 : f32 to vector<8x8xf32>
    %339 = arith.mulf %337, %338 : vector<8x8xf32>
    %340 = vector.broadcast %331 : vector<1x8xf32> to vector<8x8xf32>
    %341 = arith.addf %339, %340 : vector<8x8xf32>
    %cst_105 = arith.constant dense<0xFF800000> : vector<8xf32>
    %342 = vector.multi_reduction <maximumf>, %341, %cst_105 [1] : vector<8x8xf32> to vector<8xf32>
    %343 = vector.shape_cast %342 : vector<8xf32> to vector<8x1xf32>
    %344 = vector.broadcast %343 : vector<8x1xf32> to vector<8x8xf32>
    %345 = arith.subf %341, %344 : vector<8x8xf32>
    %346 = math.exp %345 : vector<8x8xf32>
    %cst_106 = arith.constant dense<0.000000e+00> : vector<8xf32>
    %347 = vector.multi_reduction <add>, %346, %cst_106 [1] : vector<8x8xf32> to vector<8xf32>
    %348 = vector.shape_cast %347 : vector<8xf32> to vector<8x1xf32>
    %349 = tpu.reciprocal %348 {approx = true} : vector<8x1xf32> -> vector<8x1xf32>
    %350 = vector.broadcast %349 : vector<8x1xf32> to vector<8x8xf32>
    %351 = arith.mulf %346, %350 : vector<8x8xf32>
    %352 = arith.truncf %351 : vector<8x8xf32> to vector<8x8xbf16>
    %353 = arith.truncf %334 : vector<8x16xf32> to vector<8x16xbf16>
    %cst_107 = arith.constant dense<0.000000e+00> : vector<8x16xf32>
    %354 = tpu.matmul %352, %353, %cst_107 {dimension_numbers = #tpu.dot_dimension_numbers<[1], [0], [0], [1], [0, 0, 1, 1], [], []>} : vector<8x8xbf16>, vector<8x16xbf16>, vector<8x16xf32> -> vector<8x16xf32>
    %c48 = arith.constant 48 : index
    %c0_108 = arith.constant 0 : index
    %355 = vector.load %arg19[%c48, %c0_108] : memref<64x32xf32, #tpu.memory_space<vmem>>, vector<8x16xf32>
    tpu.vector_store %arg19[%c48, %c0_108], %354 {strides = array<i32>} : memref<64x32xf32, #tpu.memory_space<vmem>>, vector<8x16xf32>,
    %356 = vector.extract_strided_slice %34 {offsets = [48, 16], sizes = [8, 16], strides = [1, 1]} : vector<64x32xf32> to vector<8x16xf32>
    %357 = vector.extract_strided_slice %35 {offsets = [48, 16], sizes = [8, 16], strides = [1, 1]} : vector<64x32xf32> to vector<8x16xf32>
    %358 = vector.extract_strided_slice %36 {offsets = [48, 16], sizes = [8, 16], strides = [1, 1]} : vector<64x32xf32> to vector<8x16xf32>
    %359 = arith.truncf %356 : vector<8x16xf32> to vector<8x16xbf16>
    %360 = arith.truncf %357 : vector<8x16xf32> to vector<8x16xbf16>
    %cst_109 = arith.constant dense<0.000000e+00> : vector<8x8xf32>
    %361 = tpu.matmul %359, %360, %cst_109 {dimension_numbers = #tpu.dot_dimension_numbers<[1], [1], [0], [0], [0, 0, 1, 0], [], []>} : vector<8x16xbf16>, vector<8x16xbf16>, vector<8x8xf32> -> vector<8x8xf32>
    %cst_110 = arith.constant 2.500000e-01 : f32
    %362 = vector.broadcast %cst_110 : f32 to vector<8x8xf32>
    %363 = arith.mulf %361, %362 : vector<8x8xf32>
    %364 = vector.broadcast %331 : vector<1x8xf32> to vector<8x8xf32>
    %365 = arith.addf %363, %364 : vector<8x8xf32>
    %cst_111 = arith.constant dense<0xFF800000> : vector<8xf32>
    %366 = vector.multi_reduction <maximumf>, %365, %cst_111 [1] : vector<8x8xf32> to vector<8xf32>
    %367 = vector.shape_cast %366 : vector<8xf32> to vector<8x1xf32>
    %368 = vector.broadcast %367 : vector<8x1xf32> to vector<8x8xf32>
    %369 = arith.subf %365, %368 : vector<8x8xf32>
    %370 = math.exp %369 : vector<8x8xf32>
    %cst_112 = arith.constant dense<0.000000e+00> : vector<8xf32>
    %371 = vector.multi_reduction <add>, %370, %cst_112 [1] : vector<8x8xf32> to vector<8xf32>
    %372 = vector.shape_cast %371 : vector<8xf32> to vector<8x1xf32>
    %373 = tpu.reciprocal %372 {approx = true} : vector<8x1xf32> -> vector<8x1xf32>
    %374 = vector.broadcast %373 : vector<8x1xf32> to vector<8x8xf32>
    %375 = arith.mulf %370, %374 : vector<8x8xf32>
    %376 = arith.truncf %375 : vector<8x8xf32> to vector<8x8xbf16>
    %377 = arith.truncf %358 : vector<8x16xf32> to vector<8x16xbf16>
    %cst_113 = arith.constant dense<0.000000e+00> : vector<8x16xf32>
    %378 = tpu.matmul %376, %377, %cst_113 {dimension_numbers = #tpu.dot_dimension_numbers<[1], [0], [0], [1], [0, 0, 1, 1], [], []>} : vector<8x8xbf16>, vector<8x16xbf16>, vector<8x16xf32> -> vector<8x16xf32>
    %c48_114 = arith.constant 48 : index
    %c16_115 = arith.constant 16 : index
    %379 = vector.load %arg19[%c48_114, %c16_115] : memref<64x32xf32, #tpu.memory_space<vmem>>, vector<8x16xf32>
    tpu.vector_store %arg19[%c48_114, %c16_115], %378 {strides = array<i32>} : memref<64x32xf32, #tpu.memory_space<vmem>>, vector<8x16xf32>,
    %c7 = arith.constant 7 : index
    %c0_116 = arith.constant 0 : index
    %380 = vector.load %arg1[%c7, %c0_116] : memref<8x8xf32, #tpu.memory_space<vmem>>, vector<1x8xf32>
    %381 = vector.extract_strided_slice %34 {offsets = [56, 0], sizes = [8, 16], strides = [1, 1]} : vector<64x32xf32> to vector<8x16xf32>
    %382 = vector.extract_strided_slice %35 {offsets = [56, 0], sizes = [8, 16], strides = [1, 1]} : vector<64x32xf32> to vector<8x16xf32>
    %383 = vector.extract_strided_slice %36 {offsets = [56, 0], sizes = [8, 16], strides = [1, 1]} : vector<64x32xf32> to vector<8x16xf32>
    %384 = arith.truncf %381 : vector<8x16xf32> to vector<8x16xbf16>
    %385 = arith.truncf %382 : vector<8x16xf32> to vector<8x16xbf16>
    %cst_117 = arith.constant dense<0.000000e+00> : vector<8x8xf32>
    %386 = tpu.matmul %384, %385, %cst_117 {dimension_numbers = #tpu.dot_dimension_numbers<[1], [1], [0], [0], [0, 0, 1, 0], [], []>} : vector<8x16xbf16>, vector<8x16xbf16>, vector<8x8xf32> -> vector<8x8xf32>
    %cst_118 = arith.constant 2.500000e-01 : f32
    %387 = vector.broadcast %cst_118 : f32 to vector<8x8xf32>
    %388 = arith.mulf %386, %387 : vector<8x8xf32>
    %389 = vector.broadcast %380 : vector<1x8xf32> to vector<8x8xf32>
    %390 = arith.addf %388, %389 : vector<8x8xf32>
    %cst_119 = arith.constant dense<0xFF800000> : vector<8xf32>
    %391 = vector.multi_reduction <maximumf>, %390, %cst_119 [1] : vector<8x8xf32> to vector<8xf32>
    %392 = vector.shape_cast %391 : vector<8xf32> to vector<8x1xf32>
    %393 = vector.broadcast %392 : vector<8x1xf32> to vector<8x8xf32>
    %394 = arith.subf %390, %393 : vector<8x8xf32>
    %395 = math.exp %394 : vector<8x8xf32>
    %cst_120 = arith.constant dense<0.000000e+00> : vector<8xf32>
    %396 = vector.multi_reduction <add>, %395, %cst_120 [1] : vector<8x8xf32> to vector<8xf32>
    %397 = vector.shape_cast %396 : vector<8xf32> to vector<8x1xf32>
    %398 = tpu.reciprocal %397 {approx = true} : vector<8x1xf32> -> vector<8x1xf32>
    %399 = vector.broadcast %398 : vector<8x1xf32> to vector<8x8xf32>
    %400 = arith.mulf %395, %399 : vector<8x8xf32>
    %401 = arith.truncf %400 : vector<8x8xf32> to vector<8x8xbf16>
    %402 = arith.truncf %383 : vector<8x16xf32> to vector<8x16xbf16>
    %cst_121 = arith.constant dense<0.000000e+00> : vector<8x16xf32>
    %403 = tpu.matmul %401, %402, %cst_121 {dimension_numbers = #tpu.dot_dimension_numbers<[1], [0], [0], [1], [0, 0, 1, 1], [], []>} : vector<8x8xbf16>, vector<8x16xbf16>, vector<8x16xf32> -> vector<8x16xf32>
    %c56 = arith.constant 56 : index
    %c0_122 = arith.constant 0 : index
    %404 = vector.load %arg19[%c56, %c0_122] : memref<64x32xf32, #tpu.memory_space<vmem>>, vector<8x16xf32>
    tpu.vector_store %arg19[%c56, %c0_122], %403 {strides = array<i32>} : memref<64x32xf32, #tpu.memory_space<vmem>>, vector<8x16xf32>,
    %405 = vector.extract_strided_slice %34 {offsets = [56, 16], sizes = [8, 16], strides = [1, 1]} : vector<64x32xf32> to vector<8x16xf32>
    %406 = vector.extract_strided_slice %35 {offsets = [56, 16], sizes = [8, 16], strides = [1, 1]} : vector<64x32xf32> to vector<8x16xf32>
    %407 = vector.extract_strided_slice %36 {offsets = [56, 16], sizes = [8, 16], strides = [1, 1]} : vector<64x32xf32> to vector<8x16xf32>
    %408 = arith.truncf %405 : vector<8x16xf32> to vector<8x16xbf16>
    %409 = arith.truncf %406 : vector<8x16xf32> to vector<8x16xbf16>
    %cst_123 = arith.constant dense<0.000000e+00> : vector<8x8xf32>
    %410 = tpu.matmul %408, %409, %cst_123 {dimension_numbers = #tpu.dot_dimension_numbers<[1], [1], [0], [0], [0, 0, 1, 0], [], []>} : vector<8x16xbf16>, vector<8x16xbf16>, vector<8x8xf32> -> vector<8x8xf32>
    %cst_124 = arith.constant 2.500000e-01 : f32
    %411 = vector.broadcast %cst_124 : f32 to vector<8x8xf32>
    %412 = arith.mulf %410, %411 : vector<8x8xf32>
    %413 = vector.broadcast %380 : vector<1x8xf32> to vector<8x8xf32>
    %414 = arith.addf %412, %413 : vector<8x8xf32>
    %cst_125 = arith.constant dense<0xFF800000> : vector<8xf32>
    %415 = vector.multi_reduction <maximumf>, %414, %cst_125 [1] : vector<8x8xf32> to vector<8xf32>
    %416 = vector.shape_cast %415 : vector<8xf32> to vector<8x1xf32>
    %417 = vector.broadcast %416 : vector<8x1xf32> to vector<8x8xf32>
    %418 = arith.subf %414, %417 : vector<8x8xf32>
    %419 = math.exp %418 : vector<8x8xf32>
    %cst_126 = arith.constant dense<0.000000e+00> : vector<8xf32>
    %420 = vector.multi_reduction <add>, %419, %cst_126 [1] : vector<8x8xf32> to vector<8xf32>
    %421 = vector.shape_cast %420 : vector<8xf32> to vector<8x1xf32>
    %422 = tpu.reciprocal %421 {approx = true} : vector<8x1xf32> -> vector<8x1xf32>
    %423 = vector.broadcast %422 : vector<8x1xf32> to vector<8x8xf32>
    %424 = arith.mulf %419, %423 : vector<8x8xf32>
    %425 = arith.truncf %424 : vector<8x8xf32> to vector<8x8xbf16>
    %426 = arith.truncf %407 : vector<8x16xf32> to vector<8x16xbf16>
    %cst_127 = arith.constant dense<0.000000e+00> : vector<8x16xf32>
    %427 = tpu.matmul %425, %426, %cst_127 {dimension_numbers = #tpu.dot_dimension_numbers<[1], [0], [0], [1], [0, 0, 1, 1], [], []>} : vector<8x8xbf16>, vector<8x16xbf16>, vector<8x16xf32> -> vector<8x16xf32>
    %c56_128 = arith.constant 56 : index
    %c16_129 = arith.constant 16 : index
    %428 = vector.load %arg19[%c56_128, %c16_129] : memref<64x32xf32, #tpu.memory_space<vmem>>, vector<8x16xf32>
    tpu.vector_store %arg19[%c56_128, %c16_129], %427 {strides = array<i32>} : memref<64x32xf32, #tpu.memory_space<vmem>>, vector<8x16xf32>,
    %c0_130 = arith.constant 0 : index
    %c0_131 = arith.constant 0 : index
    %429 = vector.load %arg19[%c0_130, %c0_131] : memref<64x32xf32, #tpu.memory_space<vmem>>, vector<64x32xf32>
    %c0_132 = arith.constant 0 : index
    %c0_133 = arith.constant 0 : index
    %c0_134 = arith.constant 0 : index
    %430 = vector.load %arg6[%c0_132, %c0_133, %c0_134] : memref<2x32x32xf32, #tpu.memory_space<vmem>>, vector<1x32x32xf32>
    %431 = vector.shape_cast %430 : vector<1x32x32xf32> to vector<32x32xf32>
    %432 = arith.truncf %429 : vector<64x32xf32> to vector<64x32xbf16>
    %433 = arith.truncf %431 : vector<32x32xf32> to vector<32x32xbf16>
    %cst_135 = arith.constant dense<0.000000e+00> : vector<64x32xf32>
    %434 = tpu.matmul %432, %433, %cst_135 {dimension_numbers = #tpu.dot_dimension_numbers<[1], [0], [0], [1], [0, 0, 1, 1], [], []>} : vector<64x32xbf16>, vector<32x32xbf16>, vector<64x32xf32> -> vector<64x32xf32>
    %c0_136 = arith.constant 0 : index
    %c0_137 = arith.constant 0 : index
    %c0_138 = arith.constant 0 : index
    %435 = vector.load %arg7[%c0_136, %c0_137, %c0_138] : memref<2x1x32xf32, #tpu.memory_space<vmem>>, vector<1x1x32xf32>
    %436 = vector.shape_cast %435 : vector<1x1x32xf32> to vector<1x32xf32>
    %437 = vector.broadcast %436 : vector<1x32xf32> to vector<64x32xf32>
    %438 = arith.addf %434, %437 : vector<64x32xf32>
    %c0_139 = arith.constant 0 : index
    %c0_140 = arith.constant 0 : index
    %c0_141 = arith.constant 0 : index
    %439 = vector.load %arg8[%c0_139, %c0_140, %c0_141] : memref<2x2x32xf32, #tpu.memory_space<vmem>>, vector<1x2x32xf32>
    %440 = vector.shape_cast %439 : vector<1x2x32xf32> to vector<2x32xf32>
    %441 = arith.addf %438, %24 : vector<64x32xf32>
    %442 = vector.extract_strided_slice %440 {offsets = [0, 0], sizes = [1, 32], strides = [1, 1]} : vector<2x32xf32> to vector<1x32xf32>
    %443 = vector.extract_strided_slice %440 {offsets = [1, 0], sizes = [1, 32], strides = [1, 1]} : vector<2x32xf32> to vector<1x32xf32>
    %cst_142 = arith.constant dense<0.000000e+00> : vector<64xf32>
    %444 = vector.multi_reduction <add>, %441, %cst_142 [1] : vector<64x32xf32> to vector<64xf32>
    %445 = vector.shape_cast %444 : vector<64xf32> to vector<64x1xf32>
    %cst_143 = arith.constant 3.200000e+01 : f32
    %446 = vector.broadcast %cst_143 : f32 to vector<64x1xf32>
    %447 = arith.divf %445, %446 : vector<64x1xf32>
    %448 = vector.broadcast %447 : vector<64x1xf32> to vector<64x32xf32>
    %449 = arith.subf %441, %448 : vector<64x32xf32>
    %450 = arith.mulf %449, %449 : vector<64x32xf32>
    %cst_144 = arith.constant dense<0.000000e+00> : vector<64xf32>
    %451 = vector.multi_reduction <add>, %450, %cst_144 [1] : vector<64x32xf32> to vector<64xf32>
    %452 = vector.shape_cast %451 : vector<64xf32> to vector<64x1xf32>
    %cst_145 = arith.constant 3.200000e+01 : f32
    %453 = vector.broadcast %cst_145 : f32 to vector<64x1xf32>
    %454 = arith.divf %452, %453 : vector<64x1xf32>
    %455 = vector.broadcast %447 : vector<64x1xf32> to vector<64x32xf32>
    %456 = arith.subf %441, %455 : vector<64x32xf32>
    %cst_146 = arith.constant 9.99999996E-13 : f32
    %457 = vector.broadcast %cst_146 : f32 to vector<64x1xf32>
    %458 = arith.addf %454, %457 : vector<64x1xf32>
    %459 = math.rsqrt %458 : vector<64x1xf32>
    %460 = vector.broadcast %459 : vector<64x1xf32> to vector<64x32xf32>
    %461 = arith.mulf %456, %460 : vector<64x32xf32>
    %462 = vector.broadcast %442 : vector<1x32xf32> to vector<64x32xf32>
    %463 = arith.mulf %461, %462 : vector<64x32xf32>
    %464 = vector.broadcast %443 : vector<1x32xf32> to vector<64x32xf32>
    %465 = arith.addf %463, %464 : vector<64x32xf32>
    %c0_147 = arith.constant 0 : index
    %c0_148 = arith.constant 0 : index
    %c0_149 = arith.constant 0 : index
    %466 = vector.load %arg9[%c0_147, %c0_148, %c0_149] : memref<2x32x64xf32, #tpu.memory_space<vmem>>, vector<1x32x64xf32>
    %467 = vector.shape_cast %466 : vector<1x32x64xf32> to vector<32x64xf32>
    %468 = arith.truncf %465 : vector<64x32xf32> to vector<64x32xbf16>
    %469 = arith.truncf %467 : vector<32x64xf32> to vector<32x64xbf16>
    %cst_150 = arith.constant dense<0.000000e+00> : vector<64x64xf32>
    %470 = tpu.matmul %468, %469, %cst_150 {dimension_numbers = #tpu.dot_dimension_numbers<[1], [0], [0], [1], [0, 0, 1, 1], [], []>} : vector<64x32xbf16>, vector<32x64xbf16>, vector<64x64xf32> -> vector<64x64xf32>
    %c0_151 = arith.constant 0 : index
    %c0_152 = arith.constant 0 : index
    %c0_153 = arith.constant 0 : index
    %471 = vector.load %arg10[%c0_151, %c0_152, %c0_153] : memref<2x1x64xf32, #tpu.memory_space<vmem>>, vector<1x1x64xf32>
    %472 = vector.shape_cast %471 : vector<1x1x64xf32> to vector<1x64xf32>
    %473 = vector.broadcast %472 : vector<1x64xf32> to vector<64x64xf32>
    %474 = arith.addf %470, %473 : vector<64x64xf32>
    %475 = arith.mulf %474, %474 : vector<64x64xf32>
    %476 = arith.mulf %474, %475 : vector<64x64xf32>
    %cst_154 = arith.constant 4.471500e-02 : f32
    %477 = vector.broadcast %cst_154 : f32 to vector<64x64xf32>
    %478 = arith.mulf %477, %476 : vector<64x64xf32>
    %479 = arith.addf %474, %478 : vector<64x64xf32>
    %cst_155 = arith.constant 0.797884583 : f32
    %480 = vector.broadcast %cst_155 : f32 to vector<64x64xf32>
    %481 = arith.mulf %480, %479 : vector<64x64xf32>
    %482 = math.tanh %481 : vector<64x64xf32>
    %cst_156 = arith.constant 1.000000e+00 : f32
    %483 = vector.broadcast %cst_156 : f32 to vector<64x64xf32>
    %484 = arith.addf %483, %482 : vector<64x64xf32>
    %cst_157 = arith.constant 5.000000e-01 : f32
    %485 = vector.broadcast %cst_157 : f32 to vector<64x64xf32>
    %486 = arith.mulf %485, %484 : vector<64x64xf32>
    %487 = arith.mulf %474, %486 : vector<64x64xf32>
    %c0_158 = arith.constant 0 : index
    %c0_159 = arith.constant 0 : index
    %c0_160 = arith.constant 0 : index
    %488 = vector.load %arg11[%c0_158, %c0_159, %c0_160] : memref<2x64x32xf32, #tpu.memory_space<vmem>>, vector<1x64x32xf32>
    %489 = vector.shape_cast %488 : vector<1x64x32xf32> to vector<64x32xf32>
    %490 = arith.truncf %487 : vector<64x64xf32> to vector<64x64xbf16>
    %491 = arith.truncf %489 : vector<64x32xf32> to vector<64x32xbf16>
    %cst_161 = arith.constant dense<0.000000e+00> : vector<64x32xf32>
    %492 = tpu.matmul %490, %491, %cst_161 {dimension_numbers = #tpu.dot_dimension_numbers<[1], [0], [0], [1], [0, 0, 1, 1], [], []>} : vector<64x64xbf16>, vector<64x32xbf16>, vector<64x32xf32> -> vector<64x32xf32>
    %c0_162 = arith.constant 0 : index
    %c0_163 = arith.constant 0 : index
    %c0_164 = arith.constant 0 : index
    %493 = vector.load %arg12[%c0_162, %c0_163, %c0_164] : memref<2x1x32xf32, #tpu.memory_space<vmem>>, vector<1x1x32xf32>
    %494 = vector.shape_cast %493 : vector<1x1x32xf32> to vector<1x32xf32>
    %495 = vector.broadcast %494 : vector<1x32xf32> to vector<64x32xf32>
    %496 = arith.addf %492, %495 : vector<64x32xf32>
    %c0_165 = arith.constant 0 : index
    %c0_166 = arith.constant 0 : index
    %c0_167 = arith.constant 0 : index
    %497 = vector.load %arg13[%c0_165, %c0_166, %c0_167] : memref<2x2x32xf32, #tpu.memory_space<vmem>>, vector<1x2x32xf32>
    %498 = vector.shape_cast %497 : vector<1x2x32xf32> to vector<2x32xf32>
    %499 = arith.addf %496, %465 : vector<64x32xf32>
    %500 = vector.extract_strided_slice %498 {offsets = [0, 0], sizes = [1, 32], strides = [1, 1]} : vector<2x32xf32> to vector<1x32xf32>
    %501 = vector.extract_strided_slice %498 {offsets = [1, 0], sizes = [1, 32], strides = [1, 1]} : vector<2x32xf32> to vector<1x32xf32>
    %cst_168 = arith.constant dense<0.000000e+00> : vector<64xf32>
    %502 = vector.multi_reduction <add>, %499, %cst_168 [1] : vector<64x32xf32> to vector<64xf32>
    %503 = vector.shape_cast %502 : vector<64xf32> to vector<64x1xf32>
    %cst_169 = arith.constant 3.200000e+01 : f32
    %504 = vector.broadcast %cst_169 : f32 to vector<64x1xf32>
    %505 = arith.divf %503, %504 : vector<64x1xf32>
    %506 = vector.broadcast %505 : vector<64x1xf32> to vector<64x32xf32>
    %507 = arith.subf %499, %506 : vector<64x32xf32>
    %508 = arith.mulf %507, %507 : vector<64x32xf32>
    %cst_170 = arith.constant dense<0.000000e+00> : vector<64xf32>
    %509 = vector.multi_reduction <add>, %508, %cst_170 [1] : vector<64x32xf32> to vector<64xf32>
    %510 = vector.shape_cast %509 : vector<64xf32> to vector<64x1xf32>
    %cst_171 = arith.constant 3.200000e+01 : f32
    %511 = vector.broadcast %cst_171 : f32 to vector<64x1xf32>
    %512 = arith.divf %510, %511 : vector<64x1xf32>
    %513 = vector.broadcast %505 : vector<64x1xf32> to vector<64x32xf32>
    %514 = arith.subf %499, %513 : vector<64x32xf32>
    %cst_172 = arith.constant 9.99999996E-13 : f32
    %515 = vector.broadcast %cst_172 : f32 to vector<64x1xf32>
    %516 = arith.addf %512, %515 : vector<64x1xf32>
    %517 = math.rsqrt %516 : vector<64x1xf32>
    %518 = vector.broadcast %517 : vector<64x1xf32> to vector<64x32xf32>
    %519 = arith.mulf %514, %518 : vector<64x32xf32>
    %520 = vector.broadcast %500 : vector<1x32xf32> to vector<64x32xf32>
    %521 = arith.mulf %519, %520 : vector<64x32xf32>
    %522 = vector.broadcast %501 : vector<1x32xf32> to vector<64x32xf32>
    %523 = arith.addf %521, %522 : vector<64x32xf32>
    %c1_173 = arith.constant 1 : index
    %c0_174 = arith.constant 0 : index
    %c0_175 = arith.constant 0 : index
    %524 = vector.load %arg4[%c1_173, %c0_174, %c0_175] : memref<2x32x96xf32, #tpu.memory_space<vmem>>, vector<1x32x96xf32>
    %525 = vector.shape_cast %524 : vector<1x32x96xf32> to vector<32x96xf32>
    %526 = arith.truncf %523 : vector<64x32xf32> to vector<64x32xbf16>
    %527 = arith.truncf %525 : vector<32x96xf32> to vector<32x96xbf16>
    %cst_176 = arith.constant dense<0.000000e+00> : vector<64x96xf32>
    %528 = tpu.matmul %526, %527, %cst_176 {dimension_numbers = #tpu.dot_dimension_numbers<[1], [0], [0], [1], [0, 0, 1, 1], [], []>} : vector<64x32xbf16>, vector<32x96xbf16>, vector<64x96xf32> -> vector<64x96xf32>
    %c1_177 = arith.constant 1 : index
    %c0_178 = arith.constant 0 : index
    %c0_179 = arith.constant 0 : index
    %529 = vector.load %arg5[%c1_177, %c0_178, %c0_179] : memref<2x1x96xf32, #tpu.memory_space<vmem>>, vector<1x1x96xf32>
    %530 = vector.shape_cast %529 : vector<1x1x96xf32> to vector<1x96xf32>
    %531 = vector.broadcast %530 : vector<1x96xf32> to vector<64x96xf32>
    %532 = arith.addf %528, %531 : vector<64x96xf32>
    %533 = vector.extract_strided_slice %532 {offsets = [0, 0], sizes = [64, 32], strides = [1, 1]} : vector<64x96xf32> to vector<64x32xf32>
    %534 = vector.extract_strided_slice %532 {offsets = [0, 32], sizes = [64, 32], strides = [1, 1]} : vector<64x96xf32> to vector<64x32xf32>
    %535 = vector.extract_strided_slice %532 {offsets = [0, 64], sizes = [64, 32], strides = [1, 1]} : vector<64x96xf32> to vector<64x32xf32>
    %c0_180 = arith.constant 0 : index
    %c0_181 = arith.constant 0 : index
    %536 = vector.load %arg1[%c0_180, %c0_181] : memref<8x8xf32, #tpu.memory_space<vmem>>, vector<1x8xf32>
    %537 = vector.extract_strided_slice %533 {offsets = [0, 0], sizes = [8, 16], strides = [1, 1]} : vector<64x32xf32> to vector<8x16xf32>
    %538 = vector.extract_strided_slice %534 {offsets = [0, 0], sizes = [8, 16], strides = [1, 1]} : vector<64x32xf32> to vector<8x16xf32>
    %539 = vector.extract_strided_slice %535 {offsets = [0, 0], sizes = [8, 16], strides = [1, 1]} : vector<64x32xf32> to vector<8x16xf32>
    %540 = arith.truncf %537 : vector<8x16xf32> to vector<8x16xbf16>
    %541 = arith.truncf %538 : vector<8x16xf32> to vector<8x16xbf16>
    %cst_182 = arith.constant dense<0.000000e+00> : vector<8x8xf32>
    %542 = tpu.matmul %540, %541, %cst_182 {dimension_numbers = #tpu.dot_dimension_numbers<[1], [1], [0], [0], [0, 0, 1, 0], [], []>} : vector<8x16xbf16>, vector<8x16xbf16>, vector<8x8xf32> -> vector<8x8xf32>
    %cst_183 = arith.constant 2.500000e-01 : f32
    %543 = vector.broadcast %cst_183 : f32 to vector<8x8xf32>
    %544 = arith.mulf %542, %543 : vector<8x8xf32>
    %545 = vector.broadcast %536 : vector<1x8xf32> to vector<8x8xf32>
    %546 = arith.addf %544, %545 : vector<8x8xf32>
    %cst_184 = arith.constant dense<0xFF800000> : vector<8xf32>
    %547 = vector.multi_reduction <maximumf>, %546, %cst_184 [1] : vector<8x8xf32> to vector<8xf32>
    %548 = vector.shape_cast %547 : vector<8xf32> to vector<8x1xf32>
    %549 = vector.broadcast %548 : vector<8x1xf32> to vector<8x8xf32>
    %550 = arith.subf %546, %549 : vector<8x8xf32>
    %551 = math.exp %550 : vector<8x8xf32>
    %cst_185 = arith.constant dense<0.000000e+00> : vector<8xf32>
    %552 = vector.multi_reduction <add>, %551, %cst_185 [1] : vector<8x8xf32> to vector<8xf32>
    %553 = vector.shape_cast %552 : vector<8xf32> to vector<8x1xf32>
    %554 = tpu.reciprocal %553 {approx = true} : vector<8x1xf32> -> vector<8x1xf32>
    %555 = vector.broadcast %554 : vector<8x1xf32> to vector<8x8xf32>
    %556 = arith.mulf %551, %555 : vector<8x8xf32>
    %557 = arith.truncf %556 : vector<8x8xf32> to vector<8x8xbf16>
    %558 = arith.truncf %539 : vector<8x16xf32> to vector<8x16xbf16>
    %cst_186 = arith.constant dense<0.000000e+00> : vector<8x16xf32>
    %559 = tpu.matmul %557, %558, %cst_186 {dimension_numbers = #tpu.dot_dimension_numbers<[1], [0], [0], [1], [0, 0, 1, 1], [], []>} : vector<8x8xbf16>, vector<8x16xbf16>, vector<8x16xf32> -> vector<8x16xf32>
    %c0_187 = arith.constant 0 : index
    %c0_188 = arith.constant 0 : index
    %560 = vector.load %arg19[%c0_187, %c0_188] : memref<64x32xf32, #tpu.memory_space<vmem>>, vector<8x16xf32>
    tpu.vector_store %arg19[%c0_187, %c0_188], %559 {strides = array<i32>} : memref<64x32xf32, #tpu.memory_space<vmem>>, vector<8x16xf32>,
    %561 = vector.extract_strided_slice %533 {offsets = [0, 16], sizes = [8, 16], strides = [1, 1]} : vector<64x32xf32> to vector<8x16xf32>
    %562 = vector.extract_strided_slice %534 {offsets = [0, 16], sizes = [8, 16], strides = [1, 1]} : vector<64x32xf32> to vector<8x16xf32>
    %563 = vector.extract_strided_slice %535 {offsets = [0, 16], sizes = [8, 16], strides = [1, 1]} : vector<64x32xf32> to vector<8x16xf32>
    %564 = arith.truncf %561 : vector<8x16xf32> to vector<8x16xbf16>
    %565 = arith.truncf %562 : vector<8x16xf32> to vector<8x16xbf16>
    %cst_189 = arith.constant dense<0.000000e+00> : vector<8x8xf32>
    %566 = tpu.matmul %564, %565, %cst_189 {dimension_numbers = #tpu.dot_dimension_numbers<[1], [1], [0], [0], [0, 0, 1, 0], [], []>} : vector<8x16xbf16>, vector<8x16xbf16>, vector<8x8xf32> -> vector<8x8xf32>
    %cst_190 = arith.constant 2.500000e-01 : f32
    %567 = vector.broadcast %cst_190 : f32 to vector<8x8xf32>
    %568 = arith.mulf %566, %567 : vector<8x8xf32>
    %569 = vector.broadcast %536 : vector<1x8xf32> to vector<8x8xf32>
    %570 = arith.addf %568, %569 : vector<8x8xf32>
    %cst_191 = arith.constant dense<0xFF800000> : vector<8xf32>
    %571 = vector.multi_reduction <maximumf>, %570, %cst_191 [1] : vector<8x8xf32> to vector<8xf32>
    %572 = vector.shape_cast %571 : vector<8xf32> to vector<8x1xf32>
    %573 = vector.broadcast %572 : vector<8x1xf32> to vector<8x8xf32>
    %574 = arith.subf %570, %573 : vector<8x8xf32>
    %575 = math.exp %574 : vector<8x8xf32>
    %cst_192 = arith.constant dense<0.000000e+00> : vector<8xf32>
    %576 = vector.multi_reduction <add>, %575, %cst_192 [1] : vector<8x8xf32> to vector<8xf32>
    %577 = vector.shape_cast %576 : vector<8xf32> to vector<8x1xf32>
    %578 = tpu.reciprocal %577 {approx = true} : vector<8x1xf32> -> vector<8x1xf32>
    %579 = vector.broadcast %578 : vector<8x1xf32> to vector<8x8xf32>
    %580 = arith.mulf %575, %579 : vector<8x8xf32>
    %581 = arith.truncf %580 : vector<8x8xf32> to vector<8x8xbf16>
    %582 = arith.truncf %563 : vector<8x16xf32> to vector<8x16xbf16>
    %cst_193 = arith.constant dense<0.000000e+00> : vector<8x16xf32>
    %583 = tpu.matmul %581, %582, %cst_193 {dimension_numbers = #tpu.dot_dimension_numbers<[1], [0], [0], [1], [0, 0, 1, 1], [], []>} : vector<8x8xbf16>, vector<8x16xbf16>, vector<8x16xf32> -> vector<8x16xf32>
    %c0_194 = arith.constant 0 : index
    %c16_195 = arith.constant 16 : index
    %584 = vector.load %arg19[%c0_194, %c16_195] : memref<64x32xf32, #tpu.memory_space<vmem>>, vector<8x16xf32>
    tpu.vector_store %arg19[%c0_194, %c16_195], %583 {strides = array<i32>} : memref<64x32xf32, #tpu.memory_space<vmem>>, vector<8x16xf32>,
    %c1_196 = arith.constant 1 : index
    %c0_197 = arith.constant 0 : index
    %585 = vector.load %arg1[%c1_196, %c0_197] : memref<8x8xf32, #tpu.memory_space<vmem>>, vector<1x8xf32>
    %586 = vector.extract_strided_slice %533 {offsets = [8, 0], sizes = [8, 16], strides = [1, 1]} : vector<64x32xf32> to vector<8x16xf32>
    %587 = vector.extract_strided_slice %534 {offsets = [8, 0], sizes = [8, 16], strides = [1, 1]} : vector<64x32xf32> to vector<8x16xf32>
    %588 = vector.extract_strided_slice %535 {offsets = [8, 0], sizes = [8, 16], strides = [1, 1]} : vector<64x32xf32> to vector<8x16xf32>
    %589 = arith.truncf %586 : vector<8x16xf32> to vector<8x16xbf16>
    %590 = arith.truncf %587 : vector<8x16xf32> to vector<8x16xbf16>
    %cst_198 = arith.constant dense<0.000000e+00> : vector<8x8xf32>
    %591 = tpu.matmul %589, %590, %cst_198 {dimension_numbers = #tpu.dot_dimension_numbers<[1], [1], [0], [0], [0, 0, 1, 0], [], []>} : vector<8x16xbf16>, vector<8x16xbf16>, vector<8x8xf32> -> vector<8x8xf32>
    %cst_199 = arith.constant 2.500000e-01 : f32
    %592 = vector.broadcast %cst_199 : f32 to vector<8x8xf32>
    %593 = arith.mulf %591, %592 : vector<8x8xf32>
    %594 = vector.broadcast %585 : vector<1x8xf32> to vector<8x8xf32>
    %595 = arith.addf %593, %594 : vector<8x8xf32>
    %cst_200 = arith.constant dense<0xFF800000> : vector<8xf32>
    %596 = vector.multi_reduction <maximumf>, %595, %cst_200 [1] : vector<8x8xf32> to vector<8xf32>
    %597 = vector.shape_cast %596 : vector<8xf32> to vector<8x1xf32>
    %598 = vector.broadcast %597 : vector<8x1xf32> to vector<8x8xf32>
    %599 = arith.subf %595, %598 : vector<8x8xf32>
    %600 = math.exp %599 : vector<8x8xf32>
    %cst_201 = arith.constant dense<0.000000e+00> : vector<8xf32>
    %601 = vector.multi_reduction <add>, %600, %cst_201 [1] : vector<8x8xf32> to vector<8xf32>
    %602 = vector.shape_cast %601 : vector<8xf32> to vector<8x1xf32>
    %603 = tpu.reciprocal %602 {approx = true} : vector<8x1xf32> -> vector<8x1xf32>
    %604 = vector.broadcast %603 : vector<8x1xf32> to vector<8x8xf32>
    %605 = arith.mulf %600, %604 : vector<8x8xf32>
    %606 = arith.truncf %605 : vector<8x8xf32> to vector<8x8xbf16>
    %607 = arith.truncf %588 : vector<8x16xf32> to vector<8x16xbf16>
    %cst_202 = arith.constant dense<0.000000e+00> : vector<8x16xf32>
    %608 = tpu.matmul %606, %607, %cst_202 {dimension_numbers = #tpu.dot_dimension_numbers<[1], [0], [0], [1], [0, 0, 1, 1], [], []>} : vector<8x8xbf16>, vector<8x16xbf16>, vector<8x16xf32> -> vector<8x16xf32>
    %c8_203 = arith.constant 8 : index
    %c0_204 = arith.constant 0 : index
    %609 = vector.load %arg19[%c8_203, %c0_204] : memref<64x32xf32, #tpu.memory_space<vmem>>, vector<8x16xf32>
    tpu.vector_store %arg19[%c8_203, %c0_204], %608 {strides = array<i32>} : memref<64x32xf32, #tpu.memory_space<vmem>>, vector<8x16xf32>,
    %610 = vector.extract_strided_slice %533 {offsets = [8, 16], sizes = [8, 16], strides = [1, 1]} : vector<64x32xf32> to vector<8x16xf32>
    %611 = vector.extract_strided_slice %534 {offsets = [8, 16], sizes = [8, 16], strides = [1, 1]} : vector<64x32xf32> to vector<8x16xf32>
    %612 = vector.extract_strided_slice %535 {offsets = [8, 16], sizes = [8, 16], strides = [1, 1]} : vector<64x32xf32> to vector<8x16xf32>
    %613 = arith.truncf %610 : vector<8x16xf32> to vector<8x16xbf16>
    %614 = arith.truncf %611 : vector<8x16xf32> to vector<8x16xbf16>
    %cst_205 = arith.constant dense<0.000000e+00> : vector<8x8xf32>
    %615 = tpu.matmul %613, %614, %cst_205 {dimension_numbers = #tpu.dot_dimension_numbers<[1], [1], [0], [0], [0, 0, 1, 0], [], []>} : vector<8x16xbf16>, vector<8x16xbf16>, vector<8x8xf32> -> vector<8x8xf32>
    %cst_206 = arith.constant 2.500000e-01 : f32
    %616 = vector.broadcast %cst_206 : f32 to vector<8x8xf32>
    %617 = arith.mulf %615, %616 : vector<8x8xf32>
    %618 = vector.broadcast %585 : vector<1x8xf32> to vector<8x8xf32>
    %619 = arith.addf %617, %618 : vector<8x8xf32>
    %cst_207 = arith.constant dense<0xFF800000> : vector<8xf32>
    %620 = vector.multi_reduction <maximumf>, %619, %cst_207 [1] : vector<8x8xf32> to vector<8xf32>
    %621 = vector.shape_cast %620 : vector<8xf32> to vector<8x1xf32>
    %622 = vector.broadcast %621 : vector<8x1xf32> to vector<8x8xf32>
    %623 = arith.subf %619, %622 : vector<8x8xf32>
    %624 = math.exp %623 : vector<8x8xf32>
    %cst_208 = arith.constant dense<0.000000e+00> : vector<8xf32>
    %625 = vector.multi_reduction <add>, %624, %cst_208 [1] : vector<8x8xf32> to vector<8xf32>
    %626 = vector.shape_cast %625 : vector<8xf32> to vector<8x1xf32>
    %627 = tpu.reciprocal %626 {approx = true} : vector<8x1xf32> -> vector<8x1xf32>
    %628 = vector.broadcast %627 : vector<8x1xf32> to vector<8x8xf32>
    %629 = arith.mulf %624, %628 : vector<8x8xf32>
    %630 = arith.truncf %629 : vector<8x8xf32> to vector<8x8xbf16>
    %631 = arith.truncf %612 : vector<8x16xf32> to vector<8x16xbf16>
    %cst_209 = arith.constant dense<0.000000e+00> : vector<8x16xf32>
    %632 = tpu.matmul %630, %631, %cst_209 {dimension_numbers = #tpu.dot_dimension_numbers<[1], [0], [0], [1], [0, 0, 1, 1], [], []>} : vector<8x8xbf16>, vector<8x16xbf16>, vector<8x16xf32> -> vector<8x16xf32>
    %c8_210 = arith.constant 8 : index
    %c16_211 = arith.constant 16 : index
    %633 = vector.load %arg19[%c8_210, %c16_211] : memref<64x32xf32, #tpu.memory_space<vmem>>, vector<8x16xf32>
    tpu.vector_store %arg19[%c8_210, %c16_211], %632 {strides = array<i32>} : memref<64x32xf32, #tpu.memory_space<vmem>>, vector<8x16xf32>,
    %c2_212 = arith.constant 2 : index
    %c0_213 = arith.constant 0 : index
    %634 = vector.load %arg1[%c2_212, %c0_213] : memref<8x8xf32, #tpu.memory_space<vmem>>, vector<1x8xf32>
    %635 = vector.extract_strided_slice %533 {offsets = [16, 0], sizes = [8, 16], strides = [1, 1]} : vector<64x32xf32> to vector<8x16xf32>
    %636 = vector.extract_strided_slice %534 {offsets = [16, 0], sizes = [8, 16], strides = [1, 1]} : vector<64x32xf32> to vector<8x16xf32>
    %637 = vector.extract_strided_slice %535 {offsets = [16, 0], sizes = [8, 16], strides = [1, 1]} : vector<64x32xf32> to vector<8x16xf32>
    %638 = arith.truncf %635 : vector<8x16xf32> to vector<8x16xbf16>
    %639 = arith.truncf %636 : vector<8x16xf32> to vector<8x16xbf16>
    %cst_214 = arith.constant dense<0.000000e+00> : vector<8x8xf32>
    %640 = tpu.matmul %638, %639, %cst_214 {dimension_numbers = #tpu.dot_dimension_numbers<[1], [1], [0], [0], [0, 0, 1, 0], [], []>} : vector<8x16xbf16>, vector<8x16xbf16>, vector<8x8xf32> -> vector<8x8xf32>
    %cst_215 = arith.constant 2.500000e-01 : f32
    %641 = vector.broadcast %cst_215 : f32 to vector<8x8xf32>
    %642 = arith.mulf %640, %641 : vector<8x8xf32>
    %643 = vector.broadcast %634 : vector<1x8xf32> to vector<8x8xf32>
    %644 = arith.addf %642, %643 : vector<8x8xf32>
    %cst_216 = arith.constant dense<0xFF800000> : vector<8xf32>
    %645 = vector.multi_reduction <maximumf>, %644, %cst_216 [1] : vector<8x8xf32> to vector<8xf32>
    %646 = vector.shape_cast %645 : vector<8xf32> to vector<8x1xf32>
    %647 = vector.broadcast %646 : vector<8x1xf32> to vector<8x8xf32>
    %648 = arith.subf %644, %647 : vector<8x8xf32>
    %649 = math.exp %648 : vector<8x8xf32>
    %cst_217 = arith.constant dense<0.000000e+00> : vector<8xf32>
    %650 = vector.multi_reduction <add>, %649, %cst_217 [1] : vector<8x8xf32> to vector<8xf32>
    %651 = vector.shape_cast %650 : vector<8xf32> to vector<8x1xf32>
    %652 = tpu.reciprocal %651 {approx = true} : vector<8x1xf32> -> vector<8x1xf32>
    %653 = vector.broadcast %652 : vector<8x1xf32> to vector<8x8xf32>
    %654 = arith.mulf %649, %653 : vector<8x8xf32>
    %655 = arith.truncf %654 : vector<8x8xf32> to vector<8x8xbf16>
    %656 = arith.truncf %637 : vector<8x16xf32> to vector<8x16xbf16>
    %cst_218 = arith.constant dense<0.000000e+00> : vector<8x16xf32>
    %657 = tpu.matmul %655, %656, %cst_218 {dimension_numbers = #tpu.dot_dimension_numbers<[1], [0], [0], [1], [0, 0, 1, 1], [], []>} : vector<8x8xbf16>, vector<8x16xbf16>, vector<8x16xf32> -> vector<8x16xf32>
    %c16_219 = arith.constant 16 : index
    %c0_220 = arith.constant 0 : index
    %658 = vector.load %arg19[%c16_219, %c0_220] : memref<64x32xf32, #tpu.memory_space<vmem>>, vector<8x16xf32>
    tpu.vector_store %arg19[%c16_219, %c0_220], %657 {strides = array<i32>} : memref<64x32xf32, #tpu.memory_space<vmem>>, vector<8x16xf32>,
    %659 = vector.extract_strided_slice %533 {offsets = [16, 16], sizes = [8, 16], strides = [1, 1]} : vector<64x32xf32> to vector<8x16xf32>
    %660 = vector.extract_strided_slice %534 {offsets = [16, 16], sizes = [8, 16], strides = [1, 1]} : vector<64x32xf32> to vector<8x16xf32>
    %661 = vector.extract_strided_slice %535 {offsets = [16, 16], sizes = [8, 16], strides = [1, 1]} : vector<64x32xf32> to vector<8x16xf32>
    %662 = arith.truncf %659 : vector<8x16xf32> to vector<8x16xbf16>
    %663 = arith.truncf %660 : vector<8x16xf32> to vector<8x16xbf16>
    %cst_221 = arith.constant dense<0.000000e+00> : vector<8x8xf32>
    %664 = tpu.matmul %662, %663, %cst_221 {dimension_numbers = #tpu.dot_dimension_numbers<[1], [1], [0], [0], [0, 0, 1, 0], [], []>} : vector<8x16xbf16>, vector<8x16xbf16>, vector<8x8xf32> -> vector<8x8xf32>
    %cst_222 = arith.constant 2.500000e-01 : f32
    %665 = vector.broadcast %cst_222 : f32 to vector<8x8xf32>
    %666 = arith.mulf %664, %665 : vector<8x8xf32>
    %667 = vector.broadcast %634 : vector<1x8xf32> to vector<8x8xf32>
    %668 = arith.addf %666, %667 : vector<8x8xf32>
    %cst_223 = arith.constant dense<0xFF800000> : vector<8xf32>
    %669 = vector.multi_reduction <maximumf>, %668, %cst_223 [1] : vector<8x8xf32> to vector<8xf32>
    %670 = vector.shape_cast %669 : vector<8xf32> to vector<8x1xf32>
    %671 = vector.broadcast %670 : vector<8x1xf32> to vector<8x8xf32>
    %672 = arith.subf %668, %671 : vector<8x8xf32>
    %673 = math.exp %672 : vector<8x8xf32>
    %cst_224 = arith.constant dense<0.000000e+00> : vector<8xf32>
    %674 = vector.multi_reduction <add>, %673, %cst_224 [1] : vector<8x8xf32> to vector<8xf32>
    %675 = vector.shape_cast %674 : vector<8xf32> to vector<8x1xf32>
    %676 = tpu.reciprocal %675 {approx = true} : vector<8x1xf32> -> vector<8x1xf32>
    %677 = vector.broadcast %676 : vector<8x1xf32> to vector<8x8xf32>
    %678 = arith.mulf %673, %677 : vector<8x8xf32>
    %679 = arith.truncf %678 : vector<8x8xf32> to vector<8x8xbf16>
    %680 = arith.truncf %661 : vector<8x16xf32> to vector<8x16xbf16>
    %cst_225 = arith.constant dense<0.000000e+00> : vector<8x16xf32>
    %681 = tpu.matmul %679, %680, %cst_225 {dimension_numbers = #tpu.dot_dimension_numbers<[1], [0], [0], [1], [0, 0, 1, 1], [], []>} : vector<8x8xbf16>, vector<8x16xbf16>, vector<8x16xf32> -> vector<8x16xf32>
    %c16_226 = arith.constant 16 : index
    %c16_227 = arith.constant 16 : index
    %682 = vector.load %arg19[%c16_226, %c16_227] : memref<64x32xf32, #tpu.memory_space<vmem>>, vector<8x16xf32>
    tpu.vector_store %arg19[%c16_226, %c16_227], %681 {strides = array<i32>} : memref<64x32xf32, #tpu.memory_space<vmem>>, vector<8x16xf32>,
    %c3_228 = arith.constant 3 : index
    %c0_229 = arith.constant 0 : index
    %683 = vector.load %arg1[%c3_228, %c0_229] : memref<8x8xf32, #tpu.memory_space<vmem>>, vector<1x8xf32>
    %684 = vector.extract_strided_slice %533 {offsets = [24, 0], sizes = [8, 16], strides = [1, 1]} : vector<64x32xf32> to vector<8x16xf32>
    %685 = vector.extract_strided_slice %534 {offsets = [24, 0], sizes = [8, 16], strides = [1, 1]} : vector<64x32xf32> to vector<8x16xf32>
    %686 = vector.extract_strided_slice %535 {offsets = [24, 0], sizes = [8, 16], strides = [1, 1]} : vector<64x32xf32> to vector<8x16xf32>
    %687 = arith.truncf %684 : vector<8x16xf32> to vector<8x16xbf16>
    %688 = arith.truncf %685 : vector<8x16xf32> to vector<8x16xbf16>
    %cst_230 = arith.constant dense<0.000000e+00> : vector<8x8xf32>
    %689 = tpu.matmul %687, %688, %cst_230 {dimension_numbers = #tpu.dot_dimension_numbers<[1], [1], [0], [0], [0, 0, 1, 0], [], []>} : vector<8x16xbf16>, vector<8x16xbf16>, vector<8x8xf32> -> vector<8x8xf32>
    %cst_231 = arith.constant 2.500000e-01 : f32
    %690 = vector.broadcast %cst_231 : f32 to vector<8x8xf32>
    %691 = arith.mulf %689, %690 : vector<8x8xf32>
    %692 = vector.broadcast %683 : vector<1x8xf32> to vector<8x8xf32>
    %693 = arith.addf %691, %692 : vector<8x8xf32>
    %cst_232 = arith.constant dense<0xFF800000> : vector<8xf32>
    %694 = vector.multi_reduction <maximumf>, %693, %cst_232 [1] : vector<8x8xf32> to vector<8xf32>
    %695 = vector.shape_cast %694 : vector<8xf32> to vector<8x1xf32>
    %696 = vector.broadcast %695 : vector<8x1xf32> to vector<8x8xf32>
    %697 = arith.subf %693, %696 : vector<8x8xf32>
    %698 = math.exp %697 : vector<8x8xf32>
    %cst_233 = arith.constant dense<0.000000e+00> : vector<8xf32>
    %699 = vector.multi_reduction <add>, %698, %cst_233 [1] : vector<8x8xf32> to vector<8xf32>
    %700 = vector.shape_cast %699 : vector<8xf32> to vector<8x1xf32>
    %701 = tpu.reciprocal %700 {approx = true} : vector<8x1xf32> -> vector<8x1xf32>
    %702 = vector.broadcast %701 : vector<8x1xf32> to vector<8x8xf32>
    %703 = arith.mulf %698, %702 : vector<8x8xf32>
    %704 = arith.truncf %703 : vector<8x8xf32> to vector<8x8xbf16>
    %705 = arith.truncf %686 : vector<8x16xf32> to vector<8x16xbf16>
    %cst_234 = arith.constant dense<0.000000e+00> : vector<8x16xf32>
    %706 = tpu.matmul %704, %705, %cst_234 {dimension_numbers = #tpu.dot_dimension_numbers<[1], [0], [0], [1], [0, 0, 1, 1], [], []>} : vector<8x8xbf16>, vector<8x16xbf16>, vector<8x16xf32> -> vector<8x16xf32>
    %c24_235 = arith.constant 24 : index
    %c0_236 = arith.constant 0 : index
    %707 = vector.load %arg19[%c24_235, %c0_236] : memref<64x32xf32, #tpu.memory_space<vmem>>, vector<8x16xf32>
    tpu.vector_store %arg19[%c24_235, %c0_236], %706 {strides = array<i32>} : memref<64x32xf32, #tpu.memory_space<vmem>>, vector<8x16xf32>,
    %708 = vector.extract_strided_slice %533 {offsets = [24, 16], sizes = [8, 16], strides = [1, 1]} : vector<64x32xf32> to vector<8x16xf32>
    %709 = vector.extract_strided_slice %534 {offsets = [24, 16], sizes = [8, 16], strides = [1, 1]} : vector<64x32xf32> to vector<8x16xf32>
    %710 = vector.extract_strided_slice %535 {offsets = [24, 16], sizes = [8, 16], strides = [1, 1]} : vector<64x32xf32> to vector<8x16xf32>
    %711 = arith.truncf %708 : vector<8x16xf32> to vector<8x16xbf16>
    %712 = arith.truncf %709 : vector<8x16xf32> to vector<8x16xbf16>
    %cst_237 = arith.constant dense<0.000000e+00> : vector<8x8xf32>
    %713 = tpu.matmul %711, %712, %cst_237 {dimension_numbers = #tpu.dot_dimension_numbers<[1], [1], [0], [0], [0, 0, 1, 0], [], []>} : vector<8x16xbf16>, vector<8x16xbf16>, vector<8x8xf32> -> vector<8x8xf32>
    %cst_238 = arith.constant 2.500000e-01 : f32
    %714 = vector.broadcast %cst_238 : f32 to vector<8x8xf32>
    %715 = arith.mulf %713, %714 : vector<8x8xf32>
    %716 = vector.broadcast %683 : vector<1x8xf32> to vector<8x8xf32>
    %717 = arith.addf %715, %716 : vector<8x8xf32>
    %cst_239 = arith.constant dense<0xFF800000> : vector<8xf32>
    %718 = vector.multi_reduction <maximumf>, %717, %cst_239 [1] : vector<8x8xf32> to vector<8xf32>
    %719 = vector.shape_cast %718 : vector<8xf32> to vector<8x1xf32>
    %720 = vector.broadcast %719 : vector<8x1xf32> to vector<8x8xf32>
    %721 = arith.subf %717, %720 : vector<8x8xf32>
    %722 = math.exp %721 : vector<8x8xf32>
    %cst_240 = arith.constant dense<0.000000e+00> : vector<8xf32>
    %723 = vector.multi_reduction <add>, %722, %cst_240 [1] : vector<8x8xf32> to vector<8xf32>
    %724 = vector.shape_cast %723 : vector<8xf32> to vector<8x1xf32>
    %725 = tpu.reciprocal %724 {approx = true} : vector<8x1xf32> -> vector<8x1xf32>
    %726 = vector.broadcast %725 : vector<8x1xf32> to vector<8x8xf32>
    %727 = arith.mulf %722, %726 : vector<8x8xf32>
    %728 = arith.truncf %727 : vector<8x8xf32> to vector<8x8xbf16>
    %729 = arith.truncf %710 : vector<8x16xf32> to vector<8x16xbf16>
    %cst_241 = arith.constant dense<0.000000e+00> : vector<8x16xf32>
    %730 = tpu.matmul %728, %729, %cst_241 {dimension_numbers = #tpu.dot_dimension_numbers<[1], [0], [0], [1], [0, 0, 1, 1], [], []>} : vector<8x8xbf16>, vector<8x16xbf16>, vector<8x16xf32> -> vector<8x16xf32>
    %c24_242 = arith.constant 24 : index
    %c16_243 = arith.constant 16 : index
    %731 = vector.load %arg19[%c24_242, %c16_243] : memref<64x32xf32, #tpu.memory_space<vmem>>, vector<8x16xf32>
    tpu.vector_store %arg19[%c24_242, %c16_243], %730 {strides = array<i32>} : memref<64x32xf32, #tpu.memory_space<vmem>>, vector<8x16xf32>,
    %c4_244 = arith.constant 4 : index
    %c0_245 = arith.constant 0 : index
    %732 = vector.load %arg1[%c4_244, %c0_245] : memref<8x8xf32, #tpu.memory_space<vmem>>, vector<1x8xf32>
    %733 = vector.extract_strided_slice %533 {offsets = [32, 0], sizes = [8, 16], strides = [1, 1]} : vector<64x32xf32> to vector<8x16xf32>
    %734 = vector.extract_strided_slice %534 {offsets = [32, 0], sizes = [8, 16], strides = [1, 1]} : vector<64x32xf32> to vector<8x16xf32>
    %735 = vector.extract_strided_slice %535 {offsets = [32, 0], sizes = [8, 16], strides = [1, 1]} : vector<64x32xf32> to vector<8x16xf32>
    %736 = arith.truncf %733 : vector<8x16xf32> to vector<8x16xbf16>
    %737 = arith.truncf %734 : vector<8x16xf32> to vector<8x16xbf16>
    %cst_246 = arith.constant dense<0.000000e+00> : vector<8x8xf32>
    %738 = tpu.matmul %736, %737, %cst_246 {dimension_numbers = #tpu.dot_dimension_numbers<[1], [1], [0], [0], [0, 0, 1, 0], [], []>} : vector<8x16xbf16>, vector<8x16xbf16>, vector<8x8xf32> -> vector<8x8xf32>
    %cst_247 = arith.constant 2.500000e-01 : f32
    %739 = vector.broadcast %cst_247 : f32 to vector<8x8xf32>
    %740 = arith.mulf %738, %739 : vector<8x8xf32>
    %741 = vector.broadcast %732 : vector<1x8xf32> to vector<8x8xf32>
    %742 = arith.addf %740, %741 : vector<8x8xf32>
    %cst_248 = arith.constant dense<0xFF800000> : vector<8xf32>
    %743 = vector.multi_reduction <maximumf>, %742, %cst_248 [1] : vector<8x8xf32> to vector<8xf32>
    %744 = vector.shape_cast %743 : vector<8xf32> to vector<8x1xf32>
    %745 = vector.broadcast %744 : vector<8x1xf32> to vector<8x8xf32>
    %746 = arith.subf %742, %745 : vector<8x8xf32>
    %747 = math.exp %746 : vector<8x8xf32>
    %cst_249 = arith.constant dense<0.000000e+00> : vector<8xf32>
    %748 = vector.multi_reduction <add>, %747, %cst_249 [1] : vector<8x8xf32> to vector<8xf32>
    %749 = vector.shape_cast %748 : vector<8xf32> to vector<8x1xf32>
    %750 = tpu.reciprocal %749 {approx = true} : vector<8x1xf32> -> vector<8x1xf32>
    %751 = vector.broadcast %750 : vector<8x1xf32> to vector<8x8xf32>
    %752 = arith.mulf %747, %751 : vector<8x8xf32>
    %753 = arith.truncf %752 : vector<8x8xf32> to vector<8x8xbf16>
    %754 = arith.truncf %735 : vector<8x16xf32> to vector<8x16xbf16>
    %cst_250 = arith.constant dense<0.000000e+00> : vector<8x16xf32>
    %755 = tpu.matmul %753, %754, %cst_250 {dimension_numbers = #tpu.dot_dimension_numbers<[1], [0], [0], [1], [0, 0, 1, 1], [], []>} : vector<8x8xbf16>, vector<8x16xbf16>, vector<8x16xf32> -> vector<8x16xf32>
    %c32_251 = arith.constant 32 : index
    %c0_252 = arith.constant 0 : index
    %756 = vector.load %arg19[%c32_251, %c0_252] : memref<64x32xf32, #tpu.memory_space<vmem>>, vector<8x16xf32>
    tpu.vector_store %arg19[%c32_251, %c0_252], %755 {strides = array<i32>} : memref<64x32xf32, #tpu.memory_space<vmem>>, vector<8x16xf32>,
    %757 = vector.extract_strided_slice %533 {offsets = [32, 16], sizes = [8, 16], strides = [1, 1]} : vector<64x32xf32> to vector<8x16xf32>
    %758 = vector.extract_strided_slice %534 {offsets = [32, 16], sizes = [8, 16], strides = [1, 1]} : vector<64x32xf32> to vector<8x16xf32>
    %759 = vector.extract_strided_slice %535 {offsets = [32, 16], sizes = [8, 16], strides = [1, 1]} : vector<64x32xf32> to vector<8x16xf32>
    %760 = arith.truncf %757 : vector<8x16xf32> to vector<8x16xbf16>
    %761 = arith.truncf %758 : vector<8x16xf32> to vector<8x16xbf16>
    %cst_253 = arith.constant dense<0.000000e+00> : vector<8x8xf32>
    %762 = tpu.matmul %760, %761, %cst_253 {dimension_numbers = #tpu.dot_dimension_numbers<[1], [1], [0], [0], [0, 0, 1, 0], [], []>} : vector<8x16xbf16>, vector<8x16xbf16>, vector<8x8xf32> -> vector<8x8xf32>
    %cst_254 = arith.constant 2.500000e-01 : f32
    %763 = vector.broadcast %cst_254 : f32 to vector<8x8xf32>
    %764 = arith.mulf %762, %763 : vector<8x8xf32>
    %765 = vector.broadcast %732 : vector<1x8xf32> to vector<8x8xf32>
    %766 = arith.addf %764, %765 : vector<8x8xf32>
    %cst_255 = arith.constant dense<0xFF800000> : vector<8xf32>
    %767 = vector.multi_reduction <maximumf>, %766, %cst_255 [1] : vector<8x8xf32> to vector<8xf32>
    %768 = vector.shape_cast %767 : vector<8xf32> to vector<8x1xf32>
    %769 = vector.broadcast %768 : vector<8x1xf32> to vector<8x8xf32>
    %770 = arith.subf %766, %769 : vector<8x8xf32>
    %771 = math.exp %770 : vector<8x8xf32>
    %cst_256 = arith.constant dense<0.000000e+00> : vector<8xf32>
    %772 = vector.multi_reduction <add>, %771, %cst_256 [1] : vector<8x8xf32> to vector<8xf32>
    %773 = vector.shape_cast %772 : vector<8xf32> to vector<8x1xf32>
    %774 = tpu.reciprocal %773 {approx = true} : vector<8x1xf32> -> vector<8x1xf32>
    %775 = vector.broadcast %774 : vector<8x1xf32> to vector<8x8xf32>
    %776 = arith.mulf %771, %775 : vector<8x8xf32>
    %777 = arith.truncf %776 : vector<8x8xf32> to vector<8x8xbf16>
    %778 = arith.truncf %759 : vector<8x16xf32> to vector<8x16xbf16>
    %cst_257 = arith.constant dense<0.000000e+00> : vector<8x16xf32>
    %779 = tpu.matmul %777, %778, %cst_257 {dimension_numbers = #tpu.dot_dimension_numbers<[1], [0], [0], [1], [0, 0, 1, 1], [], []>} : vector<8x8xbf16>, vector<8x16xbf16>, vector<8x16xf32> -> vector<8x16xf32>
    %c32_258 = arith.constant 32 : index
    %c16_259 = arith.constant 16 : index
    %780 = vector.load %arg19[%c32_258, %c16_259] : memref<64x32xf32, #tpu.memory_space<vmem>>, vector<8x16xf32>
    tpu.vector_store %arg19[%c32_258, %c16_259], %779 {strides = array<i32>} : memref<64x32xf32, #tpu.memory_space<vmem>>, vector<8x16xf32>,
    %c5_260 = arith.constant 5 : index
    %c0_261 = arith.constant 0 : index
    %781 = vector.load %arg1[%c5_260, %c0_261] : memref<8x8xf32, #tpu.memory_space<vmem>>, vector<1x8xf32>
    %782 = vector.extract_strided_slice %533 {offsets = [40, 0], sizes = [8, 16], strides = [1, 1]} : vector<64x32xf32> to vector<8x16xf32>
    %783 = vector.extract_strided_slice %534 {offsets = [40, 0], sizes = [8, 16], strides = [1, 1]} : vector<64x32xf32> to vector<8x16xf32>
    %784 = vector.extract_strided_slice %535 {offsets = [40, 0], sizes = [8, 16], strides = [1, 1]} : vector<64x32xf32> to vector<8x16xf32>
    %785 = arith.truncf %782 : vector<8x16xf32> to vector<8x16xbf16>
    %786 = arith.truncf %783 : vector<8x16xf32> to vector<8x16xbf16>
    %cst_262 = arith.constant dense<0.000000e+00> : vector<8x8xf32>
    %787 = tpu.matmul %785, %786, %cst_262 {dimension_numbers = #tpu.dot_dimension_numbers<[1], [1], [0], [0], [0, 0, 1, 0], [], []>} : vector<8x16xbf16>, vector<8x16xbf16>, vector<8x8xf32> -> vector<8x8xf32>
    %cst_263 = arith.constant 2.500000e-01 : f32
    %788 = vector.broadcast %cst_263 : f32 to vector<8x8xf32>
    %789 = arith.mulf %787, %788 : vector<8x8xf32>
    %790 = vector.broadcast %781 : vector<1x8xf32> to vector<8x8xf32>
    %791 = arith.addf %789, %790 : vector<8x8xf32>
    %cst_264 = arith.constant dense<0xFF800000> : vector<8xf32>
    %792 = vector.multi_reduction <maximumf>, %791, %cst_264 [1] : vector<8x8xf32> to vector<8xf32>
    %793 = vector.shape_cast %792 : vector<8xf32> to vector<8x1xf32>
    %794 = vector.broadcast %793 : vector<8x1xf32> to vector<8x8xf32>
    %795 = arith.subf %791, %794 : vector<8x8xf32>
    %796 = math.exp %795 : vector<8x8xf32>
    %cst_265 = arith.constant dense<0.000000e+00> : vector<8xf32>
    %797 = vector.multi_reduction <add>, %796, %cst_265 [1] : vector<8x8xf32> to vector<8xf32>
    %798 = vector.shape_cast %797 : vector<8xf32> to vector<8x1xf32>
    %799 = tpu.reciprocal %798 {approx = true} : vector<8x1xf32> -> vector<8x1xf32>
    %800 = vector.broadcast %799 : vector<8x1xf32> to vector<8x8xf32>
    %801 = arith.mulf %796, %800 : vector<8x8xf32>
    %802 = arith.truncf %801 : vector<8x8xf32> to vector<8x8xbf16>
    %803 = arith.truncf %784 : vector<8x16xf32> to vector<8x16xbf16>
    %cst_266 = arith.constant dense<0.000000e+00> : vector<8x16xf32>
    %804 = tpu.matmul %802, %803, %cst_266 {dimension_numbers = #tpu.dot_dimension_numbers<[1], [0], [0], [1], [0, 0, 1, 1], [], []>} : vector<8x8xbf16>, vector<8x16xbf16>, vector<8x16xf32> -> vector<8x16xf32>
    %c40_267 = arith.constant 40 : index
    %c0_268 = arith.constant 0 : index
    %805 = vector.load %arg19[%c40_267, %c0_268] : memref<64x32xf32, #tpu.memory_space<vmem>>, vector<8x16xf32>
    tpu.vector_store %arg19[%c40_267, %c0_268], %804 {strides = array<i32>} : memref<64x32xf32, #tpu.memory_space<vmem>>, vector<8x16xf32>,
    %806 = vector.extract_strided_slice %533 {offsets = [40, 16], sizes = [8, 16], strides = [1, 1]} : vector<64x32xf32> to vector<8x16xf32>
    %807 = vector.extract_strided_slice %534 {offsets = [40, 16], sizes = [8, 16], strides = [1, 1]} : vector<64x32xf32> to vector<8x16xf32>
    %808 = vector.extract_strided_slice %535 {offsets = [40, 16], sizes = [8, 16], strides = [1, 1]} : vector<64x32xf32> to vector<8x16xf32>
    %809 = arith.truncf %806 : vector<8x16xf32> to vector<8x16xbf16>
    %810 = arith.truncf %807 : vector<8x16xf32> to vector<8x16xbf16>
    %cst_269 = arith.constant dense<0.000000e+00> : vector<8x8xf32>
    %811 = tpu.matmul %809, %810, %cst_269 {dimension_numbers = #tpu.dot_dimension_numbers<[1], [1], [0], [0], [0, 0, 1, 0], [], []>} : vector<8x16xbf16>, vector<8x16xbf16>, vector<8x8xf32> -> vector<8x8xf32>
    %cst_270 = arith.constant 2.500000e-01 : f32
    %812 = vector.broadcast %cst_270 : f32 to vector<8x8xf32>
    %813 = arith.mulf %811, %812 : vector<8x8xf32>
    %814 = vector.broadcast %781 : vector<1x8xf32> to vector<8x8xf32>
    %815 = arith.addf %813, %814 : vector<8x8xf32>
    %cst_271 = arith.constant dense<0xFF800000> : vector<8xf32>
    %816 = vector.multi_reduction <maximumf>, %815, %cst_271 [1] : vector<8x8xf32> to vector<8xf32>
    %817 = vector.shape_cast %816 : vector<8xf32> to vector<8x1xf32>
    %818 = vector.broadcast %817 : vector<8x1xf32> to vector<8x8xf32>
    %819 = arith.subf %815, %818 : vector<8x8xf32>
    %820 = math.exp %819 : vector<8x8xf32>
    %cst_272 = arith.constant dense<0.000000e+00> : vector<8xf32>
    %821 = vector.multi_reduction <add>, %820, %cst_272 [1] : vector<8x8xf32> to vector<8xf32>
    %822 = vector.shape_cast %821 : vector<8xf32> to vector<8x1xf32>
    %823 = tpu.reciprocal %822 {approx = true} : vector<8x1xf32> -> vector<8x1xf32>
    %824 = vector.broadcast %823 : vector<8x1xf32> to vector<8x8xf32>
    %825 = arith.mulf %820, %824 : vector<8x8xf32>
    %826 = arith.truncf %825 : vector<8x8xf32> to vector<8x8xbf16>
    %827 = arith.truncf %808 : vector<8x16xf32> to vector<8x16xbf16>
    %cst_273 = arith.constant dense<0.000000e+00> : vector<8x16xf32>
    %828 = tpu.matmul %826, %827, %cst_273 {dimension_numbers = #tpu.dot_dimension_numbers<[1], [0], [0], [1], [0, 0, 1, 1], [], []>} : vector<8x8xbf16>, vector<8x16xbf16>, vector<8x16xf32> -> vector<8x16xf32>
    %c40_274 = arith.constant 40 : index
    %c16_275 = arith.constant 16 : index
    %829 = vector.load %arg19[%c40_274, %c16_275] : memref<64x32xf32, #tpu.memory_space<vmem>>, vector<8x16xf32>
    tpu.vector_store %arg19[%c40_274, %c16_275], %828 {strides = array<i32>} : memref<64x32xf32, #tpu.memory_space<vmem>>, vector<8x16xf32>,
    %c6_276 = arith.constant 6 : index
    %c0_277 = arith.constant 0 : index
    %830 = vector.load %arg1[%c6_276, %c0_277] : memref<8x8xf32, #tpu.memory_space<vmem>>, vector<1x8xf32>
    %831 = vector.extract_strided_slice %533 {offsets = [48, 0], sizes = [8, 16], strides = [1, 1]} : vector<64x32xf32> to vector<8x16xf32>
    %832 = vector.extract_strided_slice %534 {offsets = [48, 0], sizes = [8, 16], strides = [1, 1]} : vector<64x32xf32> to vector<8x16xf32>
    %833 = vector.extract_strided_slice %535 {offsets = [48, 0], sizes = [8, 16], strides = [1, 1]} : vector<64x32xf32> to vector<8x16xf32>
    %834 = arith.truncf %831 : vector<8x16xf32> to vector<8x16xbf16>
    %835 = arith.truncf %832 : vector<8x16xf32> to vector<8x16xbf16>
    %cst_278 = arith.constant dense<0.000000e+00> : vector<8x8xf32>
    %836 = tpu.matmul %834, %835, %cst_278 {dimension_numbers = #tpu.dot_dimension_numbers<[1], [1], [0], [0], [0, 0, 1, 0], [], []>} : vector<8x16xbf16>, vector<8x16xbf16>, vector<8x8xf32> -> vector<8x8xf32>
    %cst_279 = arith.constant 2.500000e-01 : f32
    %837 = vector.broadcast %cst_279 : f32 to vector<8x8xf32>
    %838 = arith.mulf %836, %837 : vector<8x8xf32>
    %839 = vector.broadcast %830 : vector<1x8xf32> to vector<8x8xf32>
    %840 = arith.addf %838, %839 : vector<8x8xf32>
    %cst_280 = arith.constant dense<0xFF800000> : vector<8xf32>
    %841 = vector.multi_reduction <maximumf>, %840, %cst_280 [1] : vector<8x8xf32> to vector<8xf32>
    %842 = vector.shape_cast %841 : vector<8xf32> to vector<8x1xf32>
    %843 = vector.broadcast %842 : vector<8x1xf32> to vector<8x8xf32>
    %844 = arith.subf %840, %843 : vector<8x8xf32>
    %845 = math.exp %844 : vector<8x8xf32>
    %cst_281 = arith.constant dense<0.000000e+00> : vector<8xf32>
    %846 = vector.multi_reduction <add>, %845, %cst_281 [1] : vector<8x8xf32> to vector<8xf32>
    %847 = vector.shape_cast %846 : vector<8xf32> to vector<8x1xf32>
    %848 = tpu.reciprocal %847 {approx = true} : vector<8x1xf32> -> vector<8x1xf32>
    %849 = vector.broadcast %848 : vector<8x1xf32> to vector<8x8xf32>
    %850 = arith.mulf %845, %849 : vector<8x8xf32>
    %851 = arith.truncf %850 : vector<8x8xf32> to vector<8x8xbf16>
    %852 = arith.truncf %833 : vector<8x16xf32> to vector<8x16xbf16>
    %cst_282 = arith.constant dense<0.000000e+00> : vector<8x16xf32>
    %853 = tpu.matmul %851, %852, %cst_282 {dimension_numbers = #tpu.dot_dimension_numbers<[1], [0], [0], [1], [0, 0, 1, 1], [], []>} : vector<8x8xbf16>, vector<8x16xbf16>, vector<8x16xf32> -> vector<8x16xf32>
    %c48_283 = arith.constant 48 : index
    %c0_284 = arith.constant 0 : index
    %854 = vector.load %arg19[%c48_283, %c0_284] : memref<64x32xf32, #tpu.memory_space<vmem>>, vector<8x16xf32>
    tpu.vector_store %arg19[%c48_283, %c0_284], %853 {strides = array<i32>} : memref<64x32xf32, #tpu.memory_space<vmem>>, vector<8x16xf32>,
    %855 = vector.extract_strided_slice %533 {offsets = [48, 16], sizes = [8, 16], strides = [1, 1]} : vector<64x32xf32> to vector<8x16xf32>
    %856 = vector.extract_strided_slice %534 {offsets = [48, 16], sizes = [8, 16], strides = [1, 1]} : vector<64x32xf32> to vector<8x16xf32>
    %857 = vector.extract_strided_slice %535 {offsets = [48, 16], sizes = [8, 16], strides = [1, 1]} : vector<64x32xf32> to vector<8x16xf32>
    %858 = arith.truncf %855 : vector<8x16xf32> to vector<8x16xbf16>
    %859 = arith.truncf %856 : vector<8x16xf32> to vector<8x16xbf16>
    %cst_285 = arith.constant dense<0.000000e+00> : vector<8x8xf32>
    %860 = tpu.matmul %858, %859, %cst_285 {dimension_numbers = #tpu.dot_dimension_numbers<[1], [1], [0], [0], [0, 0, 1, 0], [], []>} : vector<8x16xbf16>, vector<8x16xbf16>, vector<8x8xf32> -> vector<8x8xf32>
    %cst_286 = arith.constant 2.500000e-01 : f32
    %861 = vector.broadcast %cst_286 : f32 to vector<8x8xf32>
    %862 = arith.mulf %860, %861 : vector<8x8xf32>
    %863 = vector.broadcast %830 : vector<1x8xf32> to vector<8x8xf32>
    %864 = arith.addf %862, %863 : vector<8x8xf32>
    %cst_287 = arith.constant dense<0xFF800000> : vector<8xf32>
    %865 = vector.multi_reduction <maximumf>, %864, %cst_287 [1] : vector<8x8xf32> to vector<8xf32>
    %866 = vector.shape_cast %865 : vector<8xf32> to vector<8x1xf32>
    %867 = vector.broadcast %866 : vector<8x1xf32> to vector<8x8xf32>
    %868 = arith.subf %864, %867 : vector<8x8xf32>
    %869 = math.exp %868 : vector<8x8xf32>
    %cst_288 = arith.constant dense<0.000000e+00> : vector<8xf32>
    %870 = vector.multi_reduction <add>, %869, %cst_288 [1] : vector<8x8xf32> to vector<8xf32>
    %871 = vector.shape_cast %870 : vector<8xf32> to vector<8x1xf32>
    %872 = tpu.reciprocal %871 {approx = true} : vector<8x1xf32> -> vector<8x1xf32>
    %873 = vector.broadcast %872 : vector<8x1xf32> to vector<8x8xf32>
    %874 = arith.mulf %869, %873 : vector<8x8xf32>
    %875 = arith.truncf %874 : vector<8x8xf32> to vector<8x8xbf16>
    %876 = arith.truncf %857 : vector<8x16xf32> to vector<8x16xbf16>
    %cst_289 = arith.constant dense<0.000000e+00> : vector<8x16xf32>
    %877 = tpu.matmul %875, %876, %cst_289 {dimension_numbers = #tpu.dot_dimension_numbers<[1], [0], [0], [1], [0, 0, 1, 1], [], []>} : vector<8x8xbf16>, vector<8x16xbf16>, vector<8x16xf32> -> vector<8x16xf32>
    %c48_290 = arith.constant 48 : index
    %c16_291 = arith.constant 16 : index
    %878 = vector.load %arg19[%c48_290, %c16_291] : memref<64x32xf32, #tpu.memory_space<vmem>>, vector<8x16xf32>
    tpu.vector_store %arg19[%c48_290, %c16_291], %877 {strides = array<i32>} : memref<64x32xf32, #tpu.memory_space<vmem>>, vector<8x16xf32>,
    %c7_292 = arith.constant 7 : index
    %c0_293 = arith.constant 0 : index
    %879 = vector.load %arg1[%c7_292, %c0_293] : memref<8x8xf32, #tpu.memory_space<vmem>>, vector<1x8xf32>
    %880 = vector.extract_strided_slice %533 {offsets = [56, 0], sizes = [8, 16], strides = [1, 1]} : vector<64x32xf32> to vector<8x16xf32>
    %881 = vector.extract_strided_slice %534 {offsets = [56, 0], sizes = [8, 16], strides = [1, 1]} : vector<64x32xf32> to vector<8x16xf32>
    %882 = vector.extract_strided_slice %535 {offsets = [56, 0], sizes = [8, 16], strides = [1, 1]} : vector<64x32xf32> to vector<8x16xf32>
    %883 = arith.truncf %880 : vector<8x16xf32> to vector<8x16xbf16>
    %884 = arith.truncf %881 : vector<8x16xf32> to vector<8x16xbf16>
    %cst_294 = arith.constant dense<0.000000e+00> : vector<8x8xf32>
    %885 = tpu.matmul %883, %884, %cst_294 {dimension_numbers = #tpu.dot_dimension_numbers<[1], [1], [0], [0], [0, 0, 1, 0], [], []>} : vector<8x16xbf16>, vector<8x16xbf16>, vector<8x8xf32> -> vector<8x8xf32>
    %cst_295 = arith.constant 2.500000e-01 : f32
    %886 = vector.broadcast %cst_295 : f32 to vector<8x8xf32>
    %887 = arith.mulf %885, %886 : vector<8x8xf32>
    %888 = vector.broadcast %879 : vector<1x8xf32> to vector<8x8xf32>
    %889 = arith.addf %887, %888 : vector<8x8xf32>
    %cst_296 = arith.constant dense<0xFF800000> : vector<8xf32>
    %890 = vector.multi_reduction <maximumf>, %889, %cst_296 [1] : vector<8x8xf32> to vector<8xf32>
    %891 = vector.shape_cast %890 : vector<8xf32> to vector<8x1xf32>
    %892 = vector.broadcast %891 : vector<8x1xf32> to vector<8x8xf32>
    %893 = arith.subf %889, %892 : vector<8x8xf32>
    %894 = math.exp %893 : vector<8x8xf32>
    %cst_297 = arith.constant dense<0.000000e+00> : vector<8xf32>
    %895 = vector.multi_reduction <add>, %894, %cst_297 [1] : vector<8x8xf32> to vector<8xf32>
    %896 = vector.shape_cast %895 : vector<8xf32> to vector<8x1xf32>
    %897 = tpu.reciprocal %896 {approx = true} : vector<8x1xf32> -> vector<8x1xf32>
    %898 = vector.broadcast %897 : vector<8x1xf32> to vector<8x8xf32>
    %899 = arith.mulf %894, %898 : vector<8x8xf32>
    %900 = arith.truncf %899 : vector<8x8xf32> to vector<8x8xbf16>
    %901 = arith.truncf %882 : vector<8x16xf32> to vector<8x16xbf16>
    %cst_298 = arith.constant dense<0.000000e+00> : vector<8x16xf32>
    %902 = tpu.matmul %900, %901, %cst_298 {dimension_numbers = #tpu.dot_dimension_numbers<[1], [0], [0], [1], [0, 0, 1, 1], [], []>} : vector<8x8xbf16>, vector<8x16xbf16>, vector<8x16xf32> -> vector<8x16xf32>
    %c56_299 = arith.constant 56 : index
    %c0_300 = arith.constant 0 : index
    %903 = vector.load %arg19[%c56_299, %c0_300] : memref<64x32xf32, #tpu.memory_space<vmem>>, vector<8x16xf32>
    tpu.vector_store %arg19[%c56_299, %c0_300], %902 {strides = array<i32>} : memref<64x32xf32, #tpu.memory_space<vmem>>, vector<8x16xf32>,
    %904 = vector.extract_strided_slice %533 {offsets = [56, 16], sizes = [8, 16], strides = [1, 1]} : vector<64x32xf32> to vector<8x16xf32>
    %905 = vector.extract_strided_slice %534 {offsets = [56, 16], sizes = [8, 16], strides = [1, 1]} : vector<64x32xf32> to vector<8x16xf32>
    %906 = vector.extract_strided_slice %535 {offsets = [56, 16], sizes = [8, 16], strides = [1, 1]} : vector<64x32xf32> to vector<8x16xf32>
    %907 = arith.truncf %904 : vector<8x16xf32> to vector<8x16xbf16>
    %908 = arith.truncf %905 : vector<8x16xf32> to vector<8x16xbf16>
    %cst_301 = arith.constant dense<0.000000e+00> : vector<8x8xf32>
    %909 = tpu.matmul %907, %908, %cst_301 {dimension_numbers = #tpu.dot_dimension_numbers<[1], [1], [0], [0], [0, 0, 1, 0], [], []>} : vector<8x16xbf16>, vector<8x16xbf16>, vector<8x8xf32> -> vector<8x8xf32>
    %cst_302 = arith.constant 2.500000e-01 : f32
    %910 = vector.broadcast %cst_302 : f32 to vector<8x8xf32>
    %911 = arith.mulf %909, %910 : vector<8x8xf32>
    %912 = vector.broadcast %879 : vector<1x8xf32> to vector<8x8xf32>
    %913 = arith.addf %911, %912 : vector<8x8xf32>
    %cst_303 = arith.constant dense<0xFF800000> : vector<8xf32>
    %914 = vector.multi_reduction <maximumf>, %913, %cst_303 [1] : vector<8x8xf32> to vector<8xf32>
    %915 = vector.shape_cast %914 : vector<8xf32> to vector<8x1xf32>
    %916 = vector.broadcast %915 : vector<8x1xf32> to vector<8x8xf32>
    %917 = arith.subf %913, %916 : vector<8x8xf32>
    %918 = math.exp %917 : vector<8x8xf32>
    %cst_304 = arith.constant dense<0.000000e+00> : vector<8xf32>
    %919 = vector.multi_reduction <add>, %918, %cst_304 [1] : vector<8x8xf32> to vector<8xf32>
    %920 = vector.shape_cast %919 : vector<8xf32> to vector<8x1xf32>
    %921 = tpu.reciprocal %920 {approx = true} : vector<8x1xf32> -> vector<8x1xf32>
    %922 = vector.broadcast %921 : vector<8x1xf32> to vector<8x8xf32>
    %923 = arith.mulf %918, %922 : vector<8x8xf32>
    %924 = arith.truncf %923 : vector<8x8xf32> to vector<8x8xbf16>
    %925 = arith.truncf %906 : vector<8x16xf32> to vector<8x16xbf16>
    %cst_305 = arith.constant dense<0.000000e+00> : vector<8x16xf32>
    %926 = tpu.matmul %924, %925, %cst_305 {dimension_numbers = #tpu.dot_dimension_numbers<[1], [0], [0], [1], [0, 0, 1, 1], [], []>} : vector<8x8xbf16>, vector<8x16xbf16>, vector<8x16xf32> -> vector<8x16xf32>
    %c56_306 = arith.constant 56 : index
    %c16_307 = arith.constant 16 : index
    %927 = vector.load %arg19[%c56_306, %c16_307] : memref<64x32xf32, #tpu.memory_space<vmem>>, vector<8x16xf32>
    tpu.vector_store %arg19[%c56_306, %c16_307], %926 {strides = array<i32>} : memref<64x32xf32, #tpu.memory_space<vmem>>, vector<8x16xf32>,
    %c0_308 = arith.constant 0 : index
    %c0_309 = arith.constant 0 : index
    %928 = vector.load %arg19[%c0_308, %c0_309] : memref<64x32xf32, #tpu.memory_space<vmem>>, vector<64x32xf32>
    %c1_310 = arith.constant 1 : index
    %c0_311 = arith.constant 0 : index
    %c0_312 = arith.constant 0 : index
    %929 = vector.load %arg6[%c1_310, %c0_311, %c0_312] : memref<2x32x32xf32, #tpu.memory_space<vmem>>, vector<1x32x32xf32>
    %930 = vector.shape_cast %929 : vector<1x32x32xf32> to vector<32x32xf32>
    %931 = arith.truncf %928 : vector<64x32xf32> to vector<64x32xbf16>
    %932 = arith.truncf %930 : vector<32x32xf32> to vector<32x32xbf16>
    %cst_313 = arith.constant dense<0.000000e+00> : vector<64x32xf32>
    %933 = tpu.matmul %931, %932, %cst_313 {dimension_numbers = #tpu.dot_dimension_numbers<[1], [0], [0], [1], [0, 0, 1, 1], [], []>} : vector<64x32xbf16>, vector<32x32xbf16>, vector<64x32xf32> -> vector<64x32xf32>
    %c1_314 = arith.constant 1 : index
    %c0_315 = arith.constant 0 : index
    %c0_316 = arith.constant 0 : index
    %934 = vector.load %arg7[%c1_314, %c0_315, %c0_316] : memref<2x1x32xf32, #tpu.memory_space<vmem>>, vector<1x1x32xf32>
    %935 = vector.shape_cast %934 : vector<1x1x32xf32> to vector<1x32xf32>
    %936 = vector.broadcast %935 : vector<1x32xf32> to vector<64x32xf32>
    %937 = arith.addf %933, %936 : vector<64x32xf32>
    %c1_317 = arith.constant 1 : index
    %c0_318 = arith.constant 0 : index
    %c0_319 = arith.constant 0 : index
    %938 = vector.load %arg8[%c1_317, %c0_318, %c0_319] : memref<2x2x32xf32, #tpu.memory_space<vmem>>, vector<1x2x32xf32>
    %939 = vector.shape_cast %938 : vector<1x2x32xf32> to vector<2x32xf32>
    %940 = arith.addf %937, %523 : vector<64x32xf32>
    %941 = vector.extract_strided_slice %939 {offsets = [0, 0], sizes = [1, 32], strides = [1, 1]} : vector<2x32xf32> to vector<1x32xf32>
    %942 = vector.extract_strided_slice %939 {offsets = [1, 0], sizes = [1, 32], strides = [1, 1]} : vector<2x32xf32> to vector<1x32xf32>
    %cst_320 = arith.constant dense<0.000000e+00> : vector<64xf32>
    %943 = vector.multi_reduction <add>, %940, %cst_320 [1] : vector<64x32xf32> to vector<64xf32>
    %944 = vector.shape_cast %943 : vector<64xf32> to vector<64x1xf32>
    %cst_321 = arith.constant 3.200000e+01 : f32
    %945 = vector.broadcast %cst_321 : f32 to vector<64x1xf32>
    %946 = arith.divf %944, %945 : vector<64x1xf32>
    %947 = vector.broadcast %946 : vector<64x1xf32> to vector<64x32xf32>
    %948 = arith.subf %940, %947 : vector<64x32xf32>
    %949 = arith.mulf %948, %948 : vector<64x32xf32>
    %cst_322 = arith.constant dense<0.000000e+00> : vector<64xf32>
    %950 = vector.multi_reduction <add>, %949, %cst_322 [1] : vector<64x32xf32> to vector<64xf32>
    %951 = vector.shape_cast %950 : vector<64xf32> to vector<64x1xf32>
    %cst_323 = arith.constant 3.200000e+01 : f32
    %952 = vector.broadcast %cst_323 : f32 to vector<64x1xf32>
    %953 = arith.divf %951, %952 : vector<64x1xf32>
    %954 = vector.broadcast %946 : vector<64x1xf32> to vector<64x32xf32>
    %955 = arith.subf %940, %954 : vector<64x32xf32>
    %cst_324 = arith.constant 9.99999996E-13 : f32
    %956 = vector.broadcast %cst_324 : f32 to vector<64x1xf32>
    %957 = arith.addf %953, %956 : vector<64x1xf32>
    %958 = math.rsqrt %957 : vector<64x1xf32>
    %959 = vector.broadcast %958 : vector<64x1xf32> to vector<64x32xf32>
    %960 = arith.mulf %955, %959 : vector<64x32xf32>
    %961 = vector.broadcast %941 : vector<1x32xf32> to vector<64x32xf32>
    %962 = arith.mulf %960, %961 : vector<64x32xf32>
    %963 = vector.broadcast %942 : vector<1x32xf32> to vector<64x32xf32>
    %964 = arith.addf %962, %963 : vector<64x32xf32>
    %c1_325 = arith.constant 1 : index
    %c0_326 = arith.constant 0 : index
    %c0_327 = arith.constant 0 : index
    %965 = vector.load %arg9[%c1_325, %c0_326, %c0_327] : memref<2x32x64xf32, #tpu.memory_space<vmem>>, vector<1x32x64xf32>
    %966 = vector.shape_cast %965 : vector<1x32x64xf32> to vector<32x64xf32>
    %967 = arith.truncf %964 : vector<64x32xf32> to vector<64x32xbf16>
    %968 = arith.truncf %966 : vector<32x64xf32> to vector<32x64xbf16>
    %cst_328 = arith.constant dense<0.000000e+00> : vector<64x64xf32>
    %969 = tpu.matmul %967, %968, %cst_328 {dimension_numbers = #tpu.dot_dimension_numbers<[1], [0], [0], [1], [0, 0, 1, 1], [], []>} : vector<64x32xbf16>, vector<32x64xbf16>, vector<64x64xf32> -> vector<64x64xf32>
    %c1_329 = arith.constant 1 : index
    %c0_330 = arith.constant 0 : index
    %c0_331 = arith.constant 0 : index
    %970 = vector.load %arg10[%c1_329, %c0_330, %c0_331] : memref<2x1x64xf32, #tpu.memory_space<vmem>>, vector<1x1x64xf32>
    %971 = vector.shape_cast %970 : vector<1x1x64xf32> to vector<1x64xf32>
    %972 = vector.broadcast %971 : vector<1x64xf32> to vector<64x64xf32>
    %973 = arith.addf %969, %972 : vector<64x64xf32>
    %974 = arith.mulf %973, %973 : vector<64x64xf32>
    %975 = arith.mulf %973, %974 : vector<64x64xf32>
    %cst_332 = arith.constant 4.471500e-02 : f32
    %976 = vector.broadcast %cst_332 : f32 to vector<64x64xf32>
    %977 = arith.mulf %976, %975 : vector<64x64xf32>
    %978 = arith.addf %973, %977 : vector<64x64xf32>
    %cst_333 = arith.constant 0.797884583 : f32
    %979 = vector.broadcast %cst_333 : f32 to vector<64x64xf32>
    %980 = arith.mulf %979, %978 : vector<64x64xf32>
    %981 = math.tanh %980 : vector<64x64xf32>
    %cst_334 = arith.constant 1.000000e+00 : f32
    %982 = vector.broadcast %cst_334 : f32 to vector<64x64xf32>
    %983 = arith.addf %982, %981 : vector<64x64xf32>
    %cst_335 = arith.constant 5.000000e-01 : f32
    %984 = vector.broadcast %cst_335 : f32 to vector<64x64xf32>
    %985 = arith.mulf %984, %983 : vector<64x64xf32>
    %986 = arith.mulf %973, %985 : vector<64x64xf32>
    %c1_336 = arith.constant 1 : index
    %c0_337 = arith.constant 0 : index
    %c0_338 = arith.constant 0 : index
    %987 = vector.load %arg11[%c1_336, %c0_337, %c0_338] : memref<2x64x32xf32, #tpu.memory_space<vmem>>, vector<1x64x32xf32>
    %988 = vector.shape_cast %987 : vector<1x64x32xf32> to vector<64x32xf32>
    %989 = arith.truncf %986 : vector<64x64xf32> to vector<64x64xbf16>
    %990 = arith.truncf %988 : vector<64x32xf32> to vector<64x32xbf16>
    %cst_339 = arith.constant dense<0.000000e+00> : vector<64x32xf32>
    %991 = tpu.matmul %989, %990, %cst_339 {dimension_numbers = #tpu.dot_dimension_numbers<[1], [0], [0], [1], [0, 0, 1, 1], [], []>} : vector<64x64xbf16>, vector<64x32xbf16>, vector<64x32xf32> -> vector<64x32xf32>
    %c1_340 = arith.constant 1 : index
    %c0_341 = arith.constant 0 : index
    %c0_342 = arith.constant 0 : index
    %992 = vector.load %arg12[%c1_340, %c0_341, %c0_342] : memref<2x1x32xf32, #tpu.memory_space<vmem>>, vector<1x1x32xf32>
    %993 = vector.shape_cast %992 : vector<1x1x32xf32> to vector<1x32xf32>
    %994 = vector.broadcast %993 : vector<1x32xf32> to vector<64x32xf32>
    %995 = arith.addf %991, %994 : vector<64x32xf32>
    %c1_343 = arith.constant 1 : index
    %c0_344 = arith.constant 0 : index
    %c0_345 = arith.constant 0 : index
    %996 = vector.load %arg13[%c1_343, %c0_344, %c0_345] : memref<2x2x32xf32, #tpu.memory_space<vmem>>, vector<1x2x32xf32>
    %997 = vector.shape_cast %996 : vector<1x2x32xf32> to vector<2x32xf32>
    %998 = arith.addf %995, %964 : vector<64x32xf32>
    %999 = vector.extract_strided_slice %997 {offsets = [0, 0], sizes = [1, 32], strides = [1, 1]} : vector<2x32xf32> to vector<1x32xf32>
    %1000 = vector.extract_strided_slice %997 {offsets = [1, 0], sizes = [1, 32], strides = [1, 1]} : vector<2x32xf32> to vector<1x32xf32>
    %cst_346 = arith.constant dense<0.000000e+00> : vector<64xf32>
    %1001 = vector.multi_reduction <add>, %998, %cst_346 [1] : vector<64x32xf32> to vector<64xf32>
    %1002 = vector.shape_cast %1001 : vector<64xf32> to vector<64x1xf32>
    %cst_347 = arith.constant 3.200000e+01 : f32
    %1003 = vector.broadcast %cst_347 : f32 to vector<64x1xf32>
    %1004 = arith.divf %1002, %1003 : vector<64x1xf32>
    %1005 = vector.broadcast %1004 : vector<64x1xf32> to vector<64x32xf32>
    %1006 = arith.subf %998, %1005 : vector<64x32xf32>
    %1007 = arith.mulf %1006, %1006 : vector<64x32xf32>
    %cst_348 = arith.constant dense<0.000000e+00> : vector<64xf32>
    %1008 = vector.multi_reduction <add>, %1007, %cst_348 [1] : vector<64x32xf32> to vector<64xf32>
    %1009 = vector.shape_cast %1008 : vector<64xf32> to vector<64x1xf32>
    %cst_349 = arith.constant 3.200000e+01 : f32
    %1010 = vector.broadcast %cst_349 : f32 to vector<64x1xf32>
    %1011 = arith.divf %1009, %1010 : vector<64x1xf32>
    %1012 = vector.broadcast %1004 : vector<64x1xf32> to vector<64x32xf32>
    %1013 = arith.subf %998, %1012 : vector<64x32xf32>
    %cst_350 = arith.constant 9.99999996E-13 : f32
    %1014 = vector.broadcast %cst_350 : f32 to vector<64x1xf32>
    %1015 = arith.addf %1011, %1014 : vector<64x1xf32>
    %1016 = math.rsqrt %1015 : vector<64x1xf32>
    %1017 = vector.broadcast %1016 : vector<64x1xf32> to vector<64x32xf32>
    %1018 = arith.mulf %1013, %1017 : vector<64x32xf32>
    %1019 = vector.broadcast %999 : vector<1x32xf32> to vector<64x32xf32>
    %1020 = arith.mulf %1018, %1019 : vector<64x32xf32>
    %1021 = vector.broadcast %1000 : vector<1x32xf32> to vector<64x32xf32>
    %1022 = arith.addf %1020, %1021 : vector<64x32xf32>
    %1023 = tpu.iota {dimensions = array<i32: 0>} : vector<8x64xi32>
    %1024 = tpu.iota {dimensions = array<i32: 1>} : vector<8x64xi32>
    %c8_i32 = arith.constant 8 : i32
    %1025 = vector.broadcast %c8_i32 : i32 to vector<8x64xi32>
    %1026 = arith.muli %1023, %1025 : vector<8x64xi32>
    %1027 = arith.cmpi eq, %1024, %1026 : vector<8x64xi32>
    %1028 = arith.extui %1027 : vector<8x64xi1> to vector<8x64xi32>
    %1029 = arith.sitofp %1028 : vector<8x64xi32> to vector<8x64xf32>
    %cst_351 = arith.constant dense<0.000000e+00> : vector<8x32xf32>
    %1030 = tpu.matmul %1029, %1022, %cst_351 {dimension_numbers = #tpu.dot_dimension_numbers<[1], [0], [0], [1], [0, 0, 1, 1], [], []>} : vector<8x64xf32>, vector<64x32xf32>, vector<8x32xf32> -> vector<8x32xf32>
    %c0_352 = arith.constant 0 : index
    %c0_353 = arith.constant 0 : index
    %1031 = vector.load %arg14[%c0_352, %c0_353] : memref<1x32xf32, #tpu.memory_space<vmem>>, vector<1x32xf32>
    %1032 = vector.broadcast %1031 : vector<1x32xf32> to vector<8x32xf32>
    %1033 = arith.mulf %1030, %1032 : vector<8x32xf32>
    %cst_354 = arith.constant dense<0.000000e+00> : vector<8xf32>
    %1034 = vector.multi_reduction <add>, %1033, %cst_354 [1] : vector<8x32xf32> to vector<8xf32>
    %1035 = vector.shape_cast %1034 : vector<8xf32> to vector<8x1xf32>
    %c0_355 = arith.constant 0 : index
    %c0_356 = arith.constant 0 : index
    %1036 = vector.load %arg15[%c0_355, %c0_356] : memref<1x1xf32, #tpu.memory_space<vmem>>, vector<1x1xf32>
    %1037 = vector.broadcast %1036 : vector<1x1xf32> to vector<8x1xf32>
    %1038 = arith.addf %1035, %1037 : vector<8x1xf32>
    %c0_357 = arith.constant 0 : index
    %c0_358 = arith.constant 0 : index
    %1039 = vector.load %arg16[%c0_357, %c0_358] : memref<8x1xf32, #tpu.memory_space<vmem>>, vector<8x1xf32>
    tpu.vector_store %arg16[%c0_357, %c0_358], %1038 {strides = array<i32>} : memref<8x1xf32, #tpu.memory_space<vmem>>, vector<8x1xf32>,
    %cst_359 = arith.constant 0.000000e+00 : f32
    %1040 = vector.broadcast %cst_359 : f32 to vector<1x1xf32>
    %cst_360 = arith.constant 0.000000e+00 : f32
    %1041 = vector.broadcast %cst_360 : f32 to vector<1x1xf32>
    %1042 = vector.extract_strided_slice %1038 {offsets = [0, 0], sizes = [4, 1], strides = [1, 1]} : vector<8x1xf32> to vector<4x1xf32>
    %c0_361 = arith.constant 0 : index
    %c0_362 = arith.constant 0 : index
    %1043 = vector.load %arg2[%c0_361, %c0_362] : memref<2x1xi32, #tpu.memory_space<vmem>>, vector<1x1xi32>
    %cst_363 = arith.constant dense<0xFF800000> : vector<1xf32>
    %1044 = vector.multi_reduction <maximumf>, %1042, %cst_363 [0] : vector<4x1xf32> to vector<1xf32>
    %1045 = vector.shape_cast %1044 : vector<1xf32> to vector<1x1xf32>
    %1046 = vector.broadcast %1045 : vector<1x1xf32> to vector<4x1xf32>
    %1047 = arith.subf %1042, %1046 : vector<4x1xf32>
    %1048 = math.exp %1047 : vector<4x1xf32>
    %cst_364 = arith.constant dense<0.000000e+00> : vector<1xf32>
    %1049 = vector.multi_reduction <add>, %1048, %cst_364 [0] : vector<4x1xf32> to vector<1xf32>
    %1050 = vector.shape_cast %1049 : vector<1xf32> to vector<1x1xf32>
    %1051 = math.log %1050 : vector<1x1xf32>
    %1052 = arith.addf %1051, %1045 : vector<1x1xf32>
    %1053 = tpu.iota {dimensions = array<i32: 0>} : vector<4x1xi32>
    %1054 = vector.broadcast %1043 : vector<1x1xi32> to vector<4x1xi32>
    %1055 = arith.cmpi eq, %1053, %1054 : vector<4x1xi32>
    %1056 = arith.extui %1055 : vector<4x1xi1> to vector<4x1xi32>
    %1057 = arith.sitofp %1056 : vector<4x1xi32> to vector<4x1xf32>
    %1058 = arith.mulf %1042, %1057 : vector<4x1xf32>
    %cst_365 = arith.constant dense<0.000000e+00> : vector<1xf32>
    %1059 = vector.multi_reduction <add>, %1058, %cst_365 [0] : vector<4x1xf32> to vector<1xf32>
    %1060 = vector.shape_cast %1059 : vector<1xf32> to vector<1x1xf32>
    %1061 = arith.subf %1052, %1060 : vector<1x1xf32>
    %1062 = arith.addf %1040, %1061 : vector<1x1xf32>
    %1063 = vector.broadcast %1045 : vector<1x1xf32> to vector<4x1xf32>
    %1064 = arith.cmpf oeq, %1042, %1063 : vector<4x1xf32>
    %c4_i32 = arith.constant 4 : i32
    %1065 = vector.broadcast %c4_i32 : i32 to vector<4x1xi32>
    %1066 = arith.select %1064, %1053, %1065 : vector<4x1xi1>, vector<4x1xi32>
    %cst_366 = arith.constant dense<2147483647> : vector<1xi32>
    %1067 = vector.multi_reduction <minsi>, %1066, %cst_366 [0] : vector<4x1xi32> to vector<1xi32>
    %1068 = vector.shape_cast %1067 : vector<1xi32> to vector<1x1xi32>
    %1069 = arith.cmpi eq, %1068, %1043 : vector<1x1xi32>
    %1070 = arith.extui %1069 : vector<1x1xi1> to vector<1x1xi32>
    %1071 = arith.sitofp %1070 : vector<1x1xi32> to vector<1x1xf32>
    %1072 = arith.addf %1041, %1071 : vector<1x1xf32>
    %1073 = vector.extract_strided_slice %1038 {offsets = [4, 0], sizes = [4, 1], strides = [1, 1]} : vector<8x1xf32> to vector<4x1xf32>
    %c1_367 = arith.constant 1 : index
    %c0_368 = arith.constant 0 : index
    %1074 = vector.load %arg2[%c1_367, %c0_368] : memref<2x1xi32, #tpu.memory_space<vmem>>, vector<1x1xi32>
    %cst_369 = arith.constant dense<0xFF800000> : vector<1xf32>
    %1075 = vector.multi_reduction <maximumf>, %1073, %cst_369 [0] : vector<4x1xf32> to vector<1xf32>
    %1076 = vector.shape_cast %1075 : vector<1xf32> to vector<1x1xf32>
    %1077 = vector.broadcast %1076 : vector<1x1xf32> to vector<4x1xf32>
    %1078 = arith.subf %1073, %1077 : vector<4x1xf32>
    %1079 = math.exp %1078 : vector<4x1xf32>
    %cst_370 = arith.constant dense<0.000000e+00> : vector<1xf32>
    %1080 = vector.multi_reduction <add>, %1079, %cst_370 [0] : vector<4x1xf32> to vector<1xf32>
    %1081 = vector.shape_cast %1080 : vector<1xf32> to vector<1x1xf32>
    %1082 = math.log %1081 : vector<1x1xf32>
    %1083 = arith.addf %1082, %1076 : vector<1x1xf32>
    %1084 = tpu.iota {dimensions = array<i32: 0>} : vector<4x1xi32>
    %1085 = vector.broadcast %1074 : vector<1x1xi32> to vector<4x1xi32>
    %1086 = arith.cmpi eq, %1084, %1085 : vector<4x1xi32>
    %1087 = arith.extui %1086 : vector<4x1xi1> to vector<4x1xi32>
    %1088 = arith.sitofp %1087 : vector<4x1xi32> to vector<4x1xf32>
    %1089 = arith.mulf %1073, %1088 : vector<4x1xf32>
    %cst_371 = arith.constant dense<0.000000e+00> : vector<1xf32>
    %1090 = vector.multi_reduction <add>, %1089, %cst_371 [0] : vector<4x1xf32> to vector<1xf32>
    %1091 = vector.shape_cast %1090 : vector<1xf32> to vector<1x1xf32>
    %1092 = arith.subf %1083, %1091 : vector<1x1xf32>
    %1093 = arith.addf %1062, %1092 : vector<1x1xf32>
    %1094 = vector.broadcast %1076 : vector<1x1xf32> to vector<4x1xf32>
    %1095 = arith.cmpf oeq, %1073, %1094 : vector<4x1xf32>
    %c4_i32_372 = arith.constant 4 : i32
    %1096 = vector.broadcast %c4_i32_372 : i32 to vector<4x1xi32>
    %1097 = arith.select %1095, %1084, %1096 : vector<4x1xi1>, vector<4x1xi32>
    %cst_373 = arith.constant dense<2147483647> : vector<1xi32>
    %1098 = vector.multi_reduction <minsi>, %1097, %cst_373 [0] : vector<4x1xi32> to vector<1xi32>
    %1099 = vector.shape_cast %1098 : vector<1xi32> to vector<1x1xi32>
    %1100 = arith.cmpi eq, %1099, %1074 : vector<1x1xi32>
    %1101 = arith.extui %1100 : vector<1x1xi1> to vector<1x1xi32>
    %1102 = arith.sitofp %1101 : vector<1x1xi32> to vector<1x1xf32>
    %1103 = arith.addf %1072, %1102 : vector<1x1xf32>
    %1104 = vector.shape_cast %1093 : vector<1x1xf32> to vector<1x1x1xf32>
    %cst_374 = arith.constant dense<0.000000e+00> : vector<1xf32>
    %1105 = vector.multi_reduction <add>, %1104, %cst_374 [1, 2] : vector<1x1x1xf32> to vector<1xf32>
    %1106 = vector.shape_cast %1105 : vector<1xf32> to vector<1x1x1xf32>
    %1107 = vector.extract %1106[0, 0, 0] : f32 from vector<1x1x1xf32>
    %cst_375 = arith.constant 2.000000e+00 : f32
    %1108 = arith.divf %1107, %cst_375 : f32
    %c0_376 = arith.constant 0 : index
    %c0_377 = arith.constant 0 : index
    %1109 = memref.load %arg17[%c0_376, %c0_377] : memref<1x1xf32, #tpu.memory_space<smem>>
    memref.store %1108, %arg17[%c0_376, %c0_377] : memref<1x1xf32, #tpu.memory_space<smem>>
    %1110 = vector.shape_cast %1103 : vector<1x1xf32> to vector<1x1x1xf32>
    %cst_378 = arith.constant dense<0.000000e+00> : vector<1xf32>
    %1111 = vector.multi_reduction <add>, %1110, %cst_378 [1, 2] : vector<1x1x1xf32> to vector<1xf32>
    %1112 = vector.shape_cast %1111 : vector<1xf32> to vector<1x1x1xf32>
    %1113 = vector.extract %1112[0, 0, 0] : f32 from vector<1x1x1xf32>
    %cst_379 = arith.constant 2.000000e+00 : f32
    %1114 = arith.divf %1113, %cst_379 : f32
    %c0_380 = arith.constant 0 : index
    %c0_381 = arith.constant 0 : index
    %1115 = memref.load %arg18[%c0_380, %c0_381] : memref<1x1xf32, #tpu.memory_space<smem>>
    memref.store %1114, %arg18[%c0_380, %c0_381] : memref<1x1xf32, #tpu.memory_space<smem>>
    return
  }
}

</mosaic_0001>

<llo_original>
// kernel: cross_encoder_forward.1
$region0: #{cross_encoder_forward.1}
  #allocation0 [shape = 'u32[]', space=smem, size = 0x4, offset = 0x4, fixed_abs, tag = 'smem constant byte address 0x4 - core index']
  #allocation1 [shape = 'u32[144,128]{1,0:T(1,128)}', space=vmem, size = 0x12000, scoped, tag = 'internal scratch']
  #allocation2 [shape = 'f32[64,32]{1,0:T(8,128)}', space=vmem, size = 0x8000, scoped, tag = 'scratch operand']
  #allocation3 [shape = 'f32[1,1]{1,0:T(1,128)S(1)}', space=vmem, size = 0x200, scoped, tag = 'scoped memory for cross_encoder_forward.1']
  %s0 = inlined_call_operand.vmem [shape: f32[64,32], index: 0, kind: input, shape index: {}]
  %s1 = inlined_call_operand.vmem [shape: f32[8,8], index: 1, kind: input, shape index: {}]
  %s2 = inlined_call_operand.vmem [shape: s32[2,1], index: 2, kind: input, shape index: {}]
  %s3 = inlined_call_operand.vmem [shape: f32[2,32], index: 3, kind: input, shape index: {}]
  %s4 = inlined_call_operand.vmem [shape: f32[2,32,96], index: 4, kind: input, shape index: {}]
  %s5 = inlined_call_operand.vmem [shape: f32[2,1,96], index: 5, kind: input, shape index: {}]
  %s6 = inlined_call_operand.vmem [shape: f32[2,32,32], index: 6, kind: input, shape index: {}]
  %s7 = inlined_call_operand.vmem [shape: f32[2,1,32], index: 7, kind: input, shape index: {}]
  %s8 = inlined_call_operand.vmem [shape: f32[2,2,32], index: 8, kind: input, shape index: {}]
  %s9 = inlined_call_operand.vmem [shape: f32[2,32,64], index: 9, kind: input, shape index: {}]
  %s10 = inlined_call_operand.vmem [shape: f32[2,1,64], index: 10, kind: input, shape index: {}]
  %s11 = inlined_call_operand.vmem [shape: f32[2,64,32], index: 11, kind: input, shape index: {}]
  %s12 = inlined_call_operand.vmem [shape: f32[2,1,32], index: 12, kind: input, shape index: {}]
  %s13 = inlined_call_operand.vmem [shape: f32[2,2,32], index: 13, kind: input, shape index: {}]
  %s14 = inlined_call_operand.vmem [shape: f32[1,32], index: 14, kind: input, shape index: {}]
  %s15 = inlined_call_operand.<no memory space> [shape: f32[1,1], index: 15, kind: input, shape index: {}]
  %s16 = inlined_call_operand.vmem [shape: f32[8,1], index: 16, kind: output, shape index: {0}]
  %s17 = inlined_call_operand.hbm [shape: f32[1,1], index: 17, kind: output, shape index: {1}]
  %s18 = inlined_call_operand.hbm [shape: f32[1,1], index: 18, kind: output, shape index: {2}]
  %19 = xla_tuple %s16, %s17, %s18
  %s20 = sld [smem:[#allocation0]]
  $region90: #{cross_encoder_forward.1} parent=0
    _
  %s22 = ssub.s32 1, %s20
  %s23 = scalar_select 0, %s22, %s20
  %v24 = vstv %s15
  %25 = vst [vmem:[#allocation3] sm:$0x1] %v24
  $region1: #{cross_encoder_forward.1} parent=0
    #allocation4 [shape = 'u8[512]{0}', space=smem, size = 0x200, scoped, tag = 'output window, operand 1, single buffered']
    #allocation5 [shape = 's32[1]{0}', space=sflag, size = 0x4, scoped, tag = 'scoped memory for cross_encoder_forward.1']
    #allocation6 [shape = 'u8[512]{0}', space=smem, size = 0x200, scoped, tag = 'output window, operand 2, single buffered']
    #allocation7 [shape = 's32[1]{0}', space=sflag, size = 0x4, scoped, tag = 'scoped memory for cross_encoder_forward.1']
    %26 = vsyncpa [#allocation5], 0
    %27 = vsyncpa [#allocation7], 0
    // Predicated region
    $region2: #{cross_encoder_forward.1} parent=1 // pred_check
      _
    $region3: #{cross_encoder_forward.1} parent=1 // pred_check_branch
      %29 = sbr.rel (0) target = $region5
    $region4: #{cross_encoder_forward.1} parent=1 // pred_region
      _
    $region5: #{cross_encoder_forward.1} parent=1 // pred_fallthru
      _
    // Predicated region
    $region6: #{cross_encoder_forward.1} parent=1 // pred_check
      _
    $region7: #{cross_encoder_forward.1} parent=1 // pred_check_branch
      %31 = sbr.rel (0) target = $region9
    $region8: #{cross_encoder_forward.1} parent=1 // pred_region
      _
    $region9: #{cross_encoder_forward.1} parent=1 // pred_fallthru
      _
    // Predicated region
    $region10: #{cross_encoder_forward.1} parent=1 // pred_check
      _
    $region11: #{cross_encoder_forward.1} parent=1 // pred_check_branch
      %33 = sbr.rel (0) target = $region13
    $region12: #{cross_encoder_forward.1} parent=1 // pred_region
      _
    $region13: #{cross_encoder_forward.1} parent=1 // pred_fallthru
      _
    // Predicated region
    $region14: #{cross_encoder_forward.1} parent=1 // pred_check
      _
    $region15: #{cross_encoder_forward.1} parent=1 // pred_check_branch
      %35 = sbr.rel (0) target = $region17
    $region16: #{cross_encoder_forward.1} parent=1 // pred_region
      _
    $region17: #{cross_encoder_forward.1} parent=1 // pred_fallthru
      _
    // Predicated region
    $region18: #{cross_encoder_forward.1} parent=1 // pred_check
      _
    $region19: #{cross_encoder_forward.1} parent=1 // pred_check_branch
      %37 = sbr.rel (0) target = $region21
    $region20: #{cross_encoder_forward.1} parent=1 // pred_region
      _
    $region21: #{cross_encoder_forward.1} parent=1 // pred_fallthru
      _
    // Predicated region
    $region22: #{cross_encoder_forward.1} parent=1 // pred_check
      _
    $region23: #{cross_encoder_forward.1} parent=1 // pred_check_branch
      %39 = sbr.rel (0) target = $region25
    $region24: #{cross_encoder_forward.1} parent=1 // pred_region
      _
    $region25: #{cross_encoder_forward.1} parent=1 // pred_fallthru
      _
    // Predicated region
    $region26: #{cross_encoder_forward.1} parent=1 // pred_check
      _
    $region27: #{cross_encoder_forward.1} parent=1 // pred_check_branch
      %41 = sbr.rel (0) target = $region29
    $region28: #{cross_encoder_forward.1} parent=1 // pred_region
      _
    $region29: #{cross_encoder_forward.1} parent=1 // pred_fallthru
      _
    // Predicated region
    $region30: #{cross_encoder_forward.1} parent=1 // pred_check
      _
    $region31: #{cross_encoder_forward.1} parent=1 // pred_check_branch
      %43 = sbr.rel (0) target = $region33
    $region32: #{cross_encoder_forward.1} parent=1 // pred_region
      _
    $region33: #{cross_encoder_forward.1} parent=1 // pred_fallthru
      _
    // Predicated region
    $region34: #{cross_encoder_forward.1} parent=1 // pred_check
      _
    $region35: #{cross_encoder_forward.1} parent=1 // pred_check_branch
      %45 = sbr.rel (0) target = $region37
    $region36: #{cross_encoder_forward.1} parent=1 // pred_region
      _
    $region37: #{cross_encoder_forward.1} parent=1 // pred_fallthru
      _
    // Predicated region
    $region38: #{cross_encoder_forward.1} parent=1 // pred_check
      _
    $region39: #{cross_encoder_forward.1} parent=1 // pred_check_branch
      %47 = sbr.rel (0) target = $region41
    $region40: #{cross_encoder_forward.1} parent=1 // pred_region
      _
    $region41: #{cross_encoder_forward.1} parent=1 // pred_fallthru
      _
    // Predicated region
    $region42: #{cross_encoder_forward.1} parent=1 // pred_check
      _
    $region43: #{cross_encoder_forward.1} parent=1 // pred_check_branch
      %49 = sbr.rel (0) target = $region45
    $region44: #{cross_encoder_forward.1} parent=1 // pred_region
      _
    $region45: #{cross_encoder_forward.1} parent=1 // pred_fallthru
      _
    // Predicated region
    $region46: #{cross_encoder_forward.1} parent=1 // pred_check
      _
    $region47: #{cross_encoder_forward.1} parent=1 // pred_check_branch
      %51 = sbr.rel (0) target = $region49
    $region48: #{cross_encoder_forward.1} parent=1 // pred_region
      _
    $region49: #{cross_encoder_forward.1} parent=1 // pred_fallthru
      _
    // Predicated region
    $region50: #{cross_encoder_forward.1} parent=1 // pred_check
      _
    $region51: #{cross_encoder_forward.1} parent=1 // pred_check_branch
      %53 = sbr.rel (0) target = $region53
    $region52: #{cross_encoder_forward.1} parent=1 // pred_region
      _
    $region53: #{cross_encoder_forward.1} parent=1 // pred_fallthru
      _
    // Predicated region
    $region54: #{cross_encoder_forward.1} parent=1 // pred_check
      _
    $region55: #{cross_encoder_forward.1} parent=1 // pred_check_branch
      %55 = sbr.rel (0) target = $region57
    $region56: #{cross_encoder_forward.1} parent=1 // pred_region
      _
    $region57: #{cross_encoder_forward.1} parent=1 // pred_fallthru
      _
    // Predicated region
    $region58: #{cross_encoder_forward.1} parent=1 // pred_check
      _
    $region59: #{cross_encoder_forward.1} parent=1 // pred_check_branch
      %57 = sbr.rel (0) target = $region61
    $region60: #{cross_encoder_forward.1} parent=1 // pred_region
      _
    $region61: #{cross_encoder_forward.1} parent=1 // pred_fallthru
      _
    // Predicated region
    $region62: #{cross_encoder_forward.1} parent=1 // pred_check
      _
    $region63: #{cross_encoder_forward.1} parent=1 // pred_check_branch
      %59 = sbr.rel (0) target = $region65
    $region64: #{cross_encoder_forward.1} parent=1 // pred_region
      _
    $region65: #{cross_encoder_forward.1} parent=1 // pred_fallthru
      _
    %v61 = vld [vmem:[%s0] sm:$0xff]
    %v62 = vld [vmem:[%s0 + $0x8] sm:$0xff]
    %v63 = vld [vmem:[%s0 + $0x10] sm:$0xff]
    %v64 = vld [vmem:[%s0 + $0x18] sm:$0xff]
    %v65 = vld [vmem:[%s0 + $0x20] sm:$0xff]
    %v66 = vld [vmem:[%s0 + $0x28] sm:$0xff]
    %v67 = vld [vmem:[%s0 + $0x30] sm:$0xff]
    %v68 = vld [vmem:[%s0 + $0x38] sm:$0xff]
    %v69 = vld [vmem:[%s3] sm:$0x1]
    %v70 = vld [vmem:[%s3 + $0x1] sm:$0x1]
    %vm71 = vcmask 261120
    %v72 = vsel %vm71, %v61, 0.0
    %73 = vadd.xlane.f32.xlu0 %v72
    %v74 = vpop.xlane.xlu0 %73
    %v75 = vsel %vm71, %v62, 0.0
    %76 = vadd.xlane.f32.xlu0 %v75
    %v77 = vpop.xlane.xlu0 %76
    %v78 = vsel %vm71, %v63, 0.0
    %79 = vadd.xlane.f32.xlu0 %v78
    %v80 = vpop.xlane.xlu0 %79
    %v81 = vsel %vm71, %v64, 0.0
    %82 = vadd.xlane.f32.xlu0 %v81
    %v83 = vpop.xlane.xlu0 %82
    %v84 = vsel %vm71, %v65, 0.0
    %85 = vadd.xlane.f32.xlu0 %v84
    %v86 = vpop.xlane.xlu0 %85
    %v87 = vsel %vm71, %v66, 0.0
    %88 = vadd.xlane.f32.xlu0 %v87
    %v89 = vpop.xlane.xlu0 %88
    %v90 = vsel %vm71, %v67, 0.0
    %91 = vadd.xlane.f32.xlu0 %v90
    %v92 = vpop.xlane.xlu0 %91
    %v93 = vsel %vm71, %v68, 0.0
    %94 = vadd.xlane.f32.xlu0 %v93
    %v95 = vpop.xlane.xlu0 %94
    %v96 = vrcp.pop 32.0
    %v97 = vmul.f32 %v74, %v96
    %v98 = vmul.f32 %v77, %v96
    %v99 = vmul.f32 %v80, %v96
    %v100 = vmul.f32 %v83, %v96
    %v101 = vmul.f32 %v86, %v96
    %v102 = vmul.f32 %v89, %v96
    %v103 = vmul.f32 %v92, %v96
    %v104 = vmul.f32 %v95, %v96
    %v105 = vsub.f32 %v61, %v97
    %v106 = vsub.f32 %v62, %v98
    %v107 = vsub.f32 %v63, %v99
    %v108 = vsub.f32 %v64, %v100
    %v109 = vsub.f32 %v65, %v101
    %v110 = vsub.f32 %v66, %v102
    %v111 = vsub.f32 %v67, %v103
    %v112 = vsub.f32 %v68, %v104
    %v113 = vmul.f32 %v105, %v105
    %v114 = vmul.f32 %v106, %v106
    %v115 = vmul.f32 %v107, %v107
    %v116 = vmul.f32 %v108, %v108
    %v117 = vmul.f32 %v109, %v109
    %v118 = vmul.f32 %v110, %v110
    %v119 = vmul.f32 %v111, %v111
    %v120 = vmul.f32 %v112, %v112
    %v121 = vsel %vm71, %v113, 0.0
    %122 = vadd.xlane.f32.xlu0 %v121
    %v123 = vpop.xlane.xlu0 %122
    %v124 = vsel %vm71, %v114, 0.0
    %125 = vadd.xlane.f32.xlu0 %v124
    %v126 = vpop.xlane.xlu0 %125
    %v127 = vsel %vm71, %v115, 0.0
    %128 = vadd.xlane.f32.xlu0 %v127
    %v129 = vpop.xlane.xlu0 %128
    %v130 = vsel %vm71, %v116, 0.0
    %131 = vadd.xlane.f32.xlu0 %v130
    %v132 = vpop.xlane.xlu0 %131
    %v133 = vsel %vm71, %v117, 0.0
    %134 = vadd.xlane.f32.xlu0 %v133
    %v135 = vpop.xlane.xlu0 %134
    %v136 = vsel %vm71, %v118, 0.0
    %137 = vadd.xlane.f32.xlu0 %v136
    %v138 = vpop.xlane.xlu0 %137
    %v139 = vsel %vm71, %v119, 0.0
    %140 = vadd.xlane.f32.xlu0 %v139
    %v141 = vpop.xlane.xlu0 %140
    %v142 = vsel %vm71, %v120, 0.0
    %143 = vadd.xlane.f32.xlu0 %v142
    %v144 = vpop.xlane.xlu0 %143
    %v145 = vmul.f32 %v123, %v96
    %v146 = vmul.f32 %v126, %v96
    %v147 = vmul.f32 %v129, %v96
    %v148 = vmul.f32 %v132, %v96
    %v149 = vmul.f32 %v135, %v96
    %v150 = vmul.f32 %v138, %v96
    %v151 = vmul.f32 %v141, %v96
    %v152 = vmul.f32 %v144, %v96
    %v153 = vadd.f32 %v145, 1e-12
    %v154 = vadd.f32 %v146, 1e-12
    %v155 = vadd.f32 %v147, 1e-12
    %v156 = vadd.f32 %v148, 1e-12
    %v157 = vadd.f32 %v149, 1e-12
    %v158 = vadd.f32 %v150, 1e-12
    %v159 = vadd.f32 %v151, 1e-12
    %v160 = vadd.f32 %v152, 1e-12
    %v161 = vrsqrt.pop %v153
    %v162 = vrsqrt.pop %v154
    %v163 = vrsqrt.pop %v155
    %v164 = vrsqrt.pop %v156
    %v165 = vrsqrt.pop %v157
    %v166 = vrsqrt.pop %v158
    %v167 = vrsqrt.pop %v159
    %v168 = vrsqrt.pop %v160
    %v169 = vmul.f32 %v105, %v161
    %v170 = vmul.f32 %v106, %v162
    %v171 = vmul.f32 %v107, %v163
    %v172 = vmul.f32 %v108, %v164
    %v173 = vmul.f32 %v109, %v165
    %v174 = vmul.f32 %v110, %v166
    %v175 = vmul.f32 %v111, %v167
    %v176 = vmul.f32 %v112, %v168
    %v177 = vlaneseq
    %v178 = vshrl.u32 %v177, 7
    %v179 = vsub.s32 0, %v178
    %v180 = vrot.slane %v69, %v179
    %v181 = vmul.f32 %v169, %v180
    %v182 = vmul.f32 %v170, %v180
    %v183 = vmul.f32 %v171, %v180
    %v184 = vmul.f32 %v172, %v180
    %v185 = vmul.f32 %v173, %v180
    %v186 = vmul.f32 %v174, %v180
    %v187 = vmul.f32 %v175, %v180
    %v188 = vmul.f32 %v176, %v180
    %v189 = vlaneseq
    %v190 = vshrl.u32 %v189, 7
    %v191 = vsub.s32 0, %v190
    %v192 = vrot.slane %v70, %v191
    %v193 = vadd.f32 %v181, %v192
    %v194 = vadd.f32 %v182, %v192
    %v195 = vadd.f32 %v183, %v192
    %v196 = vadd.f32 %v184, %v192
    %v197 = vadd.f32 %v185, %v192
    %v198 = vadd.f32 %v186, %v192
    %v199 = vadd.f32 %v187, %v192
    %v200 = vadd.f32 %v188, %v192
    %v201 = vld [vmem:[%s4] sm:$0xff]
    %v202 = vld [vmem:[%s4 + $0x8] sm:$0xff]
    %v203 = vld [vmem:[%s4 + $0x10] sm:$0xff]
    %v204 = vld [vmem:[%s4 + $0x18] sm:$0xff]
    %v205 = vpack.c.bf16 %v194, %v193
    %v206 = vpack.c.bf16 %v196, %v195
    %v207 = vpack.c.bf16 %v198, %v197
    %v208 = vpack.c.bf16 %v200, %v199
    %v209 = vpack.c.bf16 %v202, %v201
    %v210 = vpack.c.bf16 %v204, %v203
    %v211 = vld [vmem:[%s5] sm:$0x1]
    %v213 = vlaneseq
    %v214 = vshrl.u32 %v213, 7
    %v215 = vsub.s32 0, %v214
    %v216 = vrot.slane %v211, %v215
    %v219 = vsel %vm71, %v205, 0
    %v222 = vsel %vm71, %v206, 0
    %v225 = vsel %vm71, %v207, 0
    %v228 = vsel %vm71, %v208, 0
    %230 = vmatprep.subr.bf16.mxu0 0
    %231 = vmatpush1.bf16.msra.mxu0 %v209
    %232 = vmatprep.subr.bf16.mxu0 0
    %233 = vmatpush1.bf16.msra.mxu0 %v210
    %234 = vmatprep.subr.bf16.mxu0 0
    %235 = vmatpush1.bf16.msra.mxu0 0
    %236 = vmatprep.subr.bf16.mxu0 0
    %237 = vmatpush1.bf16.msra.mxu0 0
    %238 = vmatprep.subr.bf16.mxu0 0
    %239 = vmatpush1.bf16.msra.mxu0 0
    %240 = vmatprep.subr.bf16.mxu0 0
    %241 = vmatpush1.bf16.msra.mxu0 0
    %242 = vmatprep.subr.bf16.mxu0 0
    %243 = vmatpush1.bf16.msra.mxu0 0
    %244 = vmatprep.subr.bf16.mxu0 0
    %245 = vmatpush1.bf16.msra.mxu0 0
    %246 = vmatprep.subr.bf16.mxu0 0
    %247 = vmatpush1.bf16.msra.mxu0 0
    %248 = vmatprep.subr.bf16.mxu0 0
    %249 = vmatpush1.bf16.msra.mxu0 0
    %250 = vmatprep.subr.bf16.mxu0 0
    %251 = vmatpush1.bf16.msra.mxu0 0
    %252 = vmatprep.subr.bf16.mxu0 0
    %253 = vmatpush1.bf16.msra.mxu0 0
    %254 = vmatprep.subr.bf16.mxu0 0
    %255 = vmatpush1.bf16.msra.mxu0 0
    %256 = vmatprep.subr.bf16.mxu0 0
    %257 = vmatpush1.bf16.msra.mxu0 0
    %258 = vmatprep.subr.bf16.mxu0 0
    %259 = vmatpush1.bf16.msra.mxu0 0
    %260 = vmatprep.subr.bf16.mxu0 0
    %261 = vmatpush1.bf16.msra.mxu0 0
    %262 = vmatprep.mubr.bf16.mxu0 0
    %263 = vmatmul.mubr.bf16.gmra.mrb[0].mxu0 %v219
    %v264 = vpop.f32.mrb[0].mxu0
    %v265 = vadd.f32 %v216, %v264
    %v266 = vpop.f32.mrb[0].mxu0
    %v267 = vpop.f32.mrb[0].mxu0
    %v268 = vadd.f32 %v216, %v267
    %v269 = vpop.f32.mrb[0].mxu0
    %270 = vmatprep.mubr.bf16.mxu0 0
    %271 = vmatmul.mubr.bf16.gmra.mrb[0].mxu0 %v222
    %v272 = vpop.f32.mrb[0].mxu0
    %v273 = vadd.f32 %v216, %v272
    %v274 = vpop.f32.mrb[0].mxu0
    %v275 = vpop.f32.mrb[0].mxu0
    %v276 = vadd.f32 %v216, %v275
    %v277 = vpop.f32.mrb[0].mxu0
    %278 = vmatprep.mubr.bf16.mxu0 0
    %279 = vmatmul.mubr.bf16.gmra.mrb[0].mxu0 %v225
    %v280 = vpop.f32.mrb[0].mxu0
    %v281 = vadd.f32 %v216, %v280
    %v282 = vpop.f32.mrb[0].mxu0
    %v283 = vpop.f32.mrb[0].mxu0
    %v284 = vadd.f32 %v216, %v283
    %v285 = vpop.f32.mrb[0].mxu0
    %286 = vmatprep.mubr.bf16.mxu0 0
    %287 = vmatmul.mubr.bf16.gmra.mrb[0].mxu0 %v228
    %v288 = vpop.f32.mrb[0].mxu0
    %v289 = vadd.f32 %v216, %v288
    %v290 = vpop.f32.mrb[0].mxu0
    %v291 = vpop.f32.mrb[0].mxu0
    %v292 = vadd.f32 %v216, %v291
    %v293 = vpop.f32.mrb[0].mxu0
    %294 = vdwg.mxu0
    %v295 = vld [vmem:[%s1] sm:$0x1]
    %v296 = vpack.c.bf16 %v265, %v265
    %298 = vrot.lane.b32.xlu0 %v296, 96
    %v299 = vpop.permute.xlu0 %298
    %vm300 = vcmask 130048
    %v302 = vsel %vm300, %v296, 0
    %v305 = vsel %vm300, %v299, 0
    %307 = vmatprep.subr.bf16.mxu0 0
    %308 = vmatpush1.bf16.xpose.msra.mxu0 %v305
    %309 = vmatprep.subr.bf16.mxu0 0
    %310 = vmatpush1.bf16.xpose.msra.mxu0 0
    %311 = vmatprep.subr.bf16.mxu0 0
    %312 = vmatpush1.bf16.xpose.msra.mxu0 0
    %313 = vmatprep.subr.bf16.mxu0 0
    %314 = vmatpush1.bf16.xpose.msra.mxu0 0
    %315 = vmatprep.subr.bf16.mxu0 0
    %316 = vmatpush1.bf16.xpose.msra.mxu0 0
    %317 = vmatprep.subr.bf16.mxu0 0
    %318 = vmatpush1.bf16.xpose.msra.mxu0 0
    %319 = vmatprep.subr.bf16.mxu0 0
    %320 = vmatpush1.bf16.xpose.msra.mxu0 0
    %321 = vmatprep.subr.bf16.mxu0 0
    %322 = vmatpush1.bf16.xpose.msra.mxu0 0
    %323 = vmatprep.subr.bf16.mxu0 0
    %324 = vmatpush1.bf16.xpose.msra.mxu0 0
    %325 = vmatprep.subr.bf16.mxu0 0
    %326 = vmatpush1.bf16.xpose.msra.mxu0 0
    %327 = vmatprep.subr.bf16.mxu0 0
    %328 = vmatpush1.bf16.xpose.msra.mxu0 0
    %329 = vmatprep.subr.bf16.mxu0 0
    %330 = vmatpush1.bf16.xpose.msra.mxu0 0
    %331 = vmatprep.subr.bf16.mxu0 0
    %332 = vmatpush1.bf16.xpose.msra.mxu0 0
    %333 = vmatprep.subr.bf16.mxu0 0
    %334 = vmatpush1.bf16.xpose.msra.mxu0 0
    %335 = vmatprep.subr.bf16.mxu0 0
    %336 = vmatpush1.bf16.xpose.msra.mxu0 0
    %337 = vmatprep.subr.bf16.mxu0 0
    %338 = vmatpush1.bf16.xpose.msra.mxu0 0
    %339 = vmatprep.mubr.bf16.mxu0 0
    %340 = vmatmul.mubr.bf16.gmra.mrb[0].mxu0 %v302
    %v341 = vpop.f32.mrb[0].mxu0
    %v342 = vadd.f32 0.0, %v341
    %v343 = vpop.f32.mrb[0].mxu0
    %v344 = vpop.f32.mrb[0].mxu0
    %v345 = vpop.f32.mrb[0].mxu0
    %346 = vdwg.mxu0
    %v347 = vmul.f32 %v342, 0.25
    %v348 = vlaneseq
    %v349 = vshrl.u32 %v348, 7
    %v350 = vsub.s32 0, %v349
    %v351 = vrot.slane %v295, %v350
    %v352 = vadd.f32 %v347, %v351
    %vm353 = vcmask 64512
    %v354 = vsel %vm353, %v352, -inf
    %355 = vmax.xlane.f32.xlu0 %v354
    %v356 = vpop.xlane.xlu0 %355
    %v357 = vsub.f32 %v352, %v356
    %v358 = vmul.f32 %v357, 1.442695
    %v359 = vpow.pop %v358
    %v360 = vsel %vm353, %v359, 0.0
    %361 = vadd.xlane.f32.xlu0 %v360
    %v362 = vpop.xlane.xlu0 %361
    %v363 = vrcp.pop %v362
    %v364 = vmul.f32 %v359, %v363
    %v365 = vpack.c.bf16 %v364, %v364
    %366 = vrot.lane.b32.xlu0 %v296, 64
    %v367 = vpop.permute.xlu0 %366
    %v369 = vsel %vm353, %v365, 0
    %vm371 = vcmask 1043456
    %v373 = vsel %vm371, %v367, 0
    %375 = vmatprep.subr.bf16.mxu0 0
    %376 = vmatpush1.bf16.msra.mxu0 %v373
    %377 = vmatprep.subr.bf16.mxu0 0
    %378 = vmatpush1.bf16.msra.mxu0 0
    %379 = vmatprep.subr.bf16.mxu0 0
    %380 = vmatpush1.bf16.msra.mxu0 0
    %381 = vmatprep.subr.bf16.mxu0 0
    %382 = vmatpush1.bf16.msra.mxu0 0
    %383 = vmatprep.subr.bf16.mxu0 0
    %384 = vmatpush1.bf16.msra.mxu0 0
    %385 = vmatprep.subr.bf16.mxu0 0
    %386 = vmatpush1.bf16.msra.mxu0 0
    %387 = vmatprep.subr.bf16.mxu0 0
    %388 = vmatpush1.bf16.msra.mxu0 0
    %389 = vmatprep.subr.bf16.mxu0 0
    %390 = vmatpush1.bf16.msra.mxu0 0
    %391 = vmatprep.subr.bf16.mxu0 0
    %392 = vmatpush1.bf16.msra.mxu0 0
    %393 = vmatprep.subr.bf16.mxu0 0
    %394 = vmatpush1.bf16.msra.mxu0 0
    %395 = vmatprep.subr.bf16.mxu0 0
    %396 = vmatpush1.bf16.msra.mxu0 0
    %397 = vmatprep.subr.bf16.mxu0 0
    %398 = vmatpush1.bf16.msra.mxu0 0
    %399 = vmatprep.subr.bf16.mxu0 0
    %400 = vmatpush1.bf16.msra.mxu0 0
    %401 = vmatprep.subr.bf16.mxu0 0
    %402 = vmatpush1.bf16.msra.mxu0 0
    %403 = vmatprep.subr.bf16.mxu0 0
    %404 = vmatpush1.bf16.msra.mxu0 0
    %405 = vmatprep.subr.bf16.mxu0 0
    %406 = vmatpush1.bf16.msra.mxu0 0
    %407 = vmatprep.mubr.bf16.mxu0 0
    %408 = vmatmul.mubr.bf16.gmra.mrb[0].mxu0 %v369
    %v409 = vpop.f32.mrb[0].mxu0
    %v410 = vadd.f32 0.0, %v409
    %v411 = vpop.f32.mrb[0].mxu0
    %v412 = vpop.f32.mrb[0].mxu0
    %v413 = vpop.f32.mrb[0].mxu0
    %414 = vdwg.mxu0
    %415 = vst.msk [vmem:[#allocation2] sm:$0xff] %vm300, %v410
    %416 = vrot.lane.b32.xlu0 %v296, 112
    %v417 = vpop.permute.xlu0 %416
    %418 = vrot.lane.b32.xlu0 %v296, 80
    %v419 = vpop.permute.xlu0 %418
    %v421 = vsel %vm300, %v417, 0
    %v424 = vsel %vm300, %v419, 0
    %426 = vmatprep.subr.bf16.mxu0 0
    %427 = vmatpush1.bf16.xpose.msra.mxu0 %v424
    %428 = vmatprep.subr.bf16.mxu0 0
    %429 = vmatpush1.bf16.xpose.msra.mxu0 0
    %430 = vmatprep.subr.bf16.mxu0 0
    %431 = vmatpush1.bf16.xpose.msra.mxu0 0
    %432 = vmatprep.subr.bf16.mxu0 0
    %433 = vmatpush1.bf16.xpose.msra.mxu0 0
    %434 = vmatprep.subr.bf16.mxu0 0
    %435 = vmatpush1.bf16.xpose.msra.mxu0 0
    %436 = vmatprep.subr.bf16.mxu0 0
    %437 = vmatpush1.bf16.xpose.msra.mxu0 0
    %438 = vmatprep.subr.bf16.mxu0 0
    %439 = vmatpush1.bf16.xpose.msra.mxu0 0
    %440 = vmatprep.subr.bf16.mxu0 0
    %441 = vmatpush1.bf16.xpose.msra.mxu0 0
    %442 = vmatprep.subr.bf16.mxu0 0
    %443 = vmatpush1.bf16.xpose.msra.mxu0 0
    %444 = vmatprep.subr.bf16.mxu0 0
    %445 = vmatpush1.bf16.xpose.msra.mxu0 0
    %446 = vmatprep.subr.bf16.mxu0 0
    %447 = vmatpush1.bf16.xpose.msra.mxu0 0
    %448 = vmatprep.subr.bf16.mxu0 0
    %449 = vmatpush1.bf16.xpose.msra.mxu0 0
    %450 = vmatprep.subr.bf16.mxu0 0
    %451 = vmatpush1.bf16.xpose.msra.mxu0 0
    %452 = vmatprep.subr.bf16.mxu0 0
    %453 = vmatpush1.bf16.xpose.msra.mxu0 0
    %454 = vmatprep.subr.bf16.mxu0 0
    %455 = vmatpush1.bf16.xpose.msra.mxu0 0
    %456 = vmatprep.subr.bf16.mxu0 0
    %457 = vmatpush1.bf16.xpose.msra.mxu0 0
    %458 = vmatprep.mubr.bf16.mxu0 0
    %459 = vmatmul.mubr.bf16.gmra.mrb[0].mxu0 %v421
    %v460 = vpop.f32.mrb[0].mxu0
    %v461 = vadd.f32 0.0, %v460
    %v462 = vpop.f32.mrb[0].mxu0
    %v463 = vpop.f32.mrb[0].mxu0
    %v464 = vpop.f32.mrb[0].mxu0
    %465 = vdwg.mxu0
    %v466 = vmul.f32 %v461, 0.25
    %v467 = vadd.f32 %v466, %v351
    %v468 = vsel %vm353, %v467, -inf
    %469 = vmax.xlane.f32.xlu0 %v468
    %v470 = vpop.xlane.xlu0 %469
    %v471 = vsub.f32 %v467, %v470
    %v472 = vmul.f32 %v471, 1.442695
    %v473 = vpow.pop %v472
    %v474 = vsel %vm353, %v473, 0.0
    %475 = vadd.xlane.f32.xlu0 %v474
    %v476 = vpop.xlane.xlu0 %475
    %v477 = vrcp.pop %v476
    %v478 = vmul.f32 %v473, %v477
    %v479 = vpack.c.bf16 %v478, %v478
    %480 = vrot.lane.b32.xlu0 %v296, 48
    %v481 = vpop.permute.xlu0 %480
    %v483 = vsel %vm353, %v479, 0
    %v486 = vsel %vm371, %v481, 0
    %488 = vmatprep.subr.bf16.mxu0 0
    %489 = vmatpush1.bf16.msra.mxu0 %v486
    %490 = vmatprep.subr.bf16.mxu0 0
    %491 = vmatpush1.bf16.msra.mxu0 0
    %492 = vmatprep.subr.bf16.mxu0 0
    %493 = vmatpush1.bf16.msra.mxu0 0
    %494 = vmatprep.subr.bf16.mxu0 0
    %495 = vmatpush1.bf16.msra.mxu0 0
    %496 = vmatprep.subr.bf16.mxu0 0
    %497 = vmatpush1.bf16.msra.mxu0 0
    %498 = vmatprep.subr.bf16.mxu0 0
    %499 = vmatpush1.bf16.msra.mxu0 0
    %500 = vmatprep.subr.bf16.mxu0 0
    %501 = vmatpush1.bf16.msra.mxu0 0
    %502 = vmatprep.subr.bf16.mxu0 0
    %503 = vmatpush1.bf16.msra.mxu0 0
    %504 = vmatprep.subr.bf16.mxu0 0
    %505 = vmatpush1.bf16.msra.mxu0 0
    %506 = vmatprep.subr.bf16.mxu0 0
    %507 = vmatpush1.bf16.msra.mxu0 0
    %508 = vmatprep.subr.bf16.mxu0 0
    %509 = vmatpush1.bf16.msra.mxu0 0
    %510 = vmatprep.subr.bf16.mxu0 0
    %511 = vmatpush1.bf16.msra.mxu0 0
    %512 = vmatprep.subr.bf16.mxu0 0
    %513 = vmatpush1.bf16.msra.mxu0 0
    %514 = vmatprep.subr.bf16.mxu0 0
    %515 = vmatpush1.bf16.msra.mxu0 0
    %516 = vmatprep.subr.bf16.mxu0 0
    %517 = vmatpush1.bf16.msra.mxu0 0
    %518 = vmatprep.subr.bf16.mxu0 0
    %519 = vmatpush1.bf16.msra.mxu0 0
    %520 = vmatprep.mubr.bf16.mxu0 0
    %521 = vmatmul.mubr.bf16.gmra.mrb[0].mxu0 %v483
    %v522 = vpop.f32.mrb[0].mxu0
    %v523 = vadd.f32 0.0, %v522
    %v524 = vpop.f32.mrb[0].mxu0
    %v525 = vpop.f32.mrb[0].mxu0
    %v526 = vpop.f32.mrb[0].mxu0
    %527 = vdwg.mxu0
    %529 = vrot.lane.b32.xlu0 %v523, 16
    %v530 = vpop.permute.xlu0 %529
    %vm532 = vcmask 261248
    %533 = vst.msk [vmem:[#allocation2] sm:$0xff] %vm532, %v530
    %v534 = vld [vmem:[%s1 + $0x1] sm:$0x1]
    %v535 = vpack.c.bf16 %v268, %v268
    %537 = vrot.lane.b32.xlu0 %v535, 96
    %v538 = vpop.permute.xlu0 %537
    %v540 = vsel %vm300, %v535, 0
    %v543 = vsel %vm300, %v538, 0
    %545 = vmatprep.subr.bf16.mxu0 0
    %546 = vmatpush1.bf16.xpose.msra.mxu0 %v543
    %547 = vmatprep.subr.bf16.mxu0 0
    %548 = vmatpush1.bf16.xpose.msra.mxu0 0
    %549 = vmatprep.subr.bf16.mxu0 0
    %550 = vmatpush1.bf16.xpose.msra.mxu0 0
    %551 = vmatprep.subr.bf16.mxu0 0
    %552 = vmatpush1.bf16.xpose.msra.mxu0 0
    %553 = vmatprep.subr.bf16.mxu0 0
    %554 = vmatpush1.bf16.xpose.msra.mxu0 0
    %555 = vmatprep.subr.bf16.mxu0 0
    %556 = vmatpush1.bf16.xpose.msra.mxu0 0
    %557 = vmatprep.subr.bf16.mxu0 0
    %558 = vmatpush1.bf16.xpose.msra.mxu0 0
    %559 = vmatprep.subr.bf16.mxu0 0
    %560 = vmatpush1.bf16.xpose.msra.mxu0 0
    %561 = vmatprep.subr.bf16.mxu0 0
    %562 = vmatpush1.bf16.xpose.msra.mxu0 0
    %563 = vmatprep.subr.bf16.mxu0 0
    %564 = vmatpush1.bf16.xpose.msra.mxu0 0
    %565 = vmatprep.subr.bf16.mxu0 0
    %566 = vmatpush1.bf16.xpose.msra.mxu0 0
    %567 = vmatprep.subr.bf16.mxu0 0
    %568 = vmatpush1.bf16.xpose.msra.mxu0 0
    %569 = vmatprep.subr.bf16.mxu0 0
    %570 = vmatpush1.bf16.xpose.msra.mxu0 0
    %571 = vmatprep.subr.bf16.mxu0 0
    %572 = vmatpush1.bf16.xpose.msra.mxu0 0
    %573 = vmatprep.subr.bf16.mxu0 0
    %574 = vmatpush1.bf16.xpose.msra.mxu0 0
    %575 = vmatprep.subr.bf16.mxu0 0
    %576 = vmatpush1.bf16.xpose.msra.mxu0 0
    %577 = vmatprep.mubr.bf16.mxu0 0
    %578 = vmatmul.mubr.bf16.gmra.mrb[0].mxu0 %v540
    %v579 = vpop.f32.mrb[0].mxu0
    %v580 = vadd.f32 0.0, %v579
    %v581 = vpop.f32.mrb[0].mxu0
    %v582 = vpop.f32.mrb[0].mxu0
    %v583 = vpop.f32.mrb[0].mxu0
    %584 = vdwg.mxu0
    %v585 = vmul.f32 %v580, 0.25
    %v586 = vlaneseq
    %v587 = vshrl.u32 %v586, 7
    %v588 = vsub.s32 0, %v587
    %v589 = vrot.slane %v534, %v588
    %v590 = vadd.f32 %v585, %v589
    %v591 = vsel %vm353, %v590, -inf
    %592 = vmax.xlane.f32.xlu0 %v591
    %v593 = vpop.xlane.xlu0 %592
    %v594 = vsub.f32 %v590, %v593
    %v595 = vmul.f32 %v594, 1.442695
    %v596 = vpow.pop %v595
    %v597 = vsel %vm353, %v596, 0.0
    %598 = vadd.xlane.f32.xlu0 %v597
    %v599 = vpop.xlane.xlu0 %598
    %v600 = vrcp.pop %v599
    %v601 = vmul.f32 %v596, %v600
    %v602 = vpack.c.bf16 %v601, %v601
    %603 = vrot.lane.b32.xlu0 %v535, 64
    %v604 = vpop.permute.xlu0 %603
    %v606 = vsel %vm353, %v602, 0
    %v609 = vsel %vm371, %v604, 0
    %611 = vmatprep.subr.bf16.mxu0 0
    %612 = vmatpush1.bf16.msra.mxu0 %v609
    %613 = vmatprep.subr.bf16.mxu0 0
    %614 = vmatpush1.bf16.msra.mxu0 0
    %615 = vmatprep.subr.bf16.mxu0 0
    %616 = vmatpush1.bf16.msra.mxu0 0
    %617 = vmatprep.subr.bf16.mxu0 0
    %618 = vmatpush1.bf16.msra.mxu0 0
    %619 = vmatprep.subr.bf16.mxu0 0
    %620 = vmatpush1.bf16.msra.mxu0 0
    %621 = vmatprep.subr.bf16.mxu0 0
    %622 = vmatpush1.bf16.msra.mxu0 0
    %623 = vmatprep.subr.bf16.mxu0 0
    %624 = vmatpush1.bf16.msra.mxu0 0
    %625 = vmatprep.subr.bf16.mxu0 0
    %626 = vmatpush1.bf16.msra.mxu0 0
    %627 = vmatprep.subr.bf16.mxu0 0
    %628 = vmatpush1.bf16.msra.mxu0 0
    %629 = vmatprep.subr.bf16.mxu0 0
    %630 = vmatpush1.bf16.msra.mxu0 0
    %631 = vmatprep.subr.bf16.mxu0 0
    %632 = vmatpush1.bf16.msra.mxu0 0
    %633 = vmatprep.subr.bf16.mxu0 0
    %634 = vmatpush1.bf16.msra.mxu0 0
    %635 = vmatprep.subr.bf16.mxu0 0
    %636 = vmatpush1.bf16.msra.mxu0 0
    %637 = vmatprep.subr.bf16.mxu0 0
    %638 = vmatpush1.bf16.msra.mxu0 0
    %639 = vmatprep.subr.bf16.mxu0 0
    %640 = vmatpush1.bf16.msra.mxu0 0
    %641 = vmatprep.subr.bf16.mxu0 0
    %642 = vmatpush1.bf16.msra.mxu0 0
    %643 = vmatprep.mubr.bf16.mxu0 0
    %644 = vmatmul.mubr.bf16.gmra.mrb[0].mxu0 %v606
    %v645 = vpop.f32.mrb[0].mxu0
    %v646 = vadd.f32 0.0, %v645
    %v647 = vpop.f32.mrb[0].mxu0
    %v648 = vpop.f32.mrb[0].mxu0
    %v649 = vpop.f32.mrb[0].mxu0
    %650 = vdwg.mxu0
    %651 = vst.msk [vmem:[#allocation2 + $0x8] sm:$0xff] %vm300, %v646
    %652 = vrot.lane.b32.xlu0 %v535, 112
    %v653 = vpop.permute.xlu0 %652
    %654 = vrot.lane.b32.xlu0 %v535, 80
    %v655 = vpop.permute.xlu0 %654
    %v657 = vsel %vm300, %v653, 0
    %v660 = vsel %vm300, %v655, 0
    %662 = vmatprep.subr.bf16.mxu0 0
    %663 = vmatpush1.bf16.xpose.msra.mxu0 %v660
    %664 = vmatprep.subr.bf16.mxu0 0
    %665 = vmatpush1.bf16.xpose.msra.mxu0 0
    %666 = vmatprep.subr.bf16.mxu0 0
    %667 = vmatpush1.bf16.xpose.msra.mxu0 0
    %668 = vmatprep.subr.bf16.mxu0 0
    %669 = vmatpush1.bf16.xpose.msra.mxu0 0
    %670 = vmatprep.subr.bf16.mxu0 0
    %671 = vmatpush1.bf16.xpose.msra.mxu0 0
    %672 = vmatprep.subr.bf16.mxu0 0
    %673 = vmatpush1.bf16.xpose.msra.mxu0 0
    %674 = vmatprep.subr.bf16.mxu0 0
    %675 = vmatpush1.bf16.xpose.msra.mxu0 0
    %676 = vmatprep.subr.bf16.mxu0 0
    %677 = vmatpush1.bf16.xpose.msra.mxu0 0
    %678 = vmatprep.subr.bf16.mxu0 0
    %679 = vmatpush1.bf16.xpose.msra.mxu0 0
    %680 = vmatprep.subr.bf16.mxu0 0
    %681 = vmatpush1.bf16.xpose.msra.mxu0 0
    %682 = vmatprep.subr.bf16.mxu0 0
    %683 = vmatpush1.bf16.xpose.msra.mxu0 0
    %684 = vmatprep.subr.bf16.mxu0 0
    %685 = vmatpush1.bf16.xpose.msra.mxu0 0
    %686 = vmatprep.subr.bf16.mxu0 0
    %687 = vmatpush1.bf16.xpose.msra.mxu0 0
    %688 = vmatprep.subr.bf16.mxu0 0
    %689 = vmatpush1.bf16.xpose.msra.mxu0 0
    %690 = vmatprep.subr.bf16.mxu0 0
    %691 = vmatpush1.bf16.xpose.msra.mxu0 0
    %692 = vmatprep.subr.bf16.mxu0 0
    %693 = vmatpush1.bf16.xpose.msra.mxu0 0
    %694 = vmatprep.mubr.bf16.mxu0 0
    %695 = vmatmul.mubr.bf16.gmra.mrb[0].mxu0 %v657
    %v696 = vpop.f32.mrb[0].mxu0
    %v697 = vadd.f32 0.0, %v696
    %v698 = vpop.f32.mrb[0].mxu0
    %v699 = vpop.f32.mrb[0].mxu0
    %v700 = vpop.f32.mrb[0].mxu0
    %701 = vdwg.mxu0
    %v702 = vmul.f32 %v697, 0.25
    %v703 = vadd.f32 %v702, %v589
    %v704 = vsel %vm353, %v703, -inf
    %705 = vmax.xlane.f32.xlu0 %v704
    %v706 = vpop.xlane.xlu0 %705
    %v707 = vsub.f32 %v703, %v706
    %v708 = vmul.f32 %v707, 1.442695
    %v709 = vpow.pop %v708
    %v710 = vsel %vm353, %v709, 0.0
    %711 = vadd.xlane.f32.xlu0 %v710
    %v712 = vpop.xlane.xlu0 %711
    %v713 = vrcp.pop %v712
    %v714 = vmul.f32 %v709, %v713
    %v715 = vpack.c.bf16 %v714, %v714
    %716 = vrot.lane.b32.xlu0 %v535, 48
    %v717 = vpop.permute.xlu0 %716
    %v719 = vsel %vm353, %v715, 0
    %v722 = vsel %vm371, %v717, 0
    %724 = vmatprep.subr.bf16.mxu0 0
    %725 = vmatpush1.bf16.msra.mxu0 %v722
    %726 = vmatprep.subr.bf16.mxu0 0
    %727 = vmatpush1.bf16.msra.mxu0 0
    %728 = vmatprep.subr.bf16.mxu0 0
    %729 = vmatpush1.bf16.msra.mxu0 0
    %730 = vmatprep.subr.bf16.mxu0 0
    %731 = vmatpush1.bf16.msra.mxu0 0
    %732 = vmatprep.subr.bf16.mxu0 0
    %733 = vmatpush1.bf16.msra.mxu0 0
    %734 = vmatprep.subr.bf16.mxu0 0
    %735 = vmatpush1.bf16.msra.mxu0 0
    %736 = vmatprep.subr.bf16.mxu0 0
    %737 = vmatpush1.bf16.msra.mxu0 0
    %738 = vmatprep.subr.bf16.mxu0 0
    %739 = vmatpush1.bf16.msra.mxu0 0
    %740 = vmatprep.subr.bf16.mxu0 0
    %741 = vmatpush1.bf16.msra.mxu0 0
    %742 = vmatprep.subr.bf16.mxu0 0
    %743 = vmatpush1.bf16.msra.mxu0 0
    %744 = vmatprep.subr.bf16.mxu0 0
    %745 = vmatpush1.bf16.msra.mxu0 0
    %746 = vmatprep.subr.bf16.mxu0 0
    %747 = vmatpush1.bf16.msra.mxu0 0
    %748 = vmatprep.subr.bf16.mxu0 0
    %749 = vmatpush1.bf16.msra.mxu0 0
    %750 = vmatprep.subr.bf16.mxu0 0
    %751 = vmatpush1.bf16.msra.mxu0 0
    %752 = vmatprep.subr.bf16.mxu0 0
    %753 = vmatpush1.bf16.msra.mxu0 0
    %754 = vmatprep.subr.bf16.mxu0 0
    %755 = vmatpush1.bf16.msra.mxu0 0
    %756 = vmatprep.mubr.bf16.mxu0 0
    %757 = vmatmul.mubr.bf16.gmra.mrb[0].mxu0 %v719
    %v758 = vpop.f32.mrb[0].mxu0
    %v759 = vadd.f32 0.0, %v758
    %v760 = vpop.f32.mrb[0].mxu0
    %v761 = vpop.f32.mrb[0].mxu0
    %v762 = vpop.f32.mrb[0].mxu0
    %763 = vdwg.mxu0
    %765 = vrot.lane.b32.xlu0 %v759, 16
    %v766 = vpop.permute.xlu0 %765
    %768 = vst.msk [vmem:[#allocation2 + $0x8] sm:$0xff] %vm532, %v766
    %v769 = vld [vmem:[%s1 + $0x2] sm:$0x1]
    %v770 = vpack.c.bf16 %v273, %v273
    %772 = vrot.lane.b32.xlu0 %v770, 96
    %v773 = vpop.permute.xlu0 %772
    %v775 = vsel %vm300, %v770, 0
    %v778 = vsel %vm300, %v773, 0
    %780 = vmatprep.subr.bf16.mxu0 0
    %781 = vmatpush1.bf16.xpose.msra.mxu0 %v778
    %782 = vmatprep.subr.bf16.mxu0 0
    %783 = vmatpush1.bf16.xpose.msra.mxu0 0
    %784 = vmatprep.subr.bf16.mxu0 0
    %785 = vmatpush1.bf16.xpose.msra.mxu0 0
    %786 = vmatprep.subr.bf16.mxu0 0
    %787 = vmatpush1.bf16.xpose.msra.mxu0 0
    %788 = vmatprep.subr.bf16.mxu0 0
    %789 = vmatpush1.bf16.xpose.msra.mxu0 0
    %790 = vmatprep.subr.bf16.mxu0 0
    %791 = vmatpush1.bf16.xpose.msra.mxu0 0
    %792 = vmatprep.subr.bf16.mxu0 0
    %793 = vmatpush1.bf16.xpose.msra.mxu0 0
    %794 = vmatprep.subr.bf16.mxu0 0
    %795 = vmatpush1.bf16.xpose.msra.mxu0 0
    %796 = vmatprep.subr.bf16.mxu0 0
    %797 = vmatpush1.bf16.xpose.msra.mxu0 0
    %798 = vmatprep.subr.bf16.mxu0 0
    %799 = vmatpush1.bf16.xpose.msra.mxu0 0
    %800 = vmatprep.subr.bf16.mxu0 0
    %801 = vmatpush1.bf16.xpose.msra.mxu0 0
    %802 = vmatprep.subr.bf16.mxu0 0
    %803 = vmatpush1.bf16.xpose.msra.mxu0 0
    %804 = vmatprep.subr.bf16.mxu0 0
    %805 = vmatpush1.bf16.xpose.msra.mxu0 0
    %806 = vmatprep.subr.bf16.mxu0 0
    %807 = vmatpush1.bf16.xpose.msra.mxu0 0
    %808 = vmatprep.subr.bf16.mxu0 0
    %809 = vmatpush1.bf16.xpose.msra.mxu0 0
    %810 = vmatprep.subr.bf16.mxu0 0
    %811 = vmatpush1.bf16.xpose.msra.mxu0 0
    %812 = vmatprep.mubr.bf16.mxu0 0
    %813 = vmatmul.mubr.bf16.gmra.mrb[0].mxu0 %v775
    %v814 = vpop.f32.mrb[0].mxu0
    %v815 = vadd.f32 0.0, %v814
    %v816 = vpop.f32.mrb[0].mxu0
    %v817 = vpop.f32.mrb[0].mxu0
    %v818 = vpop.f32.mrb[0].mxu0
    %819 = vdwg.mxu0
    %v820 = vmul.f32 %v815, 0.25
    %v821 = vlaneseq
    %v822 = vshrl.u32 %v821, 7
    %v823 = vsub.s32 0, %v822
    %v824 = vrot.slane %v769, %v823
    %v825 = vadd.f32 %v820, %v824
    %v826 = vsel %vm353, %v825, -inf
    %827 = vmax.xlane.f32.xlu0 %v826
    %v828 = vpop.xlane.xlu0 %827
    %v829 = vsub.f32 %v825, %v828
    %v830 = vmul.f32 %v829, 1.442695
    %v831 = vpow.pop %v830
    %v832 = vsel %vm353, %v831, 0.0
    %833 = vadd.xlane.f32.xlu0 %v832
    %v834 = vpop.xlane.xlu0 %833
    %v835 = vrcp.pop %v834
    %v836 = vmul.f32 %v831, %v835
    %v837 = vpack.c.bf16 %v836, %v836
    %838 = vrot.lane.b32.xlu0 %v770, 64
    %v839 = vpop.permute.xlu0 %838
    %v841 = vsel %vm353, %v837, 0
    %v844 = vsel %vm371, %v839, 0
    %846 = vmatprep.subr.bf16.mxu0 0
    %847 = vmatpush1.bf16.msra.mxu0 %v844
    %848 = vmatprep.subr.bf16.mxu0 0
    %849 = vmatpush1.bf16.msra.mxu0 0
    %850 = vmatprep.subr.bf16.mxu0 0
    %851 = vmatpush1.bf16.msra.mxu0 0
    %852 = vmatprep.subr.bf16.mxu0 0
    %853 = vmatpush1.bf16.msra.mxu0 0
    %854 = vmatprep.subr.bf16.mxu0 0
    %855 = vmatpush1.bf16.msra.mxu0 0
    %856 = vmatprep.subr.bf16.mxu0 0
    %857 = vmatpush1.bf16.msra.mxu0 0
    %858 = vmatprep.subr.bf16.mxu0 0
    %859 = vmatpush1.bf16.msra.mxu0 0
    %860 = vmatprep.subr.bf16.mxu0 0
    %861 = vmatpush1.bf16.msra.mxu0 0
    %862 = vmatprep.subr.bf16.mxu0 0
    %863 = vmatpush1.bf16.msra.mxu0 0
    %864 = vmatprep.subr.bf16.mxu0 0
    %865 = vmatpush1.bf16.msra.mxu0 0
    %866 = vmatprep.subr.bf16.mxu0 0
    %867 = vmatpush1.bf16.msra.mxu0 0
    %868 = vmatprep.subr.bf16.mxu0 0
    %869 = vmatpush1.bf16.msra.mxu0 0
    %870 = vmatprep.subr.bf16.mxu0 0
    %871 = vmatpush1.bf16.msra.mxu0 0
    %872 = vmatprep.subr.bf16.mxu0 0
    %873 = vmatpush1.bf16.msra.mxu0 0
    %874 = vmatprep.subr.bf16.mxu0 0
    %875 = vmatpush1.bf16.msra.mxu0 0
    %876 = vmatprep.subr.bf16.mxu0 0
    %877 = vmatpush1.bf16.msra.mxu0 0
    %878 = vmatprep.mubr.bf16.mxu0 0
    %879 = vmatmul.mubr.bf16.gmra.mrb[0].mxu0 %v841
    %v880 = vpop.f32.mrb[0].mxu0
    %v881 = vadd.f32 0.0, %v880
    %v882 = vpop.f32.mrb[0].mxu0
    %v883 = vpop.f32.mrb[0].mxu0
    %v884 = vpop.f32.mrb[0].mxu0
    %885 = vdwg.mxu0
    %886 = vst.msk [vmem:[#allocation2 + $0x10] sm:$0xff] %vm300, %v881
    %887 = vrot.lane.b32.xlu0 %v770, 112
    %v888 = vpop.permute.xlu0 %887
    %889 = vrot.lane.b32.xlu0 %v770, 80
    %v890 = vpop.permute.xlu0 %889
    %v892 = vsel %vm300, %v888, 0
    %v895 = vsel %vm300, %v890, 0
    %897 = vmatprep.subr.bf16.mxu0 0
    %898 = vmatpush1.bf16.xpose.msra.mxu0 %v895
    %899 = vmatprep.subr.bf16.mxu0 0
    %900 = vmatpush1.bf16.xpose.msra.mxu0 0
    %901 = vmatprep.subr.bf16.mxu0 0
    %902 = vmatpush1.bf16.xpose.msra.mxu0 0
    %903 = vmatprep.subr.bf16.mxu0 0
    %904 = vmatpush1.bf16.xpose.msra.mxu0 0
    %905 = vmatprep.subr.bf16.mxu0 0
    %906 = vmatpush1.bf16.xpose.msra.mxu0 0
    %907 = vmatprep.subr.bf16.mxu0 0
    %908 = vmatpush1.bf16.xpose.msra.mxu0 0
    %909 = vmatprep.subr.bf16.mxu0 0
    %910 = vmatpush1.bf16.xpose.msra.mxu0 0
    %911 = vmatprep.subr.bf16.mxu0 0
    %912 = vmatpush1.bf16.xpose.msra.mxu0 0
    %913 = vmatprep.subr.bf16.mxu0 0
    %914 = vmatpush1.bf16.xpose.msra.mxu0 0
    %915 = vmatprep.subr.bf16.mxu0 0
    %916 = vmatpush1.bf16.xpose.msra.mxu0 0
    %917 = vmatprep.subr.bf16.mxu0 0
    %918 = vmatpush1.bf16.xpose.msra.mxu0 0
    %919 = vmatprep.subr.bf16.mxu0 0
    %920 = vmatpush1.bf16.xpose.msra.mxu0 0
    %921 = vmatprep.subr.bf16.mxu0 0
    %922 = vmatpush1.bf16.xpose.msra.mxu0 0
    %923 = vmatprep.subr.bf16.mxu0 0
    %924 = vmatpush1.bf16.xpose.msra.mxu0 0
    %925 = vmatprep.subr.bf16.mxu0 0
    %926 = vmatpush1.bf16.xpose.msra.mxu0 0
    %927 = vmatprep.subr.bf16.mxu0 0
    %928 = vmatpush1.bf16.xpose.msra.mxu0 0
    %929 = vmatprep.mubr.bf16.mxu0 0
    %930 = vmatmul.mubr.bf16.gmra.mrb[0].mxu0 %v892
    %v931 = vpop.f32.mrb[0].mxu0
    %v932 = vadd.f32 0.0, %v931
    %v933 = vpop.f32.mrb[0].mxu0
    %v934 = vpop.f32.mrb[0].mxu0
    %v935 = vpop.f32.mrb[0].mxu0
    %936 = vdwg.mxu0
    %v937 = vmul.f32 %v932, 0.25
    %v938 = vadd.f32 %v937, %v824
    %v939 = vsel %vm353, %v938, -inf
    %940 = vmax.xlane.f32.xlu0 %v939
    %v941 = vpop.xlane.xlu0 %940
    %v942 = vsub.f32 %v938, %v941
    %v943 = vmul.f32 %v942, 1.442695
    %v944 = vpow.pop %v943
    %v945 = vsel %vm353, %v944, 0.0
    %946 = vadd.xlane.f32.xlu0 %v945
    %v947 = vpop.xlane.xlu0 %946
    %v948 = vrcp.pop %v947
    %v949 = vmul.f32 %v944, %v948
    %v950 = vpack.c.bf16 %v949, %v949
    %951 = vrot.lane.b32.xlu0 %v770, 48
    %v952 = vpop.permute.xlu0 %951
    %v954 = vsel %vm353, %v950, 0
    %v957 = vsel %vm371, %v952, 0
    %959 = vmatprep.subr.bf16.mxu0 0
    %960 = vmatpush1.bf16.msra.mxu0 %v957
    %961 = vmatprep.subr.bf16.mxu0 0
    %962 = vmatpush1.bf16.msra.mxu0 0
    %963 = vmatprep.subr.bf16.mxu0 0
    %964 = vmatpush1.bf16.msra.mxu0 0
    %965 = vmatprep.subr.bf16.mxu0 0
    %966 = vmatpush1.bf16.msra.mxu0 0
    %967 = vmatprep.subr.bf16.mxu0 0
    %968 = vmatpush1.bf16.msra.mxu0 0
    %969 = vmatprep.subr.bf16.mxu0 0
    %970 = vmatpush1.bf16.msra.mxu0 0
    %971 = vmatprep.subr.bf16.mxu0 0
    %972 = vmatpush1.bf16.msra.mxu0 0
    %973 = vmatprep.subr.bf16.mxu0 0
    %974 = vmatpush1.bf16.msra.mxu0 0
    %975 = vmatprep.subr.bf16.mxu0 0
    %976 = vmatpush1.bf16.msra.mxu0 0
    %977 = vmatprep.subr.bf16.mxu0 0
    %978 = vmatpush1.bf16.msra.mxu0 0
    %979 = vmatprep.subr.bf16.mxu0 0
    %980 = vmatpush1.bf16.msra.mxu0 0
    %981 = vmatprep.subr.bf16.mxu0 0
    %982 = vmatpush1.bf16.msra.mxu0 0
    %983 = vmatprep.subr.bf16.mxu0 0
    %984 = vmatpush1.bf16.msra.mxu0 0
    %985 = vmatprep.subr.bf16.mxu0 0
    %986 = vmatpush1.bf16.msra.mxu0 0
    %987 = vmatprep.subr.bf16.mxu0 0
    %988 = vmatpush1.bf16.msra.mxu0 0
    %989 = vmatprep.subr.bf16.mxu0 0
    %990 = vmatpush1.bf16.msra.mxu0 0
    %991 = vmatprep.mubr.bf16.mxu0 0
    %992 = vmatmul.mubr.bf16.gmra.mrb[0].mxu0 %v954
    %v993 = vpop.f32.mrb[0].mxu0
    %v994 = vadd.f32 0.0, %v993
    %v995 = vpop.f32.mrb[0].mxu0
    %v996 = vpop.f32.mrb[0].mxu0
    %v997 = vpop.f32.mrb[0].mxu0
    %998 = vdwg.mxu0
    %1000 = vrot.lane.b32.xlu0 %v994, 16
    %v1001 = vpop.permute.xlu0 %1000
    %1003 = vst.msk [vmem:[#allocation2 + $0x10] sm:$0xff] %vm532, %v1001
    %v1004 = vld [vmem:[%s1 + $0x3] sm:$0x1]
    %v1005 = vpack.c.bf16 %v276, %v276
    %1007 = vrot.lane.b32.xlu0 %v1005, 96
    %v1008 = vpop.permute.xlu0 %1007
    %v1010 = vsel %vm300, %v1005, 0
    %v1013 = vsel %vm300, %v1008, 0
    %1015 = vmatprep.subr.bf16.mxu0 0
    %1016 = vmatpush1.bf16.xpose.msra.mxu0 %v1013
    %1017 = vmatprep.subr.bf16.mxu0 0
    %1018 = vmatpush1.bf16.xpose.msra.mxu0 0
    %1019 = vmatprep.subr.bf16.mxu0 0
    %1020 = vmatpush1.bf16.xpose.msra.mxu0 0
    %1021 = vmatprep.subr.bf16.mxu0 0
    %1022 = vmatpush1.bf16.xpose.msra.mxu0 0
    %1023 = vmatprep.subr.bf16.mxu0 0
    %1024 = vmatpush1.bf16.xpose.msra.mxu0 0
    %1025 = vmatprep.subr.bf16.mxu0 0
    %1026 = vmatpush1.bf16.xpose.msra.mxu0 0
    %1027 = vmatprep.subr.bf16.mxu0 0
    %1028 = vmatpush1.bf16.xpose.msra.mxu0 0
    %1029 = vmatprep.subr.bf16.mxu0 0
    %1030 = vmatpush1.bf16.xpose.msra.mxu0 0
    %1031 = vmatprep.subr.bf16.mxu0 0
    %1032 = vmatpush1.bf16.xpose.msra.mxu0 0
    %1033 = vmatprep.subr.bf16.mxu0 0
    %1034 = vmatpush1.bf16.xpose.msra.mxu0 0
    %1035 = vmatprep.subr.bf16.mxu0 0
    %1036 = vmatpush1.bf16.xpose.msra.mxu0 0
    %1037 = vmatprep.subr.bf16.mxu0 0
    %1038 = vmatpush1.bf16.xpose.msra.mxu0 0
    %1039 = vmatprep.subr.bf16.mxu0 0
    %1040 = vmatpush1.bf16.xpose.msra.mxu0 0
    %1041 = vmatprep.subr.bf16.mxu0 0
    %1042 = vmatpush1.bf16.xpose.msra.mxu0 0
    %1043 = vmatprep.subr.bf16.mxu0 0
    %1044 = vmatpush1.bf16.xpose.msra.mxu0 0
    %1045 = vmatprep.subr.bf16.mxu0 0
    %1046 = vmatpush1.bf16.xpose.msra.mxu0 0
    %1047 = vmatprep.mubr.bf16.mxu0 0
    %1048 = vmatmul.mubr.bf16.gmra.mrb[0].mxu0 %v1010
    %v1049 = vpop.f32.mrb[0].mxu0
    %v1050 = vadd.f32 0.0, %v1049
    %v1051 = vpop.f32.mrb[0].mxu0
    %v1052 = vpop.f32.mrb[0].mxu0
    %v1053 = vpop.f32.mrb[0].mxu0
    %1054 = vdwg.mxu0
    %v1055 = vmul.f32 %v1050, 0.25
    %v1056 = vlaneseq
    %v1057 = vshrl.u32 %v1056, 7
    %v1058 = vsub.s32 0, %v1057
    %v1059 = vrot.slane %v1004, %v1058
    %v1060 = vadd.f32 %v1055, %v1059
    %v1061 = vsel %vm353, %v1060, -inf
    %1062 = vmax.xlane.f32.xlu0 %v1061
    %v1063 = vpop.xlane.xlu0 %1062
    %v1064 = vsub.f32 %v1060, %v1063
    %v1065 = vmul.f32 %v1064, 1.442695
    %v1066 = vpow.pop %v1065
    %v1067 = vsel %vm353, %v1066, 0.0
    %1068 = vadd.xlane.f32.xlu0 %v1067
    %v1069 = vpop.xlane.xlu0 %1068
    %v1070 = vrcp.pop %v1069
    %v1071 = vmul.f32 %v1066, %v1070
    %v1072 = vpack.c.bf16 %v1071, %v1071
    %1073 = vrot.lane.b32.xlu0 %v1005, 64
    %v1074 = vpop.permute.xlu0 %1073
    %v1076 = vsel %vm353, %v1072, 0
    %v1079 = vsel %vm371, %v1074, 0
    %1081 = vmatprep.subr.bf16.mxu0 0
    %1082 = vmatpush1.bf16.msra.mxu0 %v1079
    %1083 = vmatprep.subr.bf16.mxu0 0
    %1084 = vmatpush1.bf16.msra.mxu0 0
    %1085 = vmatprep.subr.bf16.mxu0 0
    %1086 = vmatpush1.bf16.msra.mxu0 0
    %1087 = vmatprep.subr.bf16.mxu0 0
    %1088 = vmatpush1.bf16.msra.mxu0 0
    %1089 = vmatprep.subr.bf16.mxu0 0
    %1090 = vmatpush1.bf16.msra.mxu0 0
    %1091 = vmatprep.subr.bf16.mxu0 0
    %1092 = vmatpush1.bf16.msra.mxu0 0
    %1093 = vmatprep.subr.bf16.mxu0 0
    %1094 = vmatpush1.bf16.msra.mxu0 0
    %1095 = vmatprep.subr.bf16.mxu0 0
    %1096 = vmatpush1.bf16.msra.mxu0 0
    %1097 = vmatprep.subr.bf16.mxu0 0
    %1098 = vmatpush1.bf16.msra.mxu0 0
    %1099 = vmatprep.subr.bf16.mxu0 0
    %1100 = vmatpush1.bf16.msra.mxu0 0
    %1101 = vmatprep.subr.bf16.mxu0 0
    %1102 = vmatpush1.bf16.msra.mxu0 0
    %1103 = vmatprep.subr.bf16.mxu0 0
    %1104 = vmatpush1.bf16.msra.mxu0 0
    %1105 = vmatprep.subr.bf16.mxu0 0
    %1106 = vmatpush1.bf16.msra.mxu0 0
    %1107 = vmatprep.subr.bf16.mxu0 0
    %1108 = vmatpush1.bf16.msra.mxu0 0
    %1109 = vmatprep.subr.bf16.mxu0 0
    %1110 = vmatpush1.bf16.msra.mxu0 0
    %1111 = vmatprep.subr.bf16.mxu0 0
    %1112 = vmatpush1.bf16.msra.mxu0 0
    %1113 = vmatprep.mubr.bf16.mxu0 0
    %1114 = vmatmul.mubr.bf16.gmra.mrb[0].mxu0 %v1076
    %v1115 = vpop.f32.mrb[0].mxu0
    %v1116 = vadd.f32 0.0, %v1115
    %v1117 = vpop.f32.mrb[0].mxu0
    %v1118 = vpop.f32.mrb[0].mxu0
    %v1119 = vpop.f32.mrb[0].mxu0
    %1120 = vdwg.mxu0
    %1121 = vst.msk [vmem:[#allocation2 + $0x18] sm:$0xff] %vm300, %v1116
    %1122 = vrot.lane.b32.xlu0 %v1005, 112
    %v1123 = vpop.permute.xlu0 %1122
    %1124 = vrot.lane.b32.xlu0 %v1005, 80
    %v1125 = vpop.permute.xlu0 %1124
    %v1127 = vsel %vm300, %v1123, 0
    %v1130 = vsel %vm300, %v1125, 0
    %1132 = vmatprep.subr.bf16.mxu0 0
    %1133 = vmatpush1.bf16.xpose.msra.mxu0 %v1130
    %1134 = vmatprep.subr.bf16.mxu0 0
    %1135 = vmatpush1.bf16.xpose.msra.mxu0 0
    %1136 = vmatprep.subr.bf16.mxu0 0
    %1137 = vmatpush1.bf16.xpose.msra.mxu0 0
    %1138 = vmatprep.subr.bf16.mxu0 0
    %1139 = vmatpush1.bf16.xpose.msra.mxu0 0
    %1140 = vmatprep.subr.bf16.mxu0 0
    %1141 = vmatpush1.bf16.xpose.msra.mxu0 0
    %1142 = vmatprep.subr.bf16.mxu0 0
    %1143 = vmatpush1.bf16.xpose.msra.mxu0 0
    %1144 = vmatprep.subr.bf16.mxu0 0
    %1145 = vmatpush1.bf16.xpose.msra.mxu0 0
    %1146 = vmatprep.subr.bf16.mxu0 0
    %1147 = vmatpush1.bf16.xpose.msra.mxu0 0
    %1148 = vmatprep.subr.bf16.mxu0 0
    %1149 = vmatpush1.bf16.xpose.msra.mxu0 0
    %1150 = vmatprep.subr.bf16.mxu0 0
    %1151 = vmatpush1.bf16.xpose.msra.mxu0 0
    %1152 = vmatprep.subr.bf16.mxu0 0
    %1153 = vmatpush1.bf16.xpose.msra.mxu0 0
    %1154 = vmatprep.subr.bf16.mxu0 0
    %1155 = vmatpush1.bf16.xpose.msra.mxu0 0
    %1156 = vmatprep.subr.bf16.mxu0 0
    %1157 = vmatpush1.bf16.xpose.msra.mxu0 0
    %1158 = vmatprep.subr.bf16.mxu0 0
    %1159 = vmatpush1.bf16.xpose.msra.mxu0 0
    %1160 = vmatprep.subr.bf16.mxu0 0
    %1161 = vmatpush1.bf16.xpose.msra.mxu0 0
    %1162 = vmatprep.subr.bf16.mxu0 0
    %1163 = vmatpush1.bf16.xpose.msra.mxu0 0
    %1164 = vmatprep.mubr.bf16.mxu0 0
    %1165 = vmatmul.mubr.bf16.gmra.mrb[0].mxu0 %v1127
    %v1166 = vpop.f32.mrb[0].mxu0
    %v1167 = vadd.f32 0.0, %v1166
    %v1168 = vpop.f32.mrb[0].mxu0
    %v1169 = vpop.f32.mrb[0].mxu0
    %v1170 = vpop.f32.mrb[0].mxu0
    %1171 = vdwg.mxu0
    %v1172 = vmul.f32 %v1167, 0.25
    %v1173 = vadd.f32 %v1172, %v1059
    %v1174 = vsel %vm353, %v1173, -inf
    %1175 = vmax.xlane.f32.xlu0 %v1174
    %v1176 = vpop.xlane.xlu0 %1175
    %v1177 = vsub.f32 %v1173, %v1176
    %v1178 = vmul.f32 %v1177, 1.442695
    %v1179 = vpow.pop %v1178
    %v1180 = vsel %vm353, %v1179, 0.0
    %1181 = vadd.xlane.f32.xlu0 %v1180
    %v1182 = vpop.xlane.xlu0 %1181
    %v1183 = vrcp.pop %v1182
    %v1184 = vmul.f32 %v1179, %v1183
    %v1185 = vpack.c.bf16 %v1184, %v1184
    %1186 = vrot.lane.b32.xlu0 %v1005, 48
    %v1187 = vpop.permute.xlu0 %1186
    %v1189 = vsel %vm353, %v1185, 0
    %v1192 = vsel %vm371, %v1187, 0
    %1194 = vmatprep.subr.bf16.mxu0 0
    %1195 = vmatpush1.bf16.msra.mxu0 %v1192
    %1196 = vmatprep.subr.bf16.mxu0 0
    %1197 = vmatpush1.bf16.msra.mxu0 0
    %1198 = vmatprep.subr.bf16.mxu0 0
    %1199 = vmatpush1.bf16.msra.mxu0 0
    %1200 = vmatprep.subr.bf16.mxu0 0
    %1201 = vmatpush1.bf16.msra.mxu0 0
    %1202 = vmatprep.subr.bf16.mxu0 0
    %1203 = vmatpush1.bf16.msra.mxu0 0
    %1204 = vmatprep.subr.bf16.mxu0 0
    %1205 = vmatpush1.bf16.msra.mxu0 0
    %1206 = vmatprep.subr.bf16.mxu0 0
    %1207 = vmatpush1.bf16.msra.mxu0 0
    %1208 = vmatprep.subr.bf16.mxu0 0
    %1209 = vmatpush1.bf16.msra.mxu0 0
    %1210 = vmatprep.subr.bf16.mxu0 0
    %1211 = vmatpush1.bf16.msra.mxu0 0
    %1212 = vmatprep.subr.bf16.mxu0 0
    %1213 = vmatpush1.bf16.msra.mxu0 0
    %1214 = vmatprep.subr.bf16.mxu0 0
    %1215 = vmatpush1.bf16.msra.mxu0 0
    %1216 = vmatprep.subr.bf16.mxu0 0
    %1217 = vmatpush1.bf16.msra.mxu0 0
    %1218 = vmatprep.subr.bf16.mxu0 0
    %1219 = vmatpush1.bf16.msra.mxu0 0
    %1220 = vmatprep.subr.bf16.mxu0 0
    %1221 = vmatpush1.bf16.msra.mxu0 0
    %1222 = vmatprep.subr.bf16.mxu0 0
    %1223 = vmatpush1.bf16.msra.mxu0 0
    %1224 = vmatprep.subr.bf16.mxu0 0
    %1225 = vmatpush1.bf16.msra.mxu0 0
    %1226 = vmatprep.mubr.bf16.mxu0 0
    %1227 = vmatmul.mubr.bf16.gmra.mrb[0].mxu0 %v1189
    %v1228 = vpop.f32.mrb[0].mxu0
    %v1229 = vadd.f32 0.0, %v1228
    %v1230 = vpop.f32.mrb[0].mxu0
    %v1231 = vpop.f32.mrb[0].mxu0
    %v1232 = vpop.f32.mrb[0].mxu0
    %1233 = vdwg.mxu0
    %1235 = vrot.lane.b32.xlu0 %v1229, 16
    %v1236 = vpop.permute.xlu0 %1235
    %1238 = vst.msk [vmem:[#allocation2 + $0x18] sm:$0xff] %vm532, %v1236
    %v1239 = vld [vmem:[%s1 + $0x4] sm:$0x1]
    %v1240 = vpack.c.bf16 %v281, %v281
    %1242 = vrot.lane.b32.xlu0 %v1240, 96
    %v1243 = vpop.permute.xlu0 %1242
    %v1245 = vsel %vm300, %v1240, 0
    %v1248 = vsel %vm300, %v1243, 0
    %1250 = vmatprep.subr.bf16.mxu0 0
    %1251 = vmatpush1.bf16.xpose.msra.mxu0 %v1248
    %1252 = vmatprep.subr.bf16.mxu0 0
    %1253 = vmatpush1.bf16.xpose.msra.mxu0 0
    %1254 = vmatprep.subr.bf16.mxu0 0
    %1255 = vmatpush1.bf16.xpose.msra.mxu0 0
    %1256 = vmatprep.subr.bf16.mxu0 0
    %1257 = vmatpush1.bf16.xpose.msra.mxu0 0
    %1258 = vmatprep.subr.bf16.mxu0 0
    %1259 = vmatpush1.bf16.xpose.msra.mxu0 0
    %1260 = vmatprep.subr.bf16.mxu0 0
    %1261 = vmatpush1.bf16.xpose.msra.mxu0 0
    %1262 = vmatprep.subr.bf16.mxu0 0
    %1263 = vmatpush1.bf16.xpose.msra.mxu0 0
    %1264 = vmatprep.subr.bf16.mxu0 0
    %1265 = vmatpush1.bf16.xpose.msra.mxu0 0
    %1266 = vmatprep.subr.bf16.mxu0 0
    %1267 = vmatpush1.bf16.xpose.msra.mxu0 0
    %1268 = vmatprep.subr.bf16.mxu0 0
    %1269 = vmatpush1.bf16.xpose.msra.mxu0 0
    %1270 = vmatprep.subr.bf16.mxu0 0
    %1271 = vmatpush1.bf16.xpose.msra.mxu0 0
    %1272 = vmatprep.subr.bf16.mxu0 0
    %1273 = vmatpush1.bf16.xpose.msra.mxu0 0
    %1274 = vmatprep.subr.bf16.mxu0 0
    %1275 = vmatpush1.bf16.xpose.msra.mxu0 0
    %1276 = vmatprep.subr.bf16.mxu0 0
    %1277 = vmatpush1.bf16.xpose.msra.mxu0 0
    %1278 = vmatprep.subr.bf16.mxu0 0
    %1279 = vmatpush1.bf16.xpose.msra.mxu0 0
    %1280 = vmatprep.subr.bf16.mxu0 0
    %1281 = vmatpush1.bf16.xpose.msra.mxu0 0
    %1282 = vmatprep.mubr.bf16.mxu0 0
    %1283 = vmatmul.mubr.bf16.gmra.mrb[0].mxu0 %v1245
    %v1284 = vpop.f32.mrb[0].mxu0
    %v1285 = vadd.f32 0.0, %v1284
    %v1286 = vpop.f32.mrb[0].mxu0
    %v1287 = vpop.f32.mrb[0].mxu0
    %v1288 = vpop.f32.mrb[0].mxu0
    %1289 = vdwg.mxu0
    %v1290 = vmul.f32 %v1285, 0.25
    %v1291 = vlaneseq
    %v1292 = vshrl.u32 %v1291, 7
    %v1293 = vsub.s32 0, %v1292
    %v1294 = vrot.slane %v1239, %v1293
    %v1295 = vadd.f32 %v1290, %v1294
    %v1296 = vsel %vm353, %v1295, -inf
    %1297 = vmax.xlane.f32.xlu0 %v1296
    %v1298 = vpop.xlane.xlu0 %1297
    %v1299 = vsub.f32 %v1295, %v1298
    %v1300 = vmul.f32 %v1299, 1.442695
    %v1301 = vpow.pop %v1300
    %v1302 = vsel %vm353, %v1301, 0.0
    %1303 = vadd.xlane.f32.xlu0 %v1302
    %v1304 = vpop.xlane.xlu0 %1303
    %v1305 = vrcp.pop %v1304
    %v1306 = vmul.f32 %v1301, %v1305
    %v1307 = vpack.c.bf16 %v1306, %v1306
    %1308 = vrot.lane.b32.xlu0 %v1240, 64
    %v1309 = vpop.permute.xlu0 %1308
    %v1311 = vsel %vm353, %v1307, 0
    %v1314 = vsel %vm371, %v1309, 0
    %1316 = vmatprep.subr.bf16.mxu0 0
    %1317 = vmatpush1.bf16.msra.mxu0 %v1314
    %1318 = vmatprep.subr.bf16.mxu0 0
    %1319 = vmatpush1.bf16.msra.mxu0 0
    %1320 = vmatprep.subr.bf16.mxu0 0
    %1321 = vmatpush1.bf16.msra.mxu0 0
    %1322 = vmatprep.subr.bf16.mxu0 0
    %1323 = vmatpush1.bf16.msra.mxu0 0
    %1324 = vmatprep.subr.bf16.mxu0 0
    %1325 = vmatpush1.bf16.msra.mxu0 0
    %1326 = vmatprep.subr.bf16.mxu0 0
    %1327 = vmatpush1.bf16.msra.mxu0 0
    %1328 = vmatprep.subr.bf16.mxu0 0
    %1329 = vmatpush1.bf16.msra.mxu0 0
    %1330 = vmatprep.subr.bf16.mxu0 0
    %1331 = vmatpush1.bf16.msra.mxu0 0
    %1332 = vmatprep.subr.bf16.mxu0 0
    %1333 = vmatpush1.bf16.msra.mxu0 0
    %1334 = vmatprep.subr.bf16.mxu0 0
    %1335 = vmatpush1.bf16.msra.mxu0 0
    %1336 = vmatprep.subr.bf16.mxu0 0
    %1337 = vmatpush1.bf16.msra.mxu0 0
    %1338 = vmatprep.subr.bf16.mxu0 0
    %1339 = vmatpush1.bf16.msra.mxu0 0
    %1340 = vmatprep.subr.bf16.mxu0 0
    %1341 = vmatpush1.bf16.msra.mxu0 0
    %1342 = vmatprep.subr.bf16.mxu0 0
    %1343 = vmatpush1.bf16.msra.mxu0 0
    %1344 = vmatprep.subr.bf16.mxu0 0
    %1345 = vmatpush1.bf16.msra.mxu0 0
    %1346 = vmatprep.subr.bf16.mxu0 0
    %1347 = vmatpush1.bf16.msra.mxu0 0
    %1348 = vmatprep.mubr.bf16.mxu0 0
    %1349 = vmatmul.mubr.bf16.gmra.mrb[0].mxu0 %v1311
    %v1350 = vpop.f32.mrb[0].mxu0
    %v1351 = vadd.f32 0.0, %v1350
    %v1352 = vpop.f32.mrb[0].mxu0
    %v1353 = vpop.f32.mrb[0].mxu0
    %v1354 = vpop.f32.mrb[0].mxu0
    %1355 = vdwg.mxu0
    %1356 = vst.msk [vmem:[#allocation2 + $0x20] sm:$0xff] %vm300, %v1351
    %1357 = vrot.lane.b32.xlu0 %v1240, 112
    %v1358 = vpop.permute.xlu0 %1357
    %1359 = vrot.lane.b32.xlu0 %v1240, 80
    %v1360 = vpop.permute.xlu0 %1359
    %v1362 = vsel %vm300, %v1358, 0
    %v1365 = vsel %vm300, %v1360, 0
    %1367 = vmatprep.subr.bf16.mxu0 0
    %1368 = vmatpush1.bf16.xpose.msra.mxu0 %v1365
    %1369 = vmatprep.subr.bf16.mxu0 0
    %1370 = vmatpush1.bf16.xpose.msra.mxu0 0
    %1371 = vmatprep.subr.bf16.mxu0 0
    %1372 = vmatpush1.bf16.xpose.msra.mxu0 0
    %1373 = vmatprep.subr.bf16.mxu0 0
    %1374 = vmatpush1.bf16.xpose.msra.mxu0 0
    %1375 = vmatprep.subr.bf16.mxu0 0
    %1376 = vmatpush1.bf16.xpose.msra.mxu0 0
    %1377 = vmatprep.subr.bf16.mxu0 0
    %1378 = vmatpush1.bf16.xpose.msra.mxu0 0
    %1379 = vmatprep.subr.bf16.mxu0 0
    %1380 = vmatpush1.bf16.xpose.msra.mxu0 0
    %1381 = vmatprep.subr.bf16.mxu0 0
    %1382 = vmatpush1.bf16.xpose.msra.mxu0 0
    %1383 = vmatprep.subr.bf16.mxu0 0
    %1384 = vmatpush1.bf16.xpose.msra.mxu0 0
    %1385 = vmatprep.subr.bf16.mxu0 0
    %1386 = vmatpush1.bf16.xpose.msra.mxu0 0
    %1387 = vmatprep.subr.bf16.mxu0 0
    %1388 = vmatpush1.bf16.xpose.msra.mxu0 0
    %1389 = vmatprep.subr.bf16.mxu0 0
    %1390 = vmatpush1.bf16.xpose.msra.mxu0 0
    %1391 = vmatprep.subr.bf16.mxu0 0
    %1392 = vmatpush1.bf16.xpose.msra.mxu0 0
    %1393 = vmatprep.subr.bf16.mxu0 0
    %1394 = vmatpush1.bf16.xpose.msra.mxu0 0
    %1395 = vmatprep.subr.bf16.mxu0 0
    %1396 = vmatpush1.bf16.xpose.msra.mxu0 0
    %1397 = vmatprep.subr.bf16.mxu0 0
    %1398 = vmatpush1.bf16.xpose.msra.mxu0 0
    %1399 = vmatprep.mubr.bf16.mxu0 0
    %1400 = vmatmul.mubr.bf16.gmra.mrb[0].mxu0 %v1362
    %v1401 = vpop.f32.mrb[0].mxu0
    %v1402 = vadd.f32 0.0, %v1401
    %v1403 = vpop.f32.mrb[0].mxu0
    %v1404 = vpop.f32.mrb[0].mxu0
    %v1405 = vpop.f32.mrb[0].mxu0
    %1406 = vdwg.mxu0
    %v1407 = vmul.f32 %v1402, 0.25
    %v1408 = vadd.f32 %v1407, %v1294
    %v1409 = vsel %vm353, %v1408, -inf
    %1410 = vmax.xlane.f32.xlu0 %v1409
    %v1411 = vpop.xlane.xlu0 %1410
    %v1412 = vsub.f32 %v1408, %v1411
    %v1413 = vmul.f32 %v1412, 1.442695
    %v1414 = vpow.pop %v1413
    %v1415 = vsel %vm353, %v1414, 0.0
    %1416 = vadd.xlane.f32.xlu0 %v1415
    %v1417 = vpop.xlane.xlu0 %1416
    %v1418 = vrcp.pop %v1417
    %v1419 = vmul.f32 %v1414, %v1418
    %v1420 = vpack.c.bf16 %v1419, %v1419
    %1421 = vrot.lane.b32.xlu0 %v1240, 48
    %v1422 = vpop.permute.xlu0 %1421
    %v1424 = vsel %vm353, %v1420, 0
    %v1427 = vsel %vm371, %v1422, 0
    %1429 = vmatprep.subr.bf16.mxu0 0
    %1430 = vmatpush1.bf16.msra.mxu0 %v1427
    %1431 = vmatprep.subr.bf16.mxu0 0
    %1432 = vmatpush1.bf16.msra.mxu0 0
    %1433 = vmatprep.subr.bf16.mxu0 0
    %1434 = vmatpush1.bf16.msra.mxu0 0
    %1435 = vmatprep.subr.bf16.mxu0 0
    %1436 = vmatpush1.bf16.msra.mxu0 0
    %1437 = vmatprep.subr.bf16.mxu0 0
    %1438 = vmatpush1.bf16.msra.mxu0 0
    %1439 = vmatprep.subr.bf16.mxu0 0
    %1440 = vmatpush1.bf16.msra.mxu0 0
    %1441 = vmatprep.subr.bf16.mxu0 0
    %1442 = vmatpush1.bf16.msra.mxu0 0
    %1443 = vmatprep.subr.bf16.mxu0 0
    %1444 = vmatpush1.bf16.msra.mxu0 0
    %1445 = vmatprep.subr.bf16.mxu0 0
    %1446 = vmatpush1.bf16.msra.mxu0 0
    %1447 = vmatprep.subr.bf16.mxu0 0
    %1448 = vmatpush1.bf16.msra.mxu0 0
    %1449 = vmatprep.subr.bf16.mxu0 0
    %1450 = vmatpush1.bf16.msra.mxu0 0
    %1451 = vmatprep.subr.bf16.mxu0 0
    %1452 = vmatpush1.bf16.msra.mxu0 0
    %1453 = vmatprep.subr.bf16.mxu0 0
    %1454 = vmatpush1.bf16.msra.mxu0 0
    %1455 = vmatprep.subr.bf16.mxu0 0
    %1456 = vmatpush1.bf16.msra.mxu0 0
    %1457 = vmatprep.subr.bf16.mxu0 0
    %1458 = vmatpush1.bf16.msra.mxu0 0
    %1459 = vmatprep.subr.bf16.mxu0 0
    %1460 = vmatpush1.bf16.msra.mxu0 0
    %1461 = vmatprep.mubr.bf16.mxu0 0
    %1462 = vmatmul.mubr.bf16.gmra.mrb[0].mxu0 %v1424
    %v1463 = vpop.f32.mrb[0].mxu0
    %v1464 = vadd.f32 0.0, %v1463
    %v1465 = vpop.f32.mrb[0].mxu0
    %v1466 = vpop.f32.mrb[0].mxu0
    %v1467 = vpop.f32.mrb[0].mxu0
    %1468 = vdwg.mxu0
    %1470 = vrot.lane.b32.xlu0 %v1464, 16
    %v1471 = vpop.permute.xlu0 %1470
    %1473 = vst.msk [vmem:[#allocation2 + $0x20] sm:$0xff] %vm532, %v1471
    %v1474 = vld [vmem:[%s1 + $0x5] sm:$0x1]
    %v1475 = vpack.c.bf16 %v284, %v284
    %1477 = vrot.lane.b32.xlu0 %v1475, 96
    %v1478 = vpop.permute.xlu0 %1477
    %v1480 = vsel %vm300, %v1475, 0
    %v1483 = vsel %vm300, %v1478, 0
    %1485 = vmatprep.subr.bf16.mxu0 0
    %1486 = vmatpush1.bf16.xpose.msra.mxu0 %v1483
    %1487 = vmatprep.subr.bf16.mxu0 0
    %1488 = vmatpush1.bf16.xpose.msra.mxu0 0
    %1489 = vmatprep.subr.bf16.mxu0 0
    %1490 = vmatpush1.bf16.xpose.msra.mxu0 0
    %1491 = vmatprep.subr.bf16.mxu0 0
    %1492 = vmatpush1.bf16.xpose.msra.mxu0 0
    %1493 = vmatprep.subr.bf16.mxu0 0
    %1494 = vmatpush1.bf16.xpose.msra.mxu0 0
    %1495 = vmatprep.subr.bf16.mxu0 0
    %1496 = vmatpush1.bf16.xpose.msra.mxu0 0
    %1497 = vmatprep.subr.bf16.mxu0 0
    %1498 = vmatpush1.bf16.xpose.msra.mxu0 0
    %1499 = vmatprep.subr.bf16.mxu0 0
    %1500 = vmatpush1.bf16.xpose.msra.mxu0 0
    %1501 = vmatprep.subr.bf16.mxu0 0
    %1502 = vmatpush1.bf16.xpose.msra.mxu0 0
    %1503 = vmatprep.subr.bf16.mxu0 0
    %1504 = vmatpush1.bf16.xpose.msra.mxu0 0
    %1505 = vmatprep.subr.bf16.mxu0 0
    %1506 = vmatpush1.bf16.xpose.msra.mxu0 0
    %1507 = vmatprep.subr.bf16.mxu0 0
    %1508 = vmatpush1.bf16.xpose.msra.mxu0 0
    %1509 = vmatprep.subr.bf16.mxu0 0
    %1510 = vmatpush1.bf16.xpose.msra.mxu0 0
    %1511 = vmatprep.subr.bf16.mxu0 0
    %1512 = vmatpush1.bf16.xpose.msra.mxu0 0
    %1513 = vmatprep.subr.bf16.mxu0 0
    %1514 = vmatpush1.bf16.xpose.msra.mxu0 0
    %1515 = vmatprep.subr.bf16.mxu0 0
    %1516 = vmatpush1.bf16.xpose.msra.mxu0 0
    %1517 = vmatprep.mubr.bf16.mxu0 0
    %1518 = vmatmul.mubr.bf16.gmra.mrb[0].mxu0 %v1480
    %v1519 = vpop.f32.mrb[0].mxu0
    %v1520 = vadd.f32 0.0, %v1519
    %v1521 = vpop.f32.mrb[0].mxu0
    %v1522 = vpop.f32.mrb[0].mxu0
    %v1523 = vpop.f32.mrb[0].mxu0
    %1524 = vdwg.mxu0
    %v1525 = vmul.f32 %v1520, 0.25
    %v1526 = vlaneseq
    %v1527 = vshrl.u32 %v1526, 7
    %v1528 = vsub.s32 0, %v1527
    %v1529 = vrot.slane %v1474, %v1528
    %v1530 = vadd.f32 %v1525, %v1529
    %v1531 = vsel %vm353, %v1530, -inf
    %1532 = vmax.xlane.f32.xlu0 %v1531
    %v1533 = vpop.xlane.xlu0 %1532
    %v1534 = vsub.f32 %v1530, %v1533
    %v1535 = vmul.f32 %v1534, 1.442695
    %v1536 = vpow.pop %v1535
    %v1537 = vsel %vm353, %v1536, 0.0
    %1538 = vadd.xlane.f32.xlu0 %v1537
    %v1539 = vpop.xlane.xlu0 %1538
    %v1540 = vrcp.pop %v1539
    %v1541 = vmul.f32 %v1536, %v1540
    %v1542 = vpack.c.bf16 %v1541, %v1541
    %1543 = vrot.lane.b32.xlu0 %v1475, 64
    %v1544 = vpop.permute.xlu0 %1543
    %v1546 = vsel %vm353, %v1542, 0
    %v1549 = vsel %vm371, %v1544, 0
    %1551 = vmatprep.subr.bf16.mxu0 0
    %1552 = vmatpush1.bf16.msra.mxu0 %v1549
    %1553 = vmatprep.subr.bf16.mxu0 0
    %1554 = vmatpush1.bf16.msra.mxu0 0
    %1555 = vmatprep.subr.bf16.mxu0 0
    %1556 = vmatpush1.bf16.msra.mxu0 0
    %1557 = vmatprep.subr.bf16.mxu0 0
    %1558 = vmatpush1.bf16.msra.mxu0 0
    %1559 = vmatprep.subr.bf16.mxu0 0
    %1560 = vmatpush1.bf16.msra.mxu0 0
    %1561 = vmatprep.subr.bf16.mxu0 0
    %1562 = vmatpush1.bf16.msra.mxu0 0
    %1563 = vmatprep.subr.bf16.mxu0 0
    %1564 = vmatpush1.bf16.msra.mxu0 0
    %1565 = vmatprep.subr.bf16.mxu0 0
    %1566 = vmatpush1.bf16.msra.mxu0 0
    %1567 = vmatprep.subr.bf16.mxu0 0
    %1568 = vmatpush1.bf16.msra.mxu0 0
    %1569 = vmatprep.subr.bf16.mxu0 0
    %1570 = vmatpush1.bf16.msra.mxu0 0
    %1571 = vmatprep.subr.bf16.mxu0 0
    %1572 = vmatpush1.bf16.msra.mxu0 0
    %1573 = vmatprep.subr.bf16.mxu0 0
    %1574 = vmatpush1.bf16.msra.mxu0 0
    %1575 = vmatprep.subr.bf16.mxu0 0
    %1576 = vmatpush1.bf16.msra.mxu0 0
    %1577 = vmatprep.subr.bf16.mxu0 0
    %1578 = vmatpush1.bf16.msra.mxu0 0
    %1579 = vmatprep.subr.bf16.mxu0 0
    %1580 = vmatpush1.bf16.msra.mxu0 0
    %1581 = vmatprep.subr.bf16.mxu0 0
    %1582 = vmatpush1.bf16.msra.mxu0 0
    %1583 = vmatprep.mubr.bf16.mxu0 0
    %1584 = vmatmul.mubr.bf16.gmra.mrb[0].mxu0 %v1546
    %v1585 = vpop.f32.mrb[0].mxu0
    %v1586 = vadd.f32 0.0, %v1585
    %v1587 = vpop.f32.mrb[0].mxu0
    %v1588 = vpop.f32.mrb[0].mxu0
    %v1589 = vpop.f32.mrb[0].mxu0
    %1590 = vdwg.mxu0
    %1591 = vst.msk [vmem:[#allocation2 + $0x28] sm:$0xff] %vm300, %v1586
    %1592 = vrot.lane.b32.xlu0 %v1475, 112
    %v1593 = vpop.permute.xlu0 %1592
    %1594 = vrot.lane.b32.xlu0 %v1475, 80
    %v1595 = vpop.permute.xlu0 %1594
    %v1597 = vsel %vm300, %v1593, 0
    %v1600 = vsel %vm300, %v1595, 0
    %1602 = vmatprep.subr.bf16.mxu0 0
    %1603 = vmatpush1.bf16.xpose.msra.mxu0 %v1600
    %1604 = vmatprep.subr.bf16.mxu0 0
    %1605 = vmatpush1.bf16.xpose.msra.mxu0 0
    %1606 = vmatprep.subr.bf16.mxu0 0
    %1607 = vmatpush1.bf16.xpose.msra.mxu0 0
    %1608 = vmatprep.subr.bf16.mxu0 0
    %1609 = vmatpush1.bf16.xpose.msra.mxu0 0
    %1610 = vmatprep.subr.bf16.mxu0 0
    %1611 = vmatpush1.bf16.xpose.msra.mxu0 0
    %1612 = vmatprep.subr.bf16.mxu0 0
    %1613 = vmatpush1.bf16.xpose.msra.mxu0 0
    %1614 = vmatprep.subr.bf16.mxu0 0
    %1615 = vmatpush1.bf16.xpose.msra.mxu0 0
    %1616 = vmatprep.subr.bf16.mxu0 0
    %1617 = vmatpush1.bf16.xpose.msra.mxu0 0
    %1618 = vmatprep.subr.bf16.mxu0 0
    %1619 = vmatpush1.bf16.xpose.msra.mxu0 0
    %1620 = vmatprep.subr.bf16.mxu0 0
    %1621 = vmatpush1.bf16.xpose.msra.mxu0 0
    %1622 = vmatprep.subr.bf16.mxu0 0
    %1623 = vmatpush1.bf16.xpose.msra.mxu0 0
    %1624 = vmatprep.subr.bf16.mxu0 0
    %1625 = vmatpush1.bf16.xpose.msra.mxu0 0
    %1626 = vmatprep.subr.bf16.mxu0 0
    %1627 = vmatpush1.bf16.xpose.msra.mxu0 0
    %1628 = vmatprep.subr.bf16.mxu0 0
    %1629 = vmatpush1.bf16.xpose.msra.mxu0 0
    %1630 = vmatprep.subr.bf16.mxu0 0
    %1631 = vmatpush1.bf16.xpose.msra.mxu0 0
    %1632 = vmatprep.subr.bf16.mxu0 0
    %1633 = vmatpush1.bf16.xpose.msra.mxu0 0
    %1634 = vmatprep.mubr.bf16.mxu0 0
    %1635 = vmatmul.mubr.bf16.gmra.mrb[0].mxu0 %v1597
    %v1636 = vpop.f32.mrb[0].mxu0
    %v1637 = vadd.f32 0.0, %v1636
    %v1638 = vpop.f32.mrb[0].mxu0
    %v1639 = vpop.f32.mrb[0].mxu0
    %v1640 = vpop.f32.mrb[0].mxu0
    %1641 = vdwg.mxu0
    %v1642 = vmul.f32 %v1637, 0.25
    %v1643 = vadd.f32 %v1642, %v1529
    %v1644 = vsel %vm353, %v1643, -inf
    %1645 = vmax.xlane.f32.xlu0 %v1644
    %v1646 = vpop.xlane.xlu0 %1645
    %v1647 = vsub.f32 %v1643, %v1646
    %v1648 = vmul.f32 %v1647, 1.442695
    %v1649 = vpow.pop %v1648
    %v1650 = vsel %vm353, %v1649, 0.0
    %1651 = vadd.xlane.f32.xlu0 %v1650
    %v1652 = vpop.xlane.xlu0 %1651
    %v1653 = vrcp.pop %v1652
    %v1654 = vmul.f32 %v1649, %v1653
    %v1655 = vpack.c.bf16 %v1654, %v1654
    %1656 = vrot.lane.b32.xlu0 %v1475, 48
    %v1657 = vpop.permute.xlu0 %1656
    %v1659 = vsel %vm353, %v1655, 0
    %v1662 = vsel %vm371, %v1657, 0
    %1664 = vmatprep.subr.bf16.mxu0 0
    %1665 = vmatpush1.bf16.msra.mxu0 %v1662
    %1666 = vmatprep.subr.bf16.mxu0 0
    %1667 = vmatpush1.bf16.msra.mxu0 0
    %1668 = vmatprep.subr.bf16.mxu0 0
    %1669 = vmatpush1.bf16.msra.mxu0 0
    %1670 = vmatprep.subr.bf16.mxu0 0
    %1671 = vmatpush1.bf16.msra.mxu0 0
    %1672 = vmatprep.subr.bf16.mxu0 0
    %1673 = vmatpush1.bf16.msra.mxu0 0
    %1674 = vmatprep.subr.bf16.mxu0 0
    %1675 = vmatpush1.bf16.msra.mxu0 0
    %1676 = vmatprep.subr.bf16.mxu0 0
    %1677 = vmatpush1.bf16.msra.mxu0 0
    %1678 = vmatprep.subr.bf16.mxu0 0
    %1679 = vmatpush1.bf16.msra.mxu0 0
    %1680 = vmatprep.subr.bf16.mxu0 0
    %1681 = vmatpush1.bf16.msra.mxu0 0
    %1682 = vmatprep.subr.bf16.mxu0 0
    %1683 = vmatpush1.bf16.msra.mxu0 0
    %1684 = vmatprep.subr.bf16.mxu0 0
    %1685 = vmatpush1.bf16.msra.mxu0 0
    %1686 = vmatprep.subr.bf16.mxu0 0
    %1687 = vmatpush1.bf16.msra.mxu0 0
    %1688 = vmatprep.subr.bf16.mxu0 0
    %1689 = vmatpush1.bf16.msra.mxu0 0
    %1690 = vmatprep.subr.bf16.mxu0 0
    %1691 = vmatpush1.bf16.msra.mxu0 0
    %1692 = vmatprep.subr.bf16.mxu0 0
    %1693 = vmatpush1.bf16.msra.mxu0 0
    %1694 = vmatprep.subr.bf16.mxu0 0
    %1695 = vmatpush1.bf16.msra.mxu0 0
    %1696 = vmatprep.mubr.bf16.mxu0 0
    %1697 = vmatmul.mubr.bf16.gmra.mrb[0].mxu0 %v1659
    %v1698 = vpop.f32.mrb[0].mxu0
    %v1699 = vadd.f32 0.0, %v1698
    %v1700 = vpop.f32.mrb[0].mxu0
    %v1701 = vpop.f32.mrb[0].mxu0
    %v1702 = vpop.f32.mrb[0].mxu0
    %1703 = vdwg.mxu0
    %1705 = vrot.lane.b32.xlu0 %v1699, 16
    %v1706 = vpop.permute.xlu0 %1705
    %1708 = vst.msk [vmem:[#allocation2 + $0x28] sm:$0xff] %vm532, %v1706
    %v1709 = vld [vmem:[%s1 + $0x6] sm:$0x1]
    %v1710 = vpack.c.bf16 %v289, %v289
    %1712 = vrot.lane.b32.xlu0 %v1710, 96
    %v1713 = vpop.permute.xlu0 %1712
    %v1715 = vsel %vm300, %v1710, 0
    %v1718 = vsel %vm300, %v1713, 0
    %1720 = vmatprep.subr.bf16.mxu0 0
    %1721 = vmatpush1.bf16.xpose.msra.mxu0 %v1718
    %1722 = vmatprep.subr.bf16.mxu0 0
    %1723 = vmatpush1.bf16.xpose.msra.mxu0 0
    %1724 = vmatprep.subr.bf16.mxu0 0
    %1725 = vmatpush1.bf16.xpose.msra.mxu0 0
    %1726 = vmatprep.subr.bf16.mxu0 0
    %1727 = vmatpush1.bf16.xpose.msra.mxu0 0
    %1728 = vmatprep.subr.bf16.mxu0 0
    %1729 = vmatpush1.bf16.xpose.msra.mxu0 0
    %1730 = vmatprep.subr.bf16.mxu0 0
    %1731 = vmatpush1.bf16.xpose.msra.mxu0 0
    %1732 = vmatprep.subr.bf16.mxu0 0
    %1733 = vmatpush1.bf16.xpose.msra.mxu0 0
    %1734 = vmatprep.subr.bf16.mxu0 0
    %1735 = vmatpush1.bf16.xpose.msra.mxu0 0
    %1736 = vmatprep.subr.bf16.mxu0 0
    %1737 = vmatpush1.bf16.xpose.msra.mxu0 0
    %1738 = vmatprep.subr.bf16.mxu0 0
    %1739 = vmatpush1.bf16.xpose.msra.mxu0 0
    %1740 = vmatprep.subr.bf16.mxu0 0
    %1741 = vmatpush1.bf16.xpose.msra.mxu0 0
    %1742 = vmatprep.subr.bf16.mxu0 0
    %1743 = vmatpush1.bf16.xpose.msra.mxu0 0
    %1744 = vmatprep.subr.bf16.mxu0 0
    %1745 = vmatpush1.bf16.xpose.msra.mxu0 0
    %1746 = vmatprep.subr.bf16.mxu0 0
    %1747 = vmatpush1.bf16.xpose.msra.mxu0 0
    %1748 = vmatprep.subr.bf16.mxu0 0
    %1749 = vmatpush1.bf16.xpose.msra.mxu0 0
    %1750 = vmatprep.subr.bf16.mxu0 0
    %1751 = vmatpush1.bf16.xpose.msra.mxu0 0
    %1752 = vmatprep.mubr.bf16.mxu0 0
    %1753 = vmatmul.mubr.bf16.gmra.mrb[0].mxu0 %v1715
    %v1754 = vpop.f32.mrb[0].mxu0
    %v1755 = vadd.f32 0.0, %v1754
    %v1756 = vpop.f32.mrb[0].mxu0
    %v1757 = vpop.f32.mrb[0].mxu0
    %v1758 = vpop.f32.mrb[0].mxu0
    %1759 = vdwg.mxu0
    %v1760 = vmul.f32 %v1755, 0.25
    %v1761 = vlaneseq
    %v1762 = vshrl.u32 %v1761, 7
    %v1763 = vsub.s32 0, %v1762
    %v1764 = vrot.slane %v1709, %v1763
    %v1765 = vadd.f32 %v1760, %v1764
    %v1766 = vsel %vm353, %v1765, -inf
    %1767 = vmax.xlane.f32.xlu0 %v1766
    %v1768 = vpop.xlane.xlu0 %1767
    %v1769 = vsub.f32 %v1765, %v1768
    %v1770 = vmul.f32 %v1769, 1.442695
    %v1771 = vpow.pop %v1770
    %v1772 = vsel %vm353, %v1771, 0.0
    %1773 = vadd.xlane.f32.xlu0 %v1772
    %v1774 = vpop.xlane.xlu0 %1773
    %v1775 = vrcp.pop %v1774
    %v1776 = vmul.f32 %v1771, %v1775
    %v1777 = vpack.c.bf16 %v1776, %v1776
    %1778 = vrot.lane.b32.xlu0 %v1710, 64
    %v1779 = vpop.permute.xlu0 %1778
    %v1781 = vsel %vm353, %v1777, 0
    %v1784 = vsel %vm371, %v1779, 0
    %1786 = vmatprep.subr.bf16.mxu0 0
    %1787 = vmatpush1.bf16.msra.mxu0 %v1784
    %1788 = vmatprep.subr.bf16.mxu0 0
    %1789 = vmatpush1.bf16.msra.mxu0 0
    %1790 = vmatprep.subr.bf16.mxu0 0
    %1791 = vmatpush1.bf16.msra.mxu0 0
    %1792 = vmatprep.subr.bf16.mxu0 0
    %1793 = vmatpush1.bf16.msra.mxu0 0
    %1794 = vmatprep.subr.bf16.mxu0 0
    %1795 = vmatpush1.bf16.msra.mxu0 0
    %1796 = vmatprep.subr.bf16.mxu0 0
    %1797 = vmatpush1.bf16.msra.mxu0 0
    %1798 = vmatprep.subr.bf16.mxu0 0
    %1799 = vmatpush1.bf16.msra.mxu0 0
    %1800 = vmatprep.subr.bf16.mxu0 0
    %1801 = vmatpush1.bf16.msra.mxu0 0
    %1802 = vmatprep.subr.bf16.mxu0 0
    %1803 = vmatpush1.bf16.msra.mxu0 0
    %1804 = vmatprep.subr.bf16.mxu0 0
    %1805 = vmatpush1.bf16.msra.mxu0 0
    %1806 = vmatprep.subr.bf16.mxu0 0
    %1807 = vmatpush1.bf16.msra.mxu0 0
    %1808 = vmatprep.subr.bf16.mxu0 0
    %1809 = vmatpush1.bf16.msra.mxu0 0
    %1810 = vmatprep.subr.bf16.mxu0 0
    %1811 = vmatpush1.bf16.msra.mxu0 0
    %1812 = vmatprep.subr.bf16.mxu0 0
    %1813 = vmatpush1.bf16.msra.mxu0 0
    %1814 = vmatprep.subr.bf16.mxu0 0
    %1815 = vmatpush1.bf16.msra.mxu0 0
    %1816 = vmatprep.subr.bf16.mxu0 0
    %1817 = vmatpush1.bf16.msra.mxu0 0
    %1818 = vmatprep.mubr.bf16.mxu0 0
    %1819 = vmatmul.mubr.bf16.gmra.mrb[0].mxu0 %v1781
    %v1820 = vpop.f32.mrb[0].mxu0
    %v1821 = vadd.f32 0.0, %v1820
    %v1822 = vpop.f32.mrb[0].mxu0
    %v1823 = vpop.f32.mrb[0].mxu0
    %v1824 = vpop.f32.mrb[0].mxu0
    %1825 = vdwg.mxu0
    %1826 = vst.msk [vmem:[#allocation2 + $0x30] sm:$0xff] %vm300, %v1821
    %1827 = vrot.lane.b32.xlu0 %v1710, 112
    %v1828 = vpop.permute.xlu0 %1827
    %1829 = vrot.lane.b32.xlu0 %v1710, 80
    %v1830 = vpop.permute.xlu0 %1829
    %v1832 = vsel %vm300, %v1828, 0
    %v1835 = vsel %vm300, %v1830, 0
    %1837 = vmatprep.subr.bf16.mxu0 0
    %1838 = vmatpush1.bf16.xpose.msra.mxu0 %v1835
    %1839 = vmatprep.subr.bf16.mxu0 0
    %1840 = vmatpush1.bf16.xpose.msra.mxu0 0
    %1841 = vmatprep.subr.bf16.mxu0 0
    %1842 = vmatpush1.bf16.xpose.msra.mxu0 0
    %1843 = vmatprep.subr.bf16.mxu0 0
    %1844 = vmatpush1.bf16.xpose.msra.mxu0 0
    %1845 = vmatprep.subr.bf16.mxu0 0
    %1846 = vmatpush1.bf16.xpose.msra.mxu0 0
    %1847 = vmatprep.subr.bf16.mxu0 0
    %1848 = vmatpush1.bf16.xpose.msra.mxu0 0
    %1849 = vmatprep.subr.bf16.mxu0 0
    %1850 = vmatpush1.bf16.xpose.msra.mxu0 0
    %1851 = vmatprep.subr.bf16.mxu0 0
    %1852 = vmatpush1.bf16.xpose.msra.mxu0 0
    %1853 = vmatprep.subr.bf16.mxu0 0
    %1854 = vmatpush1.bf16.xpose.msra.mxu0 0
    %1855 = vmatprep.subr.bf16.mxu0 0
    %1856 = vmatpush1.bf16.xpose.msra.mxu0 0
    %1857 = vmatprep.subr.bf16.mxu0 0
    %1858 = vmatpush1.bf16.xpose.msra.mxu0 0
    %1859 = vmatprep.subr.bf16.mxu0 0
    %1860 = vmatpush1.bf16.xpose.msra.mxu0 0
    %1861 = vmatprep.subr.bf16.mxu0 0
    %1862 = vmatpush1.bf16.xpose.msra.mxu0 0
    %1863 = vmatprep.subr.bf16.mxu0 0
    %1864 = vmatpush1.bf16.xpose.msra.mxu0 0
    %1865 = vmatprep.subr.bf16.mxu0 0
    %1866 = vmatpush1.bf16.xpose.msra.mxu0 0
    %1867 = vmatprep.subr.bf16.mxu0 0
    %1868 = vmatpush1.bf16.xpose.msra.mxu0 0
    %1869 = vmatprep.mubr.bf16.mxu0 0
    %1870 = vmatmul.mubr.bf16.gmra.mrb[0].mxu0 %v1832
    %v1871 = vpop.f32.mrb[0].mxu0
    %v1872 = vadd.f32 0.0, %v1871
    %v1873 = vpop.f32.mrb[0].mxu0
    %v1874 = vpop.f32.mrb[0].mxu0
    %v1875 = vpop.f32.mrb[0].mxu0
    %1876 = vdwg.mxu0
    %v1877 = vmul.f32 %v1872, 0.25
    %v1878 = vadd.f32 %v1877, %v1764
    %v1879 = vsel %vm353, %v1878, -inf
    %1880 = vmax.xlane.f32.xlu0 %v1879
    %v1881 = vpop.xlane.xlu0 %1880
    %v1882 = vsub.f32 %v1878, %v1881
    %v1883 = vmul.f32 %v1882, 1.442695
    %v1884 = vpow.pop %v1883
    %v1885 = vsel %vm353, %v1884, 0.0
    %1886 = vadd.xlane.f32.xlu0 %v1885
    %v1887 = vpop.xlane.xlu0 %1886
    %v1888 = vrcp.pop %v1887
    %v1889 = vmul.f32 %v1884, %v1888
    %v1890 = vpack.c.bf16 %v1889, %v1889
    %1891 = vrot.lane.b32.xlu0 %v1710, 48
    %v1892 = vpop.permute.xlu0 %1891
    %v1894 = vsel %vm353, %v1890, 0
    %v1897 = vsel %vm371, %v1892, 0
    %1899 = vmatprep.subr.bf16.mxu0 0
    %1900 = vmatpush1.bf16.msra.mxu0 %v1897
    %1901 = vmatprep.subr.bf16.mxu0 0
    %1902 = vmatpush1.bf16.msra.mxu0 0
    %1903 = vmatprep.subr.bf16.mxu0 0
    %1904 = vmatpush1.bf16.msra.mxu0 0
    %1905 = vmatprep.subr.bf16.mxu0 0
    %1906 = vmatpush1.bf16.msra.mxu0 0
    %1907 = vmatprep.subr.bf16.mxu0 0
    %1908 = vmatpush1.bf16.msra.mxu0 0
    %1909 = vmatprep.subr.bf16.mxu0 0
    %1910 = vmatpush1.bf16.msra.mxu0 0
    %1911 = vmatprep.subr.bf16.mxu0 0
    %1912 = vmatpush1.bf16.msra.mxu0 0
    %1913 = vmatprep.subr.bf16.mxu0 0
    %1914 = vmatpush1.bf16.msra.mxu0 0
    %1915 = vmatprep.subr.bf16.mxu0 0
    %1916 = vmatpush1.bf16.msra.mxu0 0
    %1917 = vmatprep.subr.bf16.mxu0 0
    %1918 = vmatpush1.bf16.msra.mxu0 0
    %1919 = vmatprep.subr.bf16.mxu0 0
    %1920 = vmatpush1.bf16.msra.mxu0 0
    %1921 = vmatprep.subr.bf16.mxu0 0
    %1922 = vmatpush1.bf16.msra.mxu0 0
    %1923 = vmatprep.subr.bf16.mxu0 0
    %1924 = vmatpush1.bf16.msra.mxu0 0
    %1925 = vmatprep.subr.bf16.mxu0 0
    %1926 = vmatpush1.bf16.msra.mxu0 0
    %1927 = vmatprep.subr.bf16.mxu0 0
    %1928 = vmatpush1.bf16.msra.mxu0 0
    %1929 = vmatprep.subr.bf16.mxu0 0
    %1930 = vmatpush1.bf16.msra.mxu0 0
    %1931 = vmatprep.mubr.bf16.mxu0 0
    %1932 = vmatmul.mubr.bf16.gmra.mrb[0].mxu0 %v1894
    %v1933 = vpop.f32.mrb[0].mxu0
    %v1934 = vadd.f32 0.0, %v1933
    %v1935 = vpop.f32.mrb[0].mxu0
    %v1936 = vpop.f32.mrb[0].mxu0
    %v1937 = vpop.f32.mrb[0].mxu0
    %1938 = vdwg.mxu0
    %1940 = vrot.lane.b32.xlu0 %v1934, 16
    %v1941 = vpop.permute.xlu0 %1940
    %1943 = vst.msk [vmem:[#allocation2 + $0x30] sm:$0xff] %vm532, %v1941
    %v1944 = vld [vmem:[%s1 + $0x7] sm:$0x1]
    %v1945 = vpack.c.bf16 %v292, %v292
    %1947 = vrot.lane.b32.xlu0 %v1945, 96
    %v1948 = vpop.permute.xlu0 %1947
    %v1950 = vsel %vm300, %v1945, 0
    %v1953 = vsel %vm300, %v1948, 0
    %1955 = vmatprep.subr.bf16.mxu0 0
    %1956 = vmatpush1.bf16.xpose.msra.mxu0 %v1953
    %1957 = vmatprep.subr.bf16.mxu0 0
    %1958 = vmatpush1.bf16.xpose.msra.mxu0 0
    %1959 = vmatprep.subr.bf16.mxu0 0
    %1960 = vmatpush1.bf16.xpose.msra.mxu0 0
    %1961 = vmatprep.subr.bf16.mxu0 0
    %1962 = vmatpush1.bf16.xpose.msra.mxu0 0
    %1963 = vmatprep.subr.bf16.mxu0 0
    %1964 = vmatpush1.bf16.xpose.msra.mxu0 0
    %1965 = vmatprep.subr.bf16.mxu0 0
    %1966 = vmatpush1.bf16.xpose.msra.mxu0 0
    %1967 = vmatprep.subr.bf16.mxu0 0
    %1968 = vmatpush1.bf16.xpose.msra.mxu0 0
    %1969 = vmatprep.subr.bf16.mxu0 0
    %1970 = vmatpush1.bf16.xpose.msra.mxu0 0
    %1971 = vmatprep.subr.bf16.mxu0 0
    %1972 = vmatpush1.bf16.xpose.msra.mxu0 0
    %1973 = vmatprep.subr.bf16.mxu0 0
    %1974 = vmatpush1.bf16.xpose.msra.mxu0 0
    %1975 = vmatprep.subr.bf16.mxu0 0
    %1976 = vmatpush1.bf16.xpose.msra.mxu0 0
    %1977 = vmatprep.subr.bf16.mxu0 0
    %1978 = vmatpush1.bf16.xpose.msra.mxu0 0
    %1979 = vmatprep.subr.bf16.mxu0 0
    %1980 = vmatpush1.bf16.xpose.msra.mxu0 0
    %1981 = vmatprep.subr.bf16.mxu0 0
    %1982 = vmatpush1.bf16.xpose.msra.mxu0 0
    %1983 = vmatprep.subr.bf16.mxu0 0
    %1984 = vmatpush1.bf16.xpose.msra.mxu0 0
    %1985 = vmatprep.subr.bf16.mxu0 0
    %1986 = vmatpush1.bf16.xpose.msra.mxu0 0
    %1987 = vmatprep.mubr.bf16.mxu0 0
    %1988 = vmatmul.mubr.bf16.gmra.mrb[0].mxu0 %v1950
    %v1989 = vpop.f32.mrb[0].mxu0
    %v1990 = vadd.f32 0.0, %v1989
    %v1991 = vpop.f32.mrb[0].mxu0
    %v1992 = vpop.f32.mrb[0].mxu0
    %v1993 = vpop.f32.mrb[0].mxu0
    %1994 = vdwg.mxu0
    %v1995 = vmul.f32 %v1990, 0.25
    %v1996 = vlaneseq
    %v1997 = vshrl.u32 %v1996, 7
    %v1998 = vsub.s32 0, %v1997
    %v1999 = vrot.slane %v1944, %v1998
    %v2000 = vadd.f32 %v1995, %v1999
    %v2001 = vsel %vm353, %v2000, -inf
    %2002 = vmax.xlane.f32.xlu0 %v2001
    %v2003 = vpop.xlane.xlu0 %2002
    %v2004 = vsub.f32 %v2000, %v2003
    %v2005 = vmul.f32 %v2004, 1.442695
    %v2006 = vpow.pop %v2005
    %v2007 = vsel %vm353, %v2006, 0.0
    %2008 = vadd.xlane.f32.xlu0 %v2007
    %v2009 = vpop.xlane.xlu0 %2008
    %v2010 = vrcp.pop %v2009
    %v2011 = vmul.f32 %v2006, %v2010
    %v2012 = vpack.c.bf16 %v2011, %v2011
    %2013 = vrot.lane.b32.xlu0 %v1945, 64
    %v2014 = vpop.permute.xlu0 %2013
    %v2016 = vsel %vm353, %v2012, 0
    %v2019 = vsel %vm371, %v2014, 0
    %2021 = vmatprep.subr.bf16.mxu0 0
    %2022 = vmatpush1.bf16.msra.mxu0 %v2019
    %2023 = vmatprep.subr.bf16.mxu0 0
    %2024 = vmatpush1.bf16.msra.mxu0 0
    %2025 = vmatprep.subr.bf16.mxu0 0
    %2026 = vmatpush1.bf16.msra.mxu0 0
    %2027 = vmatprep.subr.bf16.mxu0 0
    %2028 = vmatpush1.bf16.msra.mxu0 0
    %2029 = vmatprep.subr.bf16.mxu0 0
    %2030 = vmatpush1.bf16.msra.mxu0 0
    %2031 = vmatprep.subr.bf16.mxu0 0
    %2032 = vmatpush1.bf16.msra.mxu0 0
    %2033 = vmatprep.subr.bf16.mxu0 0
    %2034 = vmatpush1.bf16.msra.mxu0 0
    %2035 = vmatprep.subr.bf16.mxu0 0
    %2036 = vmatpush1.bf16.msra.mxu0 0
    %2037 = vmatprep.subr.bf16.mxu0 0
    %2038 = vmatpush1.bf16.msra.mxu0 0
    %2039 = vmatprep.subr.bf16.mxu0 0
    %2040 = vmatpush1.bf16.msra.mxu0 0
    %2041 = vmatprep.subr.bf16.mxu0 0
    %2042 = vmatpush1.bf16.msra.mxu0 0
    %2043 = vmatprep.subr.bf16.mxu0 0
    %2044 = vmatpush1.bf16.msra.mxu0 0
    %2045 = vmatprep.subr.bf16.mxu0 0
    %2046 = vmatpush1.bf16.msra.mxu0 0
    %2047 = vmatprep.subr.bf16.mxu0 0
    %2048 = vmatpush1.bf16.msra.mxu0 0
    %2049 = vmatprep.subr.bf16.mxu0 0
    %2050 = vmatpush1.bf16.msra.mxu0 0
    %2051 = vmatprep.subr.bf16.mxu0 0
    %2052 = vmatpush1.bf16.msra.mxu0 0
    %2053 = vmatprep.mubr.bf16.mxu0 0
    %2054 = vmatmul.mubr.bf16.gmra.mrb[0].mxu0 %v2016
    %v2055 = vpop.f32.mrb[0].mxu0
    %v2056 = vadd.f32 0.0, %v2055
    %v2057 = vpop.f32.mrb[0].mxu0
    %v2058 = vpop.f32.mrb[0].mxu0
    %v2059 = vpop.f32.mrb[0].mxu0
    %2060 = vdwg.mxu0
    %2061 = vst.msk [vmem:[#allocation2 + $0x38] sm:$0xff] %vm300, %v2056
    %2062 = vrot.lane.b32.xlu0 %v1945, 112
    %v2063 = vpop.permute.xlu0 %2062
    %2064 = vrot.lane.b32.xlu0 %v1945, 80
    %v2065 = vpop.permute.xlu0 %2064
    %v2067 = vsel %vm300, %v2063, 0
    %v2070 = vsel %vm300, %v2065, 0
    %2072 = vmatprep.subr.bf16.mxu0 0
    %2073 = vmatpush1.bf16.xpose.msra.mxu0 %v2070
    %2074 = vmatprep.subr.bf16.mxu0 0
    %2075 = vmatpush1.bf16.xpose.msra.mxu0 0
    %2076 = vmatprep.subr.bf16.mxu0 0
    %2077 = vmatpush1.bf16.xpose.msra.mxu0 0
    %2078 = vmatprep.subr.bf16.mxu0 0
    %2079 = vmatpush1.bf16.xpose.msra.mxu0 0
    %2080 = vmatprep.subr.bf16.mxu0 0
    %2081 = vmatpush1.bf16.xpose.msra.mxu0 0
    %2082 = vmatprep.subr.bf16.mxu0 0
    %2083 = vmatpush1.bf16.xpose.msra.mxu0 0
    %2084 = vmatprep.subr.bf16.mxu0 0
    %2085 = vmatpush1.bf16.xpose.msra.mxu0 0
    %2086 = vmatprep.subr.bf16.mxu0 0
    %2087 = vmatpush1.bf16.xpose.msra.mxu0 0
    %2088 = vmatprep.subr.bf16.mxu0 0
    %2089 = vmatpush1.bf16.xpose.msra.mxu0 0
    %2090 = vmatprep.subr.bf16.mxu0 0
    %2091 = vmatpush1.bf16.xpose.msra.mxu0 0
    %2092 = vmatprep.subr.bf16.mxu0 0
    %2093 = vmatpush1.bf16.xpose.msra.mxu0 0
    %2094 = vmatprep.subr.bf16.mxu0 0
    %2095 = vmatpush1.bf16.xpose.msra.mxu0 0
    %2096 = vmatprep.subr.bf16.mxu0 0
    %2097 = vmatpush1.bf16.xpose.msra.mxu0 0
    %2098 = vmatprep.subr.bf16.mxu0 0
    %2099 = vmatpush1.bf16.xpose.msra.mxu0 0
    %2100 = vmatprep.subr.bf16.mxu0 0
    %2101 = vmatpush1.bf16.xpose.msra.mxu0 0
    %2102 = vmatprep.subr.bf16.mxu0 0
    %2103 = vmatpush1.bf16.xpose.msra.mxu0 0
    %2104 = vmatprep.mubr.bf16.mxu0 0
    %2105 = vmatmul.mubr.bf16.gmra.mrb[0].mxu0 %v2067
    %v2106 = vpop.f32.mrb[0].mxu0
    %v2107 = vadd.f32 0.0, %v2106
    %v2108 = vpop.f32.mrb[0].mxu0
    %v2109 = vpop.f32.mrb[0].mxu0
    %v2110 = vpop.f32.mrb[0].mxu0
    %2111 = vdwg.mxu0
    %v2112 = vmul.f32 %v2107, 0.25
    %v2113 = vadd.f32 %v2112, %v1999
    %v2114 = vsel %vm353, %v2113, -inf
    %2115 = vmax.xlane.f32.xlu0 %v2114
    %v2116 = vpop.xlane.xlu0 %2115
    %v2117 = vsub.f32 %v2113, %v2116
    %v2118 = vmul.f32 %v2117, 1.442695
    %v2119 = vpow.pop %v2118
    %v2120 = vsel %vm353, %v2119, 0.0
    %2121 = vadd.xlane.f32.xlu0 %v2120
    %v2122 = vpop.xlane.xlu0 %2121
    %v2123 = vrcp.pop %v2122
    %v2124 = vmul.f32 %v2119, %v2123
    %v2125 = vpack.c.bf16 %v2124, %v2124
    %2126 = vrot.lane.b32.xlu0 %v1945, 48
    %v2127 = vpop.permute.xlu0 %2126
    %v2129 = vsel %vm353, %v2125, 0
    %v2132 = vsel %vm371, %v2127, 0
    %2134 = vmatprep.subr.bf16.mxu0 0
    %2135 = vmatpush1.bf16.msra.mxu0 %v2132
    %2136 = vmatprep.subr.bf16.mxu0 0
    %2137 = vmatpush1.bf16.msra.mxu0 0
    %2138 = vmatprep.subr.bf16.mxu0 0
    %2139 = vmatpush1.bf16.msra.mxu0 0
    %2140 = vmatprep.subr.bf16.mxu0 0
    %2141 = vmatpush1.bf16.msra.mxu0 0
    %2142 = vmatprep.subr.bf16.mxu0 0
    %2143 = vmatpush1.bf16.msra.mxu0 0
    %2144 = vmatprep.subr.bf16.mxu0 0
    %2145 = vmatpush1.bf16.msra.mxu0 0
    %2146 = vmatprep.subr.bf16.mxu0 0
    %2147 = vmatpush1.bf16.msra.mxu0 0
    %2148 = vmatprep.subr.bf16.mxu0 0
    %2149 = vmatpush1.bf16.msra.mxu0 0
    %2150 = vmatprep.subr.bf16.mxu0 0
    %2151 = vmatpush1.bf16.msra.mxu0 0
    %2152 = vmatprep.subr.bf16.mxu0 0
    %2153 = vmatpush1.bf16.msra.mxu0 0
    %2154 = vmatprep.subr.bf16.mxu0 0
    %2155 = vmatpush1.bf16.msra.mxu0 0
    %2156 = vmatprep.subr.bf16.mxu0 0
    %2157 = vmatpush1.bf16.msra.mxu0 0
    %2158 = vmatprep.subr.bf16.mxu0 0
    %2159 = vmatpush1.bf16.msra.mxu0 0
    %2160 = vmatprep.subr.bf16.mxu0 0
    %2161 = vmatpush1.bf16.msra.mxu0 0
    %2162 = vmatprep.subr.bf16.mxu0 0
    %2163 = vmatpush1.bf16.msra.mxu0 0
    %2164 = vmatprep.subr.bf16.mxu0 0
    %2165 = vmatpush1.bf16.msra.mxu0 0
    %2166 = vmatprep.mubr.bf16.mxu0 0
    %2167 = vmatmul.mubr.bf16.gmra.mrb[0].mxu0 %v2129
    %v2168 = vpop.f32.mrb[0].mxu0
    %v2169 = vadd.f32 0.0, %v2168
    %v2170 = vpop.f32.mrb[0].mxu0
    %v2171 = vpop.f32.mrb[0].mxu0
    %v2172 = vpop.f32.mrb[0].mxu0
    %2173 = vdwg.mxu0
    %2175 = vrot.lane.b32.xlu0 %v2169, 16
    %v2176 = vpop.permute.xlu0 %2175
    %2178 = vst.msk [vmem:[#allocation2 + $0x38] sm:$0xff] %vm532, %v2176
    %v2179 = vld [vmem:[#allocation2] sm:$0xff]
    %v2180 = vld [vmem:[#allocation2 + $0x8] sm:$0xff]
    %v2181 = vld [vmem:[#allocation2 + $0x10] sm:$0xff]
    %v2182 = vld [vmem:[#allocation2 + $0x18] sm:$0xff]
    %v2183 = vld [vmem:[#allocation2 + $0x20] sm:$0xff]
    %v2184 = vld [vmem:[#allocation2 + $0x28] sm:$0xff]
    %v2185 = vld [vmem:[#allocation2 + $0x30] sm:$0xff]
    %v2186 = vld [vmem:[#allocation2 + $0x38] sm:$0xff]
    %v2187 = vld [vmem:[%s6] sm:$0xff]
    %v2188 = vld [vmem:[%s6 + $0x8] sm:$0xff]
    %v2189 = vld [vmem:[%s6 + $0x10] sm:$0xff]
    %v2190 = vld [vmem:[%s6 + $0x18] sm:$0xff]
    %v2191 = vpack.c.bf16 %v2180, %v2179
    %v2192 = vpack.c.bf16 %v2182, %v2181
    %v2193 = vpack.c.bf16 %v2184, %v2183
    %v2194 = vpack.c.bf16 %v2186, %v2185
    %v2195 = vpack.c.bf16 %v2188, %v2187
    %v2196 = vpack.c.bf16 %v2190, %v2189
    %v2197 = vld [vmem:[%s7] sm:$0x1]
    %v2199 = vlaneseq
    %v2200 = vshrl.u32 %v2199, 7
    %v2201 = vsub.s32 0, %v2200
    %v2202 = vrot.slane %v2197, %v2201
    %v2205 = vsel %vm71, %v2191, 0
    %v2208 = vsel %vm71, %v2192, 0
    %v2211 = vsel %vm71, %v2193, 0
    %v2214 = vsel %vm71, %v2194, 0
    %2216 = vmatprep.subr.bf16.mxu0 0
    %2217 = vmatpush1.bf16.msra.mxu0 %v2195
    %2218 = vmatprep.subr.bf16.mxu0 0
    %2219 = vmatpush1.bf16.msra.mxu0 %v2196
    %2220 = vmatprep.subr.bf16.mxu0 0
    %2221 = vmatpush1.bf16.msra.mxu0 0
    %2222 = vmatprep.subr.bf16.mxu0 0
    %2223 = vmatpush1.bf16.msra.mxu0 0
    %2224 = vmatprep.subr.bf16.mxu0 0
    %2225 = vmatpush1.bf16.msra.mxu0 0
    %2226 = vmatprep.subr.bf16.mxu0 0
    %2227 = vmatpush1.bf16.msra.mxu0 0
    %2228 = vmatprep.subr.bf16.mxu0 0
    %2229 = vmatpush1.bf16.msra.mxu0 0
    %2230 = vmatprep.subr.bf16.mxu0 0
    %2231 = vmatpush1.bf16.msra.mxu0 0
    %2232 = vmatprep.subr.bf16.mxu0 0
    %2233 = vmatpush1.bf16.msra.mxu0 0
    %2234 = vmatprep.subr.bf16.mxu0 0
    %2235 = vmatpush1.bf16.msra.mxu0 0
    %2236 = vmatprep.subr.bf16.mxu0 0
    %2237 = vmatpush1.bf16.msra.mxu0 0
    %2238 = vmatprep.subr.bf16.mxu0 0
    %2239 = vmatpush1.bf16.msra.mxu0 0
    %2240 = vmatprep.subr.bf16.mxu0 0
    %2241 = vmatpush1.bf16.msra.mxu0 0
    %2242 = vmatprep.subr.bf16.mxu0 0
    %2243 = vmatpush1.bf16.msra.mxu0 0
    %2244 = vmatprep.subr.bf16.mxu0 0
    %2245 = vmatpush1.bf16.msra.mxu0 0
    %2246 = vmatprep.subr.bf16.mxu0 0
    %2247 = vmatpush1.bf16.msra.mxu0 0
    %2248 = vmatprep.mubr.bf16.mxu0 0
    %2249 = vmatmul.mubr.bf16.gmra.mrb[0].mxu0 %v2205
    %v2250 = vpop.f32.mrb[0].mxu0
    %v2251 = vadd.f32 %v2202, %v2250
    %v2252 = vpop.f32.mrb[0].mxu0
    %v2253 = vpop.f32.mrb[0].mxu0
    %v2254 = vadd.f32 %v2202, %v2253
    %v2255 = vpop.f32.mrb[0].mxu0
    %2256 = vmatprep.mubr.bf16.mxu0 0
    %2257 = vmatmul.mubr.bf16.gmra.mrb[0].mxu0 %v2208
    %v2258 = vpop.f32.mrb[0].mxu0
    %v2259 = vadd.f32 %v2202, %v2258
    %v2260 = vpop.f32.mrb[0].mxu0
    %v2261 = vpop.f32.mrb[0].mxu0
    %v2262 = vadd.f32 %v2202, %v2261
    %v2263 = vpop.f32.mrb[0].mxu0
    %2264 = vmatprep.mubr.bf16.mxu0 0
    %2265 = vmatmul.mubr.bf16.gmra.mrb[0].mxu0 %v2211
    %v2266 = vpop.f32.mrb[0].mxu0
    %v2267 = vadd.f32 %v2202, %v2266
    %v2268 = vpop.f32.mrb[0].mxu0
    %v2269 = vpop.f32.mrb[0].mxu0
    %v2270 = vadd.f32 %v2202, %v2269
    %v2271 = vpop.f32.mrb[0].mxu0
    %2272 = vmatprep.mubr.bf16.mxu0 0
    %2273 = vmatmul.mubr.bf16.gmra.mrb[0].mxu0 %v2214
    %v2274 = vpop.f32.mrb[0].mxu0
    %v2275 = vadd.f32 %v2202, %v2274
    %v2276 = vpop.f32.mrb[0].mxu0
    %v2277 = vpop.f32.mrb[0].mxu0
    %v2278 = vadd.f32 %v2202, %v2277
    %v2279 = vpop.f32.mrb[0].mxu0
    %2280 = vdwg.mxu0
    %v2281 = vld [vmem:[%s8] sm:$0x3]
    %v2282 = vadd.f32 %v2251, %v193
    %v2283 = vadd.f32 %v2254, %v194
    %v2284 = vadd.f32 %v2259, %v195
    %v2285 = vadd.f32 %v2262, %v196
    %v2286 = vadd.f32 %v2267, %v197
    %v2287 = vadd.f32 %v2270, %v198
    %v2288 = vadd.f32 %v2275, %v199
    %v2289 = vadd.f32 %v2278, %v200
    %v2290 = vsel %vm71, %v2282, 0.0
    %2291 = vadd.xlane.f32.xlu0 %v2290
    %v2292 = vpop.xlane.xlu0 %2291
    %v2293 = vsel %vm71, %v2283, 0.0
    %2294 = vadd.xlane.f32.xlu0 %v2293
    %v2295 = vpop.xlane.xlu0 %2294
    %v2296 = vsel %vm71, %v2284, 0.0
    %2297 = vadd.xlane.f32.xlu0 %v2296
    %v2298 = vpop.xlane.xlu0 %2297
    %v2299 = vsel %vm71, %v2285, 0.0
    %2300 = vadd.xlane.f32.xlu0 %v2299
    %v2301 = vpop.xlane.xlu0 %2300
    %v2302 = vsel %vm71, %v2286, 0.0
    %2303 = vadd.xlane.f32.xlu0 %v2302
    %v2304 = vpop.xlane.xlu0 %2303
    %v2305 = vsel %vm71, %v2287, 0.0
    %2306 = vadd.xlane.f32.xlu0 %v2305
    %v2307 = vpop.xlane.xlu0 %2306
    %v2308 = vsel %vm71, %v2288, 0.0
    %2309 = vadd.xlane.f32.xlu0 %v2308
    %v2310 = vpop.xlane.xlu0 %2309
    %v2311 = vsel %vm71, %v2289, 0.0
    %2312 = vadd.xlane.f32.xlu0 %v2311
    %v2313 = vpop.xlane.xlu0 %2312
    %v2314 = vmul.f32 %v2292, %v96
    %v2315 = vmul.f32 %v2295, %v96
    %v2316 = vmul.f32 %v2298, %v96
    %v2317 = vmul.f32 %v2301, %v96
    %v2318 = vmul.f32 %v2304, %v96
    %v2319 = vmul.f32 %v2307, %v96
    %v2320 = vmul.f32 %v2310, %v96
    %v2321 = vmul.f32 %v2313, %v96
    %v2322 = vsub.f32 %v2282, %v2314
    %v2323 = vsub.f32 %v2283, %v2315
    %v2324 = vsub.f32 %v2284, %v2316
    %v2325 = vsub.f32 %v2285, %v2317
    %v2326 = vsub.f32 %v2286, %v2318
    %v2327 = vsub.f32 %v2287, %v2319
    %v2328 = vsub.f32 %v2288, %v2320
    %v2329 = vsub.f32 %v2289, %v2321
    %v2330 = vmul.f32 %v2322, %v2322
    %v2331 = vmul.f32 %v2323, %v2323
    %v2332 = vmul.f32 %v2324, %v2324
    %v2333 = vmul.f32 %v2325, %v2325
    %v2334 = vmul.f32 %v2326, %v2326
    %v2335 = vmul.f32 %v2327, %v2327
    %v2336 = vmul.f32 %v2328, %v2328
    %v2337 = vmul.f32 %v2329, %v2329
    %v2338 = vsel %vm71, %v2330, 0.0
    %2339 = vadd.xlane.f32.xlu0 %v2338
    %v2340 = vpop.xlane.xlu0 %2339
    %v2341 = vsel %vm71, %v2331, 0.0
    %2342 = vadd.xlane.f32.xlu0 %v2341
    %v2343 = vpop.xlane.xlu0 %2342
    %v2344 = vsel %vm71, %v2332, 0.0
    %2345 = vadd.xlane.f32.xlu0 %v2344
    %v2346 = vpop.xlane.xlu0 %2345
    %v2347 = vsel %vm71, %v2333, 0.0
    %2348 = vadd.xlane.f32.xlu0 %v2347
    %v2349 = vpop.xlane.xlu0 %2348
    %v2350 = vsel %vm71, %v2334, 0.0
    %2351 = vadd.xlane.f32.xlu0 %v2350
    %v2352 = vpop.xlane.xlu0 %2351
    %v2353 = vsel %vm71, %v2335, 0.0
    %2354 = vadd.xlane.f32.xlu0 %v2353
    %v2355 = vpop.xlane.xlu0 %2354
    %v2356 = vsel %vm71, %v2336, 0.0
    %2357 = vadd.xlane.f32.xlu0 %v2356
    %v2358 = vpop.xlane.xlu0 %2357
    %v2359 = vsel %vm71, %v2337, 0.0
    %2360 = vadd.xlane.f32.xlu0 %v2359
    %v2361 = vpop.xlane.xlu0 %2360
    %v2362 = vmul.f32 %v2340, %v96
    %v2363 = vmul.f32 %v2343, %v96
    %v2364 = vmul.f32 %v2346, %v96
    %v2365 = vmul.f32 %v2349, %v96
    %v2366 = vmul.f32 %v2352, %v96
    %v2367 = vmul.f32 %v2355, %v96
    %v2368 = vmul.f32 %v2358, %v96
    %v2369 = vmul.f32 %v2361, %v96
    %v2370 = vadd.f32 %v2362, 1e-12
    %v2371 = vadd.f32 %v2363, 1e-12
    %v2372 = vadd.f32 %v2364, 1e-12
    %v2373 = vadd.f32 %v2365, 1e-12
    %v2374 = vadd.f32 %v2366, 1e-12
    %v2375 = vadd.f32 %v2367, 1e-12
    %v2376 = vadd.f32 %v2368, 1e-12
    %v2377 = vadd.f32 %v2369, 1e-12
    %v2378 = vrsqrt.pop %v2370
    %v2379 = vrsqrt.pop %v2371
    %v2380 = vrsqrt.pop %v2372
    %v2381 = vrsqrt.pop %v2373
    %v2382 = vrsqrt.pop %v2374
    %v2383 = vrsqrt.pop %v2375
    %v2384 = vrsqrt.pop %v2376
    %v2385 = vrsqrt.pop %v2377
    %v2386 = vmul.f32 %v2322, %v2378
    %v2387 = vmul.f32 %v2323, %v2379
    %v2388 = vmul.f32 %v2324, %v2380
    %v2389 = vmul.f32 %v2325, %v2381
    %v2390 = vmul.f32 %v2326, %v2382
    %v2391 = vmul.f32 %v2327, %v2383
    %v2392 = vmul.f32 %v2328, %v2384
    %v2393 = vmul.f32 %v2329, %v2385
    %v2394 = vlaneseq
    %v2395 = vshrl.u32 %v2394, 7
    %v2396 = vsub.s32 0, %v2395
    %v2397 = vrot.slane %v2281, %v2396
    %v2398 = vmul.f32 %v2386, %v2397
    %v2399 = vmul.f32 %v2387, %v2397
    %v2400 = vmul.f32 %v2388, %v2397
    %v2401 = vmul.f32 %v2389, %v2397
    %v2402 = vmul.f32 %v2390, %v2397
    %v2403 = vmul.f32 %v2391, %v2397
    %v2404 = vmul.f32 %v2392, %v2397
    %v2405 = vmul.f32 %v2393, %v2397
    %v2406 = vlaneseq
    %v2407 = vshrl.u32 %v2406, 7
    %v2408 = vsub.s32 1, %v2407
    %v2409 = vrot.slane %v2281, %v2408
    %v2410 = vadd.f32 %v2398, %v2409
    %v2411 = vadd.f32 %v2399, %v2409
    %v2412 = vadd.f32 %v2400, %v2409
    %v2413 = vadd.f32 %v2401, %v2409
    %v2414 = vadd.f32 %v2402, %v2409
    %v2415 = vadd.f32 %v2403, %v2409
    %v2416 = vadd.f32 %v2404, %v2409
    %v2417 = vadd.f32 %v2405, %v2409
    %v2418 = vld [vmem:[%s9] sm:$0xff]
    %v2419 = vld [vmem:[%s9 + $0x8] sm:$0xff]
    %v2420 = vld [vmem:[%s9 + $0x10] sm:$0xff]
    %v2421 = vld [vmem:[%s9 + $0x18] sm:$0xff]
    %v2422 = vpack.c.bf16 %v2411, %v2410
    %v2423 = vpack.c.bf16 %v2413, %v2412
    %v2424 = vpack.c.bf16 %v2415, %v2414
    %v2425 = vpack.c.bf16 %v2417, %v2416
    %v2426 = vpack.c.bf16 %v2419, %v2418
    %v2427 = vpack.c.bf16 %v2421, %v2420
    %v2428 = vld [vmem:[%s10] sm:$0x1]
    %v2430 = vlaneseq
    %v2431 = vshrl.u32 %v2430, 7
    %v2432 = vsub.s32 0, %v2431
    %v2433 = vrot.slane %v2428, %v2432
    %v2436 = vsel %vm71, %v2422, 0
    %v2439 = vsel %vm71, %v2423, 0
    %v2442 = vsel %vm71, %v2424, 0
    %v2445 = vsel %vm71, %v2425, 0
    %2447 = vmatprep.subr.bf16.mxu0 0
    %2448 = vmatpush1.bf16.msra.mxu0 %v2426
    %2449 = vmatprep.subr.bf16.mxu0 0
    %2450 = vmatpush1.bf16.msra.mxu0 %v2427
    %2451 = vmatprep.subr.bf16.mxu0 0
    %2452 = vmatpush1.bf16.msra.mxu0 0
    %2453 = vmatprep.subr.bf16.mxu0 0
    %2454 = vmatpush1.bf16.msra.mxu0 0
    %2455 = vmatprep.subr.bf16.mxu0 0
    %2456 = vmatpush1.bf16.msra.mxu0 0
    %2457 = vmatprep.subr.bf16.mxu0 0
    %2458 = vmatpush1.bf16.msra.mxu0 0
    %2459 = vmatprep.subr.bf16.mxu0 0
    %2460 = vmatpush1.bf16.msra.mxu0 0
    %2461 = vmatprep.subr.bf16.mxu0 0
    %2462 = vmatpush1.bf16.msra.mxu0 0
    %2463 = vmatprep.subr.bf16.mxu0 0
    %2464 = vmatpush1.bf16.msra.mxu0 0
    %2465 = vmatprep.subr.bf16.mxu0 0
    %2466 = vmatpush1.bf16.msra.mxu0 0
    %2467 = vmatprep.subr.bf16.mxu0 0
    %2468 = vmatpush1.bf16.msra.mxu0 0
    %2469 = vmatprep.subr.bf16.mxu0 0
    %2470 = vmatpush1.bf16.msra.mxu0 0
    %2471 = vmatprep.subr.bf16.mxu0 0
    %2472 = vmatpush1.bf16.msra.mxu0 0
    %2473 = vmatprep.subr.bf16.mxu0 0
    %2474 = vmatpush1.bf16.msra.mxu0 0
    %2475 = vmatprep.subr.bf16.mxu0 0
    %2476 = vmatpush1.bf16.msra.mxu0 0
    %2477 = vmatprep.subr.bf16.mxu0 0
    %2478 = vmatpush1.bf16.msra.mxu0 0
    %2479 = vmatprep.mubr.bf16.mxu0 0
    %2480 = vmatmul.mubr.bf16.gmra.mrb[0].mxu0 %v2436
    %v2481 = vpop.f32.mrb[0].mxu0
    %v2482 = vadd.f32 %v2433, %v2481
    %v2483 = vpop.f32.mrb[0].mxu0
    %v2484 = vpop.f32.mrb[0].mxu0
    %v2485 = vadd.f32 %v2433, %v2484
    %v2486 = vpop.f32.mrb[0].mxu0
    %2487 = vmatprep.mubr.bf16.mxu0 0
    %2488 = vmatmul.mubr.bf16.gmra.mrb[0].mxu0 %v2439
    %v2489 = vpop.f32.mrb[0].mxu0
    %v2490 = vadd.f32 %v2433, %v2489
    %v2491 = vpop.f32.mrb[0].mxu0
    %v2492 = vpop.f32.mrb[0].mxu0
    %v2493 = vadd.f32 %v2433, %v2492
    %v2494 = vpop.f32.mrb[0].mxu0
    %2495 = vmatprep.mubr.bf16.mxu0 0
    %2496 = vmatmul.mubr.bf16.gmra.mrb[0].mxu0 %v2442
    %v2497 = vpop.f32.mrb[0].mxu0
    %v2498 = vadd.f32 %v2433, %v2497
    %v2499 = vpop.f32.mrb[0].mxu0
    %v2500 = vpop.f32.mrb[0].mxu0
    %v2501 = vadd.f32 %v2433, %v2500
    %v2502 = vpop.f32.mrb[0].mxu0
    %2503 = vmatprep.mubr.bf16.mxu0 0
    %2504 = vmatmul.mubr.bf16.gmra.mrb[0].mxu0 %v2445
    %v2505 = vpop.f32.mrb[0].mxu0
    %v2506 = vadd.f32 %v2433, %v2505
    %v2507 = vpop.f32.mrb[0].mxu0
    %v2508 = vpop.f32.mrb[0].mxu0
    %v2509 = vadd.f32 %v2433, %v2508
    %v2510 = vpop.f32.mrb[0].mxu0
    %2511 = vdwg.mxu0
    %v2512 = vmul.f32 %v2482, %v2482
    %v2513 = vmul.f32 %v2485, %v2485
    %v2514 = vmul.f32 %v2490, %v2490
    %v2515 = vmul.f32 %v2493, %v2493
    %v2516 = vmul.f32 %v2498, %v2498
    %v2517 = vmul.f32 %v2501, %v2501
    %v2518 = vmul.f32 %v2506, %v2506
    %v2519 = vmul.f32 %v2509, %v2509
    %v2520 = vmul.f32 %v2482, %v2512
    %v2521 = vmul.f32 %v2485, %v2513
    %v2522 = vmul.f32 %v2490, %v2514
    %v2523 = vmul.f32 %v2493, %v2515
    %v2524 = vmul.f32 %v2498, %v2516
    %v2525 = vmul.f32 %v2501, %v2517
    %v2526 = vmul.f32 %v2506, %v2518
    %v2527 = vmul.f32 %v2509, %v2519
    %v2528 = vmul.f32 %v2520, 0.044715
    %v2529 = vmul.f32 %v2521, 0.044715
    %v2530 = vmul.f32 %v2522, 0.044715
    %v2531 = vmul.f32 %v2523, 0.044715
    %v2532 = vmul.f32 %v2524, 0.044715
    %v2533 = vmul.f32 %v2525, 0.044715
    %v2534 = vmul.f32 %v2526, 0.044715
    %v2535 = vmul.f32 %v2527, 0.044715
    %v2536 = vadd.f32 %v2482, %v2528
    %v2537 = vadd.f32 %v2485, %v2529
    %v2538 = vadd.f32 %v2490, %v2530
    %v2539 = vadd.f32 %v2493, %v2531
    %v2540 = vadd.f32 %v2498, %v2532
    %v2541 = vadd.f32 %v2501, %v2533
    %v2542 = vadd.f32 %v2506, %v2534
    %v2543 = vadd.f32 %v2509, %v2535
    %v2544 = vmul.f32 %v2536, 0.7978846
    %v2545 = vmul.f32 %v2537, 0.7978846
    %v2546 = vmul.f32 %v2538, 0.7978846
    %v2547 = vmul.f32 %v2539, 0.7978846
    %v2548 = vmul.f32 %v2540, 0.7978846
    %v2549 = vmul.f32 %v2541, 0.7978846
    %v2550 = vmul.f32 %v2542, 0.7978846
    %v2551 = vmul.f32 %v2543, 0.7978846
    %v2552 = vtanh.pop %v2544
    %v2553 = vtanh.pop %v2545
    %v2554 = vtanh.pop %v2546
    %v2555 = vtanh.pop %v2547
    %v2556 = vtanh.pop %v2548
    %v2557 = vtanh.pop %v2549
    %v2558 = vtanh.pop %v2550
    %v2559 = vtanh.pop %v2551
    %v2560 = vadd.f32 %v2552, 1.0
    %v2561 = vadd.f32 %v2553, 1.0
    %v2562 = vadd.f32 %v2554, 1.0
    %v2563 = vadd.f32 %v2555, 1.0
    %v2564 = vadd.f32 %v2556, 1.0
    %v2565 = vadd.f32 %v2557, 1.0
    %v2566 = vadd.f32 %v2558, 1.0
    %v2567 = vadd.f32 %v2559, 1.0
    %v2568 = vmul.f32 %v2560, 0.5
    %v2569 = vmul.f32 %v2561, 0.5
    %v2570 = vmul.f32 %v2562, 0.5
    %v2571 = vmul.f32 %v2563, 0.5
    %v2572 = vmul.f32 %v2564, 0.5
    %v2573 = vmul.f32 %v2565, 0.5
    %v2574 = vmul.f32 %v2566, 0.5
    %v2575 = vmul.f32 %v2567, 0.5
    %v2576 = vmul.f32 %v2482, %v2568
    %v2577 = vmul.f32 %v2485, %v2569
    %v2578 = vmul.f32 %v2490, %v2570
    %v2579 = vmul.f32 %v2493, %v2571
    %v2580 = vmul.f32 %v2498, %v2572
    %v2581 = vmul.f32 %v2501, %v2573
    %v2582 = vmul.f32 %v2506, %v2574
    %v2583 = vmul.f32 %v2509, %v2575
    %v2584 = vld [vmem:[%s11] sm:$0xff]
    %v2585 = vld [vmem:[%s11 + $0x8] sm:$0xff]
    %v2586 = vld [vmem:[%s11 + $0x10] sm:$0xff]
    %v2587 = vld [vmem:[%s11 + $0x18] sm:$0xff]
    %v2588 = vld [vmem:[%s11 + $0x20] sm:$0xff]
    %v2589 = vld [vmem:[%s11 + $0x28] sm:$0xff]
    %v2590 = vld [vmem:[%s11 + $0x30] sm:$0xff]
    %v2591 = vld [vmem:[%s11 + $0x38] sm:$0xff]
    %v2592 = vpack.c.bf16 %v2577, %v2576
    %v2593 = vpack.c.bf16 %v2579, %v2578
    %v2594 = vpack.c.bf16 %v2581, %v2580
    %v2595 = vpack.c.bf16 %v2583, %v2582
    %v2596 = vpack.c.bf16 %v2585, %v2584
    %v2597 = vpack.c.bf16 %v2587, %v2586
    %v2598 = vpack.c.bf16 %v2589, %v2588
    %v2599 = vpack.c.bf16 %v2591, %v2590
    %v2600 = vld [vmem:[%s12] sm:$0x1]
    %v2602 = vlaneseq
    %v2603 = vshrl.u32 %v2602, 7
    %v2604 = vsub.s32 0, %v2603
    %v2605 = vrot.slane %v2600, %v2604
    %vm2607 = vcmask 523264
    %v2609 = vsel %vm2607, %v2592, 0
    %v2612 = vsel %vm2607, %v2593, 0
    %v2615 = vsel %vm2607, %v2594, 0
    %v2618 = vsel %vm2607, %v2595, 0
    %2620 = vmatprep.subr.bf16.mxu0 0
    %2621 = vmatpush1.bf16.msra.mxu0 %v2596
    %2622 = vmatprep.subr.bf16.mxu0 0
    %2623 = vmatpush1.bf16.msra.mxu0 %v2597
    %2624 = vmatprep.subr.bf16.mxu0 0
    %2625 = vmatpush1.bf16.msra.mxu0 %v2598
    %2626 = vmatprep.subr.bf16.mxu0 0
    %2627 = vmatpush1.bf16.msra.mxu0 %v2599
    %2628 = vmatprep.subr.bf16.mxu0 0
    %2629 = vmatpush1.bf16.msra.mxu0 0
    %2630 = vmatprep.subr.bf16.mxu0 0
    %2631 = vmatpush1.bf16.msra.mxu0 0
    %2632 = vmatprep.subr.bf16.mxu0 0
    %2633 = vmatpush1.bf16.msra.mxu0 0
    %2634 = vmatprep.subr.bf16.mxu0 0
    %2635 = vmatpush1.bf16.msra.mxu0 0
    %2636 = vmatprep.subr.bf16.mxu0 0
    %2637 = vmatpush1.bf16.msra.mxu0 0
    %2638 = vmatprep.subr.bf16.mxu0 0
    %2639 = vmatpush1.bf16.msra.mxu0 0
    %2640 = vmatprep.subr.bf16.mxu0 0
    %2641 = vmatpush1.bf16.msra.mxu0 0
    %2642 = vmatprep.subr.bf16.mxu0 0
    %2643 = vmatpush1.bf16.msra.mxu0 0
    %2644 = vmatprep.subr.bf16.mxu0 0
    %2645 = vmatpush1.bf16.msra.mxu0 0
    %2646 = vmatprep.subr.bf16.mxu0 0
    %2647 = vmatpush1.bf16.msra.mxu0 0
    %2648 = vmatprep.subr.bf16.mxu0 0
    %2649 = vmatpush1.bf16.msra.mxu0 0
    %2650 = vmatprep.subr.bf16.mxu0 0
    %2651 = vmatpush1.bf16.msra.mxu0 0
    %2652 = vmatprep.mubr.bf16.mxu0 0
    %2653 = vmatmul.mubr.bf16.gmra.mrb[0].mxu0 %v2609
    %v2654 = vpop.f32.mrb[0].mxu0
    %v2655 = vadd.f32 %v2605, %v2654
    %v2656 = vpop.f32.mrb[0].mxu0
    %v2657 = vpop.f32.mrb[0].mxu0
    %v2658 = vadd.f32 %v2605, %v2657
    %v2659 = vpop.f32.mrb[0].mxu0
    %2660 = vmatprep.mubr.bf16.mxu0 0
    %2661 = vmatmul.mubr.bf16.gmra.mrb[0].mxu0 %v2612
    %v2662 = vpop.f32.mrb[0].mxu0
    %v2663 = vadd.f32 %v2605, %v2662
    %v2664 = vpop.f32.mrb[0].mxu0
    %v2665 = vpop.f32.mrb[0].mxu0
    %v2666 = vadd.f32 %v2605, %v2665
    %v2667 = vpop.f32.mrb[0].mxu0
    %2668 = vmatprep.mubr.bf16.mxu0 0
    %2669 = vmatmul.mubr.bf16.gmra.mrb[0].mxu0 %v2615
    %v2670 = vpop.f32.mrb[0].mxu0
    %v2671 = vadd.f32 %v2605, %v2670
    %v2672 = vpop.f32.mrb[0].mxu0
    %v2673 = vpop.f32.mrb[0].mxu0
    %v2674 = vadd.f32 %v2605, %v2673
    %v2675 = vpop.f32.mrb[0].mxu0
    %2676 = vmatprep.mubr.bf16.mxu0 0
    %2677 = vmatmul.mubr.bf16.gmra.mrb[0].mxu0 %v2618
    %v2678 = vpop.f32.mrb[0].mxu0
    %v2679 = vadd.f32 %v2605, %v2678
    %v2680 = vpop.f32.mrb[0].mxu0
    %v2681 = vpop.f32.mrb[0].mxu0
    %v2682 = vadd.f32 %v2605, %v2681
    %v2683 = vpop.f32.mrb[0].mxu0
    %2684 = vdwg.mxu0
    %v2685 = vld [vmem:[%s13] sm:$0x3]
    %v2686 = vadd.f32 %v2655, %v2410
    %v2687 = vadd.f32 %v2658, %v2411
    %v2688 = vadd.f32 %v2663, %v2412
    %v2689 = vadd.f32 %v2666, %v2413
    %v2690 = vadd.f32 %v2671, %v2414
    %v2691 = vadd.f32 %v2674, %v2415
    %v2692 = vadd.f32 %v2679, %v2416
    %v2693 = vadd.f32 %v2682, %v2417
    %v2694 = vsel %vm71, %v2686, 0.0
    %2695 = vadd.xlane.f32.xlu0 %v2694
    %v2696 = vpop.xlane.xlu0 %2695
    %v2697 = vsel %vm71, %v2687, 0.0
    %2698 = vadd.xlane.f32.xlu0 %v2697
    %v2699 = vpop.xlane.xlu0 %2698
    %v2700 = vsel %vm71, %v2688, 0.0
    %2701 = vadd.xlane.f32.xlu0 %v2700
    %v2702 = vpop.xlane.xlu0 %2701
    %v2703 = vsel %vm71, %v2689, 0.0
    %2704 = vadd.xlane.f32.xlu0 %v2703
    %v2705 = vpop.xlane.xlu0 %2704
    %v2706 = vsel %vm71, %v2690, 0.0
    %2707 = vadd.xlane.f32.xlu0 %v2706
    %v2708 = vpop.xlane.xlu0 %2707
    %v2709 = vsel %vm71, %v2691, 0.0
    %2710 = vadd.xlane.f32.xlu0 %v2709
    %v2711 = vpop.xlane.xlu0 %2710
    %v2712 = vsel %vm71, %v2692, 0.0
    %2713 = vadd.xlane.f32.xlu0 %v2712
    %v2714 = vpop.xlane.xlu0 %2713
    %v2715 = vsel %vm71, %v2693, 0.0
    %2716 = vadd.xlane.f32.xlu0 %v2715
    %v2717 = vpop.xlane.xlu0 %2716
    %v2718 = vmul.f32 %v2696, %v96
    %v2719 = vmul.f32 %v2699, %v96
    %v2720 = vmul.f32 %v2702, %v96
    %v2721 = vmul.f32 %v2705, %v96
    %v2722 = vmul.f32 %v2708, %v96
    %v2723 = vmul.f32 %v2711, %v96
    %v2724 = vmul.f32 %v2714, %v96
    %v2725 = vmul.f32 %v2717, %v96
    %v2726 = vsub.f32 %v2686, %v2718
    %v2727 = vsub.f32 %v2687, %v2719
    %v2728 = vsub.f32 %v2688, %v2720
    %v2729 = vsub.f32 %v2689, %v2721
    %v2730 = vsub.f32 %v2690, %v2722
    %v2731 = vsub.f32 %v2691, %v2723
    %v2732 = vsub.f32 %v2692, %v2724
    %v2733 = vsub.f32 %v2693, %v2725
    %v2734 = vmul.f32 %v2726, %v2726
    %v2735 = vmul.f32 %v2727, %v2727
    %v2736 = vmul.f32 %v2728, %v2728
    %v2737 = vmul.f32 %v2729, %v2729
    %v2738 = vmul.f32 %v2730, %v2730
    %v2739 = vmul.f32 %v2731, %v2731
    %v2740 = vmul.f32 %v2732, %v2732
    %v2741 = vmul.f32 %v2733, %v2733
    %v2742 = vsel %vm71, %v2734, 0.0
    %2743 = vadd.xlane.f32.xlu0 %v2742
    %v2744 = vpop.xlane.xlu0 %2743
    %v2745 = vsel %vm71, %v2735, 0.0
    %2746 = vadd.xlane.f32.xlu0 %v2745
    %v2747 = vpop.xlane.xlu0 %2746
    %v2748 = vsel %vm71, %v2736, 0.0
    %2749 = vadd.xlane.f32.xlu0 %v2748
    %v2750 = vpop.xlane.xlu0 %2749
    %v2751 = vsel %vm71, %v2737, 0.0
    %2752 = vadd.xlane.f32.xlu0 %v2751
    %v2753 = vpop.xlane.xlu0 %2752
    %v2754 = vsel %vm71, %v2738, 0.0
    %2755 = vadd.xlane.f32.xlu0 %v2754
    %v2756 = vpop.xlane.xlu0 %2755
    %v2757 = vsel %vm71, %v2739, 0.0
    %2758 = vadd.xlane.f32.xlu0 %v2757
    %v2759 = vpop.xlane.xlu0 %2758
    %v2760 = vsel %vm71, %v2740, 0.0
    %2761 = vadd.xlane.f32.xlu0 %v2760
    %v2762 = vpop.xlane.xlu0 %2761
    %v2763 = vsel %vm71, %v2741, 0.0
    %2764 = vadd.xlane.f32.xlu0 %v2763
    %v2765 = vpop.xlane.xlu0 %2764
    %v2766 = vmul.f32 %v2744, %v96
    %v2767 = vmul.f32 %v2747, %v96
    %v2768 = vmul.f32 %v2750, %v96
    %v2769 = vmul.f32 %v2753, %v96
    %v2770 = vmul.f32 %v2756, %v96
    %v2771 = vmul.f32 %v2759, %v96
    %v2772 = vmul.f32 %v2762, %v96
    %v2773 = vmul.f32 %v2765, %v96
    %v2774 = vadd.f32 %v2766, 1e-12
    %v2775 = vadd.f32 %v2767, 1e-12
    %v2776 = vadd.f32 %v2768, 1e-12
    %v2777 = vadd.f32 %v2769, 1e-12
    %v2778 = vadd.f32 %v2770, 1e-12
    %v2779 = vadd.f32 %v2771, 1e-12
    %v2780 = vadd.f32 %v2772, 1e-12
    %v2781 = vadd.f32 %v2773, 1e-12
    %v2782 = vrsqrt.pop %v2774
    %v2783 = vrsqrt.pop %v2775
    %v2784 = vrsqrt.pop %v2776
    %v2785 = vrsqrt.pop %v2777
    %v2786 = vrsqrt.pop %v2778
    %v2787 = vrsqrt.pop %v2779
    %v2788 = vrsqrt.pop %v2780
    %v2789 = vrsqrt.pop %v2781
    %v2790 = vmul.f32 %v2726, %v2782
    %v2791 = vmul.f32 %v2727, %v2783
    %v2792 = vmul.f32 %v2728, %v2784
    %v2793 = vmul.f32 %v2729, %v2785
    %v2794 = vmul.f32 %v2730, %v2786
    %v2795 = vmul.f32 %v2731, %v2787
    %v2796 = vmul.f32 %v2732, %v2788
    %v2797 = vmul.f32 %v2733, %v2789
    %v2798 = vlaneseq
    %v2799 = vshrl.u32 %v2798, 7
    %v2800 = vsub.s32 0, %v2799
    %v2801 = vrot.slane %v2685, %v2800
    %v2802 = vmul.f32 %v2790, %v2801
    %v2803 = vmul.f32 %v2791, %v2801
    %v2804 = vmul.f32 %v2792, %v2801
    %v2805 = vmul.f32 %v2793, %v2801
    %v2806 = vmul.f32 %v2794, %v2801
    %v2807 = vmul.f32 %v2795, %v2801
    %v2808 = vmul.f32 %v2796, %v2801
    %v2809 = vmul.f32 %v2797, %v2801
    %v2810 = vlaneseq
    %v2811 = vshrl.u32 %v2810, 7
    %v2812 = vsub.s32 1, %v2811
    %v2813 = vrot.slane %v2685, %v2812
    %v2814 = vadd.f32 %v2802, %v2813
    %v2815 = vadd.f32 %v2803, %v2813
    %v2816 = vadd.f32 %v2804, %v2813
    %v2817 = vadd.f32 %v2805, %v2813
    %v2818 = vadd.f32 %v2806, %v2813
    %v2819 = vadd.f32 %v2807, %v2813
    %v2820 = vadd.f32 %v2808, %v2813
    %v2821 = vadd.f32 %v2809, %v2813
    %s2822 = scalar_lea.vmem %s4, 32
    %v2823 = vld [vmem:[%s2822] sm:$0xff]
    %v2824 = vld [vmem:[%s2822 + $0x8] sm:$0xff]
    %v2825 = vld [vmem:[%s2822 + $0x10] sm:$0xff]
    %v2826 = vld [vmem:[%s2822 + $0x18] sm:$0xff]
    %v2827 = vpack.c.bf16 %v2815, %v2814
    %v2828 = vpack.c.bf16 %v2817, %v2816
    %v2829 = vpack.c.bf16 %v2819, %v2818
    %v2830 = vpack.c.bf16 %v2821, %v2820
    %v2831 = vpack.c.bf16 %v2824, %v2823
    %v2832 = vpack.c.bf16 %v2826, %v2825
    %s2833 = scalar_lea.vmem %s5, 1
    %v2834 = vld [vmem:[%s2833] sm:$0x1]
    %v2836 = vlaneseq
    %v2837 = vshrl.u32 %v2836, 7
    %v2838 = vsub.s32 0, %v2837
    %v2839 = vrot.slane %v2834, %v2838
    %v2842 = vsel %vm71, %v2827, 0
    %v2845 = vsel %vm71, %v2828, 0
    %v2848 = vsel %vm71, %v2829, 0
    %v2851 = vsel %vm71, %v2830, 0
    %2853 = vmatprep.subr.bf16.mxu0 0
    %2854 = vmatpush1.bf16.msra.mxu0 %v2831
    %2855 = vmatprep.subr.bf16.mxu0 0
    %2856 = vmatpush1.bf16.msra.mxu0 %v2832
    %2857 = vmatprep.subr.bf16.mxu0 0
    %2858 = vmatpush1.bf16.msra.mxu0 0
    %2859 = vmatprep.subr.bf16.mxu0 0
    %2860 = vmatpush1.bf16.msra.mxu0 0
    %2861 = vmatprep.subr.bf16.mxu0 0
    %2862 = vmatpush1.bf16.msra.mxu0 0
    %2863 = vmatprep.subr.bf16.mxu0 0
    %2864 = vmatpush1.bf16.msra.mxu0 0
    %2865 = vmatprep.subr.bf16.mxu0 0
    %2866 = vmatpush1.bf16.msra.mxu0 0
    %2867 = vmatprep.subr.bf16.mxu0 0
    %2868 = vmatpush1.bf16.msra.mxu0 0
    %2869 = vmatprep.subr.bf16.mxu0 0
    %2870 = vmatpush1.bf16.msra.mxu0 0
    %2871 = vmatprep.subr.bf16.mxu0 0
    %2872 = vmatpush1.bf16.msra.mxu0 0
    %2873 = vmatprep.subr.bf16.mxu0 0
    %2874 = vmatpush1.bf16.msra.mxu0 0
    %2875 = vmatprep.subr.bf16.mxu0 0
    %2876 = vmatpush1.bf16.msra.mxu0 0
    %2877 = vmatprep.subr.bf16.mxu0 0
    %2878 = vmatpush1.bf16.msra.mxu0 0
    %2879 = vmatprep.subr.bf16.mxu0 0
    %2880 = vmatpush1.bf16.msra.mxu0 0
    %2881 = vmatprep.subr.bf16.mxu0 0
    %2882 = vmatpush1.bf16.msra.mxu0 0
    %2883 = vmatprep.subr.bf16.mxu0 0
    %2884 = vmatpush1.bf16.msra.mxu0 0
    %2885 = vmatprep.mubr.bf16.mxu0 0
    %2886 = vmatmul.mubr.bf16.gmra.mrb[0].mxu0 %v2842
    %v2887 = vpop.f32.mrb[0].mxu0
    %v2888 = vadd.f32 %v2839, %v2887
    %v2889 = vpop.f32.mrb[0].mxu0
    %v2890 = vpop.f32.mrb[0].mxu0
    %v2891 = vadd.f32 %v2839, %v2890
    %v2892 = vpop.f32.mrb[0].mxu0
    %2893 = vmatprep.mubr.bf16.mxu0 0
    %2894 = vmatmul.mubr.bf16.gmra.mrb[0].mxu0 %v2845
    %v2895 = vpop.f32.mrb[0].mxu0
    %v2896 = vadd.f32 %v2839, %v2895
    %v2897 = vpop.f32.mrb[0].mxu0
    %v2898 = vpop.f32.mrb[0].mxu0
    %v2899 = vadd.f32 %v2839, %v2898
    %v2900 = vpop.f32.mrb[0].mxu0
    %2901 = vmatprep.mubr.bf16.mxu0 0
    %2902 = vmatmul.mubr.bf16.gmra.mrb[0].mxu0 %v2848
    %v2903 = vpop.f32.mrb[0].mxu0
    %v2904 = vadd.f32 %v2839, %v2903
    %v2905 = vpop.f32.mrb[0].mxu0
    %v2906 = vpop.f32.mrb[0].mxu0
    %v2907 = vadd.f32 %v2839, %v2906
    %v2908 = vpop.f32.mrb[0].mxu0
    %2909 = vmatprep.mubr.bf16.mxu0 0
    %2910 = vmatmul.mubr.bf16.gmra.mrb[0].mxu0 %v2851
    %v2911 = vpop.f32.mrb[0].mxu0
    %v2912 = vadd.f32 %v2839, %v2911
    %v2913 = vpop.f32.mrb[0].mxu0
    %v2914 = vpop.f32.mrb[0].mxu0
    %v2915 = vadd.f32 %v2839, %v2914
    %v2916 = vpop.f32.mrb[0].mxu0
    %2917 = vdwg.mxu0
    %v2918 = vld [vmem:[%s1] sm:$0x1]
    %v2919 = vpack.c.bf16 %v2888, %v2888
    %2921 = vrot.lane.b32.xlu0 %v2919, 96
    %v2922 = vpop.permute.xlu0 %2921
    %v2924 = vsel %vm300, %v2919, 0
    %v2927 = vsel %vm300, %v2922, 0
    %2929 = vmatprep.subr.bf16.mxu0 0
    %2930 = vmatpush1.bf16.xpose.msra.mxu0 %v2927
    %2931 = vmatprep.subr.bf16.mxu0 0
    %2932 = vmatpush1.bf16.xpose.msra.mxu0 0
    %2933 = vmatprep.subr.bf16.mxu0 0
    %2934 = vmatpush1.bf16.xpose.msra.mxu0 0
    %2935 = vmatprep.subr.bf16.mxu0 0
    %2936 = vmatpush1.bf16.xpose.msra.mxu0 0
    %2937 = vmatprep.subr.bf16.mxu0 0
    %2938 = vmatpush1.bf16.xpose.msra.mxu0 0
    %2939 = vmatprep.subr.bf16.mxu0 0
    %2940 = vmatpush1.bf16.xpose.msra.mxu0 0
    %2941 = vmatprep.subr.bf16.mxu0 0
    %2942 = vmatpush1.bf16.xpose.msra.mxu0 0
    %2943 = vmatprep.subr.bf16.mxu0 0
    %2944 = vmatpush1.bf16.xpose.msra.mxu0 0
    %2945 = vmatprep.subr.bf16.mxu0 0
    %2946 = vmatpush1.bf16.xpose.msra.mxu0 0
    %2947 = vmatprep.subr.bf16.mxu0 0
    %2948 = vmatpush1.bf16.xpose.msra.mxu0 0
    %2949 = vmatprep.subr.bf16.mxu0 0
    %2950 = vmatpush1.bf16.xpose.msra.mxu0 0
    %2951 = vmatprep.subr.bf16.mxu0 0
    %2952 = vmatpush1.bf16.xpose.msra.mxu0 0
    %2953 = vmatprep.subr.bf16.mxu0 0
    %2954 = vmatpush1.bf16.xpose.msra.mxu0 0
    %2955 = vmatprep.subr.bf16.mxu0 0
    %2956 = vmatpush1.bf16.xpose.msra.mxu0 0
    %2957 = vmatprep.subr.bf16.mxu0 0
    %2958 = vmatpush1.bf16.xpose.msra.mxu0 0
    %2959 = vmatprep.subr.bf16.mxu0 0
    %2960 = vmatpush1.bf16.xpose.msra.mxu0 0
    %2961 = vmatprep.mubr.bf16.mxu0 0
    %2962 = vmatmul.mubr.bf16.gmra.mrb[0].mxu0 %v2924
    %v2963 = vpop.f32.mrb[0].mxu0
    %v2964 = vadd.f32 0.0, %v2963
    %v2965 = vpop.f32.mrb[0].mxu0
    %v2966 = vpop.f32.mrb[0].mxu0
    %v2967 = vpop.f32.mrb[0].mxu0
    %2968 = vdwg.mxu0
    %v2969 = vmul.f32 %v2964, 0.25
    %v2970 = vlaneseq
    %v2971 = vshrl.u32 %v2970, 7
    %v2972 = vsub.s32 0, %v2971
    %v2973 = vrot.slane %v2918, %v2972
    %v2974 = vadd.f32 %v2969, %v2973
    %v2975 = vsel %vm353, %v2974, -inf
    %2976 = vmax.xlane.f32.xlu0 %v2975
    %v2977 = vpop.xlane.xlu0 %2976
    %v2978 = vsub.f32 %v2974, %v2977
    %v2979 = vmul.f32 %v2978, 1.442695
    %v2980 = vpow.pop %v2979
    %v2981 = vsel %vm353, %v2980, 0.0
    %2982 = vadd.xlane.f32.xlu0 %v2981
    %v2983 = vpop.xlane.xlu0 %2982
    %v2984 = vrcp.pop %v2983
    %v2985 = vmul.f32 %v2980, %v2984
    %v2986 = vpack.c.bf16 %v2985, %v2985
    %2987 = vrot.lane.b32.xlu0 %v2919, 64
    %v2988 = vpop.permute.xlu0 %2987
    %v2990 = vsel %vm353, %v2986, 0
    %v2993 = vsel %vm371, %v2988, 0
    %2995 = vmatprep.subr.bf16.mxu0 0
    %2996 = vmatpush1.bf16.msra.mxu0 %v2993
    %2997 = vmatprep.subr.bf16.mxu0 0
    %2998 = vmatpush1.bf16.msra.mxu0 0
    %2999 = vmatprep.subr.bf16.mxu0 0
    %3000 = vmatpush1.bf16.msra.mxu0 0
    %3001 = vmatprep.subr.bf16.mxu0 0
    %3002 = vmatpush1.bf16.msra.mxu0 0
    %3003 = vmatprep.subr.bf16.mxu0 0
    %3004 = vmatpush1.bf16.msra.mxu0 0
    %3005 = vmatprep.subr.bf16.mxu0 0
    %3006 = vmatpush1.bf16.msra.mxu0 0
    %3007 = vmatprep.subr.bf16.mxu0 0
    %3008 = vmatpush1.bf16.msra.mxu0 0
    %3009 = vmatprep.subr.bf16.mxu0 0
    %3010 = vmatpush1.bf16.msra.mxu0 0
    %3011 = vmatprep.subr.bf16.mxu0 0
    %3012 = vmatpush1.bf16.msra.mxu0 0
    %3013 = vmatprep.subr.bf16.mxu0 0
    %3014 = vmatpush1.bf16.msra.mxu0 0
    %3015 = vmatprep.subr.bf16.mxu0 0
    %3016 = vmatpush1.bf16.msra.mxu0 0
    %3017 = vmatprep.subr.bf16.mxu0 0
    %3018 = vmatpush1.bf16.msra.mxu0 0
    %3019 = vmatprep.subr.bf16.mxu0 0
    %3020 = vmatpush1.bf16.msra.mxu0 0
    %3021 = vmatprep.subr.bf16.mxu0 0
    %3022 = vmatpush1.bf16.msra.mxu0 0
    %3023 = vmatprep.subr.bf16.mxu0 0
    %3024 = vmatpush1.bf16.msra.mxu0 0
    %3025 = vmatprep.subr.bf16.mxu0 0
    %3026 = vmatpush1.bf16.msra.mxu0 0
    %3027 = vmatprep.mubr.bf16.mxu0 0
    %3028 = vmatmul.mubr.bf16.gmra.mrb[0].mxu0 %v2990
    %v3029 = vpop.f32.mrb[0].mxu0
    %v3030 = vadd.f32 0.0, %v3029
    %v3031 = vpop.f32.mrb[0].mxu0
    %v3032 = vpop.f32.mrb[0].mxu0
    %v3033 = vpop.f32.mrb[0].mxu0
    %3034 = vdwg.mxu0
    %3035 = vst.msk [vmem:[#allocation2] sm:$0xff] %vm300, %v3030
    %3036 = vrot.lane.b32.xlu0 %v2919, 112
    %v3037 = vpop.permute.xlu0 %3036
    %3038 = vrot.lane.b32.xlu0 %v2919, 80
    %v3039 = vpop.permute.xlu0 %3038
    %v3041 = vsel %vm300, %v3037, 0
    %v3044 = vsel %vm300, %v3039, 0
    %3046 = vmatprep.subr.bf16.mxu0 0
    %3047 = vmatpush1.bf16.xpose.msra.mxu0 %v3044
    %3048 = vmatprep.subr.bf16.mxu0 0
    %3049 = vmatpush1.bf16.xpose.msra.mxu0 0
    %3050 = vmatprep.subr.bf16.mxu0 0
    %3051 = vmatpush1.bf16.xpose.msra.mxu0 0
    %3052 = vmatprep.subr.bf16.mxu0 0
    %3053 = vmatpush1.bf16.xpose.msra.mxu0 0
    %3054 = vmatprep.subr.bf16.mxu0 0
    %3055 = vmatpush1.bf16.xpose.msra.mxu0 0
    %3056 = vmatprep.subr.bf16.mxu0 0
    %3057 = vmatpush1.bf16.xpose.msra.mxu0 0
    %3058 = vmatprep.subr.bf16.mxu0 0
    %3059 = vmatpush1.bf16.xpose.msra.mxu0 0
    %3060 = vmatprep.subr.bf16.mxu0 0
    %3061 = vmatpush1.bf16.xpose.msra.mxu0 0
    %3062 = vmatprep.subr.bf16.mxu0 0
    %3063 = vmatpush1.bf16.xpose.msra.mxu0 0
    %3064 = vmatprep.subr.bf16.mxu0 0
    %3065 = vmatpush1.bf16.xpose.msra.mxu0 0
    %3066 = vmatprep.subr.bf16.mxu0 0
    %3067 = vmatpush1.bf16.xpose.msra.mxu0 0
    %3068 = vmatprep.subr.bf16.mxu0 0
    %3069 = vmatpush1.bf16.xpose.msra.mxu0 0
    %3070 = vmatprep.subr.bf16.mxu0 0
    %3071 = vmatpush1.bf16.xpose.msra.mxu0 0
    %3072 = vmatprep.subr.bf16.mxu0 0
    %3073 = vmatpush1.bf16.xpose.msra.mxu0 0
    %3074 = vmatprep.subr.bf16.mxu0 0
    %3075 = vmatpush1.bf16.xpose.msra.mxu0 0
    %3076 = vmatprep.subr.bf16.mxu0 0
    %3077 = vmatpush1.bf16.xpose.msra.mxu0 0
    %3078 = vmatprep.mubr.bf16.mxu0 0
    %3079 = vmatmul.mubr.bf16.gmra.mrb[0].mxu0 %v3041
    %v3080 = vpop.f32.mrb[0].mxu0
    %v3081 = vadd.f32 0.0, %v3080
    %v3082 = vpop.f32.mrb[0].mxu0
    %v3083 = vpop.f32.mrb[0].mxu0
    %v3084 = vpop.f32.mrb[0].mxu0
    %3085 = vdwg.mxu0
    %v3086 = vmul.f32 %v3081, 0.25
    %v3087 = vadd.f32 %v3086, %v2973
    %v3088 = vsel %vm353, %v3087, -inf
    %3089 = vmax.xlane.f32.xlu0 %v3088
    %v3090 = vpop.xlane.xlu0 %3089
    %v3091 = vsub.f32 %v3087, %v3090
    %v3092 = vmul.f32 %v3091, 1.442695
    %v3093 = vpow.pop %v3092
    %v3094 = vsel %vm353, %v3093, 0.0
    %3095 = vadd.xlane.f32.xlu0 %v3094
    %v3096 = vpop.xlane.xlu0 %3095
    %v3097 = vrcp.pop %v3096
    %v3098 = vmul.f32 %v3093, %v3097
    %v3099 = vpack.c.bf16 %v3098, %v3098
    %3100 = vrot.lane.b32.xlu0 %v2919, 48
    %v3101 = vpop.permute.xlu0 %3100
    %v3103 = vsel %vm353, %v3099, 0
    %v3106 = vsel %vm371, %v3101, 0
    %3108 = vmatprep.subr.bf16.mxu0 0
    %3109 = vmatpush1.bf16.msra.mxu0 %v3106
    %3110 = vmatprep.subr.bf16.mxu0 0
    %3111 = vmatpush1.bf16.msra.mxu0 0
    %3112 = vmatprep.subr.bf16.mxu0 0
    %3113 = vmatpush1.bf16.msra.mxu0 0
    %3114 = vmatprep.subr.bf16.mxu0 0
    %3115 = vmatpush1.bf16.msra.mxu0 0
    %3116 = vmatprep.subr.bf16.mxu0 0
    %3117 = vmatpush1.bf16.msra.mxu0 0
    %3118 = vmatprep.subr.bf16.mxu0 0
    %3119 = vmatpush1.bf16.msra.mxu0 0
    %3120 = vmatprep.subr.bf16.mxu0 0
    %3121 = vmatpush1.bf16.msra.mxu0 0
    %3122 = vmatprep.subr.bf16.mxu0 0
    %3123 = vmatpush1.bf16.msra.mxu0 0
    %3124 = vmatprep.subr.bf16.mxu0 0
    %3125 = vmatpush1.bf16.msra.mxu0 0
    %3126 = vmatprep.subr.bf16.mxu0 0
    %3127 = vmatpush1.bf16.msra.mxu0 0
    %3128 = vmatprep.subr.bf16.mxu0 0
    %3129 = vmatpush1.bf16.msra.mxu0 0
    %3130 = vmatprep.subr.bf16.mxu0 0
    %3131 = vmatpush1.bf16.msra.mxu0 0
    %3132 = vmatprep.subr.bf16.mxu0 0
    %3133 = vmatpush1.bf16.msra.mxu0 0
    %3134 = vmatprep.subr.bf16.mxu0 0
    %3135 = vmatpush1.bf16.msra.mxu0 0
    %3136 = vmatprep.subr.bf16.mxu0 0
    %3137 = vmatpush1.bf16.msra.mxu0 0
    %3138 = vmatprep.subr.bf16.mxu0 0
    %3139 = vmatpush1.bf16.msra.mxu0 0
    %3140 = vmatprep.mubr.bf16.mxu0 0
    %3141 = vmatmul.mubr.bf16.gmra.mrb[0].mxu0 %v3103
    %v3142 = vpop.f32.mrb[0].mxu0
    %v3143 = vadd.f32 0.0, %v3142
    %v3144 = vpop.f32.mrb[0].mxu0
    %v3145 = vpop.f32.mrb[0].mxu0
    %v3146 = vpop.f32.mrb[0].mxu0
    %3147 = vdwg.mxu0
    %3149 = vrot.lane.b32.xlu0 %v3143, 16
    %v3150 = vpop.permute.xlu0 %3149
    %3152 = vst.msk [vmem:[#allocation2] sm:$0xff] %vm532, %v3150
    %v3153 = vld [vmem:[%s1 + $0x1] sm:$0x1]
    %v3154 = vpack.c.bf16 %v2891, %v2891
    %3156 = vrot.lane.b32.xlu0 %v3154, 96
    %v3157 = vpop.permute.xlu0 %3156
    %v3159 = vsel %vm300, %v3154, 0
    %v3162 = vsel %vm300, %v3157, 0
    %3164 = vmatprep.subr.bf16.mxu0 0
    %3165 = vmatpush1.bf16.xpose.msra.mxu0 %v3162
    %3166 = vmatprep.subr.bf16.mxu0 0
    %3167 = vmatpush1.bf16.xpose.msra.mxu0 0
    %3168 = vmatprep.subr.bf16.mxu0 0
    %3169 = vmatpush1.bf16.xpose.msra.mxu0 0
    %3170 = vmatprep.subr.bf16.mxu0 0
    %3171 = vmatpush1.bf16.xpose.msra.mxu0 0
    %3172 = vmatprep.subr.bf16.mxu0 0
    %3173 = vmatpush1.bf16.xpose.msra.mxu0 0
    %3174 = vmatprep.subr.bf16.mxu0 0
    %3175 = vmatpush1.bf16.xpose.msra.mxu0 0
    %3176 = vmatprep.subr.bf16.mxu0 0
    %3177 = vmatpush1.bf16.xpose.msra.mxu0 0
    %3178 = vmatprep.subr.bf16.mxu0 0
    %3179 = vmatpush1.bf16.xpose.msra.mxu0 0
    %3180 = vmatprep.subr.bf16.mxu0 0
    %3181 = vmatpush1.bf16.xpose.msra.mxu0 0
    %3182 = vmatprep.subr.bf16.mxu0 0
    %3183 = vmatpush1.bf16.xpose.msra.mxu0 0
    %3184 = vmatprep.subr.bf16.mxu0 0
    %3185 = vmatpush1.bf16.xpose.msra.mxu0 0
    %3186 = vmatprep.subr.bf16.mxu0 0
    %3187 = vmatpush1.bf16.xpose.msra.mxu0 0
    %3188 = vmatprep.subr.bf16.mxu0 0
    %3189 = vmatpush1.bf16.xpose.msra.mxu0 0
    %3190 = vmatprep.subr.bf16.mxu0 0
    %3191 = vmatpush1.bf16.xpose.msra.mxu0 0
    %3192 = vmatprep.subr.bf16.mxu0 0
    %3193 = vmatpush1.bf16.xpose.msra.mxu0 0
    %3194 = vmatprep.subr.bf16.mxu0 0
    %3195 = vmatpush1.bf16.xpose.msra.mxu0 0
    %3196 = vmatprep.mubr.bf16.mxu0 0
    %3197 = vmatmul.mubr.bf16.gmra.mrb[0].mxu0 %v3159
    %v3198 = vpop.f32.mrb[0].mxu0
    %v3199 = vadd.f32 0.0, %v3198
    %v3200 = vpop.f32.mrb[0].mxu0
    %v3201 = vpop.f32.mrb[0].mxu0
    %v3202 = vpop.f32.mrb[0].mxu0
    %3203 = vdwg.mxu0
    %v3204 = vmul.f32 %v3199, 0.25
    %v3205 = vlaneseq
    %v3206 = vshrl.u32 %v3205, 7
    %v3207 = vsub.s32 0, %v3206
    %v3208 = vrot.slane %v3153, %v3207
    %v3209 = vadd.f32 %v3204, %v3208
    %v3210 = vsel %vm353, %v3209, -inf
    %3211 = vmax.xlane.f32.xlu0 %v3210
    %v3212 = vpop.xlane.xlu0 %3211
    %v3213 = vsub.f32 %v3209, %v3212
    %v3214 = vmul.f32 %v3213, 1.442695
    %v3215 = vpow.pop %v3214
    %v3216 = vsel %vm353, %v3215, 0.0
    %3217 = vadd.xlane.f32.xlu0 %v3216
    %v3218 = vpop.xlane.xlu0 %3217
    %v3219 = vrcp.pop %v3218
    %v3220 = vmul.f32 %v3215, %v3219
    %v3221 = vpack.c.bf16 %v3220, %v3220
    %3222 = vrot.lane.b32.xlu0 %v3154, 64
    %v3223 = vpop.permute.xlu0 %3222
    %v3225 = vsel %vm353, %v3221, 0
    %v3228 = vsel %vm371, %v3223, 0
    %3230 = vmatprep.subr.bf16.mxu0 0
    %3231 = vmatpush1.bf16.msra.mxu0 %v3228
    %3232 = vmatprep.subr.bf16.mxu0 0
    %3233 = vmatpush1.bf16.msra.mxu0 0
    %3234 = vmatprep.subr.bf16.mxu0 0
    %3235 = vmatpush1.bf16.msra.mxu0 0
    %3236 = vmatprep.subr.bf16.mxu0 0
    %3237 = vmatpush1.bf16.msra.mxu0 0
    %3238 = vmatprep.subr.bf16.mxu0 0
    %3239 = vmatpush1.bf16.msra.mxu0 0
    %3240 = vmatprep.subr.bf16.mxu0 0
    %3241 = vmatpush1.bf16.msra.mxu0 0
    %3242 = vmatprep.subr.bf16.mxu0 0
    %3243 = vmatpush1.bf16.msra.mxu0 0
    %3244 = vmatprep.subr.bf16.mxu0 0
    %3245 = vmatpush1.bf16.msra.mxu0 0
    %3246 = vmatprep.subr.bf16.mxu0 0
    %3247 = vmatpush1.bf16.msra.mxu0 0
    %3248 = vmatprep.subr.bf16.mxu0 0
    %3249 = vmatpush1.bf16.msra.mxu0 0
    %3250 = vmatprep.subr.bf16.mxu0 0
    %3251 = vmatpush1.bf16.msra.mxu0 0
    %3252 = vmatprep.subr.bf16.mxu0 0
    %3253 = vmatpush1.bf16.msra.mxu0 0
    %3254 = vmatprep.subr.bf16.mxu0 0
    %3255 = vmatpush1.bf16.msra.mxu0 0
    %3256 = vmatprep.subr.bf16.mxu0 0
    %3257 = vmatpush1.bf16.msra.mxu0 0
    %3258 = vmatprep.subr.bf16.mxu0 0
    %3259 = vmatpush1.bf16.msra.mxu0 0
    %3260 = vmatprep.subr.bf16.mxu0 0
    %3261 = vmatpush1.bf16.msra.mxu0 0
    %3262 = vmatprep.mubr.bf16.mxu0 0
    %3263 = vmatmul.mubr.bf16.gmra.mrb[0].mxu0 %v3225
    %v3264 = vpop.f32.mrb[0].mxu0
    %v3265 = vadd.f32 0.0, %v3264
    %v3266 = vpop.f32.mrb[0].mxu0
    %v3267 = vpop.f32.mrb[0].mxu0
    %v3268 = vpop.f32.mrb[0].mxu0
    %3269 = vdwg.mxu0
    %3270 = vst.msk [vmem:[#allocation2 + $0x8] sm:$0xff] %vm300, %v3265
    %3271 = vrot.lane.b32.xlu0 %v3154, 112
    %v3272 = vpop.permute.xlu0 %3271
    %3273 = vrot.lane.b32.xlu0 %v3154, 80
    %v3274 = vpop.permute.xlu0 %3273
    %v3276 = vsel %vm300, %v3272, 0
    %v3279 = vsel %vm300, %v3274, 0
    %3281 = vmatprep.subr.bf16.mxu0 0
    %3282 = vmatpush1.bf16.xpose.msra.mxu0 %v3279
    %3283 = vmatprep.subr.bf16.mxu0 0
    %3284 = vmatpush1.bf16.xpose.msra.mxu0 0
    %3285 = vmatprep.subr.bf16.mxu0 0
    %3286 = vmatpush1.bf16.xpose.msra.mxu0 0
    %3287 = vmatprep.subr.bf16.mxu0 0
    %3288 = vmatpush1.bf16.xpose.msra.mxu0 0
    %3289 = vmatprep.subr.bf16.mxu0 0
    %3290 = vmatpush1.bf16.xpose.msra.mxu0 0
    %3291 = vmatprep.subr.bf16.mxu0 0
    %3292 = vmatpush1.bf16.xpose.msra.mxu0 0
    %3293 = vmatprep.subr.bf16.mxu0 0
    %3294 = vmatpush1.bf16.xpose.msra.mxu0 0
    %3295 = vmatprep.subr.bf16.mxu0 0
    %3296 = vmatpush1.bf16.xpose.msra.mxu0 0
    %3297 = vmatprep.subr.bf16.mxu0 0
    %3298 = vmatpush1.bf16.xpose.msra.mxu0 0
    %3299 = vmatprep.subr.bf16.mxu0 0
    %3300 = vmatpush1.bf16.xpose.msra.mxu0 0
    %3301 = vmatprep.subr.bf16.mxu0 0
    %3302 = vmatpush1.bf16.xpose.msra.mxu0 0
    %3303 = vmatprep.subr.bf16.mxu0 0
    %3304 = vmatpush1.bf16.xpose.msra.mxu0 0
    %3305 = vmatprep.subr.bf16.mxu0 0
    %3306 = vmatpush1.bf16.xpose.msra.mxu0 0
    %3307 = vmatprep.subr.bf16.mxu0 0
    %3308 = vmatpush1.bf16.xpose.msra.mxu0 0
    %3309 = vmatprep.subr.bf16.mxu0 0
    %3310 = vmatpush1.bf16.xpose.msra.mxu0 0
    %3311 = vmatprep.subr.bf16.mxu0 0
    %3312 = vmatpush1.bf16.xpose.msra.mxu0 0
    %3313 = vmatprep.mubr.bf16.mxu0 0
    %3314 = vmatmul.mubr.bf16.gmra.mrb[0].mxu0 %v3276
    %v3315 = vpop.f32.mrb[0].mxu0
    %v3316 = vadd.f32 0.0, %v3315
    %v3317 = vpop.f32.mrb[0].mxu0
    %v3318 = vpop.f32.mrb[0].mxu0
    %v3319 = vpop.f32.mrb[0].mxu0
    %3320 = vdwg.mxu0
    %v3321 = vmul.f32 %v3316, 0.25
    %v3322 = vadd.f32 %v3321, %v3208
    %v3323 = vsel %vm353, %v3322, -inf
    %3324 = vmax.xlane.f32.xlu0 %v3323
    %v3325 = vpop.xlane.xlu0 %3324
    %v3326 = vsub.f32 %v3322, %v3325
    %v3327 = vmul.f32 %v3326, 1.442695
    %v3328 = vpow.pop %v3327
    %v3329 = vsel %vm353, %v3328, 0.0
    %3330 = vadd.xlane.f32.xlu0 %v3329
    %v3331 = vpop.xlane.xlu0 %3330
    %v3332 = vrcp.pop %v3331
    %v3333 = vmul.f32 %v3328, %v3332
    %v3334 = vpack.c.bf16 %v3333, %v3333
    %3335 = vrot.lane.b32.xlu0 %v3154, 48
    %v3336 = vpop.permute.xlu0 %3335
    %v3338 = vsel %vm353, %v3334, 0
    %v3341 = vsel %vm371, %v3336, 0
    %3343 = vmatprep.subr.bf16.mxu0 0
    %3344 = vmatpush1.bf16.msra.mxu0 %v3341
    %3345 = vmatprep.subr.bf16.mxu0 0
    %3346 = vmatpush1.bf16.msra.mxu0 0
    %3347 = vmatprep.subr.bf16.mxu0 0
    %3348 = vmatpush1.bf16.msra.mxu0 0
    %3349 = vmatprep.subr.bf16.mxu0 0
    %3350 = vmatpush1.bf16.msra.mxu0 0
    %3351 = vmatprep.subr.bf16.mxu0 0
    %3352 = vmatpush1.bf16.msra.mxu0 0
    %3353 = vmatprep.subr.bf16.mxu0 0
    %3354 = vmatpush1.bf16.msra.mxu0 0
    %3355 = vmatprep.subr.bf16.mxu0 0
    %3356 = vmatpush1.bf16.msra.mxu0 0
    %3357 = vmatprep.subr.bf16.mxu0 0
    %3358 = vmatpush1.bf16.msra.mxu0 0
    %3359 = vmatprep.subr.bf16.mxu0 0
    %3360 = vmatpush1.bf16.msra.mxu0 0
    %3361 = vmatprep.subr.bf16.mxu0 0
    %3362 = vmatpush1.bf16.msra.mxu0 0
    %3363 = vmatprep.subr.bf16.mxu0 0
    %3364 = vmatpush1.bf16.msra.mxu0 0
    %3365 = vmatprep.subr.bf16.mxu0 0
    %3366 = vmatpush1.bf16.msra.mxu0 0
    %3367 = vmatprep.subr.bf16.mxu0 0
    %3368 = vmatpush1.bf16.msra.mxu0 0
    %3369 = vmatprep.subr.bf16.mxu0 0
    %3370 = vmatpush1.bf16.msra.mxu0 0
    %3371 = vmatprep.subr.bf16.mxu0 0
    %3372 = vmatpush1.bf16.msra.mxu0 0
    %3373 = vmatprep.subr.bf16.mxu0 0
    %3374 = vmatpush1.bf16.msra.mxu0 0
    %3375 = vmatprep.mubr.bf16.mxu0 0
    %3376 = vmatmul.mubr.bf16.gmra.mrb[0].mxu0 %v3338
    %v3377 = vpop.f32.mrb[0].mxu0
    %v3378 = vadd.f32 0.0, %v3377
    %v3379 = vpop.f32.mrb[0].mxu0
    %v3380 = vpop.f32.mrb[0].mxu0
    %v3381 = vpop.f32.mrb[0].mxu0
    %3382 = vdwg.mxu0
    %3384 = vrot.lane.b32.xlu0 %v3378, 16
    %v3385 = vpop.permute.xlu0 %3384
    %3387 = vst.msk [vmem:[#allocation2 + $0x8] sm:$0xff] %vm532, %v3385
    %v3388 = vld [vmem:[%s1 + $0x2] sm:$0x1]
    %v3389 = vpack.c.bf16 %v2896, %v2896
    %3391 = vrot.lane.b32.xlu0 %v3389, 96
    %v3392 = vpop.permute.xlu0 %3391
    %v3394 = vsel %vm300, %v3389, 0
    %v3397 = vsel %vm300, %v3392, 0
    %3399 = vmatprep.subr.bf16.mxu0 0
    %3400 = vmatpush1.bf16.xpose.msra.mxu0 %v3397
    %3401 = vmatprep.subr.bf16.mxu0 0
    %3402 = vmatpush1.bf16.xpose.msra.mxu0 0
    %3403 = vmatprep.subr.bf16.mxu0 0
    %3404 = vmatpush1.bf16.xpose.msra.mxu0 0
    %3405 = vmatprep.subr.bf16.mxu0 0
    %3406 = vmatpush1.bf16.xpose.msra.mxu0 0
    %3407 = vmatprep.subr.bf16.mxu0 0
    %3408 = vmatpush1.bf16.xpose.msra.mxu0 0
    %3409 = vmatprep.subr.bf16.mxu0 0
    %3410 = vmatpush1.bf16.xpose.msra.mxu0 0
    %3411 = vmatprep.subr.bf16.mxu0 0
    %3412 = vmatpush1.bf16.xpose.msra.mxu0 0
    %3413 = vmatprep.subr.bf16.mxu0 0
    %3414 = vmatpush1.bf16.xpose.msra.mxu0 0
    %3415 = vmatprep.subr.bf16.mxu0 0
    %3416 = vmatpush1.bf16.xpose.msra.mxu0 0
    %3417 = vmatprep.subr.bf16.mxu0 0
    %3418 = vmatpush1.bf16.xpose.msra.mxu0 0
    %3419 = vmatprep.subr.bf16.mxu0 0
    %3420 = vmatpush1.bf16.xpose.msra.mxu0 0
    %3421 = vmatprep.subr.bf16.mxu0 0
    %3422 = vmatpush1.bf16.xpose.msra.mxu0 0
    %3423 = vmatprep.subr.bf16.mxu0 0
    %3424 = vmatpush1.bf16.xpose.msra.mxu0 0
    %3425 = vmatprep.subr.bf16.mxu0 0
    %3426 = vmatpush1.bf16.xpose.msra.mxu0 0
    %3427 = vmatprep.subr.bf16.mxu0 0
    %3428 = vmatpush1.bf16.xpose.msra.mxu0 0
    %3429 = vmatprep.subr.bf16.mxu0 0
    %3430 = vmatpush1.bf16.xpose.msra.mxu0 0
    %3431 = vmatprep.mubr.bf16.mxu0 0
    %3432 = vmatmul.mubr.bf16.gmra.mrb[0].mxu0 %v3394
    %v3433 = vpop.f32.mrb[0].mxu0
    %v3434 = vadd.f32 0.0, %v3433
    %v3435 = vpop.f32.mrb[0].mxu0
    %v3436 = vpop.f32.mrb[0].mxu0
    %v3437 = vpop.f32.mrb[0].mxu0
    %3438 = vdwg.mxu0
    %v3439 = vmul.f32 %v3434, 0.25
    %v3440 = vlaneseq
    %v3441 = vshrl.u32 %v3440, 7
    %v3442 = vsub.s32 0, %v3441
    %v3443 = vrot.slane %v3388, %v3442
    %v3444 = vadd.f32 %v3439, %v3443
    %v3445 = vsel %vm353, %v3444, -inf
    %3446 = vmax.xlane.f32.xlu0 %v3445
    %v3447 = vpop.xlane.xlu0 %3446
    %v3448 = vsub.f32 %v3444, %v3447
    %v3449 = vmul.f32 %v3448, 1.442695
    %v3450 = vpow.pop %v3449
    %v3451 = vsel %vm353, %v3450, 0.0
    %3452 = vadd.xlane.f32.xlu0 %v3451
    %v3453 = vpop.xlane.xlu0 %3452
    %v3454 = vrcp.pop %v3453
    %v3455 = vmul.f32 %v3450, %v3454
    %v3456 = vpack.c.bf16 %v3455, %v3455
    %3457 = vrot.lane.b32.xlu0 %v3389, 64
    %v3458 = vpop.permute.xlu0 %3457
    %v3460 = vsel %vm353, %v3456, 0
    %v3463 = vsel %vm371, %v3458, 0
    %3465 = vmatprep.subr.bf16.mxu0 0
    %3466 = vmatpush1.bf16.msra.mxu0 %v3463
    %3467 = vmatprep.subr.bf16.mxu0 0
    %3468 = vmatpush1.bf16.msra.mxu0 0
    %3469 = vmatprep.subr.bf16.mxu0 0
    %3470 = vmatpush1.bf16.msra.mxu0 0
    %3471 = vmatprep.subr.bf16.mxu0 0
    %3472 = vmatpush1.bf16.msra.mxu0 0
    %3473 = vmatprep.subr.bf16.mxu0 0
    %3474 = vmatpush1.bf16.msra.mxu0 0
    %3475 = vmatprep.subr.bf16.mxu0 0
    %3476 = vmatpush1.bf16.msra.mxu0 0
    %3477 = vmatprep.subr.bf16.mxu0 0
    %3478 = vmatpush1.bf16.msra.mxu0 0
    %3479 = vmatprep.subr.bf16.mxu0 0
    %3480 = vmatpush1.bf16.msra.mxu0 0
    %3481 = vmatprep.subr.bf16.mxu0 0
    %3482 = vmatpush1.bf16.msra.mxu0 0
    %3483 = vmatprep.subr.bf16.mxu0 0
    %3484 = vmatpush1.bf16.msra.mxu0 0
    %3485 = vmatprep.subr.bf16.mxu0 0
    %3486 = vmatpush1.bf16.msra.mxu0 0
    %3487 = vmatprep.subr.bf16.mxu0 0
    %3488 = vmatpush1.bf16.msra.mxu0 0
    %3489 = vmatprep.subr.bf16.mxu0 0
    %3490 = vmatpush1.bf16.msra.mxu0 0
    %3491 = vmatprep.subr.bf16.mxu0 0
    %3492 = vmatpush1.bf16.msra.mxu0 0
    %3493 = vmatprep.subr.bf16.mxu0 0
    %3494 = vmatpush1.bf16.msra.mxu0 0
    %3495 = vmatprep.subr.bf16.mxu0 0
    %3496 = vmatpush1.bf16.msra.mxu0 0
    %3497 = vmatprep.mubr.bf16.mxu0 0
    %3498 = vmatmul.mubr.bf16.gmra.mrb[0].mxu0 %v3460
    %v3499 = vpop.f32.mrb[0].mxu0
    %v3500 = vadd.f32 0.0, %v3499
    %v3501 = vpop.f32.mrb[0].mxu0
    %v3502 = vpop.f32.mrb[0].mxu0
    %v3503 = vpop.f32.mrb[0].mxu0
    %3504 = vdwg.mxu0
    %3505 = vst.msk [vmem:[#allocation2 + $0x10] sm:$0xff] %vm300, %v3500
    %3506 = vrot.lane.b32.xlu0 %v3389, 112
    %v3507 = vpop.permute.xlu0 %3506
    %3508 = vrot.lane.b32.xlu0 %v3389, 80
    %v3509 = vpop.permute.xlu0 %3508
    %v3511 = vsel %vm300, %v3507, 0
    %v3514 = vsel %vm300, %v3509, 0
    %3516 = vmatprep.subr.bf16.mxu0 0
    %3517 = vmatpush1.bf16.xpose.msra.mxu0 %v3514
    %3518 = vmatprep.subr.bf16.mxu0 0
    %3519 = vmatpush1.bf16.xpose.msra.mxu0 0
    %3520 = vmatprep.subr.bf16.mxu0 0
    %3521 = vmatpush1.bf16.xpose.msra.mxu0 0
    %3522 = vmatprep.subr.bf16.mxu0 0
    %3523 = vmatpush1.bf16.xpose.msra.mxu0 0
    %3524 = vmatprep.subr.bf16.mxu0 0
    %3525 = vmatpush1.bf16.xpose.msra.mxu0 0
    %3526 = vmatprep.subr.bf16.mxu0 0
    %3527 = vmatpush1.bf16.xpose.msra.mxu0 0
    %3528 = vmatprep.subr.bf16.mxu0 0
    %3529 = vmatpush1.bf16.xpose.msra.mxu0 0
    %3530 = vmatprep.subr.bf16.mxu0 0
    %3531 = vmatpush1.bf16.xpose.msra.mxu0 0
    %3532 = vmatprep.subr.bf16.mxu0 0
    %3533 = vmatpush1.bf16.xpose.msra.mxu0 0
    %3534 = vmatprep.subr.bf16.mxu0 0
    %3535 = vmatpush1.bf16.xpose.msra.mxu0 0
    %3536 = vmatprep.subr.bf16.mxu0 0
    %3537 = vmatpush1.bf16.xpose.msra.mxu0 0
    %3538 = vmatprep.subr.bf16.mxu0 0
    %3539 = vmatpush1.bf16.xpose.msra.mxu0 0
    %3540 = vmatprep.subr.bf16.mxu0 0
    %3541 = vmatpush1.bf16.xpose.msra.mxu0 0
    %3542 = vmatprep.subr.bf16.mxu0 0
    %3543 = vmatpush1.bf16.xpose.msra.mxu0 0
    %3544 = vmatprep.subr.bf16.mxu0 0
    %3545 = vmatpush1.bf16.xpose.msra.mxu0 0
    %3546 = vmatprep.subr.bf16.mxu0 0
    %3547 = vmatpush1.bf16.xpose.msra.mxu0 0
    %3548 = vmatprep.mubr.bf16.mxu0 0
    %3549 = vmatmul.mubr.bf16.gmra.mrb[0].mxu0 %v3511
    %v3550 = vpop.f32.mrb[0].mxu0
    %v3551 = vadd.f32 0.0, %v3550
    %v3552 = vpop.f32.mrb[0].mxu0
    %v3553 = vpop.f32.mrb[0].mxu0
    %v3554 = vpop.f32.mrb[0].mxu0
    %3555 = vdwg.mxu0
    %v3556 = vmul.f32 %v3551, 0.25
    %v3557 = vadd.f32 %v3556, %v3443
    %v3558 = vsel %vm353, %v3557, -inf
    %3559 = vmax.xlane.f32.xlu0 %v3558
    %v3560 = vpop.xlane.xlu0 %3559
    %v3561 = vsub.f32 %v3557, %v3560
    %v3562 = vmul.f32 %v3561, 1.442695
    %v3563 = vpow.pop %v3562
    %v3564 = vsel %vm353, %v3563, 0.0
    %3565 = vadd.xlane.f32.xlu0 %v3564
    %v3566 = vpop.xlane.xlu0 %3565
    %v3567 = vrcp.pop %v3566
    %v3568 = vmul.f32 %v3563, %v3567
    %v3569 = vpack.c.bf16 %v3568, %v3568
    %3570 = vrot.lane.b32.xlu0 %v3389, 48
    %v3571 = vpop.permute.xlu0 %3570
    %v3573 = vsel %vm353, %v3569, 0
    %v3576 = vsel %vm371, %v3571, 0
    %3578 = vmatprep.subr.bf16.mxu0 0
    %3579 = vmatpush1.bf16.msra.mxu0 %v3576
    %3580 = vmatprep.subr.bf16.mxu0 0
    %3581 = vmatpush1.bf16.msra.mxu0 0
    %3582 = vmatprep.subr.bf16.mxu0 0
    %3583 = vmatpush1.bf16.msra.mxu0 0
    %3584 = vmatprep.subr.bf16.mxu0 0
    %3585 = vmatpush1.bf16.msra.mxu0 0
    %3586 = vmatprep.subr.bf16.mxu0 0
    %3587 = vmatpush1.bf16.msra.mxu0 0
    %3588 = vmatprep.subr.bf16.mxu0 0
    %3589 = vmatpush1.bf16.msra.mxu0 0
    %3590 = vmatprep.subr.bf16.mxu0 0
    %3591 = vmatpush1.bf16.msra.mxu0 0
    %3592 = vmatprep.subr.bf16.mxu0 0
    %3593 = vmatpush1.bf16.msra.mxu0 0
    %3594 = vmatprep.subr.bf16.mxu0 0
    %3595 = vmatpush1.bf16.msra.mxu0 0
    %3596 = vmatprep.subr.bf16.mxu0 0
    %3597 = vmatpush1.bf16.msra.mxu0 0
    %3598 = vmatprep.subr.bf16.mxu0 0
    %3599 = vmatpush1.bf16.msra.mxu0 0
    %3600 = vmatprep.subr.bf16.mxu0 0
    %3601 = vmatpush1.bf16.msra.mxu0 0
    %3602 = vmatprep.subr.bf16.mxu0 0
    %3603 = vmatpush1.bf16.msra.mxu0 0
    %3604 = vmatprep.subr.bf16.mxu0 0
    %3605 = vmatpush1.bf16.msra.mxu0 0
    %3606 = vmatprep.subr.bf16.mxu0 0
    %3607 = vmatpush1.bf16.msra.mxu0 0
    %3608 = vmatprep.subr.bf16.mxu0 0
    %3609 = vmatpush1.bf16.msra.mxu0 0
    %3610 = vmatprep.mubr.bf16.mxu0 0
    %3611 = vmatmul.mubr.bf16.gmra.mrb[0].mxu0 %v3573
    %v3612 = vpop.f32.mrb[0].mxu0
    %v3613 = vadd.f32 0.0, %v3612
    %v3614 = vpop.f32.mrb[0].mxu0
    %v3615 = vpop.f32.mrb[0].mxu0
    %v3616 = vpop.f32.mrb[0].mxu0
    %3617 = vdwg.mxu0
    %3619 = vrot.lane.b32.xlu0 %v3613, 16
    %v3620 = vpop.permute.xlu0 %3619
    %3622 = vst.msk [vmem:[#allocation2 + $0x10] sm:$0xff] %vm532, %v3620
    %v3623 = vld [vmem:[%s1 + $0x3] sm:$0x1]
    %v3624 = vpack.c.bf16 %v2899, %v2899
    %3626 = vrot.lane.b32.xlu0 %v3624, 96
    %v3627 = vpop.permute.xlu0 %3626
    %v3629 = vsel %vm300, %v3624, 0
    %v3632 = vsel %vm300, %v3627, 0
    %3634 = vmatprep.subr.bf16.mxu0 0
    %3635 = vmatpush1.bf16.xpose.msra.mxu0 %v3632
    %3636 = vmatprep.subr.bf16.mxu0 0
    %3637 = vmatpush1.bf16.xpose.msra.mxu0 0
    %3638 = vmatprep.subr.bf16.mxu0 0
    %3639 = vmatpush1.bf16.xpose.msra.mxu0 0
    %3640 = vmatprep.subr.bf16.mxu0 0
    %3641 = vmatpush1.bf16.xpose.msra.mxu0 0
    %3642 = vmatprep.subr.bf16.mxu0 0
    %3643 = vmatpush1.bf16.xpose.msra.mxu0 0
    %3644 = vmatprep.subr.bf16.mxu0 0
    %3645 = vmatpush1.bf16.xpose.msra.mxu0 0
    %3646 = vmatprep.subr.bf16.mxu0 0
    %3647 = vmatpush1.bf16.xpose.msra.mxu0 0
    %3648 = vmatprep.subr.bf16.mxu0 0
    %3649 = vmatpush1.bf16.xpose.msra.mxu0 0
    %3650 = vmatprep.subr.bf16.mxu0 0
    %3651 = vmatpush1.bf16.xpose.msra.mxu0 0
    %3652 = vmatprep.subr.bf16.mxu0 0
    %3653 = vmatpush1.bf16.xpose.msra.mxu0 0
    %3654 = vmatprep.subr.bf16.mxu0 0
    %3655 = vmatpush1.bf16.xpose.msra.mxu0 0
    %3656 = vmatprep.subr.bf16.mxu0 0
    %3657 = vmatpush1.bf16.xpose.msra.mxu0 0
    %3658 = vmatprep.subr.bf16.mxu0 0
    %3659 = vmatpush1.bf16.xpose.msra.mxu0 0
    %3660 = vmatprep.subr.bf16.mxu0 0
    %3661 = vmatpush1.bf16.xpose.msra.mxu0 0
    %3662 = vmatprep.subr.bf16.mxu0 0
    %3663 = vmatpush1.bf16.xpose.msra.mxu0 0
    %3664 = vmatprep.subr.bf16.mxu0 0
    %3665 = vmatpush1.bf16.xpose.msra.mxu0 0
    %3666 = vmatprep.mubr.bf16.mxu0 0
    %3667 = vmatmul.mubr.bf16.gmra.mrb[0].mxu0 %v3629
    %v3668 = vpop.f32.mrb[0].mxu0
    %v3669 = vadd.f32 0.0, %v3668
    %v3670 = vpop.f32.mrb[0].mxu0
    %v3671 = vpop.f32.mrb[0].mxu0
    %v3672 = vpop.f32.mrb[0].mxu0
    %3673 = vdwg.mxu0
    %v3674 = vmul.f32 %v3669, 0.25
    %v3675 = vlaneseq
    %v3676 = vshrl.u32 %v3675, 7
    %v3677 = vsub.s32 0, %v3676
    %v3678 = vrot.slane %v3623, %v3677
    %v3679 = vadd.f32 %v3674, %v3678
    %v3680 = vsel %vm353, %v3679, -inf
    %3681 = vmax.xlane.f32.xlu0 %v3680
    %v3682 = vpop.xlane.xlu0 %3681
    %v3683 = vsub.f32 %v3679, %v3682
    %v3684 = vmul.f32 %v3683, 1.442695
    %v3685 = vpow.pop %v3684
    %v3686 = vsel %vm353, %v3685, 0.0
    %3687 = vadd.xlane.f32.xlu0 %v3686
    %v3688 = vpop.xlane.xlu0 %3687
    %v3689 = vrcp.pop %v3688
    %v3690 = vmul.f32 %v3685, %v3689
    %v3691 = vpack.c.bf16 %v3690, %v3690
    %3692 = vrot.lane.b32.xlu0 %v3624, 64
    %v3693 = vpop.permute.xlu0 %3692
    %v3695 = vsel %vm353, %v3691, 0
    %v3698 = vsel %vm371, %v3693, 0
    %3700 = vmatprep.subr.bf16.mxu0 0
    %3701 = vmatpush1.bf16.msra.mxu0 %v3698
    %3702 = vmatprep.subr.bf16.mxu0 0
    %3703 = vmatpush1.bf16.msra.mxu0 0
    %3704 = vmatprep.subr.bf16.mxu0 0
    %3705 = vmatpush1.bf16.msra.mxu0 0
    %3706 = vmatprep.subr.bf16.mxu0 0
    %3707 = vmatpush1.bf16.msra.mxu0 0
    %3708 = vmatprep.subr.bf16.mxu0 0
    %3709 = vmatpush1.bf16.msra.mxu0 0
    %3710 = vmatprep.subr.bf16.mxu0 0
    %3711 = vmatpush1.bf16.msra.mxu0 0
    %3712 = vmatprep.subr.bf16.mxu0 0
    %3713 = vmatpush1.bf16.msra.mxu0 0
    %3714 = vmatprep.subr.bf16.mxu0 0
    %3715 = vmatpush1.bf16.msra.mxu0 0
    %3716 = vmatprep.subr.bf16.mxu0 0
    %3717 = vmatpush1.bf16.msra.mxu0 0
    %3718 = vmatprep.subr.bf16.mxu0 0
    %3719 = vmatpush1.bf16.msra.mxu0 0
    %3720 = vmatprep.subr.bf16.mxu0 0
    %3721 = vmatpush1.bf16.msra.mxu0 0
    %3722 = vmatprep.subr.bf16.mxu0 0
    %3723 = vmatpush1.bf16.msra.mxu0 0
    %3724 = vmatprep.subr.bf16.mxu0 0
    %3725 = vmatpush1.bf16.msra.mxu0 0
    %3726 = vmatprep.subr.bf16.mxu0 0
    %3727 = vmatpush1.bf16.msra.mxu0 0
    %3728 = vmatprep.subr.bf16.mxu0 0
    %3729 = vmatpush1.bf16.msra.mxu0 0
    %3730 = vmatprep.subr.bf16.mxu0 0
    %3731 = vmatpush1.bf16.msra.mxu0 0
    %3732 = vmatprep.mubr.bf16.mxu0 0
    %3733 = vmatmul.mubr.bf16.gmra.mrb[0].mxu0 %v3695
    %v3734 = vpop.f32.mrb[0].mxu0
    %v3735 = vadd.f32 0.0, %v3734
    %v3736 = vpop.f32.mrb[0].mxu0
    %v3737 = vpop.f32.mrb[0].mxu0
    %v3738 = vpop.f32.mrb[0].mxu0
    %3739 = vdwg.mxu0
    %3740 = vst.msk [vmem:[#allocation2 + $0x18] sm:$0xff] %vm300, %v3735
    %3741 = vrot.lane.b32.xlu0 %v3624, 112
    %v3742 = vpop.permute.xlu0 %3741
    %3743 = vrot.lane.b32.xlu0 %v3624, 80
    %v3744 = vpop.permute.xlu0 %3743
    %v3746 = vsel %vm300, %v3742, 0
    %v3749 = vsel %vm300, %v3744, 0
    %3751 = vmatprep.subr.bf16.mxu0 0
    %3752 = vmatpush1.bf16.xpose.msra.mxu0 %v3749
    %3753 = vmatprep.subr.bf16.mxu0 0
    %3754 = vmatpush1.bf16.xpose.msra.mxu0 0
    %3755 = vmatprep.subr.bf16.mxu0 0
    %3756 = vmatpush1.bf16.xpose.msra.mxu0 0
    %3757 = vmatprep.subr.bf16.mxu0 0
    %3758 = vmatpush1.bf16.xpose.msra.mxu0 0
    %3759 = vmatprep.subr.bf16.mxu0 0
    %3760 = vmatpush1.bf16.xpose.msra.mxu0 0
    %3761 = vmatprep.subr.bf16.mxu0 0
    %3762 = vmatpush1.bf16.xpose.msra.mxu0 0
    %3763 = vmatprep.subr.bf16.mxu0 0
    %3764 = vmatpush1.bf16.xpose.msra.mxu0 0
    %3765 = vmatprep.subr.bf16.mxu0 0
    %3766 = vmatpush1.bf16.xpose.msra.mxu0 0
    %3767 = vmatprep.subr.bf16.mxu0 0
    %3768 = vmatpush1.bf16.xpose.msra.mxu0 0
    %3769 = vmatprep.subr.bf16.mxu0 0
    %3770 = vmatpush1.bf16.xpose.msra.mxu0 0
    %3771 = vmatprep.subr.bf16.mxu0 0
    %3772 = vmatpush1.bf16.xpose.msra.mxu0 0
    %3773 = vmatprep.subr.bf16.mxu0 0
    %3774 = vmatpush1.bf16.xpose.msra.mxu0 0
    %3775 = vmatprep.subr.bf16.mxu0 0
    %3776 = vmatpush1.bf16.xpose.msra.mxu0 0
    %3777 = vmatprep.subr.bf16.mxu0 0
    %3778 = vmatpush1.bf16.xpose.msra.mxu0 0
    %3779 = vmatprep.subr.bf16.mxu0 0
    %3780 = vmatpush1.bf16.xpose.msra.mxu0 0
    %3781 = vmatprep.subr.bf16.mxu0 0
    %3782 = vmatpush1.bf16.xpose.msra.mxu0 0
    %3783 = vmatprep.mubr.bf16.mxu0 0
    %3784 = vmatmul.mubr.bf16.gmra.mrb[0].mxu0 %v3746
    %v3785 = vpop.f32.mrb[0].mxu0
    %v3786 = vadd.f32 0.0, %v3785
    %v3787 = vpop.f32.mrb[0].mxu0
    %v3788 = vpop.f32.mrb[0].mxu0
    %v3789 = vpop.f32.mrb[0].mxu0
    %3790 = vdwg.mxu0
    %v3791 = vmul.f32 %v3786, 0.25
    %v3792 = vadd.f32 %v3791, %v3678
    %v3793 = vsel %vm353, %v3792, -inf
    %3794 = vmax.xlane.f32.xlu0 %v3793
    %v3795 = vpop.xlane.xlu0 %3794
    %v3796 = vsub.f32 %v3792, %v3795
    %v3797 = vmul.f32 %v3796, 1.442695
    %v3798 = vpow.pop %v3797
    %v3799 = vsel %vm353, %v3798, 0.0
    %3800 = vadd.xlane.f32.xlu0 %v3799
    %v3801 = vpop.xlane.xlu0 %3800
    %v3802 = vrcp.pop %v3801
    %v3803 = vmul.f32 %v3798, %v3802
    %v3804 = vpack.c.bf16 %v3803, %v3803
    %3805 = vrot.lane.b32.xlu0 %v3624, 48
    %v3806 = vpop.permute.xlu0 %3805
    %v3808 = vsel %vm353, %v3804, 0
    %v3811 = vsel %vm371, %v3806, 0
    %3813 = vmatprep.subr.bf16.mxu0 0
    %3814 = vmatpush1.bf16.msra.mxu0 %v3811
    %3815 = vmatprep.subr.bf16.mxu0 0
    %3816 = vmatpush1.bf16.msra.mxu0 0
    %3817 = vmatprep.subr.bf16.mxu0 0
    %3818 = vmatpush1.bf16.msra.mxu0 0
    %3819 = vmatprep.subr.bf16.mxu0 0
    %3820 = vmatpush1.bf16.msra.mxu0 0
    %3821 = vmatprep.subr.bf16.mxu0 0
    %3822 = vmatpush1.bf16.msra.mxu0 0
    %3823 = vmatprep.subr.bf16.mxu0 0
    %3824 = vmatpush1.bf16.msra.mxu0 0
    %3825 = vmatprep.subr.bf16.mxu0 0
    %3826 = vmatpush1.bf16.msra.mxu0 0
    %3827 = vmatprep.subr.bf16.mxu0 0
    %3828 = vmatpush1.bf16.msra.mxu0 0
    %3829 = vmatprep.subr.bf16.mxu0 0
    %3830 = vmatpush1.bf16.msra.mxu0 0
    %3831 = vmatprep.subr.bf16.mxu0 0
    %3832 = vmatpush1.bf16.msra.mxu0 0
    %3833 = vmatprep.subr.bf16.mxu0 0
    %3834 = vmatpush1.bf16.msra.mxu0 0
    %3835 = vmatprep.subr.bf16.mxu0 0
    %3836 = vmatpush1.bf16.msra.mxu0 0
    %3837 = vmatprep.subr.bf16.mxu0 0
    %3838 = vmatpush1.bf16.msra.mxu0 0
    %3839 = vmatprep.subr.bf16.mxu0 0
    %3840 = vmatpush1.bf16.msra.mxu0 0
    %3841 = vmatprep.subr.bf16.mxu0 0
    %3842 = vmatpush1.bf16.msra.mxu0 0
    %3843 = vmatprep.subr.bf16.mxu0 0
    %3844 = vmatpush1.bf16.msra.mxu0 0
    %3845 = vmatprep.mubr.bf16.mxu0 0
    %3846 = vmatmul.mubr.bf16.gmra.mrb[0].mxu0 %v3808
    %v3847 = vpop.f32.mrb[0].mxu0
    %v3848 = vadd.f32 0.0, %v3847
    %v3849 = vpop.f32.mrb[0].mxu0
    %v3850 = vpop.f32.mrb[0].mxu0
    %v3851 = vpop.f32.mrb[0].mxu0
    %3852 = vdwg.mxu0
    %3854 = vrot.lane.b32.xlu0 %v3848, 16
    %v3855 = vpop.permute.xlu0 %3854
    %3857 = vst.msk [vmem:[#allocation2 + $0x18] sm:$0xff] %vm532, %v3855
    %v3858 = vld [vmem:[%s1 + $0x4] sm:$0x1]
    %v3859 = vpack.c.bf16 %v2904, %v2904
    %3861 = vrot.lane.b32.xlu0 %v3859, 96
    %v3862 = vpop.permute.xlu0 %3861
    %v3864 = vsel %vm300, %v3859, 0
    %v3867 = vsel %vm300, %v3862, 0
    %3869 = vmatprep.subr.bf16.mxu0 0
    %3870 = vmatpush1.bf16.xpose.msra.mxu0 %v3867
    %3871 = vmatprep.subr.bf16.mxu0 0
    %3872 = vmatpush1.bf16.xpose.msra.mxu0 0
    %3873 = vmatprep.subr.bf16.mxu0 0
    %3874 = vmatpush1.bf16.xpose.msra.mxu0 0
    %3875 = vmatprep.subr.bf16.mxu0 0
    %3876 = vmatpush1.bf16.xpose.msra.mxu0 0
    %3877 = vmatprep.subr.bf16.mxu0 0
    %3878 = vmatpush1.bf16.xpose.msra.mxu0 0
    %3879 = vmatprep.subr.bf16.mxu0 0
    %3880 = vmatpush1.bf16.xpose.msra.mxu0 0
    %3881 = vmatprep.subr.bf16.mxu0 0
    %3882 = vmatpush1.bf16.xpose.msra.mxu0 0
    %3883 = vmatprep.subr.bf16.mxu0 0
    %3884 = vmatpush1.bf16.xpose.msra.mxu0 0
    %3885 = vmatprep.subr.bf16.mxu0 0
    %3886 = vmatpush1.bf16.xpose.msra.mxu0 0
    %3887 = vmatprep.subr.bf16.mxu0 0
    %3888 = vmatpush1.bf16.xpose.msra.mxu0 0
    %3889 = vmatprep.subr.bf16.mxu0 0
    %3890 = vmatpush1.bf16.xpose.msra.mxu0 0
    %3891 = vmatprep.subr.bf16.mxu0 0
    %3892 = vmatpush1.bf16.xpose.msra.mxu0 0
    %3893 = vmatprep.subr.bf16.mxu0 0
    %3894 = vmatpush1.bf16.xpose.msra.mxu0 0
    %3895 = vmatprep.subr.bf16.mxu0 0
    %3896 = vmatpush1.bf16.xpose.msra.mxu0 0
    %3897 = vmatprep.subr.bf16.mxu0 0
    %3898 = vmatpush1.bf16.xpose.msra.mxu0 0
    %3899 = vmatprep.subr.bf16.mxu0 0
    %3900 = vmatpush1.bf16.xpose.msra.mxu0 0
    %3901 = vmatprep.mubr.bf16.mxu0 0
    %3902 = vmatmul.mubr.bf16.gmra.mrb[0].mxu0 %v3864
    %v3903 = vpop.f32.mrb[0].mxu0
    %v3904 = vadd.f32 0.0, %v3903
    %v3905 = vpop.f32.mrb[0].mxu0
    %v3906 = vpop.f32.mrb[0].mxu0
    %v3907 = vpop.f32.mrb[0].mxu0
    %3908 = vdwg.mxu0
    %v3909 = vmul.f32 %v3904, 0.25
    %v3910 = vlaneseq
    %v3911 = vshrl.u32 %v3910, 7
    %v3912 = vsub.s32 0, %v3911
    %v3913 = vrot.slane %v3858, %v3912
    %v3914 = vadd.f32 %v3909, %v3913
    %v3915 = vsel %vm353, %v3914, -inf
    %3916 = vmax.xlane.f32.xlu0 %v3915
    %v3917 = vpop.xlane.xlu0 %3916
    %v3918 = vsub.f32 %v3914, %v3917
    %v3919 = vmul.f32 %v3918, 1.442695
    %v3920 = vpow.pop %v3919
    %v3921 = vsel %vm353, %v3920, 0.0
    %3922 = vadd.xlane.f32.xlu0 %v3921
    %v3923 = vpop.xlane.xlu0 %3922
    %v3924 = vrcp.pop %v3923
    %v3925 = vmul.f32 %v3920, %v3924
    %v3926 = vpack.c.bf16 %v3925, %v3925
    %3927 = vrot.lane.b32.xlu0 %v3859, 64
    %v3928 = vpop.permute.xlu0 %3927
    %v3930 = vsel %vm353, %v3926, 0
    %v3933 = vsel %vm371, %v3928, 0
    %3935 = vmatprep.subr.bf16.mxu0 0
    %3936 = vmatpush1.bf16.msra.mxu0 %v3933
    %3937 = vmatprep.subr.bf16.mxu0 0
    %3938 = vmatpush1.bf16.msra.mxu0 0
    %3939 = vmatprep.subr.bf16.mxu0 0
    %3940 = vmatpush1.bf16.msra.mxu0 0
    %3941 = vmatprep.subr.bf16.mxu0 0
    %3942 = vmatpush1.bf16.msra.mxu0 0
    %3943 = vmatprep.subr.bf16.mxu0 0
    %3944 = vmatpush1.bf16.msra.mxu0 0
    %3945 = vmatprep.subr.bf16.mxu0 0
    %3946 = vmatpush1.bf16.msra.mxu0 0
    %3947 = vmatprep.subr.bf16.mxu0 0
    %3948 = vmatpush1.bf16.msra.mxu0 0
    %3949 = vmatprep.subr.bf16.mxu0 0
    %3950 = vmatpush1.bf16.msra.mxu0 0
    %3951 = vmatprep.subr.bf16.mxu0 0
    %3952 = vmatpush1.bf16.msra.mxu0 0
    %3953 = vmatprep.subr.bf16.mxu0 0
    %3954 = vmatpush1.bf16.msra.mxu0 0
    %3955 = vmatprep.subr.bf16.mxu0 0
    %3956 = vmatpush1.bf16.msra.mxu0 0
    %3957 = vmatprep.subr.bf16.mxu0 0
    %3958 = vmatpush1.bf16.msra.mxu0 0
    %3959 = vmatprep.subr.bf16.mxu0 0
    %3960 = vmatpush1.bf16.msra.mxu0 0
    %3961 = vmatprep.subr.bf16.mxu0 0
    %3962 = vmatpush1.bf16.msra.mxu0 0
    %3963 = vmatprep.subr.bf16.mxu0 0
    %3964 = vmatpush1.bf16.msra.mxu0 0
    %3965 = vmatprep.subr.bf16.mxu0 0
    %3966 = vmatpush1.bf16.msra.mxu0 0
    %3967 = vmatprep.mubr.bf16.mxu0 0
    %3968 = vmatmul.mubr.bf16.gmra.mrb[0].mxu0 %v3930
    %v3969 = vpop.f32.mrb[0].mxu0
    %v3970 = vadd.f32 0.0, %v3969
    %v3971 = vpop.f32.mrb[0].mxu0
    %v3972 = vpop.f32.mrb[0].mxu0
    %v3973 = vpop.f32.mrb[0].mxu0
    %3974 = vdwg.mxu0
    %3975 = vst.msk [vmem:[#allocation2 + $0x20] sm:$0xff] %vm300, %v3970
    %3976 = vrot.lane.b32.xlu0 %v3859, 112
    %v3977 = vpop.permute.xlu0 %3976
    %3978 = vrot.lane.b32.xlu0 %v3859, 80
    %v3979 = vpop.permute.xlu0 %3978
    %v3981 = vsel %vm300, %v3977, 0
    %v3984 = vsel %vm300, %v3979, 0
    %3986 = vmatprep.subr.bf16.mxu0 0
    %3987 = vmatpush1.bf16.xpose.msra.mxu0 %v3984
    %3988 = vmatprep.subr.bf16.mxu0 0
    %3989 = vmatpush1.bf16.xpose.msra.mxu0 0
    %3990 = vmatprep.subr.bf16.mxu0 0
    %3991 = vmatpush1.bf16.xpose.msra.mxu0 0
    %3992 = vmatprep.subr.bf16.mxu0 0
    %3993 = vmatpush1.bf16.xpose.msra.mxu0 0
    %3994 = vmatprep.subr.bf16.mxu0 0
    %3995 = vmatpush1.bf16.xpose.msra.mxu0 0
    %3996 = vmatprep.subr.bf16.mxu0 0
    %3997 = vmatpush1.bf16.xpose.msra.mxu0 0
    %3998 = vmatprep.subr.bf16.mxu0 0
    %3999 = vmatpush1.bf16.xpose.msra.mxu0 0
    %4000 = vmatprep.subr.bf16.mxu0 0
    %4001 = vmatpush1.bf16.xpose.msra.mxu0 0
    %4002 = vmatprep.subr.bf16.mxu0 0
    %4003 = vmatpush1.bf16.xpose.msra.mxu0 0
    %4004 = vmatprep.subr.bf16.mxu0 0
    %4005 = vmatpush1.bf16.xpose.msra.mxu0 0
    %4006 = vmatprep.subr.bf16.mxu0 0
    %4007 = vmatpush1.bf16.xpose.msra.mxu0 0
    %4008 = vmatprep.subr.bf16.mxu0 0
    %4009 = vmatpush1.bf16.xpose.msra.mxu0 0
    %4010 = vmatprep.subr.bf16.mxu0 0
    %4011 = vmatpush1.bf16.xpose.msra.mxu0 0
    %4012 = vmatprep.subr.bf16.mxu0 0
    %4013 = vmatpush1.bf16.xpose.msra.mxu0 0
    %4014 = vmatprep.subr.bf16.mxu0 0
    %4015 = vmatpush1.bf16.xpose.msra.mxu0 0
    %4016 = vmatprep.subr.bf16.mxu0 0
    %4017 = vmatpush1.bf16.xpose.msra.mxu0 0
    %4018 = vmatprep.mubr.bf16.mxu0 0
    %4019 = vmatmul.mubr.bf16.gmra.mrb[0].mxu0 %v3981
    %v4020 = vpop.f32.mrb[0].mxu0
    %v4021 = vadd.f32 0.0, %v4020
    %v4022 = vpop.f32.mrb[0].mxu0
    %v4023 = vpop.f32.mrb[0].mxu0
    %v4024 = vpop.f32.mrb[0].mxu0
    %4025 = vdwg.mxu0
    %v4026 = vmul.f32 %v4021, 0.25
    %v4027 = vadd.f32 %v4026, %v3913
    %v4028 = vsel %vm353, %v4027, -inf
    %4029 = vmax.xlane.f32.xlu0 %v4028
    %v4030 = vpop.xlane.xlu0 %4029
    %v4031 = vsub.f32 %v4027, %v4030
    %v4032 = vmul.f32 %v4031, 1.442695
    %v4033 = vpow.pop %v4032
    %v4034 = vsel %vm353, %v4033, 0.0
    %4035 = vadd.xlane.f32.xlu0 %v4034
    %v4036 = vpop.xlane.xlu0 %4035
    %v4037 = vrcp.pop %v4036
    %v4038 = vmul.f32 %v4033, %v4037
    %v4039 = vpack.c.bf16 %v4038, %v4038
    %4040 = vrot.lane.b32.xlu0 %v3859, 48
    %v4041 = vpop.permute.xlu0 %4040
    %v4043 = vsel %vm353, %v4039, 0
    %v4046 = vsel %vm371, %v4041, 0
    %4048 = vmatprep.subr.bf16.mxu0 0
    %4049 = vmatpush1.bf16.msra.mxu0 %v4046
    %4050 = vmatprep.subr.bf16.mxu0 0
    %4051 = vmatpush1.bf16.msra.mxu0 0
    %4052 = vmatprep.subr.bf16.mxu0 0
    %4053 = vmatpush1.bf16.msra.mxu0 0
    %4054 = vmatprep.subr.bf16.mxu0 0
    %4055 = vmatpush1.bf16.msra.mxu0 0
    %4056 = vmatprep.subr.bf16.mxu0 0
    %4057 = vmatpush1.bf16.msra.mxu0 0
    %4058 = vmatprep.subr.bf16.mxu0 0
    %4059 = vmatpush1.bf16.msra.mxu0 0
    %4060 = vmatprep.subr.bf16.mxu0 0
    %4061 = vmatpush1.bf16.msra.mxu0 0
    %4062 = vmatprep.subr.bf16.mxu0 0
    %4063 = vmatpush1.bf16.msra.mxu0 0
    %4064 = vmatprep.subr.bf16.mxu0 0
    %4065 = vmatpush1.bf16.msra.mxu0 0
    %4066 = vmatprep.subr.bf16.mxu0 0
    %4067 = vmatpush1.bf16.msra.mxu0 0
    %4068 = vmatprep.subr.bf16.mxu0 0
    %4069 = vmatpush1.bf16.msra.mxu0 0
    %4070 = vmatprep.subr.bf16.mxu0 0
    %4071 = vmatpush1.bf16.msra.mxu0 0
    %4072 = vmatprep.subr.bf16.mxu0 0
    %4073 = vmatpush1.bf16.msra.mxu0 0
    %4074 = vmatprep.subr.bf16.mxu0 0
    %4075 = vmatpush1.bf16.msra.mxu0 0
    %4076 = vmatprep.subr.bf16.mxu0 0
    %4077 = vmatpush1.bf16.msra.mxu0 0
    %4078 = vmatprep.subr.bf16.mxu0 0
    %4079 = vmatpush1.bf16.msra.mxu0 0
    %4080 = vmatprep.mubr.bf16.mxu0 0
    %4081 = vmatmul.mubr.bf16.gmra.mrb[0].mxu0 %v4043
    %v4082 = vpop.f32.mrb[0].mxu0
    %v4083 = vadd.f32 0.0, %v4082
    %v4084 = vpop.f32.mrb[0].mxu0
    %v4085 = vpop.f32.mrb[0].mxu0
    %v4086 = vpop.f32.mrb[0].mxu0
    %4087 = vdwg.mxu0
    %4089 = vrot.lane.b32.xlu0 %v4083, 16
    %v4090 = vpop.permute.xlu0 %4089
    %4092 = vst.msk [vmem:[#allocation2 + $0x20] sm:$0xff] %vm532, %v4090
    %v4093 = vld [vmem:[%s1 + $0x5] sm:$0x1]
    %v4094 = vpack.c.bf16 %v2907, %v2907
    %4096 = vrot.lane.b32.xlu0 %v4094, 96
    %v4097 = vpop.permute.xlu0 %4096
    %v4099 = vsel %vm300, %v4094, 0
    %v4102 = vsel %vm300, %v4097, 0
    %4104 = vmatprep.subr.bf16.mxu0 0
    %4105 = vmatpush1.bf16.xpose.msra.mxu0 %v4102
    %4106 = vmatprep.subr.bf16.mxu0 0
    %4107 = vmatpush1.bf16.xpose.msra.mxu0 0
    %4108 = vmatprep.subr.bf16.mxu0 0
    %4109 = vmatpush1.bf16.xpose.msra.mxu0 0
    %4110 = vmatprep.subr.bf16.mxu0 0
    %4111 = vmatpush1.bf16.xpose.msra.mxu0 0
    %4112 = vmatprep.subr.bf16.mxu0 0
    %4113 = vmatpush1.bf16.xpose.msra.mxu0 0
    %4114 = vmatprep.subr.bf16.mxu0 0
    %4115 = vmatpush1.bf16.xpose.msra.mxu0 0
    %4116 = vmatprep.subr.bf16.mxu0 0
    %4117 = vmatpush1.bf16.xpose.msra.mxu0 0
    %4118 = vmatprep.subr.bf16.mxu0 0
    %4119 = vmatpush1.bf16.xpose.msra.mxu0 0
    %4120 = vmatprep.subr.bf16.mxu0 0
    %4121 = vmatpush1.bf16.xpose.msra.mxu0 0
    %4122 = vmatprep.subr.bf16.mxu0 0
    %4123 = vmatpush1.bf16.xpose.msra.mxu0 0
    %4124 = vmatprep.subr.bf16.mxu0 0
    %4125 = vmatpush1.bf16.xpose.msra.mxu0 0
    %4126 = vmatprep.subr.bf16.mxu0 0
    %4127 = vmatpush1.bf16.xpose.msra.mxu0 0
    %4128 = vmatprep.subr.bf16.mxu0 0
    %4129 = vmatpush1.bf16.xpose.msra.mxu0 0
    %4130 = vmatprep.subr.bf16.mxu0 0
    %4131 = vmatpush1.bf16.xpose.msra.mxu0 0
    %4132 = vmatprep.subr.bf16.mxu0 0
    %4133 = vmatpush1.bf16.xpose.msra.mxu0 0
    %4134 = vmatprep.subr.bf16.mxu0 0
    %4135 = vmatpush1.bf16.xpose.msra.mxu0 0
    %4136 = vmatprep.mubr.bf16.mxu0 0
    %4137 = vmatmul.mubr.bf16.gmra.mrb[0].mxu0 %v4099
    %v4138 = vpop.f32.mrb[0].mxu0
    %v4139 = vadd.f32 0.0, %v4138
    %v4140 = vpop.f32.mrb[0].mxu0
    %v4141 = vpop.f32.mrb[0].mxu0
    %v4142 = vpop.f32.mrb[0].mxu0
    %4143 = vdwg.mxu0
    %v4144 = vmul.f32 %v4139, 0.25
    %v4145 = vlaneseq
    %v4146 = vshrl.u32 %v4145, 7
    %v4147 = vsub.s32 0, %v4146
    %v4148 = vrot.slane %v4093, %v4147
    %v4149 = vadd.f32 %v4144, %v4148
    %v4150 = vsel %vm353, %v4149, -inf
    %4151 = vmax.xlane.f32.xlu0 %v4150
    %v4152 = vpop.xlane.xlu0 %4151
    %v4153 = vsub.f32 %v4149, %v4152
    %v4154 = vmul.f32 %v4153, 1.442695
    %v4155 = vpow.pop %v4154
    %v4156 = vsel %vm353, %v4155, 0.0
    %4157 = vadd.xlane.f32.xlu0 %v4156
    %v4158 = vpop.xlane.xlu0 %4157
    %v4159 = vrcp.pop %v4158
    %v4160 = vmul.f32 %v4155, %v4159
    %v4161 = vpack.c.bf16 %v4160, %v4160
    %4162 = vrot.lane.b32.xlu0 %v4094, 64
    %v4163 = vpop.permute.xlu0 %4162
    %v4165 = vsel %vm353, %v4161, 0
    %v4168 = vsel %vm371, %v4163, 0
    %4170 = vmatprep.subr.bf16.mxu0 0
    %4171 = vmatpush1.bf16.msra.mxu0 %v4168
    %4172 = vmatprep.subr.bf16.mxu0 0
    %4173 = vmatpush1.bf16.msra.mxu0 0
    %4174 = vmatprep.subr.bf16.mxu0 0
    %4175 = vmatpush1.bf16.msra.mxu0 0
    %4176 = vmatprep.subr.bf16.mxu0 0
    %4177 = vmatpush1.bf16.msra.mxu0 0
    %4178 = vmatprep.subr.bf16.mxu0 0
    %4179 = vmatpush1.bf16.msra.mxu0 0
    %4180 = vmatprep.subr.bf16.mxu0 0
    %4181 = vmatpush1.bf16.msra.mxu0 0
    %4182 = vmatprep.subr.bf16.mxu0 0
    %4183 = vmatpush1.bf16.msra.mxu0 0
    %4184 = vmatprep.subr.bf16.mxu0 0
    %4185 = vmatpush1.bf16.msra.mxu0 0
    %4186 = vmatprep.subr.bf16.mxu0 0
    %4187 = vmatpush1.bf16.msra.mxu0 0
    %4188 = vmatprep.subr.bf16.mxu0 0
    %4189 = vmatpush1.bf16.msra.mxu0 0
    %4190 = vmatprep.subr.bf16.mxu0 0
    %4191 = vmatpush1.bf16.msra.mxu0 0
    %4192 = vmatprep.subr.bf16.mxu0 0
    %4193 = vmatpush1.bf16.msra.mxu0 0
    %4194 = vmatprep.subr.bf16.mxu0 0
    %4195 = vmatpush1.bf16.msra.mxu0 0
    %4196 = vmatprep.subr.bf16.mxu0 0
    %4197 = vmatpush1.bf16.msra.mxu0 0
    %4198 = vmatprep.subr.bf16.mxu0 0
    %4199 = vmatpush1.bf16.msra.mxu0 0
    %4200 = vmatprep.subr.bf16.mxu0 0
    %4201 = vmatpush1.bf16.msra.mxu0 0
    %4202 = vmatprep.mubr.bf16.mxu0 0
    %4203 = vmatmul.mubr.bf16.gmra.mrb[0].mxu0 %v4165
    %v4204 = vpop.f32.mrb[0].mxu0
    %v4205 = vadd.f32 0.0, %v4204
    %v4206 = vpop.f32.mrb[0].mxu0
    %v4207 = vpop.f32.mrb[0].mxu0
    %v4208 = vpop.f32.mrb[0].mxu0
    %4209 = vdwg.mxu0
    %4210 = vst.msk [vmem:[#allocation2 + $0x28] sm:$0xff] %vm300, %v4205
    %4211 = vrot.lane.b32.xlu0 %v4094, 112
    %v4212 = vpop.permute.xlu0 %4211
    %4213 = vrot.lane.b32.xlu0 %v4094, 80
    %v4214 = vpop.permute.xlu0 %4213
    %v4216 = vsel %vm300, %v4212, 0
    %v4219 = vsel %vm300, %v4214, 0
    %4221 = vmatprep.subr.bf16.mxu0 0
    %4222 = vmatpush1.bf16.xpose.msra.mxu0 %v4219
    %4223 = vmatprep.subr.bf16.mxu0 0
    %4224 = vmatpush1.bf16.xpose.msra.mxu0 0
    %4225 = vmatprep.subr.bf16.mxu0 0
    %4226 = vmatpush1.bf16.xpose.msra.mxu0 0
    %4227 = vmatprep.subr.bf16.mxu0 0
    %4228 = vmatpush1.bf16.xpose.msra.mxu0 0
    %4229 = vmatprep.subr.bf16.mxu0 0
    %4230 = vmatpush1.bf16.xpose.msra.mxu0 0
    %4231 = vmatprep.subr.bf16.mxu0 0
    %4232 = vmatpush1.bf16.xpose.msra.mxu0 0
    %4233 = vmatprep.subr.bf16.mxu0 0
    %4234 = vmatpush1.bf16.xpose.msra.mxu0 0
    %4235 = vmatprep.subr.bf16.mxu0 0
    %4236 = vmatpush1.bf16.xpose.msra.mxu0 0
    %4237 = vmatprep.subr.bf16.mxu0 0
    %4238 = vmatpush1.bf16.xpose.msra.mxu0 0
    %4239 = vmatprep.subr.bf16.mxu0 0
    %4240 = vmatpush1.bf16.xpose.msra.mxu0 0
    %4241 = vmatprep.subr.bf16.mxu0 0
    %4242 = vmatpush1.bf16.xpose.msra.mxu0 0
    %4243 = vmatprep.subr.bf16.mxu0 0
    %4244 = vmatpush1.bf16.xpose.msra.mxu0 0
    %4245 = vmatprep.subr.bf16.mxu0 0
    %4246 = vmatpush1.bf16.xpose.msra.mxu0 0
    %4247 = vmatprep.subr.bf16.mxu0 0
    %4248 = vmatpush1.bf16.xpose.msra.mxu0 0
    %4249 = vmatprep.subr.bf16.mxu0 0
    %4250 = vmatpush1.bf16.xpose.msra.mxu0 0
    %4251 = vmatprep.subr.bf16.mxu0 0
    %4252 = vmatpush1.bf16.xpose.msra.mxu0 0
    %4253 = vmatprep.mubr.bf16.mxu0 0
    %4254 = vmatmul.mubr.bf16.gmra.mrb[0].mxu0 %v4216
    %v4255 = vpop.f32.mrb[0].mxu0
    %v4256 = vadd.f32 0.0, %v4255
    %v4257 = vpop.f32.mrb[0].mxu0
    %v4258 = vpop.f32.mrb[0].mxu0
    %v4259 = vpop.f32.mrb[0].mxu0
    %4260 = vdwg.mxu0
    %v4261 = vmul.f32 %v4256, 0.25
    %v4262 = vadd.f32 %v4261, %v4148
    %v4263 = vsel %vm353, %v4262, -inf
    %4264 = vmax.xlane.f32.xlu0 %v4263
    %v4265 = vpop.xlane.xlu0 %4264
    %v4266 = vsub.f32 %v4262, %v4265
    %v4267 = vmul.f32 %v4266, 1.442695
    %v4268 = vpow.pop %v4267
    %v4269 = vsel %vm353, %v4268, 0.0
    %4270 = vadd.xlane.f32.xlu0 %v4269
    %v4271 = vpop.xlane.xlu0 %4270
    %v4272 = vrcp.pop %v4271
    %v4273 = vmul.f32 %v4268, %v4272
    %v4274 = vpack.c.bf16 %v4273, %v4273
    %4275 = vrot.lane.b32.xlu0 %v4094, 48
    %v4276 = vpop.permute.xlu0 %4275
    %v4278 = vsel %vm353, %v4274, 0
    %v4281 = vsel %vm371, %v4276, 0
    %4283 = vmatprep.subr.bf16.mxu0 0
    %4284 = vmatpush1.bf16.msra.mxu0 %v4281
    %4285 = vmatprep.subr.bf16.mxu0 0
    %4286 = vmatpush1.bf16.msra.mxu0 0
    %4287 = vmatprep.subr.bf16.mxu0 0
    %4288 = vmatpush1.bf16.msra.mxu0 0
    %4289 = vmatprep.subr.bf16.mxu0 0
    %4290 = vmatpush1.bf16.msra.mxu0 0
    %4291 = vmatprep.subr.bf16.mxu0 0
    %4292 = vmatpush1.bf16.msra.mxu0 0
    %4293 = vmatprep.subr.bf16.mxu0 0
    %4294 = vmatpush1.bf16.msra.mxu0 0
    %4295 = vmatprep.subr.bf16.mxu0 0
    %4296 = vmatpush1.bf16.msra.mxu0 0
    %4297 = vmatprep.subr.bf16.mxu0 0
    %4298 = vmatpush1.bf16.msra.mxu0 0
    %4299 = vmatprep.subr.bf16.mxu0 0
    %4300 = vmatpush1.bf16.msra.mxu0 0
    %4301 = vmatprep.subr.bf16.mxu0 0
    %4302 = vmatpush1.bf16.msra.mxu0 0
    %4303 = vmatprep.subr.bf16.mxu0 0
    %4304 = vmatpush1.bf16.msra.mxu0 0
    %4305 = vmatprep.subr.bf16.mxu0 0
    %4306 = vmatpush1.bf16.msra.mxu0 0
    %4307 = vmatprep.subr.bf16.mxu0 0
    %4308 = vmatpush1.bf16.msra.mxu0 0
    %4309 = vmatprep.subr.bf16.mxu0 0
    %4310 = vmatpush1.bf16.msra.mxu0 0
    %4311 = vmatprep.subr.bf16.mxu0 0
    %4312 = vmatpush1.bf16.msra.mxu0 0
    %4313 = vmatprep.subr.bf16.mxu0 0
    %4314 = vmatpush1.bf16.msra.mxu0 0
    %4315 = vmatprep.mubr.bf16.mxu0 0
    %4316 = vmatmul.mubr.bf16.gmra.mrb[0].mxu0 %v4278
    %v4317 = vpop.f32.mrb[0].mxu0
    %v4318 = vadd.f32 0.0, %v4317
    %v4319 = vpop.f32.mrb[0].mxu0
    %v4320 = vpop.f32.mrb[0].mxu0
    %v4321 = vpop.f32.mrb[0].mxu0
    %4322 = vdwg.mxu0
    %4324 = vrot.lane.b32.xlu0 %v4318, 16
    %v4325 = vpop.permute.xlu0 %4324
    %4327 = vst.msk [vmem:[#allocation2 + $0x28] sm:$0xff] %vm532, %v4325
    %v4328 = vld [vmem:[%s1 + $0x6] sm:$0x1]
    %v4329 = vpack.c.bf16 %v2912, %v2912
    %4331 = vrot.lane.b32.xlu0 %v4329, 96
    %v4332 = vpop.permute.xlu0 %4331
    %v4334 = vsel %vm300, %v4329, 0
    %v4337 = vsel %vm300, %v4332, 0
    %4339 = vmatprep.subr.bf16.mxu0 0
    %4340 = vmatpush1.bf16.xpose.msra.mxu0 %v4337
    %4341 = vmatprep.subr.bf16.mxu0 0
    %4342 = vmatpush1.bf16.xpose.msra.mxu0 0
    %4343 = vmatprep.subr.bf16.mxu0 0
    %4344 = vmatpush1.bf16.xpose.msra.mxu0 0
    %4345 = vmatprep.subr.bf16.mxu0 0
    %4346 = vmatpush1.bf16.xpose.msra.mxu0 0
    %4347 = vmatprep.subr.bf16.mxu0 0
    %4348 = vmatpush1.bf16.xpose.msra.mxu0 0
    %4349 = vmatprep.subr.bf16.mxu0 0
    %4350 = vmatpush1.bf16.xpose.msra.mxu0 0
    %4351 = vmatprep.subr.bf16.mxu0 0
    %4352 = vmatpush1.bf16.xpose.msra.mxu0 0
    %4353 = vmatprep.subr.bf16.mxu0 0
    %4354 = vmatpush1.bf16.xpose.msra.mxu0 0
    %4355 = vmatprep.subr.bf16.mxu0 0
    %4356 = vmatpush1.bf16.xpose.msra.mxu0 0
    %4357 = vmatprep.subr.bf16.mxu0 0
    %4358 = vmatpush1.bf16.xpose.msra.mxu0 0
    %4359 = vmatprep.subr.bf16.mxu0 0
    %4360 = vmatpush1.bf16.xpose.msra.mxu0 0
    %4361 = vmatprep.subr.bf16.mxu0 0
    %4362 = vmatpush1.bf16.xpose.msra.mxu0 0
    %4363 = vmatprep.subr.bf16.mxu0 0
    %4364 = vmatpush1.bf16.xpose.msra.mxu0 0
    %4365 = vmatprep.subr.bf16.mxu0 0
    %4366 = vmatpush1.bf16.xpose.msra.mxu0 0
    %4367 = vmatprep.subr.bf16.mxu0 0
    %4368 = vmatpush1.bf16.xpose.msra.mxu0 0
    %4369 = vmatprep.subr.bf16.mxu0 0
    %4370 = vmatpush1.bf16.xpose.msra.mxu0 0
    %4371 = vmatprep.mubr.bf16.mxu0 0
    %4372 = vmatmul.mubr.bf16.gmra.mrb[0].mxu0 %v4334
    %v4373 = vpop.f32.mrb[0].mxu0
    %v4374 = vadd.f32 0.0, %v4373
    %v4375 = vpop.f32.mrb[0].mxu0
    %v4376 = vpop.f32.mrb[0].mxu0
    %v4377 = vpop.f32.mrb[0].mxu0
    %4378 = vdwg.mxu0
    %v4379 = vmul.f32 %v4374, 0.25
    %v4380 = vlaneseq
    %v4381 = vshrl.u32 %v4380, 7
    %v4382 = vsub.s32 0, %v4381
    %v4383 = vrot.slane %v4328, %v4382
    %v4384 = vadd.f32 %v4379, %v4383
    %v4385 = vsel %vm353, %v4384, -inf
    %4386 = vmax.xlane.f32.xlu0 %v4385
    %v4387 = vpop.xlane.xlu0 %4386
    %v4388 = vsub.f32 %v4384, %v4387
    %v4389 = vmul.f32 %v4388, 1.442695
    %v4390 = vpow.pop %v4389
    %v4391 = vsel %vm353, %v4390, 0.0
    %4392 = vadd.xlane.f32.xlu0 %v4391
    %v4393 = vpop.xlane.xlu0 %4392
    %v4394 = vrcp.pop %v4393
    %v4395 = vmul.f32 %v4390, %v4394
    %v4396 = vpack.c.bf16 %v4395, %v4395
    %4397 = vrot.lane.b32.xlu0 %v4329, 64
    %v4398 = vpop.permute.xlu0 %4397
    %v4400 = vsel %vm353, %v4396, 0
    %v4403 = vsel %vm371, %v4398, 0
    %4405 = vmatprep.subr.bf16.mxu0 0
    %4406 = vmatpush1.bf16.msra.mxu0 %v4403
    %4407 = vmatprep.subr.bf16.mxu0 0
    %4408 = vmatpush1.bf16.msra.mxu0 0
    %4409 = vmatprep.subr.bf16.mxu0 0
    %4410 = vmatpush1.bf16.msra.mxu0 0
    %4411 = vmatprep.subr.bf16.mxu0 0
    %4412 = vmatpush1.bf16.msra.mxu0 0
    %4413 = vmatprep.subr.bf16.mxu0 0
    %4414 = vmatpush1.bf16.msra.mxu0 0
    %4415 = vmatprep.subr.bf16.mxu0 0
    %4416 = vmatpush1.bf16.msra.mxu0 0
    %4417 = vmatprep.subr.bf16.mxu0 0
    %4418 = vmatpush1.bf16.msra.mxu0 0
    %4419 = vmatprep.subr.bf16.mxu0 0
    %4420 = vmatpush1.bf16.msra.mxu0 0
    %4421 = vmatprep.subr.bf16.mxu0 0
    %4422 = vmatpush1.bf16.msra.mxu0 0
    %4423 = vmatprep.subr.bf16.mxu0 0
    %4424 = vmatpush1.bf16.msra.mxu0 0
    %4425 = vmatprep.subr.bf16.mxu0 0
    %4426 = vmatpush1.bf16.msra.mxu0 0
    %4427 = vmatprep.subr.bf16.mxu0 0
    %4428 = vmatpush1.bf16.msra.mxu0 0
    %4429 = vmatprep.subr.bf16.mxu0 0
    %4430 = vmatpush1.bf16.msra.mxu0 0
    %4431 = vmatprep.subr.bf16.mxu0 0
    %4432 = vmatpush1.bf16.msra.mxu0 0
    %4433 = vmatprep.subr.bf16.mxu0 0
    %4434 = vmatpush1.bf16.msra.mxu0 0
    %4435 = vmatprep.subr.bf16.mxu0 0
    %4436 = vmatpush1.bf16.msra.mxu0 0
    %4437 = vmatprep.mubr.bf16.mxu0 0
    %4438 = vmatmul.mubr.bf16.gmra.mrb[0].mxu0 %v4400
    %v4439 = vpop.f32.mrb[0].mxu0
    %v4440 = vadd.f32 0.0, %v4439
    %v4441 = vpop.f32.mrb[0].mxu0
    %v4442 = vpop.f32.mrb[0].mxu0
    %v4443 = vpop.f32.mrb[0].mxu0
    %4444 = vdwg.mxu0
    %4445 = vst.msk [vmem:[#allocation2 + $0x30] sm:$0xff] %vm300, %v4440
    %4446 = vrot.lane.b32.xlu0 %v4329, 112
    %v4447 = vpop.permute.xlu0 %4446
    %4448 = vrot.lane.b32.xlu0 %v4329, 80
    %v4449 = vpop.permute.xlu0 %4448
    %v4451 = vsel %vm300, %v4447, 0
    %v4454 = vsel %vm300, %v4449, 0
    %4456 = vmatprep.subr.bf16.mxu0 0
    %4457 = vmatpush1.bf16.xpose.msra.mxu0 %v4454
    %4458 = vmatprep.subr.bf16.mxu0 0
    %4459 = vmatpush1.bf16.xpose.msra.mxu0 0
    %4460 = vmatprep.subr.bf16.mxu0 0
    %4461 = vmatpush1.bf16.xpose.msra.mxu0 0
    %4462 = vmatprep.subr.bf16.mxu0 0
    %4463 = vmatpush1.bf16.xpose.msra.mxu0 0
    %4464 = vmatprep.subr.bf16.mxu0 0
    %4465 = vmatpush1.bf16.xpose.msra.mxu0 0
    %4466 = vmatprep.subr.bf16.mxu0 0
    %4467 = vmatpush1.bf16.xpose.msra.mxu0 0
    %4468 = vmatprep.subr.bf16.mxu0 0
    %4469 = vmatpush1.bf16.xpose.msra.mxu0 0
    %4470 = vmatprep.subr.bf16.mxu0 0
    %4471 = vmatpush1.bf16.xpose.msra.mxu0 0
    %4472 = vmatprep.subr.bf16.mxu0 0
    %4473 = vmatpush1.bf16.xpose.msra.mxu0 0
    %4474 = vmatprep.subr.bf16.mxu0 0
    %4475 = vmatpush1.bf16.xpose.msra.mxu0 0
    %4476 = vmatprep.subr.bf16.mxu0 0
    %4477 = vmatpush1.bf16.xpose.msra.mxu0 0
    %4478 = vmatprep.subr.bf16.mxu0 0
    %4479 = vmatpush1.bf16.xpose.msra.mxu0 0
    %4480 = vmatprep.subr.bf16.mxu0 0
    %4481 = vmatpush1.bf16.xpose.msra.mxu0 0
    %4482 = vmatprep.subr.bf16.mxu0 0
    %4483 = vmatpush1.bf16.xpose.msra.mxu0 0
    %4484 = vmatprep.subr.bf16.mxu0 0
    %4485 = vmatpush1.bf16.xpose.msra.mxu0 0
    %4486 = vmatprep.subr.bf16.mxu0 0
    %4487 = vmatpush1.bf16.xpose.msra.mxu0 0
    %4488 = vmatprep.mubr.bf16.mxu0 0
    %4489 = vmatmul.mubr.bf16.gmra.mrb[0].mxu0 %v4451
    %v4490 = vpop.f32.mrb[0].mxu0
    %v4491 = vadd.f32 0.0, %v4490
    %v4492 = vpop.f32.mrb[0].mxu0
    %v4493 = vpop.f32.mrb[0].mxu0
    %v4494 = vpop.f32.mrb[0].mxu0
    %4495 = vdwg.mxu0
    %v4496 = vmul.f32 %v4491, 0.25
    %v4497 = vadd.f32 %v4496, %v4383
    %v4498 = vsel %vm353, %v4497, -inf
    %4499 = vmax.xlane.f32.xlu0 %v4498
    %v4500 = vpop.xlane.xlu0 %4499
    %v4501 = vsub.f32 %v4497, %v4500
    %v4502 = vmul.f32 %v4501, 1.442695
    %v4503 = vpow.pop %v4502
    %v4504 = vsel %vm353, %v4503, 0.0
    %4505 = vadd.xlane.f32.xlu0 %v4504
    %v4506 = vpop.xlane.xlu0 %4505
    %v4507 = vrcp.pop %v4506
    %v4508 = vmul.f32 %v4503, %v4507
    %v4509 = vpack.c.bf16 %v4508, %v4508
    %4510 = vrot.lane.b32.xlu0 %v4329, 48
    %v4511 = vpop.permute.xlu0 %4510
    %v4513 = vsel %vm353, %v4509, 0
    %v4516 = vsel %vm371, %v4511, 0
    %4518 = vmatprep.subr.bf16.mxu0 0
    %4519 = vmatpush1.bf16.msra.mxu0 %v4516
    %4520 = vmatprep.subr.bf16.mxu0 0
    %4521 = vmatpush1.bf16.msra.mxu0 0
    %4522 = vmatprep.subr.bf16.mxu0 0
    %4523 = vmatpush1.bf16.msra.mxu0 0
    %4524 = vmatprep.subr.bf16.mxu0 0
    %4525 = vmatpush1.bf16.msra.mxu0 0
    %4526 = vmatprep.subr.bf16.mxu0 0
    %4527 = vmatpush1.bf16.msra.mxu0 0
    %4528 = vmatprep.subr.bf16.mxu0 0
    %4529 = vmatpush1.bf16.msra.mxu0 0
    %4530 = vmatprep.subr.bf16.mxu0 0
    %4531 = vmatpush1.bf16.msra.mxu0 0
    %4532 = vmatprep.subr.bf16.mxu0 0
    %4533 = vmatpush1.bf16.msra.mxu0 0
    %4534 = vmatprep.subr.bf16.mxu0 0
    %4535 = vmatpush1.bf16.msra.mxu0 0
    %4536 = vmatprep.subr.bf16.mxu0 0
    %4537 = vmatpush1.bf16.msra.mxu0 0
    %4538 = vmatprep.subr.bf16.mxu0 0
    %4539 = vmatpush1.bf16.msra.mxu0 0
    %4540 = vmatprep.subr.bf16.mxu0 0
    %4541 = vmatpush1.bf16.msra.mxu0 0
    %4542 = vmatprep.subr.bf16.mxu0 0
    %4543 = vmatpush1.bf16.msra.mxu0 0
    %4544 = vmatprep.subr.bf16.mxu0 0
    %4545 = vmatpush1.bf16.msra.mxu0 0
    %4546 = vmatprep.subr.bf16.mxu0 0
    %4547 = vmatpush1.bf16.msra.mxu0 0
    %4548 = vmatprep.subr.bf16.mxu0 0
    %4549 = vmatpush1.bf16.msra.mxu0 0
    %4550 = vmatprep.mubr.bf16.mxu0 0
    %4551 = vmatmul.mubr.bf16.gmra.mrb[0].mxu0 %v4513
    %v4552 = vpop.f32.mrb[0].mxu0
    %v4553 = vadd.f32 0.0, %v4552
    %v4554 = vpop.f32.mrb[0].mxu0
    %v4555 = vpop.f32.mrb[0].mxu0
    %v4556 = vpop.f32.mrb[0].mxu0
    %4557 = vdwg.mxu0
    %4559 = vrot.lane.b32.xlu0 %v4553, 16
    %v4560 = vpop.permute.xlu0 %4559
    %4562 = vst.msk [vmem:[#allocation2 + $0x30] sm:$0xff] %vm532, %v4560
    %v4563 = vld [vmem:[%s1 + $0x7] sm:$0x1]
    %v4564 = vpack.c.bf16 %v2915, %v2915
    %4566 = vrot.lane.b32.xlu0 %v4564, 96
    %v4567 = vpop.permute.xlu0 %4566
    %v4569 = vsel %vm300, %v4564, 0
    %v4572 = vsel %vm300, %v4567, 0
    %4574 = vmatprep.subr.bf16.mxu0 0
    %4575 = vmatpush1.bf16.xpose.msra.mxu0 %v4572
    %4576 = vmatprep.subr.bf16.mxu0 0
    %4577 = vmatpush1.bf16.xpose.msra.mxu0 0
    %4578 = vmatprep.subr.bf16.mxu0 0
    %4579 = vmatpush1.bf16.xpose.msra.mxu0 0
    %4580 = vmatprep.subr.bf16.mxu0 0
    %4581 = vmatpush1.bf16.xpose.msra.mxu0 0
    %4582 = vmatprep.subr.bf16.mxu0 0
    %4583 = vmatpush1.bf16.xpose.msra.mxu0 0
    %4584 = vmatprep.subr.bf16.mxu0 0
    %4585 = vmatpush1.bf16.xpose.msra.mxu0 0
    %4586 = vmatprep.subr.bf16.mxu0 0
    %4587 = vmatpush1.bf16.xpose.msra.mxu0 0
    %4588 = vmatprep.subr.bf16.mxu0 0
    %4589 = vmatpush1.bf16.xpose.msra.mxu0 0
    %4590 = vmatprep.subr.bf16.mxu0 0
    %4591 = vmatpush1.bf16.xpose.msra.mxu0 0
    %4592 = vmatprep.subr.bf16.mxu0 0
    %4593 = vmatpush1.bf16.xpose.msra.mxu0 0
    %4594 = vmatprep.subr.bf16.mxu0 0
    %4595 = vmatpush1.bf16.xpose.msra.mxu0 0
    %4596 = vmatprep.subr.bf16.mxu0 0
    %4597 = vmatpush1.bf16.xpose.msra.mxu0 0
    %4598 = vmatprep.subr.bf16.mxu0 0
    %4599 = vmatpush1.bf16.xpose.msra.mxu0 0
    %4600 = vmatprep.subr.bf16.mxu0 0
    %4601 = vmatpush1.bf16.xpose.msra.mxu0 0
    %4602 = vmatprep.subr.bf16.mxu0 0
    %4603 = vmatpush1.bf16.xpose.msra.mxu0 0
    %4604 = vmatprep.subr.bf16.mxu0 0
    %4605 = vmatpush1.bf16.xpose.msra.mxu0 0
    %4606 = vmatprep.mubr.bf16.mxu0 0
    %4607 = vmatmul.mubr.bf16.gmra.mrb[0].mxu0 %v4569
    %v4608 = vpop.f32.mrb[0].mxu0
    %v4609 = vadd.f32 0.0, %v4608
    %v4610 = vpop.f32.mrb[0].mxu0
    %v4611 = vpop.f32.mrb[0].mxu0
    %v4612 = vpop.f32.mrb[0].mxu0
    %4613 = vdwg.mxu0
    %v4614 = vmul.f32 %v4609, 0.25
    %v4615 = vlaneseq
    %v4616 = vshrl.u32 %v4615, 7
    %v4617 = vsub.s32 0, %v4616
    %v4618 = vrot.slane %v4563, %v4617
    %v4619 = vadd.f32 %v4614, %v4618
    %v4620 = vsel %vm353, %v4619, -inf
    %4621 = vmax.xlane.f32.xlu0 %v4620
    %v4622 = vpop.xlane.xlu0 %4621
    %v4623 = vsub.f32 %v4619, %v4622
    %v4624 = vmul.f32 %v4623, 1.442695
    %v4625 = vpow.pop %v4624
    %v4626 = vsel %vm353, %v4625, 0.0
    %4627 = vadd.xlane.f32.xlu0 %v4626
    %v4628 = vpop.xlane.xlu0 %4627
    %v4629 = vrcp.pop %v4628
    %v4630 = vmul.f32 %v4625, %v4629
    %v4631 = vpack.c.bf16 %v4630, %v4630
    %4632 = vrot.lane.b32.xlu0 %v4564, 64
    %v4633 = vpop.permute.xlu0 %4632
    %v4635 = vsel %vm353, %v4631, 0
    %v4638 = vsel %vm371, %v4633, 0
    %4640 = vmatprep.subr.bf16.mxu0 0
    %4641 = vmatpush1.bf16.msra.mxu0 %v4638
    %4642 = vmatprep.subr.bf16.mxu0 0
    %4643 = vmatpush1.bf16.msra.mxu0 0
    %4644 = vmatprep.subr.bf16.mxu0 0
    %4645 = vmatpush1.bf16.msra.mxu0 0
    %4646 = vmatprep.subr.bf16.mxu0 0
    %4647 = vmatpush1.bf16.msra.mxu0 0
    %4648 = vmatprep.subr.bf16.mxu0 0
    %4649 = vmatpush1.bf16.msra.mxu0 0
    %4650 = vmatprep.subr.bf16.mxu0 0
    %4651 = vmatpush1.bf16.msra.mxu0 0
    %4652 = vmatprep.subr.bf16.mxu0 0
    %4653 = vmatpush1.bf16.msra.mxu0 0
    %4654 = vmatprep.subr.bf16.mxu0 0
    %4655 = vmatpush1.bf16.msra.mxu0 0
    %4656 = vmatprep.subr.bf16.mxu0 0
    %4657 = vmatpush1.bf16.msra.mxu0 0
    %4658 = vmatprep.subr.bf16.mxu0 0
    %4659 = vmatpush1.bf16.msra.mxu0 0
    %4660 = vmatprep.subr.bf16.mxu0 0
    %4661 = vmatpush1.bf16.msra.mxu0 0
    %4662 = vmatprep.subr.bf16.mxu0 0
    %4663 = vmatpush1.bf16.msra.mxu0 0
    %4664 = vmatprep.subr.bf16.mxu0 0
    %4665 = vmatpush1.bf16.msra.mxu0 0
    %4666 = vmatprep.subr.bf16.mxu0 0
    %4667 = vmatpush1.bf16.msra.mxu0 0
    %4668 = vmatprep.subr.bf16.mxu0 0
    %4669 = vmatpush1.bf16.msra.mxu0 0
    %4670 = vmatprep.subr.bf16.mxu0 0
    %4671 = vmatpush1.bf16.msra.mxu0 0
    %4672 = vmatprep.mubr.bf16.mxu0 0
    %4673 = vmatmul.mubr.bf16.gmra.mrb[0].mxu0 %v4635
    %v4674 = vpop.f32.mrb[0].mxu0
    %v4675 = vadd.f32 0.0, %v4674
    %v4676 = vpop.f32.mrb[0].mxu0
    %v4677 = vpop.f32.mrb[0].mxu0
    %v4678 = vpop.f32.mrb[0].mxu0
    %4679 = vdwg.mxu0
    %4680 = vst.msk [vmem:[#allocation2 + $0x38] sm:$0xff] %vm300, %v4675
    %4681 = vrot.lane.b32.xlu0 %v4564, 112
    %v4682 = vpop.permute.xlu0 %4681
    %4683 = vrot.lane.b32.xlu0 %v4564, 80
    %v4684 = vpop.permute.xlu0 %4683
    %v4686 = vsel %vm300, %v4682, 0
    %v4689 = vsel %vm300, %v4684, 0
    %4691 = vmatprep.subr.bf16.mxu0 0
    %4692 = vmatpush1.bf16.xpose.msra.mxu0 %v4689
    %4693 = vmatprep.subr.bf16.mxu0 0
    %4694 = vmatpush1.bf16.xpose.msra.mxu0 0
    %4695 = vmatprep.subr.bf16.mxu0 0
    %4696 = vmatpush1.bf16.xpose.msra.mxu0 0
    %4697 = vmatprep.subr.bf16.mxu0 0
    %4698 = vmatpush1.bf16.xpose.msra.mxu0 0
    %4699 = vmatprep.subr.bf16.mxu0 0
    %4700 = vmatpush1.bf16.xpose.msra.mxu0 0
    %4701 = vmatprep.subr.bf16.mxu0 0
    %4702 = vmatpush1.bf16.xpose.msra.mxu0 0
    %4703 = vmatprep.subr.bf16.mxu0 0
    %4704 = vmatpush1.bf16.xpose.msra.mxu0 0
    %4705 = vmatprep.subr.bf16.mxu0 0
    %4706 = vmatpush1.bf16.xpose.msra.mxu0 0
    %4707 = vmatprep.subr.bf16.mxu0 0
    %4708 = vmatpush1.bf16.xpose.msra.mxu0 0
    %4709 = vmatprep.subr.bf16.mxu0 0
    %4710 = vmatpush1.bf16.xpose.msra.mxu0 0
    %4711 = vmatprep.subr.bf16.mxu0 0
    %4712 = vmatpush1.bf16.xpose.msra.mxu0 0
    %4713 = vmatprep.subr.bf16.mxu0 0
    %4714 = vmatpush1.bf16.xpose.msra.mxu0 0
    %4715 = vmatprep.subr.bf16.mxu0 0
    %4716 = vmatpush1.bf16.xpose.msra.mxu0 0
    %4717 = vmatprep.subr.bf16.mxu0 0
    %4718 = vmatpush1.bf16.xpose.msra.mxu0 0
    %4719 = vmatprep.subr.bf16.mxu0 0
    %4720 = vmatpush1.bf16.xpose.msra.mxu0 0
    %4721 = vmatprep.subr.bf16.mxu0 0
    %4722 = vmatpush1.bf16.xpose.msra.mxu0 0
    %4723 = vmatprep.mubr.bf16.mxu0 0
    %4724 = vmatmul.mubr.bf16.gmra.mrb[0].mxu0 %v4686
    %v4725 = vpop.f32.mrb[0].mxu0
    %v4726 = vadd.f32 0.0, %v4725
    %v4727 = vpop.f32.mrb[0].mxu0
    %v4728 = vpop.f32.mrb[0].mxu0
    %v4729 = vpop.f32.mrb[0].mxu0
    %4730 = vdwg.mxu0
    %v4731 = vmul.f32 %v4726, 0.25
    %v4732 = vadd.f32 %v4731, %v4618
    %v4733 = vsel %vm353, %v4732, -inf
    %4734 = vmax.xlane.f32.xlu0 %v4733
    %v4735 = vpop.xlane.xlu0 %4734
    %v4736 = vsub.f32 %v4732, %v4735
    %v4737 = vmul.f32 %v4736, 1.442695
    %v4738 = vpow.pop %v4737
    %v4739 = vsel %vm353, %v4738, 0.0
    %4740 = vadd.xlane.f32.xlu0 %v4739
    %v4741 = vpop.xlane.xlu0 %4740
    %v4742 = vrcp.pop %v4741
    %v4743 = vmul.f32 %v4738, %v4742
    %v4744 = vpack.c.bf16 %v4743, %v4743
    %4745 = vrot.lane.b32.xlu0 %v4564, 48
    %v4746 = vpop.permute.xlu0 %4745
    %v4748 = vsel %vm353, %v4744, 0
    %v4751 = vsel %vm371, %v4746, 0
    %4753 = vmatprep.subr.bf16.mxu0 0
    %4754 = vmatpush1.bf16.msra.mxu0 %v4751
    %4755 = vmatprep.subr.bf16.mxu0 0
    %4756 = vmatpush1.bf16.msra.mxu0 0
    %4757 = vmatprep.subr.bf16.mxu0 0
    %4758 = vmatpush1.bf16.msra.mxu0 0
    %4759 = vmatprep.subr.bf16.mxu0 0
    %4760 = vmatpush1.bf16.msra.mxu0 0
    %4761 = vmatprep.subr.bf16.mxu0 0
    %4762 = vmatpush1.bf16.msra.mxu0 0
    %4763 = vmatprep.subr.bf16.mxu0 0
    %4764 = vmatpush1.bf16.msra.mxu0 0
    %4765 = vmatprep.subr.bf16.mxu0 0
    %4766 = vmatpush1.bf16.msra.mxu0 0
    %4767 = vmatprep.subr.bf16.mxu0 0
    %4768 = vmatpush1.bf16.msra.mxu0 0
    %4769 = vmatprep.subr.bf16.mxu0 0
    %4770 = vmatpush1.bf16.msra.mxu0 0
    %4771 = vmatprep.subr.bf16.mxu0 0
    %4772 = vmatpush1.bf16.msra.mxu0 0
    %4773 = vmatprep.subr.bf16.mxu0 0
    %4774 = vmatpush1.bf16.msra.mxu0 0
    %4775 = vmatprep.subr.bf16.mxu0 0
    %4776 = vmatpush1.bf16.msra.mxu0 0
    %4777 = vmatprep.subr.bf16.mxu0 0
    %4778 = vmatpush1.bf16.msra.mxu0 0
    %4779 = vmatprep.subr.bf16.mxu0 0
    %4780 = vmatpush1.bf16.msra.mxu0 0
    %4781 = vmatprep.subr.bf16.mxu0 0
    %4782 = vmatpush1.bf16.msra.mxu0 0
    %4783 = vmatprep.subr.bf16.mxu0 0
    %4784 = vmatpush1.bf16.msra.mxu0 0
    %4785 = vmatprep.mubr.bf16.mxu0 0
    %4786 = vmatmul.mubr.bf16.gmra.mrb[0].mxu0 %v4748
    %v4787 = vpop.f32.mrb[0].mxu0
    %v4788 = vadd.f32 0.0, %v4787
    %v4789 = vpop.f32.mrb[0].mxu0
    %v4790 = vpop.f32.mrb[0].mxu0
    %v4791 = vpop.f32.mrb[0].mxu0
    %4792 = vdwg.mxu0
    %4794 = vrot.lane.b32.xlu0 %v4788, 16
    %v4795 = vpop.permute.xlu0 %4794
    %4797 = vst.msk [vmem:[#allocation2 + $0x38] sm:$0xff] %vm532, %v4795
    %v4798 = vld [vmem:[#allocation2] sm:$0xff]
    %v4799 = vld [vmem:[#allocation2 + $0x8] sm:$0xff]
    %v4800 = vld [vmem:[#allocation2 + $0x10] sm:$0xff]
    %v4801 = vld [vmem:[#allocation2 + $0x18] sm:$0xff]
    %v4802 = vld [vmem:[#allocation2 + $0x20] sm:$0xff]
    %v4803 = vld [vmem:[#allocation2 + $0x28] sm:$0xff]
    %v4804 = vld [vmem:[#allocation2 + $0x30] sm:$0xff]
    %v4805 = vld [vmem:[#allocation2 + $0x38] sm:$0xff]
    %s4806 = scalar_lea.vmem %s6, 32
    %v4807 = vld [vmem:[%s4806] sm:$0xff]
    %v4808 = vld [vmem:[%s4806 + $0x8] sm:$0xff]
    %v4809 = vld [vmem:[%s4806 + $0x10] sm:$0xff]
    %v4810 = vld [vmem:[%s4806 + $0x18] sm:$0xff]
    %v4811 = vpack.c.bf16 %v4799, %v4798
    %v4812 = vpack.c.bf16 %v4801, %v4800
    %v4813 = vpack.c.bf16 %v4803, %v4802
    %v4814 = vpack.c.bf16 %v4805, %v4804
    %v4815 = vpack.c.bf16 %v4808, %v4807
    %v4816 = vpack.c.bf16 %v4810, %v4809
    %s4817 = scalar_lea.vmem %s7, 1
    %v4818 = vld [vmem:[%s4817] sm:$0x1]
    %v4820 = vlaneseq
    %v4821 = vshrl.u32 %v4820, 7
    %v4822 = vsub.s32 0, %v4821
    %v4823 = vrot.slane %v4818, %v4822
    %v4826 = vsel %vm71, %v4811, 0
    %v4829 = vsel %vm71, %v4812, 0
    %v4832 = vsel %vm71, %v4813, 0
    %v4835 = vsel %vm71, %v4814, 0
    %4837 = vmatprep.subr.bf16.mxu0 0
    %4838 = vmatpush1.bf16.msra.mxu0 %v4815
    %4839 = vmatprep.subr.bf16.mxu0 0
    %4840 = vmatpush1.bf16.msra.mxu0 %v4816
    %4841 = vmatprep.subr.bf16.mxu0 0
    %4842 = vmatpush1.bf16.msra.mxu0 0
    %4843 = vmatprep.subr.bf16.mxu0 0
    %4844 = vmatpush1.bf16.msra.mxu0 0
    %4845 = vmatprep.subr.bf16.mxu0 0
    %4846 = vmatpush1.bf16.msra.mxu0 0
    %4847 = vmatprep.subr.bf16.mxu0 0
    %4848 = vmatpush1.bf16.msra.mxu0 0
    %4849 = vmatprep.subr.bf16.mxu0 0
    %4850 = vmatpush1.bf16.msra.mxu0 0
    %4851 = vmatprep.subr.bf16.mxu0 0
    %4852 = vmatpush1.bf16.msra.mxu0 0
    %4853 = vmatprep.subr.bf16.mxu0 0
    %4854 = vmatpush1.bf16.msra.mxu0 0
    %4855 = vmatprep.subr.bf16.mxu0 0
    %4856 = vmatpush1.bf16.msra.mxu0 0
    %4857 = vmatprep.subr.bf16.mxu0 0
    %4858 = vmatpush1.bf16.msra.mxu0 0
    %4859 = vmatprep.subr.bf16.mxu0 0
    %4860 = vmatpush1.bf16.msra.mxu0 0
    %4861 = vmatprep.subr.bf16.mxu0 0
    %4862 = vmatpush1.bf16.msra.mxu0 0
    %4863 = vmatprep.subr.bf16.mxu0 0
    %4864 = vmatpush1.bf16.msra.mxu0 0
    %4865 = vmatprep.subr.bf16.mxu0 0
    %4866 = vmatpush1.bf16.msra.mxu0 0
    %4867 = vmatprep.subr.bf16.mxu0 0
    %4868 = vmatpush1.bf16.msra.mxu0 0
    %4869 = vmatprep.mubr.bf16.mxu0 0
    %4870 = vmatmul.mubr.bf16.gmra.mrb[0].mxu0 %v4826
    %v4871 = vpop.f32.mrb[0].mxu0
    %v4872 = vadd.f32 %v4823, %v4871
    %v4873 = vpop.f32.mrb[0].mxu0
    %v4874 = vpop.f32.mrb[0].mxu0
    %v4875 = vadd.f32 %v4823, %v4874
    %v4876 = vpop.f32.mrb[0].mxu0
    %4877 = vmatprep.mubr.bf16.mxu0 0
    %4878 = vmatmul.mubr.bf16.gmra.mrb[0].mxu0 %v4829
    %v4879 = vpop.f32.mrb[0].mxu0
    %v4880 = vadd.f32 %v4823, %v4879
    %v4881 = vpop.f32.mrb[0].mxu0
    %v4882 = vpop.f32.mrb[0].mxu0
    %v4883 = vadd.f32 %v4823, %v4882
    %v4884 = vpop.f32.mrb[0].mxu0
    %4885 = vmatprep.mubr.bf16.mxu0 0
    %4886 = vmatmul.mubr.bf16.gmra.mrb[0].mxu0 %v4832
    %v4887 = vpop.f32.mrb[0].mxu0
    %v4888 = vadd.f32 %v4823, %v4887
    %v4889 = vpop.f32.mrb[0].mxu0
    %v4890 = vpop.f32.mrb[0].mxu0
    %v4891 = vadd.f32 %v4823, %v4890
    %v4892 = vpop.f32.mrb[0].mxu0
    %4893 = vmatprep.mubr.bf16.mxu0 0
    %4894 = vmatmul.mubr.bf16.gmra.mrb[0].mxu0 %v4835
    %v4895 = vpop.f32.mrb[0].mxu0
    %v4896 = vadd.f32 %v4823, %v4895
    %v4897 = vpop.f32.mrb[0].mxu0
    %v4898 = vpop.f32.mrb[0].mxu0
    %v4899 = vadd.f32 %v4823, %v4898
    %v4900 = vpop.f32.mrb[0].mxu0
    %4901 = vdwg.mxu0
    %s4902 = scalar_lea.vmem %s8, 2
    %v4903 = vld [vmem:[%s4902] sm:$0x3]
    %v4904 = vadd.f32 %v4872, %v2814
    %v4905 = vadd.f32 %v4875, %v2815
    %v4906 = vadd.f32 %v4880, %v2816
    %v4907 = vadd.f32 %v4883, %v2817
    %v4908 = vadd.f32 %v4888, %v2818
    %v4909 = vadd.f32 %v4891, %v2819
    %v4910 = vadd.f32 %v4896, %v2820
    %v4911 = vadd.f32 %v4899, %v2821
    %v4912 = vsel %vm71, %v4904, 0.0
    %4913 = vadd.xlane.f32.xlu0 %v4912
    %v4914 = vpop.xlane.xlu0 %4913
    %v4915 = vsel %vm71, %v4905, 0.0
    %4916 = vadd.xlane.f32.xlu0 %v4915
    %v4917 = vpop.xlane.xlu0 %4916
    %v4918 = vsel %vm71, %v4906, 0.0
    %4919 = vadd.xlane.f32.xlu0 %v4918
    %v4920 = vpop.xlane.xlu0 %4919
    %v4921 = vsel %vm71, %v4907, 0.0
    %4922 = vadd.xlane.f32.xlu0 %v4921
    %v4923 = vpop.xlane.xlu0 %4922
    %v4924 = vsel %vm71, %v4908, 0.0
    %4925 = vadd.xlane.f32.xlu0 %v4924
    %v4926 = vpop.xlane.xlu0 %4925
    %v4927 = vsel %vm71, %v4909, 0.0
    %4928 = vadd.xlane.f32.xlu0 %v4927
    %v4929 = vpop.xlane.xlu0 %4928
    %v4930 = vsel %vm71, %v4910, 0.0
    %4931 = vadd.xlane.f32.xlu0 %v4930
    %v4932 = vpop.xlane.xlu0 %4931
    %v4933 = vsel %vm71, %v4911, 0.0
    %4934 = vadd.xlane.f32.xlu0 %v4933
    %v4935 = vpop.xlane.xlu0 %4934
    %v4936 = vmul.f32 %v4914, %v96
    %v4937 = vmul.f32 %v4917, %v96
    %v4938 = vmul.f32 %v4920, %v96
    %v4939 = vmul.f32 %v4923, %v96
    %v4940 = vmul.f32 %v4926, %v96
    %v4941 = vmul.f32 %v4929, %v96
    %v4942 = vmul.f32 %v4932, %v96
    %v4943 = vmul.f32 %v4935, %v96
    %v4944 = vsub.f32 %v4904, %v4936
    %v4945 = vsub.f32 %v4905, %v4937
    %v4946 = vsub.f32 %v4906, %v4938
    %v4947 = vsub.f32 %v4907, %v4939
    %v4948 = vsub.f32 %v4908, %v4940
    %v4949 = vsub.f32 %v4909, %v4941
    %v4950 = vsub.f32 %v4910, %v4942
    %v4951 = vsub.f32 %v4911, %v4943
    %v4952 = vmul.f32 %v4944, %v4944
    %v4953 = vmul.f32 %v4945, %v4945
    %v4954 = vmul.f32 %v4946, %v4946
    %v4955 = vmul.f32 %v4947, %v4947
    %v4956 = vmul.f32 %v4948, %v4948
    %v4957 = vmul.f32 %v4949, %v4949
    %v4958 = vmul.f32 %v4950, %v4950
    %v4959 = vmul.f32 %v4951, %v4951
    %v4960 = vsel %vm71, %v4952, 0.0
    %4961 = vadd.xlane.f32.xlu0 %v4960
    %v4962 = vpop.xlane.xlu0 %4961
    %v4963 = vsel %vm71, %v4953, 0.0
    %4964 = vadd.xlane.f32.xlu0 %v4963
    %v4965 = vpop.xlane.xlu0 %4964
    %v4966 = vsel %vm71, %v4954, 0.0
    %4967 = vadd.xlane.f32.xlu0 %v4966
    %v4968 = vpop.xlane.xlu0 %4967
    %v4969 = vsel %vm71, %v4955, 0.0
    %4970 = vadd.xlane.f32.xlu0 %v4969
    %v4971 = vpop.xlane.xlu0 %4970
    %v4972 = vsel %vm71, %v4956, 0.0
    %4973 = vadd.xlane.f32.xlu0 %v4972
    %v4974 = vpop.xlane.xlu0 %4973
    %v4975 = vsel %vm71, %v4957, 0.0
    %4976 = vadd.xlane.f32.xlu0 %v4975
    %v4977 = vpop.xlane.xlu0 %4976
    %v4978 = vsel %vm71, %v4958, 0.0
    %4979 = vadd.xlane.f32.xlu0 %v4978
    %v4980 = vpop.xlane.xlu0 %4979
    %v4981 = vsel %vm71, %v4959, 0.0
    %4982 = vadd.xlane.f32.xlu0 %v4981
    %v4983 = vpop.xlane.xlu0 %4982
    %v4984 = vmul.f32 %v4962, %v96
    %v4985 = vmul.f32 %v4965, %v96
    %v4986 = vmul.f32 %v4968, %v96
    %v4987 = vmul.f32 %v4971, %v96
    %v4988 = vmul.f32 %v4974, %v96
    %v4989 = vmul.f32 %v4977, %v96
    %v4990 = vmul.f32 %v4980, %v96
    %v4991 = vmul.f32 %v4983, %v96
    %v4992 = vadd.f32 %v4984, 1e-12
    %v4993 = vadd.f32 %v4985, 1e-12
    %v4994 = vadd.f32 %v4986, 1e-12
    %v4995 = vadd.f32 %v4987, 1e-12
    %v4996 = vadd.f32 %v4988, 1e-12
    %v4997 = vadd.f32 %v4989, 1e-12
    %v4998 = vadd.f32 %v4990, 1e-12
    %v4999 = vadd.f32 %v4991, 1e-12
    %v5000 = vrsqrt.pop %v4992
    %v5001 = vrsqrt.pop %v4993
    %v5002 = vrsqrt.pop %v4994
    %v5003 = vrsqrt.pop %v4995
    %v5004 = vrsqrt.pop %v4996
    %v5005 = vrsqrt.pop %v4997
    %v5006 = vrsqrt.pop %v4998
    %v5007 = vrsqrt.pop %v4999
    %v5008 = vmul.f32 %v4944, %v5000
    %v5009 = vmul.f32 %v4945, %v5001
    %v5010 = vmul.f32 %v4946, %v5002
    %v5011 = vmul.f32 %v4947, %v5003
    %v5012 = vmul.f32 %v4948, %v5004
    %v5013 = vmul.f32 %v4949, %v5005
    %v5014 = vmul.f32 %v4950, %v5006
    %v5015 = vmul.f32 %v4951, %v5007
    %v5016 = vlaneseq
    %v5017 = vshrl.u32 %v5016, 7
    %v5018 = vsub.s32 0, %v5017
    %v5019 = vrot.slane %v4903, %v5018
    %v5020 = vmul.f32 %v5008, %v5019
    %v5021 = vmul.f32 %v5009, %v5019
    %v5022 = vmul.f32 %v5010, %v5019
    %v5023 = vmul.f32 %v5011, %v5019
    %v5024 = vmul.f32 %v5012, %v5019
    %v5025 = vmul.f32 %v5013, %v5019
    %v5026 = vmul.f32 %v5014, %v5019
    %v5027 = vmul.f32 %v5015, %v5019
    %v5028 = vlaneseq
    %v5029 = vshrl.u32 %v5028, 7
    %v5030 = vsub.s32 1, %v5029
    %v5031 = vrot.slane %v4903, %v5030
    %v5032 = vadd.f32 %v5020, %v5031
    %v5033 = vadd.f32 %v5021, %v5031
    %v5034 = vadd.f32 %v5022, %v5031
    %v5035 = vadd.f32 %v5023, %v5031
    %v5036 = vadd.f32 %v5024, %v5031
    %v5037 = vadd.f32 %v5025, %v5031
    %v5038 = vadd.f32 %v5026, %v5031
    %v5039 = vadd.f32 %v5027, %v5031
    %s5040 = scalar_lea.vmem %s9, 32
    %v5041 = vld [vmem:[%s5040] sm:$0xff]
    %v5042 = vld [vmem:[%s5040 + $0x8] sm:$0xff]
    %v5043 = vld [vmem:[%s5040 + $0x10] sm:$0xff]
    %v5044 = vld [vmem:[%s5040 + $0x18] sm:$0xff]
    %v5045 = vpack.c.bf16 %v5033, %v5032
    %v5046 = vpack.c.bf16 %v5035, %v5034
    %v5047 = vpack.c.bf16 %v5037, %v5036
    %v5048 = vpack.c.bf16 %v5039, %v5038
    %v5049 = vpack.c.bf16 %v5042, %v5041
    %v5050 = vpack.c.bf16 %v5044, %v5043
    %s5051 = scalar_lea.vmem %s10, 1
    %v5052 = vld [vmem:[%s5051] sm:$0x1]
    %v5054 = vlaneseq
    %v5055 = vshrl.u32 %v5054, 7
    %v5056 = vsub.s32 0, %v5055
    %v5057 = vrot.slane %v5052, %v5056
    %v5060 = vsel %vm71, %v5045, 0
    %v5063 = vsel %vm71, %v5046, 0
    %v5066 = vsel %vm71, %v5047, 0
    %v5069 = vsel %vm71, %v5048, 0
    %5071 = vmatprep.subr.bf16.mxu0 0
    %5072 = vmatpush1.bf16.msra.mxu0 %v5049
    %5073 = vmatprep.subr.bf16.mxu0 0
    %5074 = vmatpush1.bf16.msra.mxu0 %v5050
    %5075 = vmatprep.subr.bf16.mxu0 0
    %5076 = vmatpush1.bf16.msra.mxu0 0
    %5077 = vmatprep.subr.bf16.mxu0 0
    %5078 = vmatpush1.bf16.msra.mxu0 0
    %5079 = vmatprep.subr.bf16.mxu0 0
    %5080 = vmatpush1.bf16.msra.mxu0 0
    %5081 = vmatprep.subr.bf16.mxu0 0
    %5082 = vmatpush1.bf16.msra.mxu0 0
    %5083 = vmatprep.subr.bf16.mxu0 0
    %5084 = vmatpush1.bf16.msra.mxu0 0
    %5085 = vmatprep.subr.bf16.mxu0 0
    %5086 = vmatpush1.bf16.msra.mxu0 0
    %5087 = vmatprep.subr.bf16.mxu0 0
    %5088 = vmatpush1.bf16.msra.mxu0 0
    %5089 = vmatprep.subr.bf16.mxu0 0
    %5090 = vmatpush1.bf16.msra.mxu0 0
    %5091 = vmatprep.subr.bf16.mxu0 0
    %5092 = vmatpush1.bf16.msra.mxu0 0
    %5093 = vmatprep.subr.bf16.mxu0 0
    %5094 = vmatpush1.bf16.msra.mxu0 0
    %5095 = vmatprep.subr.bf16.mxu0 0
    %5096 = vmatpush1.bf16.msra.mxu0 0
    %5097 = vmatprep.subr.bf16.mxu0 0
    %5098 = vmatpush1.bf16.msra.mxu0 0
    %5099 = vmatprep.subr.bf16.mxu0 0
    %5100 = vmatpush1.bf16.msra.mxu0 0
    %5101 = vmatprep.subr.bf16.mxu0 0
    %5102 = vmatpush1.bf16.msra.mxu0 0
    %5103 = vmatprep.mubr.bf16.mxu0 0
    %5104 = vmatmul.mubr.bf16.gmra.mrb[0].mxu0 %v5060
    %v5105 = vpop.f32.mrb[0].mxu0
    %v5106 = vadd.f32 %v5057, %v5105
    %v5107 = vpop.f32.mrb[0].mxu0
    %v5108 = vpop.f32.mrb[0].mxu0
    %v5109 = vadd.f32 %v5057, %v5108
    %v5110 = vpop.f32.mrb[0].mxu0
    %5111 = vmatprep.mubr.bf16.mxu0 0
    %5112 = vmatmul.mubr.bf16.gmra.mrb[0].mxu0 %v5063
    %v5113 = vpop.f32.mrb[0].mxu0
    %v5114 = vadd.f32 %v5057, %v5113
    %v5115 = vpop.f32.mrb[0].mxu0
    %v5116 = vpop.f32.mrb[0].mxu0
    %v5117 = vadd.f32 %v5057, %v5116
    %v5118 = vpop.f32.mrb[0].mxu0
    %5119 = vmatprep.mubr.bf16.mxu0 0
    %5120 = vmatmul.mubr.bf16.gmra.mrb[0].mxu0 %v5066
    %v5121 = vpop.f32.mrb[0].mxu0
    %v5122 = vadd.f32 %v5057, %v5121
    %v5123 = vpop.f32.mrb[0].mxu0
    %v5124 = vpop.f32.mrb[0].mxu0
    %v5125 = vadd.f32 %v5057, %v5124
    %v5126 = vpop.f32.mrb[0].mxu0
    %5127 = vmatprep.mubr.bf16.mxu0 0
    %5128 = vmatmul.mubr.bf16.gmra.mrb[0].mxu0 %v5069
    %v5129 = vpop.f32.mrb[0].mxu0
    %v5130 = vadd.f32 %v5057, %v5129
    %v5131 = vpop.f32.mrb[0].mxu0
    %v5132 = vpop.f32.mrb[0].mxu0
    %v5133 = vadd.f32 %v5057, %v5132
    %v5134 = vpop.f32.mrb[0].mxu0
    %5135 = vdwg.mxu0
    %v5136 = vmul.f32 %v5106, %v5106
    %v5137 = vmul.f32 %v5109, %v5109
    %v5138 = vmul.f32 %v5114, %v5114
    %v5139 = vmul.f32 %v5117, %v5117
    %v5140 = vmul.f32 %v5122, %v5122
    %v5141 = vmul.f32 %v5125, %v5125
    %v5142 = vmul.f32 %v5130, %v5130
    %v5143 = vmul.f32 %v5133, %v5133
    %v5144 = vmul.f32 %v5106, %v5136
    %v5145 = vmul.f32 %v5109, %v5137
    %v5146 = vmul.f32 %v5114, %v5138
    %v5147 = vmul.f32 %v5117, %v5139
    %v5148 = vmul.f32 %v5122, %v5140
    %v5149 = vmul.f32 %v5125, %v5141
    %v5150 = vmul.f32 %v5130, %v5142
    %v5151 = vmul.f32 %v5133, %v5143
    %v5152 = vmul.f32 %v5144, 0.044715
    %v5153 = vmul.f32 %v5145, 0.044715
    %v5154 = vmul.f32 %v5146, 0.044715
    %v5155 = vmul.f32 %v5147, 0.044715
    %v5156 = vmul.f32 %v5148, 0.044715
    %v5157 = vmul.f32 %v5149, 0.044715
    %v5158 = vmul.f32 %v5150, 0.044715
    %v5159 = vmul.f32 %v5151, 0.044715
    %v5160 = vadd.f32 %v5106, %v5152
    %v5161 = vadd.f32 %v5109, %v5153
    %v5162 = vadd.f32 %v5114, %v5154
    %v5163 = vadd.f32 %v5117, %v5155
    %v5164 = vadd.f32 %v5122, %v5156
    %v5165 = vadd.f32 %v5125, %v5157
    %v5166 = vadd.f32 %v5130, %v5158
    %v5167 = vadd.f32 %v5133, %v5159
    %v5168 = vmul.f32 %v5160, 0.7978846
    %v5169 = vmul.f32 %v5161, 0.7978846
    %v5170 = vmul.f32 %v5162, 0.7978846
    %v5171 = vmul.f32 %v5163, 0.7978846
    %v5172 = vmul.f32 %v5164, 0.7978846
    %v5173 = vmul.f32 %v5165, 0.7978846
    %v5174 = vmul.f32 %v5166, 0.7978846
    %v5175 = vmul.f32 %v5167, 0.7978846
    %v5176 = vtanh.pop %v5168
    %v5177 = vtanh.pop %v5169
    %v5178 = vtanh.pop %v5170
    %v5179 = vtanh.pop %v5171
    %v5180 = vtanh.pop %v5172
    %v5181 = vtanh.pop %v5173
    %v5182 = vtanh.pop %v5174
    %v5183 = vtanh.pop %v5175
    %v5184 = vadd.f32 %v5176, 1.0
    %v5185 = vadd.f32 %v5177, 1.0
    %v5186 = vadd.f32 %v5178, 1.0
    %v5187 = vadd.f32 %v5179, 1.0
    %v5188 = vadd.f32 %v5180, 1.0
    %v5189 = vadd.f32 %v5181, 1.0
    %v5190 = vadd.f32 %v5182, 1.0
    %v5191 = vadd.f32 %v5183, 1.0
    %v5192 = vmul.f32 %v5184, 0.5
    %v5193 = vmul.f32 %v5185, 0.5
    %v5194 = vmul.f32 %v5186, 0.5
    %v5195 = vmul.f32 %v5187, 0.5
    %v5196 = vmul.f32 %v5188, 0.5
    %v5197 = vmul.f32 %v5189, 0.5
    %v5198 = vmul.f32 %v5190, 0.5
    %v5199 = vmul.f32 %v5191, 0.5
    %v5200 = vmul.f32 %v5106, %v5192
    %v5201 = vmul.f32 %v5109, %v5193
    %v5202 = vmul.f32 %v5114, %v5194
    %v5203 = vmul.f32 %v5117, %v5195
    %v5204 = vmul.f32 %v5122, %v5196
    %v5205 = vmul.f32 %v5125, %v5197
    %v5206 = vmul.f32 %v5130, %v5198
    %v5207 = vmul.f32 %v5133, %v5199
    %s5208 = scalar_lea.vmem %s11, 64
    %v5209 = vld [vmem:[%s5208] sm:$0xff]
    %v5210 = vld [vmem:[%s5208 + $0x8] sm:$0xff]
    %v5211 = vld [vmem:[%s5208 + $0x10] sm:$0xff]
    %v5212 = vld [vmem:[%s5208 + $0x18] sm:$0xff]
    %v5213 = vld [vmem:[%s5208 + $0x20] sm:$0xff]
    %v5214 = vld [vmem:[%s5208 + $0x28] sm:$0xff]
    %v5215 = vld [vmem:[%s5208 + $0x30] sm:$0xff]
    %v5216 = vld [vmem:[%s5208 + $0x38] sm:$0xff]
    %v5217 = vpack.c.bf16 %v5201, %v5200
    %v5218 = vpack.c.bf16 %v5203, %v5202
    %v5219 = vpack.c.bf16 %v5205, %v5204
    %v5220 = vpack.c.bf16 %v5207, %v5206
    %v5221 = vpack.c.bf16 %v5210, %v5209
    %v5222 = vpack.c.bf16 %v5212, %v5211
    %v5223 = vpack.c.bf16 %v5214, %v5213
    %v5224 = vpack.c.bf16 %v5216, %v5215
    %s5225 = scalar_lea.vmem %s12, 1
    %v5226 = vld [vmem:[%s5225] sm:$0x1]
    %v5228 = vlaneseq
    %v5229 = vshrl.u32 %v5228, 7
    %v5230 = vsub.s32 0, %v5229
    %v5231 = vrot.slane %v5226, %v5230
    %v5234 = vsel %vm2607, %v5217, 0
    %v5237 = vsel %vm2607, %v5218, 0
    %v5240 = vsel %vm2607, %v5219, 0
    %v5243 = vsel %vm2607, %v5220, 0
    %5245 = vmatprep.subr.bf16.mxu0 0
    %5246 = vmatpush1.bf16.msra.mxu0 %v5221
    %5247 = vmatprep.subr.bf16.mxu0 0
    %5248 = vmatpush1.bf16.msra.mxu0 %v5222
    %5249 = vmatprep.subr.bf16.mxu0 0
    %5250 = vmatpush1.bf16.msra.mxu0 %v5223
    %5251 = vmatprep.subr.bf16.mxu0 0
    %5252 = vmatpush1.bf16.msra.mxu0 %v5224
    %5253 = vmatprep.subr.bf16.mxu0 0
    %5254 = vmatpush1.bf16.msra.mxu0 0
    %5255 = vmatprep.subr.bf16.mxu0 0
    %5256 = vmatpush1.bf16.msra.mxu0 0
    %5257 = vmatprep.subr.bf16.mxu0 0
    %5258 = vmatpush1.bf16.msra.mxu0 0
    %5259 = vmatprep.subr.bf16.mxu0 0
    %5260 = vmatpush1.bf16.msra.mxu0 0
    %5261 = vmatprep.subr.bf16.mxu0 0
    %5262 = vmatpush1.bf16.msra.mxu0 0
    %5263 = vmatprep.subr.bf16.mxu0 0
    %5264 = vmatpush1.bf16.msra.mxu0 0
    %5265 = vmatprep.subr.bf16.mxu0 0
    %5266 = vmatpush1.bf16.msra.mxu0 0
    %5267 = vmatprep.subr.bf16.mxu0 0
    %5268 = vmatpush1.bf16.msra.mxu0 0
    %5269 = vmatprep.subr.bf16.mxu0 0
    %5270 = vmatpush1.bf16.msra.mxu0 0
    %5271 = vmatprep.subr.bf16.mxu0 0
    %5272 = vmatpush1.bf16.msra.mxu0 0
    %5273 = vmatprep.subr.bf16.mxu0 0
    %5274 = vmatpush1.bf16.msra.mxu0 0
    %5275 = vmatprep.subr.bf16.mxu0 0
    %5276 = vmatpush1.bf16.msra.mxu0 0
    %5277 = vmatprep.mubr.bf16.mxu0 0
    %5278 = vmatmul.mubr.bf16.gmra.mrb[0].mxu0 %v5234
    %v5279 = vpop.f32.mrb[0].mxu0
    %v5280 = vadd.f32 %v5231, %v5279
    %v5281 = vpop.f32.mrb[0].mxu0
    %v5282 = vpop.f32.mrb[0].mxu0
    %v5283 = vadd.f32 %v5231, %v5282
    %v5284 = vpop.f32.mrb[0].mxu0
    %5285 = vmatprep.mubr.bf16.mxu0 0
    %5286 = vmatmul.mubr.bf16.gmra.mrb[0].mxu0 %v5237
    %v5287 = vpop.f32.mrb[0].mxu0
    %v5288 = vadd.f32 %v5231, %v5287
    %v5289 = vpop.f32.mrb[0].mxu0
    %v5290 = vpop.f32.mrb[0].mxu0
    %v5291 = vadd.f32 %v5231, %v5290
    %v5292 = vpop.f32.mrb[0].mxu0
    %5293 = vmatprep.mubr.bf16.mxu0 0
    %5294 = vmatmul.mubr.bf16.gmra.mrb[0].mxu0 %v5240
    %v5295 = vpop.f32.mrb[0].mxu0
    %v5296 = vadd.f32 %v5231, %v5295
    %v5297 = vpop.f32.mrb[0].mxu0
    %v5298 = vpop.f32.mrb[0].mxu0
    %v5299 = vadd.f32 %v5231, %v5298
    %v5300 = vpop.f32.mrb[0].mxu0
    %5301 = vmatprep.mubr.bf16.mxu0 0
    %5302 = vmatmul.mubr.bf16.gmra.mrb[0].mxu0 %v5243
    %v5303 = vpop.f32.mrb[0].mxu0
    %v5304 = vadd.f32 %v5231, %v5303
    %v5305 = vpop.f32.mrb[0].mxu0
    %v5306 = vpop.f32.mrb[0].mxu0
    %v5307 = vadd.f32 %v5231, %v5306
    %v5308 = vpop.f32.mrb[0].mxu0
    %5309 = vdwg.mxu0
    %s5310 = scalar_lea.vmem %s13, 2
    %v5311 = vld [vmem:[%s5310] sm:$0x3]
    %v5312 = vadd.f32 %v5280, %v5032
    %v5313 = vadd.f32 %v5283, %v5033
    %v5314 = vadd.f32 %v5288, %v5034
    %v5315 = vadd.f32 %v5291, %v5035
    %v5316 = vadd.f32 %v5296, %v5036
    %v5317 = vadd.f32 %v5299, %v5037
    %v5318 = vadd.f32 %v5304, %v5038
    %v5319 = vadd.f32 %v5307, %v5039
    %v5320 = vsel %vm71, %v5312, 0.0
    %5321 = vadd.xlane.f32.xlu0 %v5320
    %v5322 = vpop.xlane.xlu0 %5321
    %v5323 = vsel %vm71, %v5313, 0.0
    %5324 = vadd.xlane.f32.xlu0 %v5323
    %v5325 = vpop.xlane.xlu0 %5324
    %v5326 = vsel %vm71, %v5314, 0.0
    %5327 = vadd.xlane.f32.xlu0 %v5326
    %v5328 = vpop.xlane.xlu0 %5327
    %v5329 = vsel %vm71, %v5315, 0.0
    %5330 = vadd.xlane.f32.xlu0 %v5329
    %v5331 = vpop.xlane.xlu0 %5330
    %v5332 = vsel %vm71, %v5316, 0.0
    %5333 = vadd.xlane.f32.xlu0 %v5332
    %v5334 = vpop.xlane.xlu0 %5333
    %v5335 = vsel %vm71, %v5317, 0.0
    %5336 = vadd.xlane.f32.xlu0 %v5335
    %v5337 = vpop.xlane.xlu0 %5336
    %v5338 = vsel %vm71, %v5318, 0.0
    %5339 = vadd.xlane.f32.xlu0 %v5338
    %v5340 = vpop.xlane.xlu0 %5339
    %v5341 = vsel %vm71, %v5319, 0.0
    %5342 = vadd.xlane.f32.xlu0 %v5341
    %v5343 = vpop.xlane.xlu0 %5342
    %v5344 = vmul.f32 %v5322, %v96
    %v5345 = vmul.f32 %v5325, %v96
    %v5346 = vmul.f32 %v5328, %v96
    %v5347 = vmul.f32 %v5331, %v96
    %v5348 = vmul.f32 %v5334, %v96
    %v5349 = vmul.f32 %v5337, %v96
    %v5350 = vmul.f32 %v5340, %v96
    %v5351 = vmul.f32 %v5343, %v96
    %v5352 = vsub.f32 %v5312, %v5344
    %v5353 = vsub.f32 %v5313, %v5345
    %v5354 = vsub.f32 %v5314, %v5346
    %v5355 = vsub.f32 %v5315, %v5347
    %v5356 = vsub.f32 %v5316, %v5348
    %v5357 = vsub.f32 %v5317, %v5349
    %v5358 = vsub.f32 %v5318, %v5350
    %v5359 = vsub.f32 %v5319, %v5351
    %v5360 = vmul.f32 %v5352, %v5352
    %v5361 = vmul.f32 %v5353, %v5353
    %v5362 = vmul.f32 %v5354, %v5354
    %v5363 = vmul.f32 %v5355, %v5355
    %v5364 = vmul.f32 %v5356, %v5356
    %v5365 = vmul.f32 %v5357, %v5357
    %v5366 = vmul.f32 %v5358, %v5358
    %v5367 = vmul.f32 %v5359, %v5359
    %v5368 = vsel %vm71, %v5360, 0.0
    %5369 = vadd.xlane.f32.xlu0 %v5368
    %v5370 = vpop.xlane.xlu0 %5369
    %v5371 = vsel %vm71, %v5361, 0.0
    %5372 = vadd.xlane.f32.xlu0 %v5371
    %v5373 = vpop.xlane.xlu0 %5372
    %v5374 = vsel %vm71, %v5362, 0.0
    %5375 = vadd.xlane.f32.xlu0 %v5374
    %v5376 = vpop.xlane.xlu0 %5375
    %v5377 = vsel %vm71, %v5363, 0.0
    %5378 = vadd.xlane.f32.xlu0 %v5377
    %v5379 = vpop.xlane.xlu0 %5378
    %v5380 = vsel %vm71, %v5364, 0.0
    %5381 = vadd.xlane.f32.xlu0 %v5380
    %v5382 = vpop.xlane.xlu0 %5381
    %v5383 = vsel %vm71, %v5365, 0.0
    %5384 = vadd.xlane.f32.xlu0 %v5383
    %v5385 = vpop.xlane.xlu0 %5384
    %v5386 = vsel %vm71, %v5366, 0.0
    %5387 = vadd.xlane.f32.xlu0 %v5386
    %v5388 = vpop.xlane.xlu0 %5387
    %v5389 = vsel %vm71, %v5367, 0.0
    %5390 = vadd.xlane.f32.xlu0 %v5389
    %v5391 = vpop.xlane.xlu0 %5390
    %v5392 = vmul.f32 %v5370, %v96
    %v5393 = vmul.f32 %v5373, %v96
    %v5394 = vmul.f32 %v5376, %v96
    %v5395 = vmul.f32 %v5379, %v96
    %v5396 = vmul.f32 %v5382, %v96
    %v5397 = vmul.f32 %v5385, %v96
    %v5398 = vmul.f32 %v5388, %v96
    %v5399 = vmul.f32 %v5391, %v96
    %v5400 = vadd.f32 %v5392, 1e-12
    %v5401 = vadd.f32 %v5393, 1e-12
    %v5402 = vadd.f32 %v5394, 1e-12
    %v5403 = vadd.f32 %v5395, 1e-12
    %v5404 = vadd.f32 %v5396, 1e-12
    %v5405 = vadd.f32 %v5397, 1e-12
    %v5406 = vadd.f32 %v5398, 1e-12
    %v5407 = vadd.f32 %v5399, 1e-12
    %v5408 = vrsqrt.pop %v5400
    %v5409 = vrsqrt.pop %v5401
    %v5410 = vrsqrt.pop %v5402
    %v5411 = vrsqrt.pop %v5403
    %v5412 = vrsqrt.pop %v5404
    %v5413 = vrsqrt.pop %v5405
    %v5414 = vrsqrt.pop %v5406
    %v5415 = vrsqrt.pop %v5407
    %v5416 = vmul.f32 %v5352, %v5408
    %v5417 = vmul.f32 %v5353, %v5409
    %v5418 = vmul.f32 %v5354, %v5410
    %v5419 = vmul.f32 %v5355, %v5411
    %v5420 = vmul.f32 %v5356, %v5412
    %v5421 = vmul.f32 %v5357, %v5413
    %v5422 = vmul.f32 %v5358, %v5414
    %v5423 = vmul.f32 %v5359, %v5415
    %v5424 = vlaneseq
    %v5425 = vshrl.u32 %v5424, 7
    %v5426 = vsub.s32 0, %v5425
    %v5427 = vrot.slane %v5311, %v5426
    %v5428 = vmul.f32 %v5416, %v5427
    %v5429 = vmul.f32 %v5417, %v5427
    %v5430 = vmul.f32 %v5418, %v5427
    %v5431 = vmul.f32 %v5419, %v5427
    %v5432 = vmul.f32 %v5420, %v5427
    %v5433 = vmul.f32 %v5421, %v5427
    %v5434 = vmul.f32 %v5422, %v5427
    %v5435 = vmul.f32 %v5423, %v5427
    %v5436 = vlaneseq
    %v5437 = vshrl.u32 %v5436, 7
    %v5438 = vsub.s32 1, %v5437
    %v5439 = vrot.slane %v5311, %v5438
    %v5440 = vadd.f32 %v5428, %v5439
    %v5441 = vadd.f32 %v5429, %v5439
    %v5442 = vadd.f32 %v5430, %v5439
    %v5443 = vadd.f32 %v5431, %v5439
    %v5444 = vadd.f32 %v5432, %v5439
    %v5445 = vadd.f32 %v5433, %v5439
    %v5446 = vadd.f32 %v5434, %v5439
    %v5447 = vadd.f32 %v5435, %v5439
    %v5448 = vlaneseq
    %v5449 = vshrl.u32 %v5448, 7
    %v5450 = vlaneseq
    %v5451 = vand.u32 %v5450, 127
    %v5452 = vmul.u32 %v5449, 8
    %vm5453 = vcmp.eq.s32.totalorder %v5451, %v5452
    %v5454 = vsel %vm5453, 1, 0
    %v5455 = vcvt.s32.f32 %v5454
    %v5457 = vsel %vm2607, %v5455, 0
    %5459 = vmatprep.subr.mxu0 0.0
    %5460 = vmatpush1.msra.mxu0 %v5440
    %5461 = vmatprep.subr.mxu0 0.0
    %5462 = vmatpush1.msra.mxu0 %v5441
    %5463 = vmatprep.subr.mxu0 0.0
    %5464 = vmatpush1.msra.mxu0 %v5442
    %5465 = vmatprep.subr.mxu0 0.0
    %5466 = vmatpush1.msra.mxu0 %v5443
    %5467 = vmatprep.subr.mxu0 0.0
    %5468 = vmatpush1.msra.mxu0 %v5444
    %5469 = vmatprep.subr.mxu0 0.0
    %5470 = vmatpush1.msra.mxu0 %v5445
    %5471 = vmatprep.subr.mxu0 0.0
    %5472 = vmatpush1.msra.mxu0 %v5446
    %5473 = vmatprep.subr.mxu0 0.0
    %5474 = vmatpush1.msra.mxu0 %v5447
    %5475 = vmatprep.subr.mxu0 0.0
    %5476 = vmatpush1.msra.mxu0 0.0
    %5477 = vmatprep.subr.mxu0 0.0
    %5478 = vmatpush1.msra.mxu0 0.0
    %5479 = vmatprep.subr.mxu0 0.0
    %5480 = vmatpush1.msra.mxu0 0.0
    %5481 = vmatprep.subr.mxu0 0.0
    %5482 = vmatpush1.msra.mxu0 0.0
    %5483 = vmatprep.subr.mxu0 0.0
    %5484 = vmatpush1.msra.mxu0 0.0
    %5485 = vmatprep.subr.mxu0 0.0
    %5486 = vmatpush1.msra.mxu0 0.0
    %5487 = vmatprep.subr.mxu0 0.0
    %5488 = vmatpush1.msra.mxu0 0.0
    %5489 = vmatprep.subr.mxu0 0.0
    %5490 = vmatpush1.msra.mxu0 0.0
    %5491 = vmatprep.subr.mxu0 0.0
    %5492 = vmatpush1.msra.mxu0 0.0
    %5493 = vmatprep.subr.mxu0 0.0
    %5494 = vmatpush1.msra.mxu0 0.0
    %5495 = vmatprep.subr.mxu0 0.0
    %5496 = vmatpush1.msra.mxu0 0.0
    %5497 = vmatprep.subr.mxu0 0.0
    %5498 = vmatpush1.msra.mxu0 0.0
    %5499 = vmatprep.subr.mxu0 0.0
    %5500 = vmatpush1.msra.mxu0 0.0
    %5501 = vmatprep.subr.mxu0 0.0
    %5502 = vmatpush1.msra.mxu0 0.0
    %5503 = vmatprep.subr.mxu0 0.0
    %5504 = vmatpush1.msra.mxu0 0.0
    %5505 = vmatprep.subr.mxu0 0.0
    %5506 = vmatpush1.msra.mxu0 0.0
    %5507 = vmatprep.subr.mxu0 0.0
    %5508 = vmatpush1.msra.mxu0 0.0
    %5509 = vmatprep.subr.mxu0 0.0
    %5510 = vmatpush1.msra.mxu0 0.0
    %5511 = vmatprep.subr.mxu0 0.0
    %5512 = vmatpush1.msra.mxu0 0.0
    %5513 = vmatprep.subr.mxu0 0.0
    %5514 = vmatpush1.msra.mxu0 0.0
    %5515 = vmatprep.subr.mxu0 0.0
    %5516 = vmatpush1.msra.mxu0 0.0
    %5517 = vmatprep.subr.mxu0 0.0
    %5518 = vmatpush1.msra.mxu0 0.0
    %5519 = vmatprep.subr.mxu0 0.0
    %5520 = vmatpush1.msra.mxu0 0.0
    %5521 = vmatprep.subr.mxu0 0.0
    %5522 = vmatpush1.msra.mxu0 0.0
    %5523 = vmatprep.mubr.f32.mxu0 0.0
    %5524 = vmatmul.mubr.f32.gmra.mrb[0].mxu0 %v5457
    %v5525 = vpop.f32.mrb[0].mxu0
    %v5526 = vadd.f32 0.0, %v5525
    %v5527 = vpop.f32.mrb[0].mxu0
    %5528 = vdwg.mxu0
    %v5529 = vld [vmem:[%s14] sm:$0x1]
    %v5531 = vlaneseq
    %v5532 = vshrl.u32 %v5531, 7
    %v5533 = vsub.s32 0, %v5532
    %v5534 = vrot.slane %v5529, %v5533
    %v5536 = vmul.f32 %v5526, %v5534
    %v5537 = vsel %vm71, %v5536, 0.0
    %5538 = vadd.xlane.f32.xlu0 %v5537
    %v5539 = vpop.xlane.xlu0 %5538
    %v5540 = vld [vmem:[#allocation3] sm:$0x1]
    %v5542 = vlaneseq
    %v5543 = vshrl.u32 %v5542, 7
    %v5544 = vsub.s32 0, %v5543
    %v5545 = vrot.slane %v5540, %v5544
    %v5547 = vadd.f32 %v5539, %v5545
    %vm5548 = vcmask 7168
    %5549 = vst.msk [vmem:[%s16] sm:$0xff] %vm5548, %v5547
    %v5550 = vld [vmem:[%s2] sm:$0x1]
    %vm5551 = vcmask 3072
    %v5552 = vsel %vm5551, %v5547, -inf
    %v5553 = vrot.slane %v5552, 4
    %v5554 = vmax.f32 %v5552, %v5553
    %v5555 = vrot.slane %v5554, 2
    %v5556 = vmax.f32 %v5554, %v5555
    %v5557 = vrot.slane %v5556, 1
    %v5558 = vmax.f32 %v5556, %v5557
    %v5559 = vsub.f32 %v5547, %v5558
    %v5560 = vmul.f32 %v5559, 1.442695
    %v5561 = vpow.pop %v5560
    %v5562 = vsel %vm5551, %v5561, 0.0
    %v5563 = vrot.slane %v5562, 4
    %v5564 = vadd.f32 %v5562, %v5563
    %v5565 = vrot.slane %v5564, 2
    %v5566 = vadd.f32 %v5564, %v5565
    %v5567 = vrot.slane %v5566, 1
    %v5568 = vadd.f32 %v5566, %v5567
    %v5569 = vlog2.pop %v5568
    %v5570 = vmul.f32 %v5569, 0.6931472
    %v5571 = vadd.f32 %v5570, %v5558
    %v5572 = vlaneseq
    %v5573 = vshrl.u32 %v5572, 7
    %v5574 = vsub.s32 0, %v5573
    %v5575 = vrot.slane %v5550, %v5574
    %vm5576 = vcmp.eq.s32.totalorder %v5449, %v5575
    %v5577 = vsel %vm5576, 1, 0
    %v5578 = vcvt.s32.f32 %v5577
    %v5579 = vmul.f32 %v5547, %v5578
    %v5580 = vsel %vm5551, %v5579, 0.0
    %v5581 = vrot.slane %v5580, 4
    %v5582 = vadd.f32 %v5580, %v5581
    %v5583 = vrot.slane %v5582, 2
    %v5584 = vadd.f32 %v5582, %v5583
    %v5585 = vrot.slane %v5584, 1
    %v5586 = vadd.f32 %v5584, %v5585
    %v5587 = vsub.f32 %v5571, %v5586
    %v5588 = vadd.f32 %v5587, 0.0
    %vm5589 = vcmp.eq.f32.partialorder %v5547, %v5558
    %v5590 = vsel %vm5589, %v5449, 4
    %v5591 = vsel %vm5551, %v5590, 2147483647
    %v5592 = vrot.slane %v5591, 4
    %vm5593 = vcmp.lt.s32.totalorder %v5591, %v5592
    %v5594 = vsel %vm5593, %v5591, %v5592
    %v5595 = vrot.slane %v5594, 2
    %vm5596 = vcmp.lt.s32.totalorder %v5594, %v5595
    %v5597 = vsel %vm5596, %v5594, %v5595
    %v5598 = vrot.slane %v5597, 1
    %vm5599 = vcmp.lt.s32.totalorder %v5597, %v5598
    %v5600 = vsel %vm5599, %v5597, %v5598
    %vm5601 = vcmp.eq.s32.totalorder %v5600, %v5550
    %v5602 = vsel %vm5601, 1, 0
    %v5603 = vcvt.s32.f32 %v5602
    %v5604 = vadd.f32 %v5603, 0.0
    %v5605 = vld [vmem:[%s2 + $0x1] sm:$0x1]
    %vm5606 = vcmask 7172
    %v5607 = vsel %vm5606, %v5547, -inf
    %v5608 = vrot.slane %v5607, 4
    %v5609 = vmax.f32 %v5607, %v5608
    %v5610 = vrot.slane %v5609, 2
    %v5611 = vmax.f32 %v5609, %v5610
    %v5612 = vrot.slane %v5611, 1
    %v5613 = vmax.f32 %v5611, %v5612
    %v5614 = vsub.f32 %v5547, %v5613
    %v5615 = vmul.f32 %v5614, 1.442695
    %v5616 = vpow.pop %v5615
    %v5618 = vrot.slane %v5616, 4
    %v5620 = vsel %vm5551, %v5618, 0.0
    %v5621 = vrot.slane %v5620, 4
    %v5622 = vadd.f32 %v5620, %v5621
    %v5623 = vrot.slane %v5622, 2
    %v5624 = vadd.f32 %v5622, %v5623
    %v5625 = vrot.slane %v5624, 1
    %v5626 = vadd.f32 %v5624, %v5625
    %v5627 = vlog2.pop %v5626
    %v5628 = vmul.f32 %v5627, 0.6931472
    %v5629 = vadd.f32 %v5628, %v5613
    %v5630 = vlaneseq
    %v5631 = vshrl.u32 %v5630, 7
    %v5632 = vsub.s32 0, %v5631
    %v5633 = vrot.slane %v5605, %v5632
    %vm5634 = vcmp.eq.s32.totalorder %v5449, %v5633
    %v5635 = vsel %vm5634, 1, 0
    %v5636 = vcvt.s32.f32 %v5635
    %v5638 = vrot.slane %v5636, 4
    %v5640 = vmul.f32 %v5547, %v5638
    %v5642 = vrot.slane %v5640, 4
    %v5644 = vsel %vm5551, %v5642, 0.0
    %v5645 = vrot.slane %v5644, 4
    %v5646 = vadd.f32 %v5644, %v5645
    %v5647 = vrot.slane %v5646, 2
    %v5648 = vadd.f32 %v5646, %v5647
    %v5649 = vrot.slane %v5648, 1
    %v5650 = vadd.f32 %v5648, %v5649
    %v5651 = vsub.f32 %v5629, %v5650
    %v5652 = vadd.f32 %v5588, %v5651
    %vm5653 = vcmp.eq.f32.partialorder %v5547, %v5613
    %v5654 = vrot.slane %v5449, 4
    %v5655 = vsel %vm5653, %v5654, 4
    %v5656 = vsel %vm5606, %v5655, 2147483647
    %v5657 = vrot.slane %v5656, 4
    %vm5658 = vcmp.lt.s32.totalorder %v5656, %v5657
    %v5659 = vsel %vm5658, %v5656, %v5657
    %v5660 = vrot.slane %v5659, 2
    %vm5661 = vcmp.lt.s32.totalorder %v5659, %v5660
    %v5662 = vsel %vm5661, %v5659, %v5660
    %v5663 = vrot.slane %v5662, 1
    %vm5664 = vcmp.lt.s32.totalorder %v5662, %v5663
    %v5665 = vsel %vm5664, %v5662, %v5663
    %vm5666 = vcmp.eq.s32.totalorder %v5665, %v5605
    %v5667 = vsel %vm5666, 1, 0
    %v5668 = vcvt.s32.f32 %v5667
    %v5669 = vadd.f32 %v5604, %v5668
    %v5670 = vadd.f32 %v5652, 0.0
    %s5671 = vtos %v5670
    %v5672 = vrcp.pop 2.0
    %s5673 = vtos %v5672
    %s5674 = smul.f32 %s5671, %s5673
    %s5675 = scalar_lea.smem [#allocation4], 0
    %5676 = sst [smem:[%s5675]] %s5674
    %v5677 = vadd.f32 %v5669, 0.0
    %s5678 = vtos %v5677
    %v5679 = vrcp.pop 2.0
    %s5680 = vtos %v5679
    %s5681 = smul.f32 %s5678, %s5680
    %s5682 = scalar_lea.smem [#allocation6], 0
    %5683 = sst [smem:[%s5682]] %s5681
    // Predicated region
    $region66: #{cross_encoder_forward.1} parent=1 // pred_check
      _
    $region67: #{cross_encoder_forward.1} parent=1 // pred_check_branch
      %5685 = sbr.rel (0) target = $region69
    $region68: #{cross_encoder_forward.1} parent=1 // pred_region
      _
    $region69: #{cross_encoder_forward.1} parent=1 // pred_fallthru
      _
    // Predicated region
    $region70: #{cross_encoder_forward.1} parent=1 // pred_check
      _
    $region71: #{cross_encoder_forward.1} parent=1 // pred_check_branch
      %5687 = sbr.rel (0) target = $region73
    $region72: #{cross_encoder_forward.1} parent=1 // pred_region
      %s5689 = ssub.s32 16, 16
      %5690 = vsyncadd [#allocation5], %s5689
      %5693 = dma.smem_to_hbm [#allocation4], 16, %s17, [#allocation5]
    $region73: #{cross_encoder_forward.1} parent=1 // pred_fallthru
      _
    // Predicated region
    $region74: #{cross_encoder_forward.1} parent=1 // pred_check
      _
    $region75: #{cross_encoder_forward.1} parent=1 // pred_check_branch
      %5695 = sbr.rel (0) target = $region77
    $region76: #{cross_encoder_forward.1} parent=1 // pred_region
      %s5697 = ssub.s32 16, 16
      %5698 = vsyncadd [#allocation7], %s5697
      %5701 = dma.smem_to_hbm [#allocation6], 16, %s18, [#allocation7]
    $region77: #{cross_encoder_forward.1} parent=1 // pred_fallthru
      _
    // Predicated region
    $region78: #{cross_encoder_forward.1} parent=1 // pred_check
      _
    $region79: #{cross_encoder_forward.1} parent=1 // pred_check_branch
      %5703 = sbr.rel (0) target = $region81
    $region80: #{cross_encoder_forward.1} parent=1 // pred_region
      _
    $region81: #{cross_encoder_forward.1} parent=1 // pred_fallthru
      _
    // Predicated region
    $region82: #{cross_encoder_forward.1} parent=1 // pred_check
      _
    $region83: #{cross_encoder_forward.1} parent=1 // pred_check_branch
      %5705 = sbr.rel (0) target = $region85
    $region84: #{cross_encoder_forward.1} parent=1 // pred_region
      %5706 = dma.done [#allocation5], 16
    $region85: #{cross_encoder_forward.1} parent=1 // pred_fallthru
      _
    // Predicated region
    $region86: #{cross_encoder_forward.1} parent=1 // pred_check
      _
    $region87: #{cross_encoder_forward.1} parent=1 // pred_check_branch
      %5708 = sbr.rel (0) target = $region89
    $region88: #{cross_encoder_forward.1} parent=1 // pred_region
      %5709 = dma.done [#allocation7], 16
    $region89: #{cross_encoder_forward.1} parent=1 // pred_fallthru
      _
    %5710 = sfence
    %5711 = vsyncpa [#allocation5], 1
    %5712 = vsyncpa [#allocation7], 1

</llo_original>
